<compile_context>
chip_gen: v6e
topology: v6e:2x2x1
jax: 0.10.0
libtpu: 0.0.40
codegen_flags: <defaults>
</compile_context>

<pallas_src>
import jax
import jax.numpy as jnp
from jax.experimental import pallas as pl
from jax.experimental.pallas import tpu as pltpu

CONFIG = dict(
    num_conv_layers=2,
    channels_1=8, kernel_size_1=5,
    channels_2=16, kernel_size_2=3,
    fc_size=32, dropout_rate=0.25,
)
SEQ_LEN = 187
NUM_CLASSES = 5


# ----------------------------------------------------------------------------
# Fused kernel factory: entire forward pass for a tile of TB batch elements.
# Layout: batch on sublanes, sequence length on lanes; channels are separate
# 2-D slabs (small fixed counts: 8 / 16), so every op is tile-wide.
# ----------------------------------------------------------------------------
def _make_kernel(C1, K1, C2, K2, L_IN):
    L1 = L_IN - K1 + 1          # conv1 output length             (183)
    LM1 = L1 - 1                # un-subsampled pool-1 length      (182)
    LU = LM1 - 2 * (K2 - 1)     # conv2 length over un-subsampled  (178)
    LM2 = LU - 2                # un-subsampled pool-2 length      (176)

    def kernel(x_ref, w1_ref, b1_ref, w2_ref, b2_ref,
               w1e_ref, bfc1_ref, wfc2_ref, bfc2_ref, o_ref):
        # x_ref: (TB, L_IN) VMEM.  Conv weights/biases: 1-D SMEM (scalar reads).
        x = x_ref[...]                                            # (TB, L_IN)

        # ---- conv1 (C_in=1) + ReLU: K1-tap accumulation, whole tile at once.
        taps1 = [x[:, k:k + L1] for k in range(K1)]               # K1 x (TB, L1)
        a1 = []
        for c in range(C1):
            acc = taps1[0] * w1_ref[c * K1]
            for k in range(1, K1):
                acc = acc + taps1[k] * w1_ref[c * K1 + k]
            a1.append(jnp.maximum(acc + b1_ref[c], 0.0))          # (TB, L1)

        # ---- max_pool1d(2), kept un-subsampled: pooled1[t,c,i] == m1[c][t,2i].
        m1 = [jnp.maximum(v[:, :LM1], v[:, 1:LM1 + 1]) for v in a1]   # (TB, LM1)

        # ---- conv2 + ReLU with pool-1's stride folded into even tap offsets.
        # u[o,l] = sum_{c,k} W2[o,c,k] * m1[c][:, l+2k];  conv2[o,j] = u[o,2j]
        taps2 = [[m1[c][:, 2 * k:2 * k + LU] for k in range(K2)]
                 for c in range(C1)]                              # C1 x K2 x (TB, LU)
        a2 = []
        for o in range(C2):
            acc = None
            for c in range(C1):
                for k in range(K2):
                    term = taps2[c][k] * w2_ref[(o * C1 + c) * K2 + k]
                    acc = term if acc is None else acc + term
            a2.append(jnp.maximum(acc + b2_ref[o], 0.0))          # (TB, LU)

        # ---- max_pool1d(2) of layer 2: pairs are 2 apart in the u-domain.
        # pooled2[t,o,i] == m2[o][t, 4i]
        m2 = [jnp.maximum(v[:, :LM2], v[:, 2:LM2 + 2]) for v in a2]   # (TB, LM2)

        # ---- fc1: ONE matmul for the whole tile.  PyTorch flatten order and
        #      the stride-4 subsample are folded into the zero-expanded,
        #      host-flattened w1e (exact: zero rows select nothing).
        m2cat = jnp.concatenate(m2, axis=1)                       # (TB, C2*LM2)
        h = jnp.dot(m2cat, w1e_ref[...],
                    preferred_element_type=jnp.float32) + bfc1_ref[...]
        h = jnp.maximum(h, 0.0)                                   # (TB, FC)
        # Dropout: identity at inference (PyTorch eval mode).

        # ---- fc2 + single tile-wide store.
        logits = jnp.dot(h, wfc2_ref[...],
                         preferred_element_type=jnp.float32) + bfc2_ref[...]
        o_ref[...] = logits.astype(o_ref.dtype)                   # (TB, NCLS)

    return kernel


# ----------------------------------------------------------------------------
# Wrapper
# ----------------------------------------------------------------------------
def _pick_batch_tile(B, max_tile=128):
    """Largest multiple-of-8 tile dividing B, keeping >=2 grid steps (v7x: 2 TCs)."""
    if B % 8 != 0:
        return B                       # single step; block equals full batch extent
    best = None
    t = 8
    while t <= min(B, max_tile):
        if B % t == 0 and B // t >= 2:
            best = t
        t += 8
    return best if best is not None else B


def tunable_cnn_forward(x, kp, *, batch_tile=None):
    """x: (B, 187) float32 -> logits (B, 5)."""
    B, L = x.shape
    TB = batch_tile if batch_tile is not None else _pick_batch_tile(B)
    assert B % TB == 0 and (TB % 8 == 0 or TB == B), (B, TB)

    C1, K1, C2, K2 = kp["dims"]
    FC, NCLS = kp["wfc2"].shape
    LM2 = (L - K1 + 1 - 1) - 2 * (K2 - 1) - 2
    assert kp["w1e_flat"].shape == (C2 * LM2, FC), kp["w1e_flat"].shape

    kernel = _make_kernel(C1, K1, C2, K2, L)
    smem = pl.BlockSpec(memory_space=pltpu.MemorySpace.SMEM)
    const2 = lambda i: (0, 0)          # constant block index -> fetched once

    out = pl.pallas_call(
        kernel,
        out_shape=jax.ShapeDtypeStruct((B, NCLS), jnp.float32),
        grid=(B // TB,),
        in_specs=[
            pl.BlockSpec((TB, L), lambda i: (i, 0)),      # x tile (batch on sublanes)
            smem, smem, smem, smem,                       # conv weights / biases
            pl.BlockSpec(kp["w1e_flat"].shape, const2),   # fc1 weight
            pl.BlockSpec(kp["bfc1"].shape, const2),
            pl.BlockSpec(kp["wfc2"].shape, const2),
            pl.BlockSpec(kp["bfc2"].shape, const2),
        ],
        out_specs=pl.BlockSpec((TB, NCLS), lambda i: (i, 0)),
        compiler_params=pltpu.CompilerParams(
            dimension_semantics=("parallel",),
            vmem_limit_bytes=32 * 1024 * 1024),
    )(x, kp["w1f"], kp["b1"], kp["w2f"], kp["b2"],
      kp["w1e_flat"], kp["bfc1"], kp["wfc2"], kp["bfc2"])
    return out


# ----------------------------------------------------------------------------
# Parameters: PyTorch-layout init + one-time host-side repack for the kernel
# ----------------------------------------------------------------------------
def init_params(key, config):
    """PyTorch layouts: conv W (C_out, C_in, K), Linear W (out, in)."""
    keys = iter(jax.random.split(key, 16))
    convs = []
    c_in, L = 1, SEQ_LEN
    for i in range(config["num_conv_layers"]):
        c_out = config[f"channels_{i + 1}"]
        k = config[f"kernel_size_{i + 1}"]
        w = jax.random.normal(next(keys), (c_out, c_in, k), jnp.float32) * 0.2
        b = jax.random.normal(next(keys), (c_out,), jnp.float32) * 0.1
        convs.append((w, b))
        c_in = c_out
        L = (L - k + 1) // 2
    conv_out = c_in * L            # 16 * 44 = 704 (matches calculate_conv_output_size)
    fc = config["fc_size"]
    w1 = jax.random.normal(next(keys), (fc, conv_out), jnp.float32) / jnp.sqrt(1.0 * conv_out)
    b1 = jax.random.normal(next(keys), (fc,), jnp.float32) * 0.1
    w2 = jax.random.normal(next(keys), (NUM_CLASSES, fc), jnp.float32) / jnp.sqrt(1.0 * fc)
    b2 = jax.random.normal(next(keys), (NUM_CLASSES,), jnp.float32) * 0.1
    return dict(convs=convs, w1=w1, b1=b1, w2=w2, b2=b2)


def prepare_kernel_params(params):
    """One-time, zero-runtime-cost repack of PyTorch weights for the kernel."""
    (w1c, b1c), (w2c, b2c) = params["convs"]
    C1, _, K1 = w1c.shape                  # (8, 1, 5)
    C2, C1b, K2 = w2c.shape                # (16, 8, 3)
    assert C1b == C1

    w1f = w1c.reshape(C1 * K1)             # index c*K1 + k   (C_in = 1)
    w2f = w2c.reshape(C2 * C1 * K2)        # index (o*C1 + c)*K2 + k

    # Geometry of the un-subsampled chain (matches the kernel's formulas).
    L1 = SEQ_LEN - K1 + 1                  # 183
    Lp1 = L1 // 2                          # 91
    L2 = Lp1 - K2 + 1                      # 89
    Lp2 = L2 // 2                          # 44
    LM2 = (L1 - 1) - 2 * (K2 - 1) - 2      # 176
    fc = params["w1"].shape[0]

    # fc1 weight expanded so that contracting over the lane-concat of the
    # un-subsampled pool-2 slabs equals PyTorch's flatten (C-major, L-minor)
    # of the stride-4 subsample: nonzero rows only at l = 4i.
    w1_t = params["w1"].T.reshape(C2, Lp2, fc)                   # [o, i, f]
    w1e = jnp.zeros((C2, LM2, fc), jnp.float32)
    w1e = w1e.at[:, 4 * jnp.arange(Lp2), :].set(w1_t)
    w1e_flat = w1e.reshape(C2 * LM2, fc)

    return dict(
        dims=(C1, K1, C2, K2),
        w1f=w1f, b1=b1c, w2f=w2f, b2=b2c,
        w1e_flat=w1e_flat, bfc1=params["b1"].reshape(1, fc),
        wfc2=params["w2"].T, bfc2=params["b2"].reshape(1, NUM_CLASSES),
    )


# ----------------------------------------------------------------------------
# Pure-JAX reference (PyTorch semantics) for correctness check
# ----------------------------------------------------------------------------
def reference_forward(x, params):
    h = x[:, None, :]                                   # (B, 1, 187) NCL
    for w, b in params["convs"]:
        C_out, _, K = w.shape
        L_out = h.shape[2] - K + 1
        z = sum(jnp.einsum("bcl,oc->bol", h[:, :, k:k + L_out], w[:, :, k])
                for k in range(K)) + b[None, :, None]
        y = jax.nn.relu(z)
        Lp = L_out // 2
        h = y[:, :, :2 * Lp].reshape(y.shape[0], C_out, Lp, 2).max(axis=3)
    flat = h.reshape(h.shape[0], -1)                    # PyTorch flatten order
    h1 = jax.nn.relu(flat @ params["w1"].T + params["b1"])
    return h1 @ params["w2"].T + params["b2"]           # dropout == identity (eval)


# ----------------------------------------------------------------------------
if __name__ == "__main__":
    key = jax.random.PRNGKey(0)
    pkey, xkey = jax.random.split(key)

    params = init_params(pkey, CONFIG)
    kparams = prepare_kernel_params(params)

    # Exercise both the multi-step grid path (B=16 -> TB=8, grid=2, "parallel")
    # and the TB == B single-step fallback (B=2).
    for batch in (16, 2):
        x = jax.random.normal(jax.random.fold_in(xkey, batch),
                              (batch, SEQ_LEN), jnp.float32)
        out = jax.block_until_ready(tunable_cnn_forward(x, kparams))
        ref = reference_forward(x, params)
        assert out.shape == (batch, NUM_CLASSES), out.shape
        assert jnp.allclose(out, ref, rtol=2e-4, atol=2e-4), (out, ref)

    print("KERNEL_OK")
</pallas_src>

<mosaic_0001>
module attributes {stable_mosaic.version = 11 : i64} {
  func.func @kernel(%arg0: i32, %arg1: memref<8x187xf32, #tpu.memory_space<vmem>>, %arg2: memref<40xf32, #tpu.memory_space<smem>>, %arg3: memref<8xf32, #tpu.memory_space<smem>>, %arg4: memref<384xf32, #tpu.memory_space<smem>>, %arg5: memref<16xf32, #tpu.memory_space<smem>>, %arg6: memref<2816x32xf32, #tpu.memory_space<vmem>>, %arg7: memref<1x32xf32, #tpu.memory_space<vmem>>, %arg8: memref<32x5xf32, #tpu.memory_space<vmem>>, %arg9: memref<1x5xf32, #tpu.memory_space<vmem>>, %arg10: memref<8x5xf32, #tpu.memory_space<vmem>>) attributes {dimension_semantics = [#tpu.dimension_semantics<parallel>], iteration_bounds = array<i64: 2>, scalar_prefetch = 0 : i64, scratch_operands = 0 : i64, tpu.core_type = #tpu.core_type<tc>, window_params = [{transform_indices = @transform_0, window_bounds = array<i64: 8, 187>}, {transform_indices = @transform_1, window_bounds = array<i64: 40>}, {transform_indices = @transform_2, window_bounds = array<i64: 8>}, {transform_indices = @transform_3, window_bounds = array<i64: 384>}, {transform_indices = @transform_4, window_bounds = array<i64: 16>}, {pipeline_mode = #tpu.pipeline_mode<synchronous>, transform_indices = @transform_5, window_bounds = array<i64: 2816, 32>}, {pipeline_mode = #tpu.pipeline_mode<synchronous>, transform_indices = @transform_6, window_bounds = array<i64: 1, 32>}, {pipeline_mode = #tpu.pipeline_mode<synchronous>, transform_indices = @transform_7, window_bounds = array<i64: 32, 5>}, {pipeline_mode = #tpu.pipeline_mode<synchronous>, transform_indices = @transform_8, window_bounds = array<i64: 1, 5>}, {transform_indices = @transform_9, window_bounds = array<i64: 8, 5>}]} {
    %c0 = arith.constant 0 : index
    %c0_0 = arith.constant 0 : index
    %0 = vector.load %arg1[%c0, %c0_0] : memref<8x187xf32, #tpu.memory_space<vmem>>, vector<8x187xf32>
    %1 = vector.extract_strided_slice %0 {offsets = [0, 0], sizes = [8, 183], strides = [1, 1]} : vector<8x187xf32> to vector<8x183xf32>
    %2 = vector.extract_strided_slice %0 {offsets = [0, 1], sizes = [8, 183], strides = [1, 1]} : vector<8x187xf32> to vector<8x183xf32>
    %3 = vector.extract_strided_slice %0 {offsets = [0, 2], sizes = [8, 183], strides = [1, 1]} : vector<8x187xf32> to vector<8x183xf32>
    %4 = vector.extract_strided_slice %0 {offsets = [0, 3], sizes = [8, 183], strides = [1, 1]} : vector<8x187xf32> to vector<8x183xf32>
    %5 = vector.extract_strided_slice %0 {offsets = [0, 4], sizes = [8, 183], strides = [1, 1]} : vector<8x187xf32> to vector<8x183xf32>
    %c0_1 = arith.constant 0 : index
    %6 = memref.load %arg2[%c0_1] : memref<40xf32, #tpu.memory_space<smem>>
    %7 = vector.broadcast %6 : f32 to vector<8x183xf32>
    %8 = arith.mulf %1, %7 : vector<8x183xf32>
    %c1 = arith.constant 1 : index
    %9 = memref.load %arg2[%c1] : memref<40xf32, #tpu.memory_space<smem>>
    %10 = vector.broadcast %9 : f32 to vector<8x183xf32>
    %11 = arith.mulf %2, %10 : vector<8x183xf32>
    %12 = arith.addf %8, %11 : vector<8x183xf32>
    %c2 = arith.constant 2 : index
    %13 = memref.load %arg2[%c2] : memref<40xf32, #tpu.memory_space<smem>>
    %14 = vector.broadcast %13 : f32 to vector<8x183xf32>
    %15 = arith.mulf %3, %14 : vector<8x183xf32>
    %16 = arith.addf %12, %15 : vector<8x183xf32>
    %c3 = arith.constant 3 : index
    %17 = memref.load %arg2[%c3] : memref<40xf32, #tpu.memory_space<smem>>
    %18 = vector.broadcast %17 : f32 to vector<8x183xf32>
    %19 = arith.mulf %4, %18 : vector<8x183xf32>
    %20 = arith.addf %16, %19 : vector<8x183xf32>
    %c4 = arith.constant 4 : index
    %21 = memref.load %arg2[%c4] : memref<40xf32, #tpu.memory_space<smem>>
    %22 = vector.broadcast %21 : f32 to vector<8x183xf32>
    %23 = arith.mulf %5, %22 : vector<8x183xf32>
    %24 = arith.addf %20, %23 : vector<8x183xf32>
    %c0_2 = arith.constant 0 : index
    %25 = memref.load %arg3[%c0_2] : memref<8xf32, #tpu.memory_space<smem>>
    %26 = vector.broadcast %25 : f32 to vector<8x183xf32>
    %27 = arith.addf %24, %26 : vector<8x183xf32>
    %cst = arith.constant 0.000000e+00 : f32
    %28 = vector.broadcast %cst : f32 to vector<8x183xf32>
    %29 = arith.maximumf %27, %28 : vector<8x183xf32>
    %c5 = arith.constant 5 : index
    %30 = memref.load %arg2[%c5] : memref<40xf32, #tpu.memory_space<smem>>
    %31 = vector.broadcast %30 : f32 to vector<8x183xf32>
    %32 = arith.mulf %1, %31 : vector<8x183xf32>
    %c6 = arith.constant 6 : index
    %33 = memref.load %arg2[%c6] : memref<40xf32, #tpu.memory_space<smem>>
    %34 = vector.broadcast %33 : f32 to vector<8x183xf32>
    %35 = arith.mulf %2, %34 : vector<8x183xf32>
    %36 = arith.addf %32, %35 : vector<8x183xf32>
    %c7 = arith.constant 7 : index
    %37 = memref.load %arg2[%c7] : memref<40xf32, #tpu.memory_space<smem>>
    %38 = vector.broadcast %37 : f32 to vector<8x183xf32>
    %39 = arith.mulf %3, %38 : vector<8x183xf32>
    %40 = arith.addf %36, %39 : vector<8x183xf32>
    %c8 = arith.constant 8 : index
    %41 = memref.load %arg2[%c8] : memref<40xf32, #tpu.memory_space<smem>>
    %42 = vector.broadcast %41 : f32 to vector<8x183xf32>
    %43 = arith.mulf %4, %42 : vector<8x183xf32>
    %44 = arith.addf %40, %43 : vector<8x183xf32>
    %c9 = arith.constant 9 : index
    %45 = memref.load %arg2[%c9] : memref<40xf32, #tpu.memory_space<smem>>
    %46 = vector.broadcast %45 : f32 to vector<8x183xf32>
    %47 = arith.mulf %5, %46 : vector<8x183xf32>
    %48 = arith.addf %44, %47 : vector<8x183xf32>
    %c1_3 = arith.constant 1 : index
    %49 = memref.load %arg3[%c1_3] : memref<8xf32, #tpu.memory_space<smem>>
    %50 = vector.broadcast %49 : f32 to vector<8x183xf32>
    %51 = arith.addf %48, %50 : vector<8x183xf32>
    %cst_4 = arith.constant 0.000000e+00 : f32
    %52 = vector.broadcast %cst_4 : f32 to vector<8x183xf32>
    %53 = arith.maximumf %51, %52 : vector<8x183xf32>
    %c10 = arith.constant 10 : index
    %54 = memref.load %arg2[%c10] : memref<40xf32, #tpu.memory_space<smem>>
    %55 = vector.broadcast %54 : f32 to vector<8x183xf32>
    %56 = arith.mulf %1, %55 : vector<8x183xf32>
    %c11 = arith.constant 11 : index
    %57 = memref.load %arg2[%c11] : memref<40xf32, #tpu.memory_space<smem>>
    %58 = vector.broadcast %57 : f32 to vector<8x183xf32>
    %59 = arith.mulf %2, %58 : vector<8x183xf32>
    %60 = arith.addf %56, %59 : vector<8x183xf32>
    %c12 = arith.constant 12 : index
    %61 = memref.load %arg2[%c12] : memref<40xf32, #tpu.memory_space<smem>>
    %62 = vector.broadcast %61 : f32 to vector<8x183xf32>
    %63 = arith.mulf %3, %62 : vector<8x183xf32>
    %64 = arith.addf %60, %63 : vector<8x183xf32>
    %c13 = arith.constant 13 : index
    %65 = memref.load %arg2[%c13] : memref<40xf32, #tpu.memory_space<smem>>
    %66 = vector.broadcast %65 : f32 to vector<8x183xf32>
    %67 = arith.mulf %4, %66 : vector<8x183xf32>
    %68 = arith.addf %64, %67 : vector<8x183xf32>
    %c14 = arith.constant 14 : index
    %69 = memref.load %arg2[%c14] : memref<40xf32, #tpu.memory_space<smem>>
    %70 = vector.broadcast %69 : f32 to vector<8x183xf32>
    %71 = arith.mulf %5, %70 : vector<8x183xf32>
    %72 = arith.addf %68, %71 : vector<8x183xf32>
    %c2_5 = arith.constant 2 : index
    %73 = memref.load %arg3[%c2_5] : memref<8xf32, #tpu.memory_space<smem>>
    %74 = vector.broadcast %73 : f32 to vector<8x183xf32>
    %75 = arith.addf %72, %74 : vector<8x183xf32>
    %cst_6 = arith.constant 0.000000e+00 : f32
    %76 = vector.broadcast %cst_6 : f32 to vector<8x183xf32>
    %77 = arith.maximumf %75, %76 : vector<8x183xf32>
    %c15 = arith.constant 15 : index
    %78 = memref.load %arg2[%c15] : memref<40xf32, #tpu.memory_space<smem>>
    %79 = vector.broadcast %78 : f32 to vector<8x183xf32>
    %80 = arith.mulf %1, %79 : vector<8x183xf32>
    %c16 = arith.constant 16 : index
    %81 = memref.load %arg2[%c16] : memref<40xf32, #tpu.memory_space<smem>>
    %82 = vector.broadcast %81 : f32 to vector<8x183xf32>
    %83 = arith.mulf %2, %82 : vector<8x183xf32>
    %84 = arith.addf %80, %83 : vector<8x183xf32>
    %c17 = arith.constant 17 : index
    %85 = memref.load %arg2[%c17] : memref<40xf32, #tpu.memory_space<smem>>
    %86 = vector.broadcast %85 : f32 to vector<8x183xf32>
    %87 = arith.mulf %3, %86 : vector<8x183xf32>
    %88 = arith.addf %84, %87 : vector<8x183xf32>
    %c18 = arith.constant 18 : index
    %89 = memref.load %arg2[%c18] : memref<40xf32, #tpu.memory_space<smem>>
    %90 = vector.broadcast %89 : f32 to vector<8x183xf32>
    %91 = arith.mulf %4, %90 : vector<8x183xf32>
    %92 = arith.addf %88, %91 : vector<8x183xf32>
    %c19 = arith.constant 19 : index
    %93 = memref.load %arg2[%c19] : memref<40xf32, #tpu.memory_space<smem>>
    %94 = vector.broadcast %93 : f32 to vector<8x183xf32>
    %95 = arith.mulf %5, %94 : vector<8x183xf32>
    %96 = arith.addf %92, %95 : vector<8x183xf32>
    %c3_7 = arith.constant 3 : index
    %97 = memref.load %arg3[%c3_7] : memref<8xf32, #tpu.memory_space<smem>>
    %98 = vector.broadcast %97 : f32 to vector<8x183xf32>
    %99 = arith.addf %96, %98 : vector<8x183xf32>
    %cst_8 = arith.constant 0.000000e+00 : f32
    %100 = vector.broadcast %cst_8 : f32 to vector<8x183xf32>
    %101 = arith.maximumf %99, %100 : vector<8x183xf32>
    %c20 = arith.constant 20 : index
    %102 = memref.load %arg2[%c20] : memref<40xf32, #tpu.memory_space<smem>>
    %103 = vector.broadcast %102 : f32 to vector<8x183xf32>
    %104 = arith.mulf %1, %103 : vector<8x183xf32>
    %c21 = arith.constant 21 : index
    %105 = memref.load %arg2[%c21] : memref<40xf32, #tpu.memory_space<smem>>
    %106 = vector.broadcast %105 : f32 to vector<8x183xf32>
    %107 = arith.mulf %2, %106 : vector<8x183xf32>
    %108 = arith.addf %104, %107 : vector<8x183xf32>
    %c22 = arith.constant 22 : index
    %109 = memref.load %arg2[%c22] : memref<40xf32, #tpu.memory_space<smem>>
    %110 = vector.broadcast %109 : f32 to vector<8x183xf32>
    %111 = arith.mulf %3, %110 : vector<8x183xf32>
    %112 = arith.addf %108, %111 : vector<8x183xf32>
    %c23 = arith.constant 23 : index
    %113 = memref.load %arg2[%c23] : memref<40xf32, #tpu.memory_space<smem>>
    %114 = vector.broadcast %113 : f32 to vector<8x183xf32>
    %115 = arith.mulf %4, %114 : vector<8x183xf32>
    %116 = arith.addf %112, %115 : vector<8x183xf32>
    %c24 = arith.constant 24 : index
    %117 = memref.load %arg2[%c24] : memref<40xf32, #tpu.memory_space<smem>>
    %118 = vector.broadcast %117 : f32 to vector<8x183xf32>
    %119 = arith.mulf %5, %118 : vector<8x183xf32>
    %120 = arith.addf %116, %119 : vector<8x183xf32>
    %c4_9 = arith.constant 4 : index
    %121 = memref.load %arg3[%c4_9] : memref<8xf32, #tpu.memory_space<smem>>
    %122 = vector.broadcast %121 : f32 to vector<8x183xf32>
    %123 = arith.addf %120, %122 : vector<8x183xf32>
    %cst_10 = arith.constant 0.000000e+00 : f32
    %124 = vector.broadcast %cst_10 : f32 to vector<8x183xf32>
    %125 = arith.maximumf %123, %124 : vector<8x183xf32>
    %c25 = arith.constant 25 : index
    %126 = memref.load %arg2[%c25] : memref<40xf32, #tpu.memory_space<smem>>
    %127 = vector.broadcast %126 : f32 to vector<8x183xf32>
    %128 = arith.mulf %1, %127 : vector<8x183xf32>
    %c26 = arith.constant 26 : index
    %129 = memref.load %arg2[%c26] : memref<40xf32, #tpu.memory_space<smem>>
    %130 = vector.broadcast %129 : f32 to vector<8x183xf32>
    %131 = arith.mulf %2, %130 : vector<8x183xf32>
    %132 = arith.addf %128, %131 : vector<8x183xf32>
    %c27 = arith.constant 27 : index
    %133 = memref.load %arg2[%c27] : memref<40xf32, #tpu.memory_space<smem>>
    %134 = vector.broadcast %133 : f32 to vector<8x183xf32>
    %135 = arith.mulf %3, %134 : vector<8x183xf32>
    %136 = arith.addf %132, %135 : vector<8x183xf32>
    %c28 = arith.constant 28 : index
    %137 = memref.load %arg2[%c28] : memref<40xf32, #tpu.memory_space<smem>>
    %138 = vector.broadcast %137 : f32 to vector<8x183xf32>
    %139 = arith.mulf %4, %138 : vector<8x183xf32>
    %140 = arith.addf %136, %139 : vector<8x183xf32>
    %c29 = arith.constant 29 : index
    %141 = memref.load %arg2[%c29] : memref<40xf32, #tpu.memory_space<smem>>
    %142 = vector.broadcast %141 : f32 to vector<8x183xf32>
    %143 = arith.mulf %5, %142 : vector<8x183xf32>
    %144 = arith.addf %140, %143 : vector<8x183xf32>
    %c5_11 = arith.constant 5 : index
    %145 = memref.load %arg3[%c5_11] : memref<8xf32, #tpu.memory_space<smem>>
    %146 = vector.broadcast %145 : f32 to vector<8x183xf32>
    %147 = arith.addf %144, %146 : vector<8x183xf32>
    %cst_12 = arith.constant 0.000000e+00 : f32
    %148 = vector.broadcast %cst_12 : f32 to vector<8x183xf32>
    %149 = arith.maximumf %147, %148 : vector<8x183xf32>
    %c30 = arith.constant 30 : index
    %150 = memref.load %arg2[%c30] : memref<40xf32, #tpu.memory_space<smem>>
    %151 = vector.broadcast %150 : f32 to vector<8x183xf32>
    %152 = arith.mulf %1, %151 : vector<8x183xf32>
    %c31 = arith.constant 31 : index
    %153 = memref.load %arg2[%c31] : memref<40xf32, #tpu.memory_space<smem>>
    %154 = vector.broadcast %153 : f32 to vector<8x183xf32>
    %155 = arith.mulf %2, %154 : vector<8x183xf32>
    %156 = arith.addf %152, %155 : vector<8x183xf32>
    %c32 = arith.constant 32 : index
    %157 = memref.load %arg2[%c32] : memref<40xf32, #tpu.memory_space<smem>>
    %158 = vector.broadcast %157 : f32 to vector<8x183xf32>
    %159 = arith.mulf %3, %158 : vector<8x183xf32>
    %160 = arith.addf %156, %159 : vector<8x183xf32>
    %c33 = arith.constant 33 : index
    %161 = memref.load %arg2[%c33] : memref<40xf32, #tpu.memory_space<smem>>
    %162 = vector.broadcast %161 : f32 to vector<8x183xf32>
    %163 = arith.mulf %4, %162 : vector<8x183xf32>
    %164 = arith.addf %160, %163 : vector<8x183xf32>
    %c34 = arith.constant 34 : index
    %165 = memref.load %arg2[%c34] : memref<40xf32, #tpu.memory_space<smem>>
    %166 = vector.broadcast %165 : f32 to vector<8x183xf32>
    %167 = arith.mulf %5, %166 : vector<8x183xf32>
    %168 = arith.addf %164, %167 : vector<8x183xf32>
    %c6_13 = arith.constant 6 : index
    %169 = memref.load %arg3[%c6_13] : memref<8xf32, #tpu.memory_space<smem>>
    %170 = vector.broadcast %169 : f32 to vector<8x183xf32>
    %171 = arith.addf %168, %170 : vector<8x183xf32>
    %cst_14 = arith.constant 0.000000e+00 : f32
    %172 = vector.broadcast %cst_14 : f32 to vector<8x183xf32>
    %173 = arith.maximumf %171, %172 : vector<8x183xf32>
    %c35 = arith.constant 35 : index
    %174 = memref.load %arg2[%c35] : memref<40xf32, #tpu.memory_space<smem>>
    %175 = vector.broadcast %174 : f32 to vector<8x183xf32>
    %176 = arith.mulf %1, %175 : vector<8x183xf32>
    %c36 = arith.constant 36 : index
    %177 = memref.load %arg2[%c36] : memref<40xf32, #tpu.memory_space<smem>>
    %178 = vector.broadcast %177 : f32 to vector<8x183xf32>
    %179 = arith.mulf %2, %178 : vector<8x183xf32>
    %180 = arith.addf %176, %179 : vector<8x183xf32>
    %c37 = arith.constant 37 : index
    %181 = memref.load %arg2[%c37] : memref<40xf32, #tpu.memory_space<smem>>
    %182 = vector.broadcast %181 : f32 to vector<8x183xf32>
    %183 = arith.mulf %3, %182 : vector<8x183xf32>
    %184 = arith.addf %180, %183 : vector<8x183xf32>
    %c38 = arith.constant 38 : index
    %185 = memref.load %arg2[%c38] : memref<40xf32, #tpu.memory_space<smem>>
    %186 = vector.broadcast %185 : f32 to vector<8x183xf32>
    %187 = arith.mulf %4, %186 : vector<8x183xf32>
    %188 = arith.addf %184, %187 : vector<8x183xf32>
    %c39 = arith.constant 39 : index
    %189 = memref.load %arg2[%c39] : memref<40xf32, #tpu.memory_space<smem>>
    %190 = vector.broadcast %189 : f32 to vector<8x183xf32>
    %191 = arith.mulf %5, %190 : vector<8x183xf32>
    %192 = arith.addf %188, %191 : vector<8x183xf32>
    %c7_15 = arith.constant 7 : index
    %193 = memref.load %arg3[%c7_15] : memref<8xf32, #tpu.memory_space<smem>>
    %194 = vector.broadcast %193 : f32 to vector<8x183xf32>
    %195 = arith.addf %192, %194 : vector<8x183xf32>
    %cst_16 = arith.constant 0.000000e+00 : f32
    %196 = vector.broadcast %cst_16 : f32 to vector<8x183xf32>
    %197 = arith.maximumf %195, %196 : vector<8x183xf32>
    %198 = vector.extract_strided_slice %29 {offsets = [0, 0], sizes = [8, 182], strides = [1, 1]} : vector<8x183xf32> to vector<8x182xf32>
    %199 = vector.extract_strided_slice %29 {offsets = [0, 1], sizes = [8, 182], strides = [1, 1]} : vector<8x183xf32> to vector<8x182xf32>
    %200 = arith.maximumf %198, %199 : vector<8x182xf32>
    %201 = vector.extract_strided_slice %53 {offsets = [0, 0], sizes = [8, 182], strides = [1, 1]} : vector<8x183xf32> to vector<8x182xf32>
    %202 = vector.extract_strided_slice %53 {offsets = [0, 1], sizes = [8, 182], strides = [1, 1]} : vector<8x183xf32> to vector<8x182xf32>
    %203 = arith.maximumf %201, %202 : vector<8x182xf32>
    %204 = vector.extract_strided_slice %77 {offsets = [0, 0], sizes = [8, 182], strides = [1, 1]} : vector<8x183xf32> to vector<8x182xf32>
    %205 = vector.extract_strided_slice %77 {offsets = [0, 1], sizes = [8, 182], strides = [1, 1]} : vector<8x183xf32> to vector<8x182xf32>
    %206 = arith.maximumf %204, %205 : vector<8x182xf32>
    %207 = vector.extract_strided_slice %101 {offsets = [0, 0], sizes = [8, 182], strides = [1, 1]} : vector<8x183xf32> to vector<8x182xf32>
    %208 = vector.extract_strided_slice %101 {offsets = [0, 1], sizes = [8, 182], strides = [1, 1]} : vector<8x183xf32> to vector<8x182xf32>
    %209 = arith.maximumf %207, %208 : vector<8x182xf32>
    %210 = vector.extract_strided_slice %125 {offsets = [0, 0], sizes = [8, 182], strides = [1, 1]} : vector<8x183xf32> to vector<8x182xf32>
    %211 = vector.extract_strided_slice %125 {offsets = [0, 1], sizes = [8, 182], strides = [1, 1]} : vector<8x183xf32> to vector<8x182xf32>
    %212 = arith.maximumf %210, %211 : vector<8x182xf32>
    %213 = vector.extract_strided_slice %149 {offsets = [0, 0], sizes = [8, 182], strides = [1, 1]} : vector<8x183xf32> to vector<8x182xf32>
    %214 = vector.extract_strided_slice %149 {offsets = [0, 1], sizes = [8, 182], strides = [1, 1]} : vector<8x183xf32> to vector<8x182xf32>
    %215 = arith.maximumf %213, %214 : vector<8x182xf32>
    %216 = vector.extract_strided_slice %173 {offsets = [0, 0], sizes = [8, 182], strides = [1, 1]} : vector<8x183xf32> to vector<8x182xf32>
    %217 = vector.extract_strided_slice %173 {offsets = [0, 1], sizes = [8, 182], strides = [1, 1]} : vector<8x183xf32> to vector<8x182xf32>
    %218 = arith.maximumf %216, %217 : vector<8x182xf32>
    %219 = vector.extract_strided_slice %197 {offsets = [0, 0], sizes = [8, 182], strides = [1, 1]} : vector<8x183xf32> to vector<8x182xf32>
    %220 = vector.extract_strided_slice %197 {offsets = [0, 1], sizes = [8, 182], strides = [1, 1]} : vector<8x183xf32> to vector<8x182xf32>
    %221 = arith.maximumf %219, %220 : vector<8x182xf32>
    %222 = vector.extract_strided_slice %200 {offsets = [0, 0], sizes = [8, 178], strides = [1, 1]} : vector<8x182xf32> to vector<8x178xf32>
    %223 = vector.extract_strided_slice %200 {offsets = [0, 2], sizes = [8, 178], strides = [1, 1]} : vector<8x182xf32> to vector<8x178xf32>
    %224 = vector.extract_strided_slice %200 {offsets = [0, 4], sizes = [8, 178], strides = [1, 1]} : vector<8x182xf32> to vector<8x178xf32>
    %225 = vector.extract_strided_slice %203 {offsets = [0, 0], sizes = [8, 178], strides = [1, 1]} : vector<8x182xf32> to vector<8x178xf32>
    %226 = vector.extract_strided_slice %203 {offsets = [0, 2], sizes = [8, 178], strides = [1, 1]} : vector<8x182xf32> to vector<8x178xf32>
    %227 = vector.extract_strided_slice %203 {offsets = [0, 4], sizes = [8, 178], strides = [1, 1]} : vector<8x182xf32> to vector<8x178xf32>
    %228 = vector.extract_strided_slice %206 {offsets = [0, 0], sizes = [8, 178], strides = [1, 1]} : vector<8x182xf32> to vector<8x178xf32>
    %229 = vector.extract_strided_slice %206 {offsets = [0, 2], sizes = [8, 178], strides = [1, 1]} : vector<8x182xf32> to vector<8x178xf32>
    %230 = vector.extract_strided_slice %206 {offsets = [0, 4], sizes = [8, 178], strides = [1, 1]} : vector<8x182xf32> to vector<8x178xf32>
    %231 = vector.extract_strided_slice %209 {offsets = [0, 0], sizes = [8, 178], strides = [1, 1]} : vector<8x182xf32> to vector<8x178xf32>
    %232 = vector.extract_strided_slice %209 {offsets = [0, 2], sizes = [8, 178], strides = [1, 1]} : vector<8x182xf32> to vector<8x178xf32>
    %233 = vector.extract_strided_slice %209 {offsets = [0, 4], sizes = [8, 178], strides = [1, 1]} : vector<8x182xf32> to vector<8x178xf32>
    %234 = vector.extract_strided_slice %212 {offsets = [0, 0], sizes = [8, 178], strides = [1, 1]} : vector<8x182xf32> to vector<8x178xf32>
    %235 = vector.extract_strided_slice %212 {offsets = [0, 2], sizes = [8, 178], strides = [1, 1]} : vector<8x182xf32> to vector<8x178xf32>
    %236 = vector.extract_strided_slice %212 {offsets = [0, 4], sizes = [8, 178], strides = [1, 1]} : vector<8x182xf32> to vector<8x178xf32>
    %237 = vector.extract_strided_slice %215 {offsets = [0, 0], sizes = [8, 178], strides = [1, 1]} : vector<8x182xf32> to vector<8x178xf32>
    %238 = vector.extract_strided_slice %215 {offsets = [0, 2], sizes = [8, 178], strides = [1, 1]} : vector<8x182xf32> to vector<8x178xf32>
    %239 = vector.extract_strided_slice %215 {offsets = [0, 4], sizes = [8, 178], strides = [1, 1]} : vector<8x182xf32> to vector<8x178xf32>
    %240 = vector.extract_strided_slice %218 {offsets = [0, 0], sizes = [8, 178], strides = [1, 1]} : vector<8x182xf32> to vector<8x178xf32>
    %241 = vector.extract_strided_slice %218 {offsets = [0, 2], sizes = [8, 178], strides = [1, 1]} : vector<8x182xf32> to vector<8x178xf32>
    %242 = vector.extract_strided_slice %218 {offsets = [0, 4], sizes = [8, 178], strides = [1, 1]} : vector<8x182xf32> to vector<8x178xf32>
    %243 = vector.extract_strided_slice %221 {offsets = [0, 0], sizes = [8, 178], strides = [1, 1]} : vector<8x182xf32> to vector<8x178xf32>
    %244 = vector.extract_strided_slice %221 {offsets = [0, 2], sizes = [8, 178], strides = [1, 1]} : vector<8x182xf32> to vector<8x178xf32>
    %245 = vector.extract_strided_slice %221 {offsets = [0, 4], sizes = [8, 178], strides = [1, 1]} : vector<8x182xf32> to vector<8x178xf32>
    %c0_17 = arith.constant 0 : index
    %246 = memref.load %arg4[%c0_17] : memref<384xf32, #tpu.memory_space<smem>>
    %247 = vector.broadcast %246 : f32 to vector<8x178xf32>
    %248 = arith.mulf %222, %247 : vector<8x178xf32>
    %c1_18 = arith.constant 1 : index
    %249 = memref.load %arg4[%c1_18] : memref<384xf32, #tpu.memory_space<smem>>
    %250 = vector.broadcast %249 : f32 to vector<8x178xf32>
    %251 = arith.mulf %223, %250 : vector<8x178xf32>
    %252 = arith.addf %248, %251 : vector<8x178xf32>
    %c2_19 = arith.constant 2 : index
    %253 = memref.load %arg4[%c2_19] : memref<384xf32, #tpu.memory_space<smem>>
    %254 = vector.broadcast %253 : f32 to vector<8x178xf32>
    %255 = arith.mulf %224, %254 : vector<8x178xf32>
    %256 = arith.addf %252, %255 : vector<8x178xf32>
    %c3_20 = arith.constant 3 : index
    %257 = memref.load %arg4[%c3_20] : memref<384xf32, #tpu.memory_space<smem>>
    %258 = vector.broadcast %257 : f32 to vector<8x178xf32>
    %259 = arith.mulf %225, %258 : vector<8x178xf32>
    %260 = arith.addf %256, %259 : vector<8x178xf32>
    %c4_21 = arith.constant 4 : index
    %261 = memref.load %arg4[%c4_21] : memref<384xf32, #tpu.memory_space<smem>>
    %262 = vector.broadcast %261 : f32 to vector<8x178xf32>
    %263 = arith.mulf %226, %262 : vector<8x178xf32>
    %264 = arith.addf %260, %263 : vector<8x178xf32>
    %c5_22 = arith.constant 5 : index
    %265 = memref.load %arg4[%c5_22] : memref<384xf32, #tpu.memory_space<smem>>
    %266 = vector.broadcast %265 : f32 to vector<8x178xf32>
    %267 = arith.mulf %227, %266 : vector<8x178xf32>
    %268 = arith.addf %264, %267 : vector<8x178xf32>
    %c6_23 = arith.constant 6 : index
    %269 = memref.load %arg4[%c6_23] : memref<384xf32, #tpu.memory_space<smem>>
    %270 = vector.broadcast %269 : f32 to vector<8x178xf32>
    %271 = arith.mulf %228, %270 : vector<8x178xf32>
    %272 = arith.addf %268, %271 : vector<8x178xf32>
    %c7_24 = arith.constant 7 : index
    %273 = memref.load %arg4[%c7_24] : memref<384xf32, #tpu.memory_space<smem>>
    %274 = vector.broadcast %273 : f32 to vector<8x178xf32>
    %275 = arith.mulf %229, %274 : vector<8x178xf32>
    %276 = arith.addf %272, %275 : vector<8x178xf32>
    %c8_25 = arith.constant 8 : index
    %277 = memref.load %arg4[%c8_25] : memref<384xf32, #tpu.memory_space<smem>>
    %278 = vector.broadcast %277 : f32 to vector<8x178xf32>
    %279 = arith.mulf %230, %278 : vector<8x178xf32>
    %280 = arith.addf %276, %279 : vector<8x178xf32>
    %c9_26 = arith.constant 9 : index
    %281 = memref.load %arg4[%c9_26] : memref<384xf32, #tpu.memory_space<smem>>
    %282 = vector.broadcast %281 : f32 to vector<8x178xf32>
    %283 = arith.mulf %231, %282 : vector<8x178xf32>
    %284 = arith.addf %280, %283 : vector<8x178xf32>
    %c10_27 = arith.constant 10 : index
    %285 = memref.load %arg4[%c10_27] : memref<384xf32, #tpu.memory_space<smem>>
    %286 = vector.broadcast %285 : f32 to vector<8x178xf32>
    %287 = arith.mulf %232, %286 : vector<8x178xf32>
    %288 = arith.addf %284, %287 : vector<8x178xf32>
    %c11_28 = arith.constant 11 : index
    %289 = memref.load %arg4[%c11_28] : memref<384xf32, #tpu.memory_space<smem>>
    %290 = vector.broadcast %289 : f32 to vector<8x178xf32>
    %291 = arith.mulf %233, %290 : vector<8x178xf32>
    %292 = arith.addf %288, %291 : vector<8x178xf32>
    %c12_29 = arith.constant 12 : index
    %293 = memref.load %arg4[%c12_29] : memref<384xf32, #tpu.memory_space<smem>>
    %294 = vector.broadcast %293 : f32 to vector<8x178xf32>
    %295 = arith.mulf %234, %294 : vector<8x178xf32>
    %296 = arith.addf %292, %295 : vector<8x178xf32>
    %c13_30 = arith.constant 13 : index
    %297 = memref.load %arg4[%c13_30] : memref<384xf32, #tpu.memory_space<smem>>
    %298 = vector.broadcast %297 : f32 to vector<8x178xf32>
    %299 = arith.mulf %235, %298 : vector<8x178xf32>
    %300 = arith.addf %296, %299 : vector<8x178xf32>
    %c14_31 = arith.constant 14 : index
    %301 = memref.load %arg4[%c14_31] : memref<384xf32, #tpu.memory_space<smem>>
    %302 = vector.broadcast %301 : f32 to vector<8x178xf32>
    %303 = arith.mulf %236, %302 : vector<8x178xf32>
    %304 = arith.addf %300, %303 : vector<8x178xf32>
    %c15_32 = arith.constant 15 : index
    %305 = memref.load %arg4[%c15_32] : memref<384xf32, #tpu.memory_space<smem>>
    %306 = vector.broadcast %305 : f32 to vector<8x178xf32>
    %307 = arith.mulf %237, %306 : vector<8x178xf32>
    %308 = arith.addf %304, %307 : vector<8x178xf32>
    %c16_33 = arith.constant 16 : index
    %309 = memref.load %arg4[%c16_33] : memref<384xf32, #tpu.memory_space<smem>>
    %310 = vector.broadcast %309 : f32 to vector<8x178xf32>
    %311 = arith.mulf %238, %310 : vector<8x178xf32>
    %312 = arith.addf %308, %311 : vector<8x178xf32>
    %c17_34 = arith.constant 17 : index
    %313 = memref.load %arg4[%c17_34] : memref<384xf32, #tpu.memory_space<smem>>
    %314 = vector.broadcast %313 : f32 to vector<8x178xf32>
    %315 = arith.mulf %239, %314 : vector<8x178xf32>
    %316 = arith.addf %312, %315 : vector<8x178xf32>
    %c18_35 = arith.constant 18 : index
    %317 = memref.load %arg4[%c18_35] : memref<384xf32, #tpu.memory_space<smem>>
    %318 = vector.broadcast %317 : f32 to vector<8x178xf32>
    %319 = arith.mulf %240, %318 : vector<8x178xf32>
    %320 = arith.addf %316, %319 : vector<8x178xf32>
    %c19_36 = arith.constant 19 : index
    %321 = memref.load %arg4[%c19_36] : memref<384xf32, #tpu.memory_space<smem>>
    %322 = vector.broadcast %321 : f32 to vector<8x178xf32>
    %323 = arith.mulf %241, %322 : vector<8x178xf32>
    %324 = arith.addf %320, %323 : vector<8x178xf32>
    %c20_37 = arith.constant 20 : index
    %325 = memref.load %arg4[%c20_37] : memref<384xf32, #tpu.memory_space<smem>>
    %326 = vector.broadcast %325 : f32 to vector<8x178xf32>
    %327 = arith.mulf %242, %326 : vector<8x178xf32>
    %328 = arith.addf %324, %327 : vector<8x178xf32>
    %c21_38 = arith.constant 21 : index
    %329 = memref.load %arg4[%c21_38] : memref<384xf32, #tpu.memory_space<smem>>
    %330 = vector.broadcast %329 : f32 to vector<8x178xf32>
    %331 = arith.mulf %243, %330 : vector<8x178xf32>
    %332 = arith.addf %328, %331 : vector<8x178xf32>
    %c22_39 = arith.constant 22 : index
    %333 = memref.load %arg4[%c22_39] : memref<384xf32, #tpu.memory_space<smem>>
    %334 = vector.broadcast %333 : f32 to vector<8x178xf32>
    %335 = arith.mulf %244, %334 : vector<8x178xf32>
    %336 = arith.addf %332, %335 : vector<8x178xf32>
    %c23_40 = arith.constant 23 : index
    %337 = memref.load %arg4[%c23_40] : memref<384xf32, #tpu.memory_space<smem>>
    %338 = vector.broadcast %337 : f32 to vector<8x178xf32>
    %339 = arith.mulf %245, %338 : vector<8x178xf32>
    %340 = arith.addf %336, %339 : vector<8x178xf32>
    %c0_41 = arith.constant 0 : index
    %341 = memref.load %arg5[%c0_41] : memref<16xf32, #tpu.memory_space<smem>>
    %342 = vector.broadcast %341 : f32 to vector<8x178xf32>
    %343 = arith.addf %340, %342 : vector<8x178xf32>
    %cst_42 = arith.constant 0.000000e+00 : f32
    %344 = vector.broadcast %cst_42 : f32 to vector<8x178xf32>
    %345 = arith.maximumf %343, %344 : vector<8x178xf32>
    %c24_43 = arith.constant 24 : index
    %346 = memref.load %arg4[%c24_43] : memref<384xf32, #tpu.memory_space<smem>>
    %347 = vector.broadcast %346 : f32 to vector<8x178xf32>
    %348 = arith.mulf %222, %347 : vector<8x178xf32>
    %c25_44 = arith.constant 25 : index
    %349 = memref.load %arg4[%c25_44] : memref<384xf32, #tpu.memory_space<smem>>
    %350 = vector.broadcast %349 : f32 to vector<8x178xf32>
    %351 = arith.mulf %223, %350 : vector<8x178xf32>
    %352 = arith.addf %348, %351 : vector<8x178xf32>
    %c26_45 = arith.constant 26 : index
    %353 = memref.load %arg4[%c26_45] : memref<384xf32, #tpu.memory_space<smem>>
    %354 = vector.broadcast %353 : f32 to vector<8x178xf32>
    %355 = arith.mulf %224, %354 : vector<8x178xf32>
    %356 = arith.addf %352, %355 : vector<8x178xf32>
    %c27_46 = arith.constant 27 : index
    %357 = memref.load %arg4[%c27_46] : memref<384xf32, #tpu.memory_space<smem>>
    %358 = vector.broadcast %357 : f32 to vector<8x178xf32>
    %359 = arith.mulf %225, %358 : vector<8x178xf32>
    %360 = arith.addf %356, %359 : vector<8x178xf32>
    %c28_47 = arith.constant 28 : index
    %361 = memref.load %arg4[%c28_47] : memref<384xf32, #tpu.memory_space<smem>>
    %362 = vector.broadcast %361 : f32 to vector<8x178xf32>
    %363 = arith.mulf %226, %362 : vector<8x178xf32>
    %364 = arith.addf %360, %363 : vector<8x178xf32>
    %c29_48 = arith.constant 29 : index
    %365 = memref.load %arg4[%c29_48] : memref<384xf32, #tpu.memory_space<smem>>
    %366 = vector.broadcast %365 : f32 to vector<8x178xf32>
    %367 = arith.mulf %227, %366 : vector<8x178xf32>
    %368 = arith.addf %364, %367 : vector<8x178xf32>
    %c30_49 = arith.constant 30 : index
    %369 = memref.load %arg4[%c30_49] : memref<384xf32, #tpu.memory_space<smem>>
    %370 = vector.broadcast %369 : f32 to vector<8x178xf32>
    %371 = arith.mulf %228, %370 : vector<8x178xf32>
    %372 = arith.addf %368, %371 : vector<8x178xf32>
    %c31_50 = arith.constant 31 : index
    %373 = memref.load %arg4[%c31_50] : memref<384xf32, #tpu.memory_space<smem>>
    %374 = vector.broadcast %373 : f32 to vector<8x178xf32>
    %375 = arith.mulf %229, %374 : vector<8x178xf32>
    %376 = arith.addf %372, %375 : vector<8x178xf32>
    %c32_51 = arith.constant 32 : index
    %377 = memref.load %arg4[%c32_51] : memref<384xf32, #tpu.memory_space<smem>>
    %378 = vector.broadcast %377 : f32 to vector<8x178xf32>
    %379 = arith.mulf %230, %378 : vector<8x178xf32>
    %380 = arith.addf %376, %379 : vector<8x178xf32>
    %c33_52 = arith.constant 33 : index
    %381 = memref.load %arg4[%c33_52] : memref<384xf32, #tpu.memory_space<smem>>
    %382 = vector.broadcast %381 : f32 to vector<8x178xf32>
    %383 = arith.mulf %231, %382 : vector<8x178xf32>
    %384 = arith.addf %380, %383 : vector<8x178xf32>
    %c34_53 = arith.constant 34 : index
    %385 = memref.load %arg4[%c34_53] : memref<384xf32, #tpu.memory_space<smem>>
    %386 = vector.broadcast %385 : f32 to vector<8x178xf32>
    %387 = arith.mulf %232, %386 : vector<8x178xf32>
    %388 = arith.addf %384, %387 : vector<8x178xf32>
    %c35_54 = arith.constant 35 : index
    %389 = memref.load %arg4[%c35_54] : memref<384xf32, #tpu.memory_space<smem>>
    %390 = vector.broadcast %389 : f32 to vector<8x178xf32>
    %391 = arith.mulf %233, %390 : vector<8x178xf32>
    %392 = arith.addf %388, %391 : vector<8x178xf32>
    %c36_55 = arith.constant 36 : index
    %393 = memref.load %arg4[%c36_55] : memref<384xf32, #tpu.memory_space<smem>>
    %394 = vector.broadcast %393 : f32 to vector<8x178xf32>
    %395 = arith.mulf %234, %394 : vector<8x178xf32>
    %396 = arith.addf %392, %395 : vector<8x178xf32>
    %c37_56 = arith.constant 37 : index
    %397 = memref.load %arg4[%c37_56] : memref<384xf32, #tpu.memory_space<smem>>
    %398 = vector.broadcast %397 : f32 to vector<8x178xf32>
    %399 = arith.mulf %235, %398 : vector<8x178xf32>
    %400 = arith.addf %396, %399 : vector<8x178xf32>
    %c38_57 = arith.constant 38 : index
    %401 = memref.load %arg4[%c38_57] : memref<384xf32, #tpu.memory_space<smem>>
    %402 = vector.broadcast %401 : f32 to vector<8x178xf32>
    %403 = arith.mulf %236, %402 : vector<8x178xf32>
    %404 = arith.addf %400, %403 : vector<8x178xf32>
    %c39_58 = arith.constant 39 : index
    %405 = memref.load %arg4[%c39_58] : memref<384xf32, #tpu.memory_space<smem>>
    %406 = vector.broadcast %405 : f32 to vector<8x178xf32>
    %407 = arith.mulf %237, %406 : vector<8x178xf32>
    %408 = arith.addf %404, %407 : vector<8x178xf32>
    %c40 = arith.constant 40 : index
    %409 = memref.load %arg4[%c40] : memref<384xf32, #tpu.memory_space<smem>>
    %410 = vector.broadcast %409 : f32 to vector<8x178xf32>
    %411 = arith.mulf %238, %410 : vector<8x178xf32>
    %412 = arith.addf %408, %411 : vector<8x178xf32>
    %c41 = arith.constant 41 : index
    %413 = memref.load %arg4[%c41] : memref<384xf32, #tpu.memory_space<smem>>
    %414 = vector.broadcast %413 : f32 to vector<8x178xf32>
    %415 = arith.mulf %239, %414 : vector<8x178xf32>
    %416 = arith.addf %412, %415 : vector<8x178xf32>
    %c42 = arith.constant 42 : index
    %417 = memref.load %arg4[%c42] : memref<384xf32, #tpu.memory_space<smem>>
    %418 = vector.broadcast %417 : f32 to vector<8x178xf32>
    %419 = arith.mulf %240, %418 : vector<8x178xf32>
    %420 = arith.addf %416, %419 : vector<8x178xf32>
    %c43 = arith.constant 43 : index
    %421 = memref.load %arg4[%c43] : memref<384xf32, #tpu.memory_space<smem>>
    %422 = vector.broadcast %421 : f32 to vector<8x178xf32>
    %423 = arith.mulf %241, %422 : vector<8x178xf32>
    %424 = arith.addf %420, %423 : vector<8x178xf32>
    %c44 = arith.constant 44 : index
    %425 = memref.load %arg4[%c44] : memref<384xf32, #tpu.memory_space<smem>>
    %426 = vector.broadcast %425 : f32 to vector<8x178xf32>
    %427 = arith.mulf %242, %426 : vector<8x178xf32>
    %428 = arith.addf %424, %427 : vector<8x178xf32>
    %c45 = arith.constant 45 : index
    %429 = memref.load %arg4[%c45] : memref<384xf32, #tpu.memory_space<smem>>
    %430 = vector.broadcast %429 : f32 to vector<8x178xf32>
    %431 = arith.mulf %243, %430 : vector<8x178xf32>
    %432 = arith.addf %428, %431 : vector<8x178xf32>
    %c46 = arith.constant 46 : index
    %433 = memref.load %arg4[%c46] : memref<384xf32, #tpu.memory_space<smem>>
    %434 = vector.broadcast %433 : f32 to vector<8x178xf32>
    %435 = arith.mulf %244, %434 : vector<8x178xf32>
    %436 = arith.addf %432, %435 : vector<8x178xf32>
    %c47 = arith.constant 47 : index
    %437 = memref.load %arg4[%c47] : memref<384xf32, #tpu.memory_space<smem>>
    %438 = vector.broadcast %437 : f32 to vector<8x178xf32>
    %439 = arith.mulf %245, %438 : vector<8x178xf32>
    %440 = arith.addf %436, %439 : vector<8x178xf32>
    %c1_59 = arith.constant 1 : index
    %441 = memref.load %arg5[%c1_59] : memref<16xf32, #tpu.memory_space<smem>>
    %442 = vector.broadcast %441 : f32 to vector<8x178xf32>
    %443 = arith.addf %440, %442 : vector<8x178xf32>
    %cst_60 = arith.constant 0.000000e+00 : f32
    %444 = vector.broadcast %cst_60 : f32 to vector<8x178xf32>
    %445 = arith.maximumf %443, %444 : vector<8x178xf32>
    %c48 = arith.constant 48 : index
    %446 = memref.load %arg4[%c48] : memref<384xf32, #tpu.memory_space<smem>>
    %447 = vector.broadcast %446 : f32 to vector<8x178xf32>
    %448 = arith.mulf %222, %447 : vector<8x178xf32>
    %c49 = arith.constant 49 : index
    %449 = memref.load %arg4[%c49] : memref<384xf32, #tpu.memory_space<smem>>
    %450 = vector.broadcast %449 : f32 to vector<8x178xf32>
    %451 = arith.mulf %223, %450 : vector<8x178xf32>
    %452 = arith.addf %448, %451 : vector<8x178xf32>
    %c50 = arith.constant 50 : index
    %453 = memref.load %arg4[%c50] : memref<384xf32, #tpu.memory_space<smem>>
    %454 = vector.broadcast %453 : f32 to vector<8x178xf32>
    %455 = arith.mulf %224, %454 : vector<8x178xf32>
    %456 = arith.addf %452, %455 : vector<8x178xf32>
    %c51 = arith.constant 51 : index
    %457 = memref.load %arg4[%c51] : memref<384xf32, #tpu.memory_space<smem>>
    %458 = vector.broadcast %457 : f32 to vector<8x178xf32>
    %459 = arith.mulf %225, %458 : vector<8x178xf32>
    %460 = arith.addf %456, %459 : vector<8x178xf32>
    %c52 = arith.constant 52 : index
    %461 = memref.load %arg4[%c52] : memref<384xf32, #tpu.memory_space<smem>>
    %462 = vector.broadcast %461 : f32 to vector<8x178xf32>
    %463 = arith.mulf %226, %462 : vector<8x178xf32>
    %464 = arith.addf %460, %463 : vector<8x178xf32>
    %c53 = arith.constant 53 : index
    %465 = memref.load %arg4[%c53] : memref<384xf32, #tpu.memory_space<smem>>
    %466 = vector.broadcast %465 : f32 to vector<8x178xf32>
    %467 = arith.mulf %227, %466 : vector<8x178xf32>
    %468 = arith.addf %464, %467 : vector<8x178xf32>
    %c54 = arith.constant 54 : index
    %469 = memref.load %arg4[%c54] : memref<384xf32, #tpu.memory_space<smem>>
    %470 = vector.broadcast %469 : f32 to vector<8x178xf32>
    %471 = arith.mulf %228, %470 : vector<8x178xf32>
    %472 = arith.addf %468, %471 : vector<8x178xf32>
    %c55 = arith.constant 55 : index
    %473 = memref.load %arg4[%c55] : memref<384xf32, #tpu.memory_space<smem>>
    %474 = vector.broadcast %473 : f32 to vector<8x178xf32>
    %475 = arith.mulf %229, %474 : vector<8x178xf32>
    %476 = arith.addf %472, %475 : vector<8x178xf32>
    %c56 = arith.constant 56 : index
    %477 = memref.load %arg4[%c56] : memref<384xf32, #tpu.memory_space<smem>>
    %478 = vector.broadcast %477 : f32 to vector<8x178xf32>
    %479 = arith.mulf %230, %478 : vector<8x178xf32>
    %480 = arith.addf %476, %479 : vector<8x178xf32>
    %c57 = arith.constant 57 : index
    %481 = memref.load %arg4[%c57] : memref<384xf32, #tpu.memory_space<smem>>
    %482 = vector.broadcast %481 : f32 to vector<8x178xf32>
    %483 = arith.mulf %231, %482 : vector<8x178xf32>
    %484 = arith.addf %480, %483 : vector<8x178xf32>
    %c58 = arith.constant 58 : index
    %485 = memref.load %arg4[%c58] : memref<384xf32, #tpu.memory_space<smem>>
    %486 = vector.broadcast %485 : f32 to vector<8x178xf32>
    %487 = arith.mulf %232, %486 : vector<8x178xf32>
    %488 = arith.addf %484, %487 : vector<8x178xf32>
    %c59 = arith.constant 59 : index
    %489 = memref.load %arg4[%c59] : memref<384xf32, #tpu.memory_space<smem>>
    %490 = vector.broadcast %489 : f32 to vector<8x178xf32>
    %491 = arith.mulf %233, %490 : vector<8x178xf32>
    %492 = arith.addf %488, %491 : vector<8x178xf32>
    %c60 = arith.constant 60 : index
    %493 = memref.load %arg4[%c60] : memref<384xf32, #tpu.memory_space<smem>>
    %494 = vector.broadcast %493 : f32 to vector<8x178xf32>
    %495 = arith.mulf %234, %494 : vector<8x178xf32>
    %496 = arith.addf %492, %495 : vector<8x178xf32>
    %c61 = arith.constant 61 : index
    %497 = memref.load %arg4[%c61] : memref<384xf32, #tpu.memory_space<smem>>
    %498 = vector.broadcast %497 : f32 to vector<8x178xf32>
    %499 = arith.mulf %235, %498 : vector<8x178xf32>
    %500 = arith.addf %496, %499 : vector<8x178xf32>
    %c62 = arith.constant 62 : index
    %501 = memref.load %arg4[%c62] : memref<384xf32, #tpu.memory_space<smem>>
    %502 = vector.broadcast %501 : f32 to vector<8x178xf32>
    %503 = arith.mulf %236, %502 : vector<8x178xf32>
    %504 = arith.addf %500, %503 : vector<8x178xf32>
    %c63 = arith.constant 63 : index
    %505 = memref.load %arg4[%c63] : memref<384xf32, #tpu.memory_space<smem>>
    %506 = vector.broadcast %505 : f32 to vector<8x178xf32>
    %507 = arith.mulf %237, %506 : vector<8x178xf32>
    %508 = arith.addf %504, %507 : vector<8x178xf32>
    %c64 = arith.constant 64 : index
    %509 = memref.load %arg4[%c64] : memref<384xf32, #tpu.memory_space<smem>>
    %510 = vector.broadcast %509 : f32 to vector<8x178xf32>
    %511 = arith.mulf %238, %510 : vector<8x178xf32>
    %512 = arith.addf %508, %511 : vector<8x178xf32>
    %c65 = arith.constant 65 : index
    %513 = memref.load %arg4[%c65] : memref<384xf32, #tpu.memory_space<smem>>
    %514 = vector.broadcast %513 : f32 to vector<8x178xf32>
    %515 = arith.mulf %239, %514 : vector<8x178xf32>
    %516 = arith.addf %512, %515 : vector<8x178xf32>
    %c66 = arith.constant 66 : index
    %517 = memref.load %arg4[%c66] : memref<384xf32, #tpu.memory_space<smem>>
    %518 = vector.broadcast %517 : f32 to vector<8x178xf32>
    %519 = arith.mulf %240, %518 : vector<8x178xf32>
    %520 = arith.addf %516, %519 : vector<8x178xf32>
    %c67 = arith.constant 67 : index
    %521 = memref.load %arg4[%c67] : memref<384xf32, #tpu.memory_space<smem>>
    %522 = vector.broadcast %521 : f32 to vector<8x178xf32>
    %523 = arith.mulf %241, %522 : vector<8x178xf32>
    %524 = arith.addf %520, %523 : vector<8x178xf32>
    %c68 = arith.constant 68 : index
    %525 = memref.load %arg4[%c68] : memref<384xf32, #tpu.memory_space<smem>>
    %526 = vector.broadcast %525 : f32 to vector<8x178xf32>
    %527 = arith.mulf %242, %526 : vector<8x178xf32>
    %528 = arith.addf %524, %527 : vector<8x178xf32>
    %c69 = arith.constant 69 : index
    %529 = memref.load %arg4[%c69] : memref<384xf32, #tpu.memory_space<smem>>
    %530 = vector.broadcast %529 : f32 to vector<8x178xf32>
    %531 = arith.mulf %243, %530 : vector<8x178xf32>
    %532 = arith.addf %528, %531 : vector<8x178xf32>
    %c70 = arith.constant 70 : index
    %533 = memref.load %arg4[%c70] : memref<384xf32, #tpu.memory_space<smem>>
    %534 = vector.broadcast %533 : f32 to vector<8x178xf32>
    %535 = arith.mulf %244, %534 : vector<8x178xf32>
    %536 = arith.addf %532, %535 : vector<8x178xf32>
    %c71 = arith.constant 71 : index
    %537 = memref.load %arg4[%c71] : memref<384xf32, #tpu.memory_space<smem>>
    %538 = vector.broadcast %537 : f32 to vector<8x178xf32>
    %539 = arith.mulf %245, %538 : vector<8x178xf32>
    %540 = arith.addf %536, %539 : vector<8x178xf32>
    %c2_61 = arith.constant 2 : index
    %541 = memref.load %arg5[%c2_61] : memref<16xf32, #tpu.memory_space<smem>>
    %542 = vector.broadcast %541 : f32 to vector<8x178xf32>
    %543 = arith.addf %540, %542 : vector<8x178xf32>
    %cst_62 = arith.constant 0.000000e+00 : f32
    %544 = vector.broadcast %cst_62 : f32 to vector<8x178xf32>
    %545 = arith.maximumf %543, %544 : vector<8x178xf32>
    %c72 = arith.constant 72 : index
    %546 = memref.load %arg4[%c72] : memref<384xf32, #tpu.memory_space<smem>>
    %547 = vector.broadcast %546 : f32 to vector<8x178xf32>
    %548 = arith.mulf %222, %547 : vector<8x178xf32>
    %c73 = arith.constant 73 : index
    %549 = memref.load %arg4[%c73] : memref<384xf32, #tpu.memory_space<smem>>
    %550 = vector.broadcast %549 : f32 to vector<8x178xf32>
    %551 = arith.mulf %223, %550 : vector<8x178xf32>
    %552 = arith.addf %548, %551 : vector<8x178xf32>
    %c74 = arith.constant 74 : index
    %553 = memref.load %arg4[%c74] : memref<384xf32, #tpu.memory_space<smem>>
    %554 = vector.broadcast %553 : f32 to vector<8x178xf32>
    %555 = arith.mulf %224, %554 : vector<8x178xf32>
    %556 = arith.addf %552, %555 : vector<8x178xf32>
    %c75 = arith.constant 75 : index
    %557 = memref.load %arg4[%c75] : memref<384xf32, #tpu.memory_space<smem>>
    %558 = vector.broadcast %557 : f32 to vector<8x178xf32>
    %559 = arith.mulf %225, %558 : vector<8x178xf32>
    %560 = arith.addf %556, %559 : vector<8x178xf32>
    %c76 = arith.constant 76 : index
    %561 = memref.load %arg4[%c76] : memref<384xf32, #tpu.memory_space<smem>>
    %562 = vector.broadcast %561 : f32 to vector<8x178xf32>
    %563 = arith.mulf %226, %562 : vector<8x178xf32>
    %564 = arith.addf %560, %563 : vector<8x178xf32>
    %c77 = arith.constant 77 : index
    %565 = memref.load %arg4[%c77] : memref<384xf32, #tpu.memory_space<smem>>
    %566 = vector.broadcast %565 : f32 to vector<8x178xf32>
    %567 = arith.mulf %227, %566 : vector<8x178xf32>
    %568 = arith.addf %564, %567 : vector<8x178xf32>
    %c78 = arith.constant 78 : index
    %569 = memref.load %arg4[%c78] : memref<384xf32, #tpu.memory_space<smem>>
    %570 = vector.broadcast %569 : f32 to vector<8x178xf32>
    %571 = arith.mulf %228, %570 : vector<8x178xf32>
    %572 = arith.addf %568, %571 : vector<8x178xf32>
    %c79 = arith.constant 79 : index
    %573 = memref.load %arg4[%c79] : memref<384xf32, #tpu.memory_space<smem>>
    %574 = vector.broadcast %573 : f32 to vector<8x178xf32>
    %575 = arith.mulf %229, %574 : vector<8x178xf32>
    %576 = arith.addf %572, %575 : vector<8x178xf32>
    %c80 = arith.constant 80 : index
    %577 = memref.load %arg4[%c80] : memref<384xf32, #tpu.memory_space<smem>>
    %578 = vector.broadcast %577 : f32 to vector<8x178xf32>
    %579 = arith.mulf %230, %578 : vector<8x178xf32>
    %580 = arith.addf %576, %579 : vector<8x178xf32>
    %c81 = arith.constant 81 : index
    %581 = memref.load %arg4[%c81] : memref<384xf32, #tpu.memory_space<smem>>
    %582 = vector.broadcast %581 : f32 to vector<8x178xf32>
    %583 = arith.mulf %231, %582 : vector<8x178xf32>
    %584 = arith.addf %580, %583 : vector<8x178xf32>
    %c82 = arith.constant 82 : index
    %585 = memref.load %arg4[%c82] : memref<384xf32, #tpu.memory_space<smem>>
    %586 = vector.broadcast %585 : f32 to vector<8x178xf32>
    %587 = arith.mulf %232, %586 : vector<8x178xf32>
    %588 = arith.addf %584, %587 : vector<8x178xf32>
    %c83 = arith.constant 83 : index
    %589 = memref.load %arg4[%c83] : memref<384xf32, #tpu.memory_space<smem>>
    %590 = vector.broadcast %589 : f32 to vector<8x178xf32>
    %591 = arith.mulf %233, %590 : vector<8x178xf32>
    %592 = arith.addf %588, %591 : vector<8x178xf32>
    %c84 = arith.constant 84 : index
    %593 = memref.load %arg4[%c84] : memref<384xf32, #tpu.memory_space<smem>>
    %594 = vector.broadcast %593 : f32 to vector<8x178xf32>
    %595 = arith.mulf %234, %594 : vector<8x178xf32>
    %596 = arith.addf %592, %595 : vector<8x178xf32>
    %c85 = arith.constant 85 : index
    %597 = memref.load %arg4[%c85] : memref<384xf32, #tpu.memory_space<smem>>
    %598 = vector.broadcast %597 : f32 to vector<8x178xf32>
    %599 = arith.mulf %235, %598 : vector<8x178xf32>
    %600 = arith.addf %596, %599 : vector<8x178xf32>
    %c86 = arith.constant 86 : index
    %601 = memref.load %arg4[%c86] : memref<384xf32, #tpu.memory_space<smem>>
    %602 = vector.broadcast %601 : f32 to vector<8x178xf32>
    %603 = arith.mulf %236, %602 : vector<8x178xf32>
    %604 = arith.addf %600, %603 : vector<8x178xf32>
    %c87 = arith.constant 87 : index
    %605 = memref.load %arg4[%c87] : memref<384xf32, #tpu.memory_space<smem>>
    %606 = vector.broadcast %605 : f32 to vector<8x178xf32>
    %607 = arith.mulf %237, %606 : vector<8x178xf32>
    %608 = arith.addf %604, %607 : vector<8x178xf32>
    %c88 = arith.constant 88 : index
    %609 = memref.load %arg4[%c88] : memref<384xf32, #tpu.memory_space<smem>>
    %610 = vector.broadcast %609 : f32 to vector<8x178xf32>
    %611 = arith.mulf %238, %610 : vector<8x178xf32>
    %612 = arith.addf %608, %611 : vector<8x178xf32>
    %c89 = arith.constant 89 : index
    %613 = memref.load %arg4[%c89] : memref<384xf32, #tpu.memory_space<smem>>
    %614 = vector.broadcast %613 : f32 to vector<8x178xf32>
    %615 = arith.mulf %239, %614 : vector<8x178xf32>
    %616 = arith.addf %612, %615 : vector<8x178xf32>
    %c90 = arith.constant 90 : index
    %617 = memref.load %arg4[%c90] : memref<384xf32, #tpu.memory_space<smem>>
    %618 = vector.broadcast %617 : f32 to vector<8x178xf32>
    %619 = arith.mulf %240, %618 : vector<8x178xf32>
    %620 = arith.addf %616, %619 : vector<8x178xf32>
    %c91 = arith.constant 91 : index
    %621 = memref.load %arg4[%c91] : memref<384xf32, #tpu.memory_space<smem>>
    %622 = vector.broadcast %621 : f32 to vector<8x178xf32>
    %623 = arith.mulf %241, %622 : vector<8x178xf32>
    %624 = arith.addf %620, %623 : vector<8x178xf32>
    %c92 = arith.constant 92 : index
    %625 = memref.load %arg4[%c92] : memref<384xf32, #tpu.memory_space<smem>>
    %626 = vector.broadcast %625 : f32 to vector<8x178xf32>
    %627 = arith.mulf %242, %626 : vector<8x178xf32>
    %628 = arith.addf %624, %627 : vector<8x178xf32>
    %c93 = arith.constant 93 : index
    %629 = memref.load %arg4[%c93] : memref<384xf32, #tpu.memory_space<smem>>
    %630 = vector.broadcast %629 : f32 to vector<8x178xf32>
    %631 = arith.mulf %243, %630 : vector<8x178xf32>
    %632 = arith.addf %628, %631 : vector<8x178xf32>
    %c94 = arith.constant 94 : index
    %633 = memref.load %arg4[%c94] : memref<384xf32, #tpu.memory_space<smem>>
    %634 = vector.broadcast %633 : f32 to vector<8x178xf32>
    %635 = arith.mulf %244, %634 : vector<8x178xf32>
    %636 = arith.addf %632, %635 : vector<8x178xf32>
    %c95 = arith.constant 95 : index
    %637 = memref.load %arg4[%c95] : memref<384xf32, #tpu.memory_space<smem>>
    %638 = vector.broadcast %637 : f32 to vector<8x178xf32>
    %639 = arith.mulf %245, %638 : vector<8x178xf32>
    %640 = arith.addf %636, %639 : vector<8x178xf32>
    %c3_63 = arith.constant 3 : index
    %641 = memref.load %arg5[%c3_63] : memref<16xf32, #tpu.memory_space<smem>>
    %642 = vector.broadcast %641 : f32 to vector<8x178xf32>
    %643 = arith.addf %640, %642 : vector<8x178xf32>
    %cst_64 = arith.constant 0.000000e+00 : f32
    %644 = vector.broadcast %cst_64 : f32 to vector<8x178xf32>
    %645 = arith.maximumf %643, %644 : vector<8x178xf32>
    %c96 = arith.constant 96 : index
    %646 = memref.load %arg4[%c96] : memref<384xf32, #tpu.memory_space<smem>>
    %647 = vector.broadcast %646 : f32 to vector<8x178xf32>
    %648 = arith.mulf %222, %647 : vector<8x178xf32>
    %c97 = arith.constant 97 : index
    %649 = memref.load %arg4[%c97] : memref<384xf32, #tpu.memory_space<smem>>
    %650 = vector.broadcast %649 : f32 to vector<8x178xf32>
    %651 = arith.mulf %223, %650 : vector<8x178xf32>
    %652 = arith.addf %648, %651 : vector<8x178xf32>
    %c98 = arith.constant 98 : index
    %653 = memref.load %arg4[%c98] : memref<384xf32, #tpu.memory_space<smem>>
    %654 = vector.broadcast %653 : f32 to vector<8x178xf32>
    %655 = arith.mulf %224, %654 : vector<8x178xf32>
    %656 = arith.addf %652, %655 : vector<8x178xf32>
    %c99 = arith.constant 99 : index
    %657 = memref.load %arg4[%c99] : memref<384xf32, #tpu.memory_space<smem>>
    %658 = vector.broadcast %657 : f32 to vector<8x178xf32>
    %659 = arith.mulf %225, %658 : vector<8x178xf32>
    %660 = arith.addf %656, %659 : vector<8x178xf32>
    %c100 = arith.constant 100 : index
    %661 = memref.load %arg4[%c100] : memref<384xf32, #tpu.memory_space<smem>>
    %662 = vector.broadcast %661 : f32 to vector<8x178xf32>
    %663 = arith.mulf %226, %662 : vector<8x178xf32>
    %664 = arith.addf %660, %663 : vector<8x178xf32>
    %c101 = arith.constant 101 : index
    %665 = memref.load %arg4[%c101] : memref<384xf32, #tpu.memory_space<smem>>
    %666 = vector.broadcast %665 : f32 to vector<8x178xf32>
    %667 = arith.mulf %227, %666 : vector<8x178xf32>
    %668 = arith.addf %664, %667 : vector<8x178xf32>
    %c102 = arith.constant 102 : index
    %669 = memref.load %arg4[%c102] : memref<384xf32, #tpu.memory_space<smem>>
    %670 = vector.broadcast %669 : f32 to vector<8x178xf32>
    %671 = arith.mulf %228, %670 : vector<8x178xf32>
    %672 = arith.addf %668, %671 : vector<8x178xf32>
    %c103 = arith.constant 103 : index
    %673 = memref.load %arg4[%c103] : memref<384xf32, #tpu.memory_space<smem>>
    %674 = vector.broadcast %673 : f32 to vector<8x178xf32>
    %675 = arith.mulf %229, %674 : vector<8x178xf32>
    %676 = arith.addf %672, %675 : vector<8x178xf32>
    %c104 = arith.constant 104 : index
    %677 = memref.load %arg4[%c104] : memref<384xf32, #tpu.memory_space<smem>>
    %678 = vector.broadcast %677 : f32 to vector<8x178xf32>
    %679 = arith.mulf %230, %678 : vector<8x178xf32>
    %680 = arith.addf %676, %679 : vector<8x178xf32>
    %c105 = arith.constant 105 : index
    %681 = memref.load %arg4[%c105] : memref<384xf32, #tpu.memory_space<smem>>
    %682 = vector.broadcast %681 : f32 to vector<8x178xf32>
    %683 = arith.mulf %231, %682 : vector<8x178xf32>
    %684 = arith.addf %680, %683 : vector<8x178xf32>
    %c106 = arith.constant 106 : index
    %685 = memref.load %arg4[%c106] : memref<384xf32, #tpu.memory_space<smem>>
    %686 = vector.broadcast %685 : f32 to vector<8x178xf32>
    %687 = arith.mulf %232, %686 : vector<8x178xf32>
    %688 = arith.addf %684, %687 : vector<8x178xf32>
    %c107 = arith.constant 107 : index
    %689 = memref.load %arg4[%c107] : memref<384xf32, #tpu.memory_space<smem>>
    %690 = vector.broadcast %689 : f32 to vector<8x178xf32>
    %691 = arith.mulf %233, %690 : vector<8x178xf32>
    %692 = arith.addf %688, %691 : vector<8x178xf32>
    %c108 = arith.constant 108 : index
    %693 = memref.load %arg4[%c108] : memref<384xf32, #tpu.memory_space<smem>>
    %694 = vector.broadcast %693 : f32 to vector<8x178xf32>
    %695 = arith.mulf %234, %694 : vector<8x178xf32>
    %696 = arith.addf %692, %695 : vector<8x178xf32>
    %c109 = arith.constant 109 : index
    %697 = memref.load %arg4[%c109] : memref<384xf32, #tpu.memory_space<smem>>
    %698 = vector.broadcast %697 : f32 to vector<8x178xf32>
    %699 = arith.mulf %235, %698 : vector<8x178xf32>
    %700 = arith.addf %696, %699 : vector<8x178xf32>
    %c110 = arith.constant 110 : index
    %701 = memref.load %arg4[%c110] : memref<384xf32, #tpu.memory_space<smem>>
    %702 = vector.broadcast %701 : f32 to vector<8x178xf32>
    %703 = arith.mulf %236, %702 : vector<8x178xf32>
    %704 = arith.addf %700, %703 : vector<8x178xf32>
    %c111 = arith.constant 111 : index
    %705 = memref.load %arg4[%c111] : memref<384xf32, #tpu.memory_space<smem>>
    %706 = vector.broadcast %705 : f32 to vector<8x178xf32>
    %707 = arith.mulf %237, %706 : vector<8x178xf32>
    %708 = arith.addf %704, %707 : vector<8x178xf32>
    %c112 = arith.constant 112 : index
    %709 = memref.load %arg4[%c112] : memref<384xf32, #tpu.memory_space<smem>>
    %710 = vector.broadcast %709 : f32 to vector<8x178xf32>
    %711 = arith.mulf %238, %710 : vector<8x178xf32>
    %712 = arith.addf %708, %711 : vector<8x178xf32>
    %c113 = arith.constant 113 : index
    %713 = memref.load %arg4[%c113] : memref<384xf32, #tpu.memory_space<smem>>
    %714 = vector.broadcast %713 : f32 to vector<8x178xf32>
    %715 = arith.mulf %239, %714 : vector<8x178xf32>
    %716 = arith.addf %712, %715 : vector<8x178xf32>
    %c114 = arith.constant 114 : index
    %717 = memref.load %arg4[%c114] : memref<384xf32, #tpu.memory_space<smem>>
    %718 = vector.broadcast %717 : f32 to vector<8x178xf32>
    %719 = arith.mulf %240, %718 : vector<8x178xf32>
    %720 = arith.addf %716, %719 : vector<8x178xf32>
    %c115 = arith.constant 115 : index
    %721 = memref.load %arg4[%c115] : memref<384xf32, #tpu.memory_space<smem>>
    %722 = vector.broadcast %721 : f32 to vector<8x178xf32>
    %723 = arith.mulf %241, %722 : vector<8x178xf32>
    %724 = arith.addf %720, %723 : vector<8x178xf32>
    %c116 = arith.constant 116 : index
    %725 = memref.load %arg4[%c116] : memref<384xf32, #tpu.memory_space<smem>>
    %726 = vector.broadcast %725 : f32 to vector<8x178xf32>
    %727 = arith.mulf %242, %726 : vector<8x178xf32>
    %728 = arith.addf %724, %727 : vector<8x178xf32>
    %c117 = arith.constant 117 : index
    %729 = memref.load %arg4[%c117] : memref<384xf32, #tpu.memory_space<smem>>
    %730 = vector.broadcast %729 : f32 to vector<8x178xf32>
    %731 = arith.mulf %243, %730 : vector<8x178xf32>
    %732 = arith.addf %728, %731 : vector<8x178xf32>
    %c118 = arith.constant 118 : index
    %733 = memref.load %arg4[%c118] : memref<384xf32, #tpu.memory_space<smem>>
    %734 = vector.broadcast %733 : f32 to vector<8x178xf32>
    %735 = arith.mulf %244, %734 : vector<8x178xf32>
    %736 = arith.addf %732, %735 : vector<8x178xf32>
    %c119 = arith.constant 119 : index
    %737 = memref.load %arg4[%c119] : memref<384xf32, #tpu.memory_space<smem>>
    %738 = vector.broadcast %737 : f32 to vector<8x178xf32>
    %739 = arith.mulf %245, %738 : vector<8x178xf32>
    %740 = arith.addf %736, %739 : vector<8x178xf32>
    %c4_65 = arith.constant 4 : index
    %741 = memref.load %arg5[%c4_65] : memref<16xf32, #tpu.memory_space<smem>>
    %742 = vector.broadcast %741 : f32 to vector<8x178xf32>
    %743 = arith.addf %740, %742 : vector<8x178xf32>
    %cst_66 = arith.constant 0.000000e+00 : f32
    %744 = vector.broadcast %cst_66 : f32 to vector<8x178xf32>
    %745 = arith.maximumf %743, %744 : vector<8x178xf32>
    %c120 = arith.constant 120 : index
    %746 = memref.load %arg4[%c120] : memref<384xf32, #tpu.memory_space<smem>>
    %747 = vector.broadcast %746 : f32 to vector<8x178xf32>
    %748 = arith.mulf %222, %747 : vector<8x178xf32>
    %c121 = arith.constant 121 : index
    %749 = memref.load %arg4[%c121] : memref<384xf32, #tpu.memory_space<smem>>
    %750 = vector.broadcast %749 : f32 to vector<8x178xf32>
    %751 = arith.mulf %223, %750 : vector<8x178xf32>
    %752 = arith.addf %748, %751 : vector<8x178xf32>
    %c122 = arith.constant 122 : index
    %753 = memref.load %arg4[%c122] : memref<384xf32, #tpu.memory_space<smem>>
    %754 = vector.broadcast %753 : f32 to vector<8x178xf32>
    %755 = arith.mulf %224, %754 : vector<8x178xf32>
    %756 = arith.addf %752, %755 : vector<8x178xf32>
    %c123 = arith.constant 123 : index
    %757 = memref.load %arg4[%c123] : memref<384xf32, #tpu.memory_space<smem>>
    %758 = vector.broadcast %757 : f32 to vector<8x178xf32>
    %759 = arith.mulf %225, %758 : vector<8x178xf32>
    %760 = arith.addf %756, %759 : vector<8x178xf32>
    %c124 = arith.constant 124 : index
    %761 = memref.load %arg4[%c124] : memref<384xf32, #tpu.memory_space<smem>>
    %762 = vector.broadcast %761 : f32 to vector<8x178xf32>
    %763 = arith.mulf %226, %762 : vector<8x178xf32>
    %764 = arith.addf %760, %763 : vector<8x178xf32>
    %c125 = arith.constant 125 : index
    %765 = memref.load %arg4[%c125] : memref<384xf32, #tpu.memory_space<smem>>
    %766 = vector.broadcast %765 : f32 to vector<8x178xf32>
    %767 = arith.mulf %227, %766 : vector<8x178xf32>
    %768 = arith.addf %764, %767 : vector<8x178xf32>
    %c126 = arith.constant 126 : index
    %769 = memref.load %arg4[%c126] : memref<384xf32, #tpu.memory_space<smem>>
    %770 = vector.broadcast %769 : f32 to vector<8x178xf32>
    %771 = arith.mulf %228, %770 : vector<8x178xf32>
    %772 = arith.addf %768, %771 : vector<8x178xf32>
    %c127 = arith.constant 127 : index
    %773 = memref.load %arg4[%c127] : memref<384xf32, #tpu.memory_space<smem>>
    %774 = vector.broadcast %773 : f32 to vector<8x178xf32>
    %775 = arith.mulf %229, %774 : vector<8x178xf32>
    %776 = arith.addf %772, %775 : vector<8x178xf32>
    %c128 = arith.constant 128 : index
    %777 = memref.load %arg4[%c128] : memref<384xf32, #tpu.memory_space<smem>>
    %778 = vector.broadcast %777 : f32 to vector<8x178xf32>
    %779 = arith.mulf %230, %778 : vector<8x178xf32>
    %780 = arith.addf %776, %779 : vector<8x178xf32>
    %c129 = arith.constant 129 : index
    %781 = memref.load %arg4[%c129] : memref<384xf32, #tpu.memory_space<smem>>
    %782 = vector.broadcast %781 : f32 to vector<8x178xf32>
    %783 = arith.mulf %231, %782 : vector<8x178xf32>
    %784 = arith.addf %780, %783 : vector<8x178xf32>
    %c130 = arith.constant 130 : index
    %785 = memref.load %arg4[%c130] : memref<384xf32, #tpu.memory_space<smem>>
    %786 = vector.broadcast %785 : f32 to vector<8x178xf32>
    %787 = arith.mulf %232, %786 : vector<8x178xf32>
    %788 = arith.addf %784, %787 : vector<8x178xf32>
    %c131 = arith.constant 131 : index
    %789 = memref.load %arg4[%c131] : memref<384xf32, #tpu.memory_space<smem>>
    %790 = vector.broadcast %789 : f32 to vector<8x178xf32>
    %791 = arith.mulf %233, %790 : vector<8x178xf32>
    %792 = arith.addf %788, %791 : vector<8x178xf32>
    %c132 = arith.constant 132 : index
    %793 = memref.load %arg4[%c132] : memref<384xf32, #tpu.memory_space<smem>>
    %794 = vector.broadcast %793 : f32 to vector<8x178xf32>
    %795 = arith.mulf %234, %794 : vector<8x178xf32>
    %796 = arith.addf %792, %795 : vector<8x178xf32>
    %c133 = arith.constant 133 : index
    %797 = memref.load %arg4[%c133] : memref<384xf32, #tpu.memory_space<smem>>
    %798 = vector.broadcast %797 : f32 to vector<8x178xf32>
    %799 = arith.mulf %235, %798 : vector<8x178xf32>
    %800 = arith.addf %796, %799 : vector<8x178xf32>
    %c134 = arith.constant 134 : index
    %801 = memref.load %arg4[%c134] : memref<384xf32, #tpu.memory_space<smem>>
    %802 = vector.broadcast %801 : f32 to vector<8x178xf32>
    %803 = arith.mulf %236, %802 : vector<8x178xf32>
    %804 = arith.addf %800, %803 : vector<8x178xf32>
    %c135 = arith.constant 135 : index
    %805 = memref.load %arg4[%c135] : memref<384xf32, #tpu.memory_space<smem>>
    %806 = vector.broadcast %805 : f32 to vector<8x178xf32>
    %807 = arith.mulf %237, %806 : vector<8x178xf32>
    %808 = arith.addf %804, %807 : vector<8x178xf32>
    %c136 = arith.constant 136 : index
    %809 = memref.load %arg4[%c136] : memref<384xf32, #tpu.memory_space<smem>>
    %810 = vector.broadcast %809 : f32 to vector<8x178xf32>
    %811 = arith.mulf %238, %810 : vector<8x178xf32>
    %812 = arith.addf %808, %811 : vector<8x178xf32>
    %c137 = arith.constant 137 : index
    %813 = memref.load %arg4[%c137] : memref<384xf32, #tpu.memory_space<smem>>
    %814 = vector.broadcast %813 : f32 to vector<8x178xf32>
    %815 = arith.mulf %239, %814 : vector<8x178xf32>
    %816 = arith.addf %812, %815 : vector<8x178xf32>
    %c138 = arith.constant 138 : index
    %817 = memref.load %arg4[%c138] : memref<384xf32, #tpu.memory_space<smem>>
    %818 = vector.broadcast %817 : f32 to vector<8x178xf32>
    %819 = arith.mulf %240, %818 : vector<8x178xf32>
    %820 = arith.addf %816, %819 : vector<8x178xf32>
    %c139 = arith.constant 139 : index
    %821 = memref.load %arg4[%c139] : memref<384xf32, #tpu.memory_space<smem>>
    %822 = vector.broadcast %821 : f32 to vector<8x178xf32>
    %823 = arith.mulf %241, %822 : vector<8x178xf32>
    %824 = arith.addf %820, %823 : vector<8x178xf32>
    %c140 = arith.constant 140 : index
    %825 = memref.load %arg4[%c140] : memref<384xf32, #tpu.memory_space<smem>>
    %826 = vector.broadcast %825 : f32 to vector<8x178xf32>
    %827 = arith.mulf %242, %826 : vector<8x178xf32>
    %828 = arith.addf %824, %827 : vector<8x178xf32>
    %c141 = arith.constant 141 : index
    %829 = memref.load %arg4[%c141] : memref<384xf32, #tpu.memory_space<smem>>
    %830 = vector.broadcast %829 : f32 to vector<8x178xf32>
    %831 = arith.mulf %243, %830 : vector<8x178xf32>
    %832 = arith.addf %828, %831 : vector<8x178xf32>
    %c142 = arith.constant 142 : index
    %833 = memref.load %arg4[%c142] : memref<384xf32, #tpu.memory_space<smem>>
    %834 = vector.broadcast %833 : f32 to vector<8x178xf32>
    %835 = arith.mulf %244, %834 : vector<8x178xf32>
    %836 = arith.addf %832, %835 : vector<8x178xf32>
    %c143 = arith.constant 143 : index
    %837 = memref.load %arg4[%c143] : memref<384xf32, #tpu.memory_space<smem>>
    %838 = vector.broadcast %837 : f32 to vector<8x178xf32>
    %839 = arith.mulf %245, %838 : vector<8x178xf32>
    %840 = arith.addf %836, %839 : vector<8x178xf32>
    %c5_67 = arith.constant 5 : index
    %841 = memref.load %arg5[%c5_67] : memref<16xf32, #tpu.memory_space<smem>>
    %842 = vector.broadcast %841 : f32 to vector<8x178xf32>
    %843 = arith.addf %840, %842 : vector<8x178xf32>
    %cst_68 = arith.constant 0.000000e+00 : f32
    %844 = vector.broadcast %cst_68 : f32 to vector<8x178xf32>
    %845 = arith.maximumf %843, %844 : vector<8x178xf32>
    %c144 = arith.constant 144 : index
    %846 = memref.load %arg4[%c144] : memref<384xf32, #tpu.memory_space<smem>>
    %847 = vector.broadcast %846 : f32 to vector<8x178xf32>
    %848 = arith.mulf %222, %847 : vector<8x178xf32>
    %c145 = arith.constant 145 : index
    %849 = memref.load %arg4[%c145] : memref<384xf32, #tpu.memory_space<smem>>
    %850 = vector.broadcast %849 : f32 to vector<8x178xf32>
    %851 = arith.mulf %223, %850 : vector<8x178xf32>
    %852 = arith.addf %848, %851 : vector<8x178xf32>
    %c146 = arith.constant 146 : index
    %853 = memref.load %arg4[%c146] : memref<384xf32, #tpu.memory_space<smem>>
    %854 = vector.broadcast %853 : f32 to vector<8x178xf32>
    %855 = arith.mulf %224, %854 : vector<8x178xf32>
    %856 = arith.addf %852, %855 : vector<8x178xf32>
    %c147 = arith.constant 147 : index
    %857 = memref.load %arg4[%c147] : memref<384xf32, #tpu.memory_space<smem>>
    %858 = vector.broadcast %857 : f32 to vector<8x178xf32>
    %859 = arith.mulf %225, %858 : vector<8x178xf32>
    %860 = arith.addf %856, %859 : vector<8x178xf32>
    %c148 = arith.constant 148 : index
    %861 = memref.load %arg4[%c148] : memref<384xf32, #tpu.memory_space<smem>>
    %862 = vector.broadcast %861 : f32 to vector<8x178xf32>
    %863 = arith.mulf %226, %862 : vector<8x178xf32>
    %864 = arith.addf %860, %863 : vector<8x178xf32>
    %c149 = arith.constant 149 : index
    %865 = memref.load %arg4[%c149] : memref<384xf32, #tpu.memory_space<smem>>
    %866 = vector.broadcast %865 : f32 to vector<8x178xf32>
    %867 = arith.mulf %227, %866 : vector<8x178xf32>
    %868 = arith.addf %864, %867 : vector<8x178xf32>
    %c150 = arith.constant 150 : index
    %869 = memref.load %arg4[%c150] : memref<384xf32, #tpu.memory_space<smem>>
    %870 = vector.broadcast %869 : f32 to vector<8x178xf32>
    %871 = arith.mulf %228, %870 : vector<8x178xf32>
    %872 = arith.addf %868, %871 : vector<8x178xf32>
    %c151 = arith.constant 151 : index
    %873 = memref.load %arg4[%c151] : memref<384xf32, #tpu.memory_space<smem>>
    %874 = vector.broadcast %873 : f32 to vector<8x178xf32>
    %875 = arith.mulf %229, %874 : vector<8x178xf32>
    %876 = arith.addf %872, %875 : vector<8x178xf32>
    %c152 = arith.constant 152 : index
    %877 = memref.load %arg4[%c152] : memref<384xf32, #tpu.memory_space<smem>>
    %878 = vector.broadcast %877 : f32 to vector<8x178xf32>
    %879 = arith.mulf %230, %878 : vector<8x178xf32>
    %880 = arith.addf %876, %879 : vector<8x178xf32>
    %c153 = arith.constant 153 : index
    %881 = memref.load %arg4[%c153] : memref<384xf32, #tpu.memory_space<smem>>
    %882 = vector.broadcast %881 : f32 to vector<8x178xf32>
    %883 = arith.mulf %231, %882 : vector<8x178xf32>
    %884 = arith.addf %880, %883 : vector<8x178xf32>
    %c154 = arith.constant 154 : index
    %885 = memref.load %arg4[%c154] : memref<384xf32, #tpu.memory_space<smem>>
    %886 = vector.broadcast %885 : f32 to vector<8x178xf32>
    %887 = arith.mulf %232, %886 : vector<8x178xf32>
    %888 = arith.addf %884, %887 : vector<8x178xf32>
    %c155 = arith.constant 155 : index
    %889 = memref.load %arg4[%c155] : memref<384xf32, #tpu.memory_space<smem>>
    %890 = vector.broadcast %889 : f32 to vector<8x178xf32>
    %891 = arith.mulf %233, %890 : vector<8x178xf32>
    %892 = arith.addf %888, %891 : vector<8x178xf32>
    %c156 = arith.constant 156 : index
    %893 = memref.load %arg4[%c156] : memref<384xf32, #tpu.memory_space<smem>>
    %894 = vector.broadcast %893 : f32 to vector<8x178xf32>
    %895 = arith.mulf %234, %894 : vector<8x178xf32>
    %896 = arith.addf %892, %895 : vector<8x178xf32>
    %c157 = arith.constant 157 : index
    %897 = memref.load %arg4[%c157] : memref<384xf32, #tpu.memory_space<smem>>
    %898 = vector.broadcast %897 : f32 to vector<8x178xf32>
    %899 = arith.mulf %235, %898 : vector<8x178xf32>
    %900 = arith.addf %896, %899 : vector<8x178xf32>
    %c158 = arith.constant 158 : index
    %901 = memref.load %arg4[%c158] : memref<384xf32, #tpu.memory_space<smem>>
    %902 = vector.broadcast %901 : f32 to vector<8x178xf32>
    %903 = arith.mulf %236, %902 : vector<8x178xf32>
    %904 = arith.addf %900, %903 : vector<8x178xf32>
    %c159 = arith.constant 159 : index
    %905 = memref.load %arg4[%c159] : memref<384xf32, #tpu.memory_space<smem>>
    %906 = vector.broadcast %905 : f32 to vector<8x178xf32>
    %907 = arith.mulf %237, %906 : vector<8x178xf32>
    %908 = arith.addf %904, %907 : vector<8x178xf32>
    %c160 = arith.constant 160 : index
    %909 = memref.load %arg4[%c160] : memref<384xf32, #tpu.memory_space<smem>>
    %910 = vector.broadcast %909 : f32 to vector<8x178xf32>
    %911 = arith.mulf %238, %910 : vector<8x178xf32>
    %912 = arith.addf %908, %911 : vector<8x178xf32>
    %c161 = arith.constant 161 : index
    %913 = memref.load %arg4[%c161] : memref<384xf32, #tpu.memory_space<smem>>
    %914 = vector.broadcast %913 : f32 to vector<8x178xf32>
    %915 = arith.mulf %239, %914 : vector<8x178xf32>
    %916 = arith.addf %912, %915 : vector<8x178xf32>
    %c162 = arith.constant 162 : index
    %917 = memref.load %arg4[%c162] : memref<384xf32, #tpu.memory_space<smem>>
    %918 = vector.broadcast %917 : f32 to vector<8x178xf32>
    %919 = arith.mulf %240, %918 : vector<8x178xf32>
    %920 = arith.addf %916, %919 : vector<8x178xf32>
    %c163 = arith.constant 163 : index
    %921 = memref.load %arg4[%c163] : memref<384xf32, #tpu.memory_space<smem>>
    %922 = vector.broadcast %921 : f32 to vector<8x178xf32>
    %923 = arith.mulf %241, %922 : vector<8x178xf32>
    %924 = arith.addf %920, %923 : vector<8x178xf32>
    %c164 = arith.constant 164 : index
    %925 = memref.load %arg4[%c164] : memref<384xf32, #tpu.memory_space<smem>>
    %926 = vector.broadcast %925 : f32 to vector<8x178xf32>
    %927 = arith.mulf %242, %926 : vector<8x178xf32>
    %928 = arith.addf %924, %927 : vector<8x178xf32>
    %c165 = arith.constant 165 : index
    %929 = memref.load %arg4[%c165] : memref<384xf32, #tpu.memory_space<smem>>
    %930 = vector.broadcast %929 : f32 to vector<8x178xf32>
    %931 = arith.mulf %243, %930 : vector<8x178xf32>
    %932 = arith.addf %928, %931 : vector<8x178xf32>
    %c166 = arith.constant 166 : index
    %933 = memref.load %arg4[%c166] : memref<384xf32, #tpu.memory_space<smem>>
    %934 = vector.broadcast %933 : f32 to vector<8x178xf32>
    %935 = arith.mulf %244, %934 : vector<8x178xf32>
    %936 = arith.addf %932, %935 : vector<8x178xf32>
    %c167 = arith.constant 167 : index
    %937 = memref.load %arg4[%c167] : memref<384xf32, #tpu.memory_space<smem>>
    %938 = vector.broadcast %937 : f32 to vector<8x178xf32>
    %939 = arith.mulf %245, %938 : vector<8x178xf32>
    %940 = arith.addf %936, %939 : vector<8x178xf32>
    %c6_69 = arith.constant 6 : index
    %941 = memref.load %arg5[%c6_69] : memref<16xf32, #tpu.memory_space<smem>>
    %942 = vector.broadcast %941 : f32 to vector<8x178xf32>
    %943 = arith.addf %940, %942 : vector<8x178xf32>
    %cst_70 = arith.constant 0.000000e+00 : f32
    %944 = vector.broadcast %cst_70 : f32 to vector<8x178xf32>
    %945 = arith.maximumf %943, %944 : vector<8x178xf32>
    %c168 = arith.constant 168 : index
    %946 = memref.load %arg4[%c168] : memref<384xf32, #tpu.memory_space<smem>>
    %947 = vector.broadcast %946 : f32 to vector<8x178xf32>
    %948 = arith.mulf %222, %947 : vector<8x178xf32>
    %c169 = arith.constant 169 : index
    %949 = memref.load %arg4[%c169] : memref<384xf32, #tpu.memory_space<smem>>
    %950 = vector.broadcast %949 : f32 to vector<8x178xf32>
    %951 = arith.mulf %223, %950 : vector<8x178xf32>
    %952 = arith.addf %948, %951 : vector<8x178xf32>
    %c170 = arith.constant 170 : index
    %953 = memref.load %arg4[%c170] : memref<384xf32, #tpu.memory_space<smem>>
    %954 = vector.broadcast %953 : f32 to vector<8x178xf32>
    %955 = arith.mulf %224, %954 : vector<8x178xf32>
    %956 = arith.addf %952, %955 : vector<8x178xf32>
    %c171 = arith.constant 171 : index
    %957 = memref.load %arg4[%c171] : memref<384xf32, #tpu.memory_space<smem>>
    %958 = vector.broadcast %957 : f32 to vector<8x178xf32>
    %959 = arith.mulf %225, %958 : vector<8x178xf32>
    %960 = arith.addf %956, %959 : vector<8x178xf32>
    %c172 = arith.constant 172 : index
    %961 = memref.load %arg4[%c172] : memref<384xf32, #tpu.memory_space<smem>>
    %962 = vector.broadcast %961 : f32 to vector<8x178xf32>
    %963 = arith.mulf %226, %962 : vector<8x178xf32>
    %964 = arith.addf %960, %963 : vector<8x178xf32>
    %c173 = arith.constant 173 : index
    %965 = memref.load %arg4[%c173] : memref<384xf32, #tpu.memory_space<smem>>
    %966 = vector.broadcast %965 : f32 to vector<8x178xf32>
    %967 = arith.mulf %227, %966 : vector<8x178xf32>
    %968 = arith.addf %964, %967 : vector<8x178xf32>
    %c174 = arith.constant 174 : index
    %969 = memref.load %arg4[%c174] : memref<384xf32, #tpu.memory_space<smem>>
    %970 = vector.broadcast %969 : f32 to vector<8x178xf32>
    %971 = arith.mulf %228, %970 : vector<8x178xf32>
    %972 = arith.addf %968, %971 : vector<8x178xf32>
    %c175 = arith.constant 175 : index
    %973 = memref.load %arg4[%c175] : memref<384xf32, #tpu.memory_space<smem>>
    %974 = vector.broadcast %973 : f32 to vector<8x178xf32>
    %975 = arith.mulf %229, %974 : vector<8x178xf32>
    %976 = arith.addf %972, %975 : vector<8x178xf32>
    %c176 = arith.constant 176 : index
    %977 = memref.load %arg4[%c176] : memref<384xf32, #tpu.memory_space<smem>>
    %978 = vector.broadcast %977 : f32 to vector<8x178xf32>
    %979 = arith.mulf %230, %978 : vector<8x178xf32>
    %980 = arith.addf %976, %979 : vector<8x178xf32>
    %c177 = arith.constant 177 : index
    %981 = memref.load %arg4[%c177] : memref<384xf32, #tpu.memory_space<smem>>
    %982 = vector.broadcast %981 : f32 to vector<8x178xf32>
    %983 = arith.mulf %231, %982 : vector<8x178xf32>
    %984 = arith.addf %980, %983 : vector<8x178xf32>
    %c178 = arith.constant 178 : index
    %985 = memref.load %arg4[%c178] : memref<384xf32, #tpu.memory_space<smem>>
    %986 = vector.broadcast %985 : f32 to vector<8x178xf32>
    %987 = arith.mulf %232, %986 : vector<8x178xf32>
    %988 = arith.addf %984, %987 : vector<8x178xf32>
    %c179 = arith.constant 179 : index
    %989 = memref.load %arg4[%c179] : memref<384xf32, #tpu.memory_space<smem>>
    %990 = vector.broadcast %989 : f32 to vector<8x178xf32>
    %991 = arith.mulf %233, %990 : vector<8x178xf32>
    %992 = arith.addf %988, %991 : vector<8x178xf32>
    %c180 = arith.constant 180 : index
    %993 = memref.load %arg4[%c180] : memref<384xf32, #tpu.memory_space<smem>>
    %994 = vector.broadcast %993 : f32 to vector<8x178xf32>
    %995 = arith.mulf %234, %994 : vector<8x178xf32>
    %996 = arith.addf %992, %995 : vector<8x178xf32>
    %c181 = arith.constant 181 : index
    %997 = memref.load %arg4[%c181] : memref<384xf32, #tpu.memory_space<smem>>
    %998 = vector.broadcast %997 : f32 to vector<8x178xf32>
    %999 = arith.mulf %235, %998 : vector<8x178xf32>
    %1000 = arith.addf %996, %999 : vector<8x178xf32>
    %c182 = arith.constant 182 : index
    %1001 = memref.load %arg4[%c182] : memref<384xf32, #tpu.memory_space<smem>>
    %1002 = vector.broadcast %1001 : f32 to vector<8x178xf32>
    %1003 = arith.mulf %236, %1002 : vector<8x178xf32>
    %1004 = arith.addf %1000, %1003 : vector<8x178xf32>
    %c183 = arith.constant 183 : index
    %1005 = memref.load %arg4[%c183] : memref<384xf32, #tpu.memory_space<smem>>
    %1006 = vector.broadcast %1005 : f32 to vector<8x178xf32>
    %1007 = arith.mulf %237, %1006 : vector<8x178xf32>
    %1008 = arith.addf %1004, %1007 : vector<8x178xf32>
    %c184 = arith.constant 184 : index
    %1009 = memref.load %arg4[%c184] : memref<384xf32, #tpu.memory_space<smem>>
    %1010 = vector.broadcast %1009 : f32 to vector<8x178xf32>
    %1011 = arith.mulf %238, %1010 : vector<8x178xf32>
    %1012 = arith.addf %1008, %1011 : vector<8x178xf32>
    %c185 = arith.constant 185 : index
    %1013 = memref.load %arg4[%c185] : memref<384xf32, #tpu.memory_space<smem>>
    %1014 = vector.broadcast %1013 : f32 to vector<8x178xf32>
    %1015 = arith.mulf %239, %1014 : vector<8x178xf32>
    %1016 = arith.addf %1012, %1015 : vector<8x178xf32>
    %c186 = arith.constant 186 : index
    %1017 = memref.load %arg4[%c186] : memref<384xf32, #tpu.memory_space<smem>>
    %1018 = vector.broadcast %1017 : f32 to vector<8x178xf32>
    %1019 = arith.mulf %240, %1018 : vector<8x178xf32>
    %1020 = arith.addf %1016, %1019 : vector<8x178xf32>
    %c187 = arith.constant 187 : index
    %1021 = memref.load %arg4[%c187] : memref<384xf32, #tpu.memory_space<smem>>
    %1022 = vector.broadcast %1021 : f32 to vector<8x178xf32>
    %1023 = arith.mulf %241, %1022 : vector<8x178xf32>
    %1024 = arith.addf %1020, %1023 : vector<8x178xf32>
    %c188 = arith.constant 188 : index
    %1025 = memref.load %arg4[%c188] : memref<384xf32, #tpu.memory_space<smem>>
    %1026 = vector.broadcast %1025 : f32 to vector<8x178xf32>
    %1027 = arith.mulf %242, %1026 : vector<8x178xf32>
    %1028 = arith.addf %1024, %1027 : vector<8x178xf32>
    %c189 = arith.constant 189 : index
    %1029 = memref.load %arg4[%c189] : memref<384xf32, #tpu.memory_space<smem>>
    %1030 = vector.broadcast %1029 : f32 to vector<8x178xf32>
    %1031 = arith.mulf %243, %1030 : vector<8x178xf32>
    %1032 = arith.addf %1028, %1031 : vector<8x178xf32>
    %c190 = arith.constant 190 : index
    %1033 = memref.load %arg4[%c190] : memref<384xf32, #tpu.memory_space<smem>>
    %1034 = vector.broadcast %1033 : f32 to vector<8x178xf32>
    %1035 = arith.mulf %244, %1034 : vector<8x178xf32>
    %1036 = arith.addf %1032, %1035 : vector<8x178xf32>
    %c191 = arith.constant 191 : index
    %1037 = memref.load %arg4[%c191] : memref<384xf32, #tpu.memory_space<smem>>
    %1038 = vector.broadcast %1037 : f32 to vector<8x178xf32>
    %1039 = arith.mulf %245, %1038 : vector<8x178xf32>
    %1040 = arith.addf %1036, %1039 : vector<8x178xf32>
    %c7_71 = arith.constant 7 : index
    %1041 = memref.load %arg5[%c7_71] : memref<16xf32, #tpu.memory_space<smem>>
    %1042 = vector.broadcast %1041 : f32 to vector<8x178xf32>
    %1043 = arith.addf %1040, %1042 : vector<8x178xf32>
    %cst_72 = arith.constant 0.000000e+00 : f32
    %1044 = vector.broadcast %cst_72 : f32 to vector<8x178xf32>
    %1045 = arith.maximumf %1043, %1044 : vector<8x178xf32>
    %c192 = arith.constant 192 : index
    %1046 = memref.load %arg4[%c192] : memref<384xf32, #tpu.memory_space<smem>>
    %1047 = vector.broadcast %1046 : f32 to vector<8x178xf32>
    %1048 = arith.mulf %222, %1047 : vector<8x178xf32>
    %c193 = arith.constant 193 : index
    %1049 = memref.load %arg4[%c193] : memref<384xf32, #tpu.memory_space<smem>>
    %1050 = vector.broadcast %1049 : f32 to vector<8x178xf32>
    %1051 = arith.mulf %223, %1050 : vector<8x178xf32>
    %1052 = arith.addf %1048, %1051 : vector<8x178xf32>
    %c194 = arith.constant 194 : index
    %1053 = memref.load %arg4[%c194] : memref<384xf32, #tpu.memory_space<smem>>
    %1054 = vector.broadcast %1053 : f32 to vector<8x178xf32>
    %1055 = arith.mulf %224, %1054 : vector<8x178xf32>
    %1056 = arith.addf %1052, %1055 : vector<8x178xf32>
    %c195 = arith.constant 195 : index
    %1057 = memref.load %arg4[%c195] : memref<384xf32, #tpu.memory_space<smem>>
    %1058 = vector.broadcast %1057 : f32 to vector<8x178xf32>
    %1059 = arith.mulf %225, %1058 : vector<8x178xf32>
    %1060 = arith.addf %1056, %1059 : vector<8x178xf32>
    %c196 = arith.constant 196 : index
    %1061 = memref.load %arg4[%c196] : memref<384xf32, #tpu.memory_space<smem>>
    %1062 = vector.broadcast %1061 : f32 to vector<8x178xf32>
    %1063 = arith.mulf %226, %1062 : vector<8x178xf32>
    %1064 = arith.addf %1060, %1063 : vector<8x178xf32>
    %c197 = arith.constant 197 : index
    %1065 = memref.load %arg4[%c197] : memref<384xf32, #tpu.memory_space<smem>>
    %1066 = vector.broadcast %1065 : f32 to vector<8x178xf32>
    %1067 = arith.mulf %227, %1066 : vector<8x178xf32>
    %1068 = arith.addf %1064, %1067 : vector<8x178xf32>
    %c198 = arith.constant 198 : index
    %1069 = memref.load %arg4[%c198] : memref<384xf32, #tpu.memory_space<smem>>
    %1070 = vector.broadcast %1069 : f32 to vector<8x178xf32>
    %1071 = arith.mulf %228, %1070 : vector<8x178xf32>
    %1072 = arith.addf %1068, %1071 : vector<8x178xf32>
    %c199 = arith.constant 199 : index
    %1073 = memref.load %arg4[%c199] : memref<384xf32, #tpu.memory_space<smem>>
    %1074 = vector.broadcast %1073 : f32 to vector<8x178xf32>
    %1075 = arith.mulf %229, %1074 : vector<8x178xf32>
    %1076 = arith.addf %1072, %1075 : vector<8x178xf32>
    %c200 = arith.constant 200 : index
    %1077 = memref.load %arg4[%c200] : memref<384xf32, #tpu.memory_space<smem>>
    %1078 = vector.broadcast %1077 : f32 to vector<8x178xf32>
    %1079 = arith.mulf %230, %1078 : vector<8x178xf32>
    %1080 = arith.addf %1076, %1079 : vector<8x178xf32>
    %c201 = arith.constant 201 : index
    %1081 = memref.load %arg4[%c201] : memref<384xf32, #tpu.memory_space<smem>>
    %1082 = vector.broadcast %1081 : f32 to vector<8x178xf32>
    %1083 = arith.mulf %231, %1082 : vector<8x178xf32>
    %1084 = arith.addf %1080, %1083 : vector<8x178xf32>
    %c202 = arith.constant 202 : index
    %1085 = memref.load %arg4[%c202] : memref<384xf32, #tpu.memory_space<smem>>
    %1086 = vector.broadcast %1085 : f32 to vector<8x178xf32>
    %1087 = arith.mulf %232, %1086 : vector<8x178xf32>
    %1088 = arith.addf %1084, %1087 : vector<8x178xf32>
    %c203 = arith.constant 203 : index
    %1089 = memref.load %arg4[%c203] : memref<384xf32, #tpu.memory_space<smem>>
    %1090 = vector.broadcast %1089 : f32 to vector<8x178xf32>
    %1091 = arith.mulf %233, %1090 : vector<8x178xf32>
    %1092 = arith.addf %1088, %1091 : vector<8x178xf32>
    %c204 = arith.constant 204 : index
    %1093 = memref.load %arg4[%c204] : memref<384xf32, #tpu.memory_space<smem>>
    %1094 = vector.broadcast %1093 : f32 to vector<8x178xf32>
    %1095 = arith.mulf %234, %1094 : vector<8x178xf32>
    %1096 = arith.addf %1092, %1095 : vector<8x178xf32>
    %c205 = arith.constant 205 : index
    %1097 = memref.load %arg4[%c205] : memref<384xf32, #tpu.memory_space<smem>>
    %1098 = vector.broadcast %1097 : f32 to vector<8x178xf32>
    %1099 = arith.mulf %235, %1098 : vector<8x178xf32>
    %1100 = arith.addf %1096, %1099 : vector<8x178xf32>
    %c206 = arith.constant 206 : index
    %1101 = memref.load %arg4[%c206] : memref<384xf32, #tpu.memory_space<smem>>
    %1102 = vector.broadcast %1101 : f32 to vector<8x178xf32>
    %1103 = arith.mulf %236, %1102 : vector<8x178xf32>
    %1104 = arith.addf %1100, %1103 : vector<8x178xf32>
    %c207 = arith.constant 207 : index
    %1105 = memref.load %arg4[%c207] : memref<384xf32, #tpu.memory_space<smem>>
    %1106 = vector.broadcast %1105 : f32 to vector<8x178xf32>
    %1107 = arith.mulf %237, %1106 : vector<8x178xf32>
    %1108 = arith.addf %1104, %1107 : vector<8x178xf32>
    %c208 = arith.constant 208 : index
    %1109 = memref.load %arg4[%c208] : memref<384xf32, #tpu.memory_space<smem>>
    %1110 = vector.broadcast %1109 : f32 to vector<8x178xf32>
    %1111 = arith.mulf %238, %1110 : vector<8x178xf32>
    %1112 = arith.addf %1108, %1111 : vector<8x178xf32>
    %c209 = arith.constant 209 : index
    %1113 = memref.load %arg4[%c209] : memref<384xf32, #tpu.memory_space<smem>>
    %1114 = vector.broadcast %1113 : f32 to vector<8x178xf32>
    %1115 = arith.mulf %239, %1114 : vector<8x178xf32>
    %1116 = arith.addf %1112, %1115 : vector<8x178xf32>
    %c210 = arith.constant 210 : index
    %1117 = memref.load %arg4[%c210] : memref<384xf32, #tpu.memory_space<smem>>
    %1118 = vector.broadcast %1117 : f32 to vector<8x178xf32>
    %1119 = arith.mulf %240, %1118 : vector<8x178xf32>
    %1120 = arith.addf %1116, %1119 : vector<8x178xf32>
    %c211 = arith.constant 211 : index
    %1121 = memref.load %arg4[%c211] : memref<384xf32, #tpu.memory_space<smem>>
    %1122 = vector.broadcast %1121 : f32 to vector<8x178xf32>
    %1123 = arith.mulf %241, %1122 : vector<8x178xf32>
    %1124 = arith.addf %1120, %1123 : vector<8x178xf32>
    %c212 = arith.constant 212 : index
    %1125 = memref.load %arg4[%c212] : memref<384xf32, #tpu.memory_space<smem>>
    %1126 = vector.broadcast %1125 : f32 to vector<8x178xf32>
    %1127 = arith.mulf %242, %1126 : vector<8x178xf32>
    %1128 = arith.addf %1124, %1127 : vector<8x178xf32>
    %c213 = arith.constant 213 : index
    %1129 = memref.load %arg4[%c213] : memref<384xf32, #tpu.memory_space<smem>>
    %1130 = vector.broadcast %1129 : f32 to vector<8x178xf32>
    %1131 = arith.mulf %243, %1130 : vector<8x178xf32>
    %1132 = arith.addf %1128, %1131 : vector<8x178xf32>
    %c214 = arith.constant 214 : index
    %1133 = memref.load %arg4[%c214] : memref<384xf32, #tpu.memory_space<smem>>
    %1134 = vector.broadcast %1133 : f32 to vector<8x178xf32>
    %1135 = arith.mulf %244, %1134 : vector<8x178xf32>
    %1136 = arith.addf %1132, %1135 : vector<8x178xf32>
    %c215 = arith.constant 215 : index
    %1137 = memref.load %arg4[%c215] : memref<384xf32, #tpu.memory_space<smem>>
    %1138 = vector.broadcast %1137 : f32 to vector<8x178xf32>
    %1139 = arith.mulf %245, %1138 : vector<8x178xf32>
    %1140 = arith.addf %1136, %1139 : vector<8x178xf32>
    %c8_73 = arith.constant 8 : index
    %1141 = memref.load %arg5[%c8_73] : memref<16xf32, #tpu.memory_space<smem>>
    %1142 = vector.broadcast %1141 : f32 to vector<8x178xf32>
    %1143 = arith.addf %1140, %1142 : vector<8x178xf32>
    %cst_74 = arith.constant 0.000000e+00 : f32
    %1144 = vector.broadcast %cst_74 : f32 to vector<8x178xf32>
    %1145 = arith.maximumf %1143, %1144 : vector<8x178xf32>
    %c216 = arith.constant 216 : index
    %1146 = memref.load %arg4[%c216] : memref<384xf32, #tpu.memory_space<smem>>
    %1147 = vector.broadcast %1146 : f32 to vector<8x178xf32>
    %1148 = arith.mulf %222, %1147 : vector<8x178xf32>
    %c217 = arith.constant 217 : index
    %1149 = memref.load %arg4[%c217] : memref<384xf32, #tpu.memory_space<smem>>
    %1150 = vector.broadcast %1149 : f32 to vector<8x178xf32>
    %1151 = arith.mulf %223, %1150 : vector<8x178xf32>
    %1152 = arith.addf %1148, %1151 : vector<8x178xf32>
    %c218 = arith.constant 218 : index
    %1153 = memref.load %arg4[%c218] : memref<384xf32, #tpu.memory_space<smem>>
    %1154 = vector.broadcast %1153 : f32 to vector<8x178xf32>
    %1155 = arith.mulf %224, %1154 : vector<8x178xf32>
    %1156 = arith.addf %1152, %1155 : vector<8x178xf32>
    %c219 = arith.constant 219 : index
    %1157 = memref.load %arg4[%c219] : memref<384xf32, #tpu.memory_space<smem>>
    %1158 = vector.broadcast %1157 : f32 to vector<8x178xf32>
    %1159 = arith.mulf %225, %1158 : vector<8x178xf32>
    %1160 = arith.addf %1156, %1159 : vector<8x178xf32>
    %c220 = arith.constant 220 : index
    %1161 = memref.load %arg4[%c220] : memref<384xf32, #tpu.memory_space<smem>>
    %1162 = vector.broadcast %1161 : f32 to vector<8x178xf32>
    %1163 = arith.mulf %226, %1162 : vector<8x178xf32>
    %1164 = arith.addf %1160, %1163 : vector<8x178xf32>
    %c221 = arith.constant 221 : index
    %1165 = memref.load %arg4[%c221] : memref<384xf32, #tpu.memory_space<smem>>
    %1166 = vector.broadcast %1165 : f32 to vector<8x178xf32>
    %1167 = arith.mulf %227, %1166 : vector<8x178xf32>
    %1168 = arith.addf %1164, %1167 : vector<8x178xf32>
    %c222 = arith.constant 222 : index
    %1169 = memref.load %arg4[%c222] : memref<384xf32, #tpu.memory_space<smem>>
    %1170 = vector.broadcast %1169 : f32 to vector<8x178xf32>
    %1171 = arith.mulf %228, %1170 : vector<8x178xf32>
    %1172 = arith.addf %1168, %1171 : vector<8x178xf32>
    %c223 = arith.constant 223 : index
    %1173 = memref.load %arg4[%c223] : memref<384xf32, #tpu.memory_space<smem>>
    %1174 = vector.broadcast %1173 : f32 to vector<8x178xf32>
    %1175 = arith.mulf %229, %1174 : vector<8x178xf32>
    %1176 = arith.addf %1172, %1175 : vector<8x178xf32>
    %c224 = arith.constant 224 : index
    %1177 = memref.load %arg4[%c224] : memref<384xf32, #tpu.memory_space<smem>>
    %1178 = vector.broadcast %1177 : f32 to vector<8x178xf32>
    %1179 = arith.mulf %230, %1178 : vector<8x178xf32>
    %1180 = arith.addf %1176, %1179 : vector<8x178xf32>
    %c225 = arith.constant 225 : index
    %1181 = memref.load %arg4[%c225] : memref<384xf32, #tpu.memory_space<smem>>
    %1182 = vector.broadcast %1181 : f32 to vector<8x178xf32>
    %1183 = arith.mulf %231, %1182 : vector<8x178xf32>
    %1184 = arith.addf %1180, %1183 : vector<8x178xf32>
    %c226 = arith.constant 226 : index
    %1185 = memref.load %arg4[%c226] : memref<384xf32, #tpu.memory_space<smem>>
    %1186 = vector.broadcast %1185 : f32 to vector<8x178xf32>
    %1187 = arith.mulf %232, %1186 : vector<8x178xf32>
    %1188 = arith.addf %1184, %1187 : vector<8x178xf32>
    %c227 = arith.constant 227 : index
    %1189 = memref.load %arg4[%c227] : memref<384xf32, #tpu.memory_space<smem>>
    %1190 = vector.broadcast %1189 : f32 to vector<8x178xf32>
    %1191 = arith.mulf %233, %1190 : vector<8x178xf32>
    %1192 = arith.addf %1188, %1191 : vector<8x178xf32>
    %c228 = arith.constant 228 : index
    %1193 = memref.load %arg4[%c228] : memref<384xf32, #tpu.memory_space<smem>>
    %1194 = vector.broadcast %1193 : f32 to vector<8x178xf32>
    %1195 = arith.mulf %234, %1194 : vector<8x178xf32>
    %1196 = arith.addf %1192, %1195 : vector<8x178xf32>
    %c229 = arith.constant 229 : index
    %1197 = memref.load %arg4[%c229] : memref<384xf32, #tpu.memory_space<smem>>
    %1198 = vector.broadcast %1197 : f32 to vector<8x178xf32>
    %1199 = arith.mulf %235, %1198 : vector<8x178xf32>
    %1200 = arith.addf %1196, %1199 : vector<8x178xf32>
    %c230 = arith.constant 230 : index
    %1201 = memref.load %arg4[%c230] : memref<384xf32, #tpu.memory_space<smem>>
    %1202 = vector.broadcast %1201 : f32 to vector<8x178xf32>
    %1203 = arith.mulf %236, %1202 : vector<8x178xf32>
    %1204 = arith.addf %1200, %1203 : vector<8x178xf32>
    %c231 = arith.constant 231 : index
    %1205 = memref.load %arg4[%c231] : memref<384xf32, #tpu.memory_space<smem>>
    %1206 = vector.broadcast %1205 : f32 to vector<8x178xf32>
    %1207 = arith.mulf %237, %1206 : vector<8x178xf32>
    %1208 = arith.addf %1204, %1207 : vector<8x178xf32>
    %c232 = arith.constant 232 : index
    %1209 = memref.load %arg4[%c232] : memref<384xf32, #tpu.memory_space<smem>>
    %1210 = vector.broadcast %1209 : f32 to vector<8x178xf32>
    %1211 = arith.mulf %238, %1210 : vector<8x178xf32>
    %1212 = arith.addf %1208, %1211 : vector<8x178xf32>
    %c233 = arith.constant 233 : index
    %1213 = memref.load %arg4[%c233] : memref<384xf32, #tpu.memory_space<smem>>
    %1214 = vector.broadcast %1213 : f32 to vector<8x178xf32>
    %1215 = arith.mulf %239, %1214 : vector<8x178xf32>
    %1216 = arith.addf %1212, %1215 : vector<8x178xf32>
    %c234 = arith.constant 234 : index
    %1217 = memref.load %arg4[%c234] : memref<384xf32, #tpu.memory_space<smem>>
    %1218 = vector.broadcast %1217 : f32 to vector<8x178xf32>
    %1219 = arith.mulf %240, %1218 : vector<8x178xf32>
    %1220 = arith.addf %1216, %1219 : vector<8x178xf32>
    %c235 = arith.constant 235 : index
    %1221 = memref.load %arg4[%c235] : memref<384xf32, #tpu.memory_space<smem>>
    %1222 = vector.broadcast %1221 : f32 to vector<8x178xf32>
    %1223 = arith.mulf %241, %1222 : vector<8x178xf32>
    %1224 = arith.addf %1220, %1223 : vector<8x178xf32>
    %c236 = arith.constant 236 : index
    %1225 = memref.load %arg4[%c236] : memref<384xf32, #tpu.memory_space<smem>>
    %1226 = vector.broadcast %1225 : f32 to vector<8x178xf32>
    %1227 = arith.mulf %242, %1226 : vector<8x178xf32>
    %1228 = arith.addf %1224, %1227 : vector<8x178xf32>
    %c237 = arith.constant 237 : index
    %1229 = memref.load %arg4[%c237] : memref<384xf32, #tpu.memory_space<smem>>
    %1230 = vector.broadcast %1229 : f32 to vector<8x178xf32>
    %1231 = arith.mulf %243, %1230 : vector<8x178xf32>
    %1232 = arith.addf %1228, %1231 : vector<8x178xf32>
    %c238 = arith.constant 238 : index
    %1233 = memref.load %arg4[%c238] : memref<384xf32, #tpu.memory_space<smem>>
    %1234 = vector.broadcast %1233 : f32 to vector<8x178xf32>
    %1235 = arith.mulf %244, %1234 : vector<8x178xf32>
    %1236 = arith.addf %1232, %1235 : vector<8x178xf32>
    %c239 = arith.constant 239 : index
    %1237 = memref.load %arg4[%c239] : memref<384xf32, #tpu.memory_space<smem>>
    %1238 = vector.broadcast %1237 : f32 to vector<8x178xf32>
    %1239 = arith.mulf %245, %1238 : vector<8x178xf32>
    %1240 = arith.addf %1236, %1239 : vector<8x178xf32>
    %c9_75 = arith.constant 9 : index
    %1241 = memref.load %arg5[%c9_75] : memref<16xf32, #tpu.memory_space<smem>>
    %1242 = vector.broadcast %1241 : f32 to vector<8x178xf32>
    %1243 = arith.addf %1240, %1242 : vector<8x178xf32>
    %cst_76 = arith.constant 0.000000e+00 : f32
    %1244 = vector.broadcast %cst_76 : f32 to vector<8x178xf32>
    %1245 = arith.maximumf %1243, %1244 : vector<8x178xf32>
    %c240 = arith.constant 240 : index
    %1246 = memref.load %arg4[%c240] : memref<384xf32, #tpu.memory_space<smem>>
    %1247 = vector.broadcast %1246 : f32 to vector<8x178xf32>
    %1248 = arith.mulf %222, %1247 : vector<8x178xf32>
    %c241 = arith.constant 241 : index
    %1249 = memref.load %arg4[%c241] : memref<384xf32, #tpu.memory_space<smem>>
    %1250 = vector.broadcast %1249 : f32 to vector<8x178xf32>
    %1251 = arith.mulf %223, %1250 : vector<8x178xf32>
    %1252 = arith.addf %1248, %1251 : vector<8x178xf32>
    %c242 = arith.constant 242 : index
    %1253 = memref.load %arg4[%c242] : memref<384xf32, #tpu.memory_space<smem>>
    %1254 = vector.broadcast %1253 : f32 to vector<8x178xf32>
    %1255 = arith.mulf %224, %1254 : vector<8x178xf32>
    %1256 = arith.addf %1252, %1255 : vector<8x178xf32>
    %c243 = arith.constant 243 : index
    %1257 = memref.load %arg4[%c243] : memref<384xf32, #tpu.memory_space<smem>>
    %1258 = vector.broadcast %1257 : f32 to vector<8x178xf32>
    %1259 = arith.mulf %225, %1258 : vector<8x178xf32>
    %1260 = arith.addf %1256, %1259 : vector<8x178xf32>
    %c244 = arith.constant 244 : index
    %1261 = memref.load %arg4[%c244] : memref<384xf32, #tpu.memory_space<smem>>
    %1262 = vector.broadcast %1261 : f32 to vector<8x178xf32>
    %1263 = arith.mulf %226, %1262 : vector<8x178xf32>
    %1264 = arith.addf %1260, %1263 : vector<8x178xf32>
    %c245 = arith.constant 245 : index
    %1265 = memref.load %arg4[%c245] : memref<384xf32, #tpu.memory_space<smem>>
    %1266 = vector.broadcast %1265 : f32 to vector<8x178xf32>
    %1267 = arith.mulf %227, %1266 : vector<8x178xf32>
    %1268 = arith.addf %1264, %1267 : vector<8x178xf32>
    %c246 = arith.constant 246 : index
    %1269 = memref.load %arg4[%c246] : memref<384xf32, #tpu.memory_space<smem>>
    %1270 = vector.broadcast %1269 : f32 to vector<8x178xf32>
    %1271 = arith.mulf %228, %1270 : vector<8x178xf32>
    %1272 = arith.addf %1268, %1271 : vector<8x178xf32>
    %c247 = arith.constant 247 : index
    %1273 = memref.load %arg4[%c247] : memref<384xf32, #tpu.memory_space<smem>>
    %1274 = vector.broadcast %1273 : f32 to vector<8x178xf32>
    %1275 = arith.mulf %229, %1274 : vector<8x178xf32>
    %1276 = arith.addf %1272, %1275 : vector<8x178xf32>
    %c248 = arith.constant 248 : index
    %1277 = memref.load %arg4[%c248] : memref<384xf32, #tpu.memory_space<smem>>
    %1278 = vector.broadcast %1277 : f32 to vector<8x178xf32>
    %1279 = arith.mulf %230, %1278 : vector<8x178xf32>
    %1280 = arith.addf %1276, %1279 : vector<8x178xf32>
    %c249 = arith.constant 249 : index
    %1281 = memref.load %arg4[%c249] : memref<384xf32, #tpu.memory_space<smem>>
    %1282 = vector.broadcast %1281 : f32 to vector<8x178xf32>
    %1283 = arith.mulf %231, %1282 : vector<8x178xf32>
    %1284 = arith.addf %1280, %1283 : vector<8x178xf32>
    %c250 = arith.constant 250 : index
    %1285 = memref.load %arg4[%c250] : memref<384xf32, #tpu.memory_space<smem>>
    %1286 = vector.broadcast %1285 : f32 to vector<8x178xf32>
    %1287 = arith.mulf %232, %1286 : vector<8x178xf32>
    %1288 = arith.addf %1284, %1287 : vector<8x178xf32>
    %c251 = arith.constant 251 : index
    %1289 = memref.load %arg4[%c251] : memref<384xf32, #tpu.memory_space<smem>>
    %1290 = vector.broadcast %1289 : f32 to vector<8x178xf32>
    %1291 = arith.mulf %233, %1290 : vector<8x178xf32>
    %1292 = arith.addf %1288, %1291 : vector<8x178xf32>
    %c252 = arith.constant 252 : index
    %1293 = memref.load %arg4[%c252] : memref<384xf32, #tpu.memory_space<smem>>
    %1294 = vector.broadcast %1293 : f32 to vector<8x178xf32>
    %1295 = arith.mulf %234, %1294 : vector<8x178xf32>
    %1296 = arith.addf %1292, %1295 : vector<8x178xf32>
    %c253 = arith.constant 253 : index
    %1297 = memref.load %arg4[%c253] : memref<384xf32, #tpu.memory_space<smem>>
    %1298 = vector.broadcast %1297 : f32 to vector<8x178xf32>
    %1299 = arith.mulf %235, %1298 : vector<8x178xf32>
    %1300 = arith.addf %1296, %1299 : vector<8x178xf32>
    %c254 = arith.constant 254 : index
    %1301 = memref.load %arg4[%c254] : memref<384xf32, #tpu.memory_space<smem>>
    %1302 = vector.broadcast %1301 : f32 to vector<8x178xf32>
    %1303 = arith.mulf %236, %1302 : vector<8x178xf32>
    %1304 = arith.addf %1300, %1303 : vector<8x178xf32>
    %c255 = arith.constant 255 : index
    %1305 = memref.load %arg4[%c255] : memref<384xf32, #tpu.memory_space<smem>>
    %1306 = vector.broadcast %1305 : f32 to vector<8x178xf32>
    %1307 = arith.mulf %237, %1306 : vector<8x178xf32>
    %1308 = arith.addf %1304, %1307 : vector<8x178xf32>
    %c256 = arith.constant 256 : index
    %1309 = memref.load %arg4[%c256] : memref<384xf32, #tpu.memory_space<smem>>
    %1310 = vector.broadcast %1309 : f32 to vector<8x178xf32>
    %1311 = arith.mulf %238, %1310 : vector<8x178xf32>
    %1312 = arith.addf %1308, %1311 : vector<8x178xf32>
    %c257 = arith.constant 257 : index
    %1313 = memref.load %arg4[%c257] : memref<384xf32, #tpu.memory_space<smem>>
    %1314 = vector.broadcast %1313 : f32 to vector<8x178xf32>
    %1315 = arith.mulf %239, %1314 : vector<8x178xf32>
    %1316 = arith.addf %1312, %1315 : vector<8x178xf32>
    %c258 = arith.constant 258 : index
    %1317 = memref.load %arg4[%c258] : memref<384xf32, #tpu.memory_space<smem>>
    %1318 = vector.broadcast %1317 : f32 to vector<8x178xf32>
    %1319 = arith.mulf %240, %1318 : vector<8x178xf32>
    %1320 = arith.addf %1316, %1319 : vector<8x178xf32>
    %c259 = arith.constant 259 : index
    %1321 = memref.load %arg4[%c259] : memref<384xf32, #tpu.memory_space<smem>>
    %1322 = vector.broadcast %1321 : f32 to vector<8x178xf32>
    %1323 = arith.mulf %241, %1322 : vector<8x178xf32>
    %1324 = arith.addf %1320, %1323 : vector<8x178xf32>
    %c260 = arith.constant 260 : index
    %1325 = memref.load %arg4[%c260] : memref<384xf32, #tpu.memory_space<smem>>
    %1326 = vector.broadcast %1325 : f32 to vector<8x178xf32>
    %1327 = arith.mulf %242, %1326 : vector<8x178xf32>
    %1328 = arith.addf %1324, %1327 : vector<8x178xf32>
    %c261 = arith.constant 261 : index
    %1329 = memref.load %arg4[%c261] : memref<384xf32, #tpu.memory_space<smem>>
    %1330 = vector.broadcast %1329 : f32 to vector<8x178xf32>
    %1331 = arith.mulf %243, %1330 : vector<8x178xf32>
    %1332 = arith.addf %1328, %1331 : vector<8x178xf32>
    %c262 = arith.constant 262 : index
    %1333 = memref.load %arg4[%c262] : memref<384xf32, #tpu.memory_space<smem>>
    %1334 = vector.broadcast %1333 : f32 to vector<8x178xf32>
    %1335 = arith.mulf %244, %1334 : vector<8x178xf32>
    %1336 = arith.addf %1332, %1335 : vector<8x178xf32>
    %c263 = arith.constant 263 : index
    %1337 = memref.load %arg4[%c263] : memref<384xf32, #tpu.memory_space<smem>>
    %1338 = vector.broadcast %1337 : f32 to vector<8x178xf32>
    %1339 = arith.mulf %245, %1338 : vector<8x178xf32>
    %1340 = arith.addf %1336, %1339 : vector<8x178xf32>
    %c10_77 = arith.constant 10 : index
    %1341 = memref.load %arg5[%c10_77] : memref<16xf32, #tpu.memory_space<smem>>
    %1342 = vector.broadcast %1341 : f32 to vector<8x178xf32>
    %1343 = arith.addf %1340, %1342 : vector<8x178xf32>
    %cst_78 = arith.constant 0.000000e+00 : f32
    %1344 = vector.broadcast %cst_78 : f32 to vector<8x178xf32>
    %1345 = arith.maximumf %1343, %1344 : vector<8x178xf32>
    %c264 = arith.constant 264 : index
    %1346 = memref.load %arg4[%c264] : memref<384xf32, #tpu.memory_space<smem>>
    %1347 = vector.broadcast %1346 : f32 to vector<8x178xf32>
    %1348 = arith.mulf %222, %1347 : vector<8x178xf32>
    %c265 = arith.constant 265 : index
    %1349 = memref.load %arg4[%c265] : memref<384xf32, #tpu.memory_space<smem>>
    %1350 = vector.broadcast %1349 : f32 to vector<8x178xf32>
    %1351 = arith.mulf %223, %1350 : vector<8x178xf32>
    %1352 = arith.addf %1348, %1351 : vector<8x178xf32>
    %c266 = arith.constant 266 : index
    %1353 = memref.load %arg4[%c266] : memref<384xf32, #tpu.memory_space<smem>>
    %1354 = vector.broadcast %1353 : f32 to vector<8x178xf32>
    %1355 = arith.mulf %224, %1354 : vector<8x178xf32>
    %1356 = arith.addf %1352, %1355 : vector<8x178xf32>
    %c267 = arith.constant 267 : index
    %1357 = memref.load %arg4[%c267] : memref<384xf32, #tpu.memory_space<smem>>
    %1358 = vector.broadcast %1357 : f32 to vector<8x178xf32>
    %1359 = arith.mulf %225, %1358 : vector<8x178xf32>
    %1360 = arith.addf %1356, %1359 : vector<8x178xf32>
    %c268 = arith.constant 268 : index
    %1361 = memref.load %arg4[%c268] : memref<384xf32, #tpu.memory_space<smem>>
    %1362 = vector.broadcast %1361 : f32 to vector<8x178xf32>
    %1363 = arith.mulf %226, %1362 : vector<8x178xf32>
    %1364 = arith.addf %1360, %1363 : vector<8x178xf32>
    %c269 = arith.constant 269 : index
    %1365 = memref.load %arg4[%c269] : memref<384xf32, #tpu.memory_space<smem>>
    %1366 = vector.broadcast %1365 : f32 to vector<8x178xf32>
    %1367 = arith.mulf %227, %1366 : vector<8x178xf32>
    %1368 = arith.addf %1364, %1367 : vector<8x178xf32>
    %c270 = arith.constant 270 : index
    %1369 = memref.load %arg4[%c270] : memref<384xf32, #tpu.memory_space<smem>>
    %1370 = vector.broadcast %1369 : f32 to vector<8x178xf32>
    %1371 = arith.mulf %228, %1370 : vector<8x178xf32>
    %1372 = arith.addf %1368, %1371 : vector<8x178xf32>
    %c271 = arith.constant 271 : index
    %1373 = memref.load %arg4[%c271] : memref<384xf32, #tpu.memory_space<smem>>
    %1374 = vector.broadcast %1373 : f32 to vector<8x178xf32>
    %1375 = arith.mulf %229, %1374 : vector<8x178xf32>
    %1376 = arith.addf %1372, %1375 : vector<8x178xf32>
    %c272 = arith.constant 272 : index
    %1377 = memref.load %arg4[%c272] : memref<384xf32, #tpu.memory_space<smem>>
    %1378 = vector.broadcast %1377 : f32 to vector<8x178xf32>
    %1379 = arith.mulf %230, %1378 : vector<8x178xf32>
    %1380 = arith.addf %1376, %1379 : vector<8x178xf32>
    %c273 = arith.constant 273 : index
    %1381 = memref.load %arg4[%c273] : memref<384xf32, #tpu.memory_space<smem>>
    %1382 = vector.broadcast %1381 : f32 to vector<8x178xf32>
    %1383 = arith.mulf %231, %1382 : vector<8x178xf32>
    %1384 = arith.addf %1380, %1383 : vector<8x178xf32>
    %c274 = arith.constant 274 : index
    %1385 = memref.load %arg4[%c274] : memref<384xf32, #tpu.memory_space<smem>>
    %1386 = vector.broadcast %1385 : f32 to vector<8x178xf32>
    %1387 = arith.mulf %232, %1386 : vector<8x178xf32>
    %1388 = arith.addf %1384, %1387 : vector<8x178xf32>
    %c275 = arith.constant 275 : index
    %1389 = memref.load %arg4[%c275] : memref<384xf32, #tpu.memory_space<smem>>
    %1390 = vector.broadcast %1389 : f32 to vector<8x178xf32>
    %1391 = arith.mulf %233, %1390 : vector<8x178xf32>
    %1392 = arith.addf %1388, %1391 : vector<8x178xf32>
    %c276 = arith.constant 276 : index
    %1393 = memref.load %arg4[%c276] : memref<384xf32, #tpu.memory_space<smem>>
    %1394 = vector.broadcast %1393 : f32 to vector<8x178xf32>
    %1395 = arith.mulf %234, %1394 : vector<8x178xf32>
    %1396 = arith.addf %1392, %1395 : vector<8x178xf32>
    %c277 = arith.constant 277 : index
    %1397 = memref.load %arg4[%c277] : memref<384xf32, #tpu.memory_space<smem>>
    %1398 = vector.broadcast %1397 : f32 to vector<8x178xf32>
    %1399 = arith.mulf %235, %1398 : vector<8x178xf32>
    %1400 = arith.addf %1396, %1399 : vector<8x178xf32>
    %c278 = arith.constant 278 : index
    %1401 = memref.load %arg4[%c278] : memref<384xf32, #tpu.memory_space<smem>>
    %1402 = vector.broadcast %1401 : f32 to vector<8x178xf32>
    %1403 = arith.mulf %236, %1402 : vector<8x178xf32>
    %1404 = arith.addf %1400, %1403 : vector<8x178xf32>
    %c279 = arith.constant 279 : index
    %1405 = memref.load %arg4[%c279] : memref<384xf32, #tpu.memory_space<smem>>
    %1406 = vector.broadcast %1405 : f32 to vector<8x178xf32>
    %1407 = arith.mulf %237, %1406 : vector<8x178xf32>
    %1408 = arith.addf %1404, %1407 : vector<8x178xf32>
    %c280 = arith.constant 280 : index
    %1409 = memref.load %arg4[%c280] : memref<384xf32, #tpu.memory_space<smem>>
    %1410 = vector.broadcast %1409 : f32 to vector<8x178xf32>
    %1411 = arith.mulf %238, %1410 : vector<8x178xf32>
    %1412 = arith.addf %1408, %1411 : vector<8x178xf32>
    %c281 = arith.constant 281 : index
    %1413 = memref.load %arg4[%c281] : memref<384xf32, #tpu.memory_space<smem>>
    %1414 = vector.broadcast %1413 : f32 to vector<8x178xf32>
    %1415 = arith.mulf %239, %1414 : vector<8x178xf32>
    %1416 = arith.addf %1412, %1415 : vector<8x178xf32>
    %c282 = arith.constant 282 : index
    %1417 = memref.load %arg4[%c282] : memref<384xf32, #tpu.memory_space<smem>>
    %1418 = vector.broadcast %1417 : f32 to vector<8x178xf32>
    %1419 = arith.mulf %240, %1418 : vector<8x178xf32>
    %1420 = arith.addf %1416, %1419 : vector<8x178xf32>
    %c283 = arith.constant 283 : index
    %1421 = memref.load %arg4[%c283] : memref<384xf32, #tpu.memory_space<smem>>
    %1422 = vector.broadcast %1421 : f32 to vector<8x178xf32>
    %1423 = arith.mulf %241, %1422 : vector<8x178xf32>
    %1424 = arith.addf %1420, %1423 : vector<8x178xf32>
    %c284 = arith.constant 284 : index
    %1425 = memref.load %arg4[%c284] : memref<384xf32, #tpu.memory_space<smem>>
    %1426 = vector.broadcast %1425 : f32 to vector<8x178xf32>
    %1427 = arith.mulf %242, %1426 : vector<8x178xf32>
    %1428 = arith.addf %1424, %1427 : vector<8x178xf32>
    %c285 = arith.constant 285 : index
    %1429 = memref.load %arg4[%c285] : memref<384xf32, #tpu.memory_space<smem>>
    %1430 = vector.broadcast %1429 : f32 to vector<8x178xf32>
    %1431 = arith.mulf %243, %1430 : vector<8x178xf32>
    %1432 = arith.addf %1428, %1431 : vector<8x178xf32>
    %c286 = arith.constant 286 : index
    %1433 = memref.load %arg4[%c286] : memref<384xf32, #tpu.memory_space<smem>>
    %1434 = vector.broadcast %1433 : f32 to vector<8x178xf32>
    %1435 = arith.mulf %244, %1434 : vector<8x178xf32>
    %1436 = arith.addf %1432, %1435 : vector<8x178xf32>
    %c287 = arith.constant 287 : index
    %1437 = memref.load %arg4[%c287] : memref<384xf32, #tpu.memory_space<smem>>
    %1438 = vector.broadcast %1437 : f32 to vector<8x178xf32>
    %1439 = arith.mulf %245, %1438 : vector<8x178xf32>
    %1440 = arith.addf %1436, %1439 : vector<8x178xf32>
    %c11_79 = arith.constant 11 : index
    %1441 = memref.load %arg5[%c11_79] : memref<16xf32, #tpu.memory_space<smem>>
    %1442 = vector.broadcast %1441 : f32 to vector<8x178xf32>
    %1443 = arith.addf %1440, %1442 : vector<8x178xf32>
    %cst_80 = arith.constant 0.000000e+00 : f32
    %1444 = vector.broadcast %cst_80 : f32 to vector<8x178xf32>
    %1445 = arith.maximumf %1443, %1444 : vector<8x178xf32>
    %c288 = arith.constant 288 : index
    %1446 = memref.load %arg4[%c288] : memref<384xf32, #tpu.memory_space<smem>>
    %1447 = vector.broadcast %1446 : f32 to vector<8x178xf32>
    %1448 = arith.mulf %222, %1447 : vector<8x178xf32>
    %c289 = arith.constant 289 : index
    %1449 = memref.load %arg4[%c289] : memref<384xf32, #tpu.memory_space<smem>>
    %1450 = vector.broadcast %1449 : f32 to vector<8x178xf32>
    %1451 = arith.mulf %223, %1450 : vector<8x178xf32>
    %1452 = arith.addf %1448, %1451 : vector<8x178xf32>
    %c290 = arith.constant 290 : index
    %1453 = memref.load %arg4[%c290] : memref<384xf32, #tpu.memory_space<smem>>
    %1454 = vector.broadcast %1453 : f32 to vector<8x178xf32>
    %1455 = arith.mulf %224, %1454 : vector<8x178xf32>
    %1456 = arith.addf %1452, %1455 : vector<8x178xf32>
    %c291 = arith.constant 291 : index
    %1457 = memref.load %arg4[%c291] : memref<384xf32, #tpu.memory_space<smem>>
    %1458 = vector.broadcast %1457 : f32 to vector<8x178xf32>
    %1459 = arith.mulf %225, %1458 : vector<8x178xf32>
    %1460 = arith.addf %1456, %1459 : vector<8x178xf32>
    %c292 = arith.constant 292 : index
    %1461 = memref.load %arg4[%c292] : memref<384xf32, #tpu.memory_space<smem>>
    %1462 = vector.broadcast %1461 : f32 to vector<8x178xf32>
    %1463 = arith.mulf %226, %1462 : vector<8x178xf32>
    %1464 = arith.addf %1460, %1463 : vector<8x178xf32>
    %c293 = arith.constant 293 : index
    %1465 = memref.load %arg4[%c293] : memref<384xf32, #tpu.memory_space<smem>>
    %1466 = vector.broadcast %1465 : f32 to vector<8x178xf32>
    %1467 = arith.mulf %227, %1466 : vector<8x178xf32>
    %1468 = arith.addf %1464, %1467 : vector<8x178xf32>
    %c294 = arith.constant 294 : index
    %1469 = memref.load %arg4[%c294] : memref<384xf32, #tpu.memory_space<smem>>
    %1470 = vector.broadcast %1469 : f32 to vector<8x178xf32>
    %1471 = arith.mulf %228, %1470 : vector<8x178xf32>
    %1472 = arith.addf %1468, %1471 : vector<8x178xf32>
    %c295 = arith.constant 295 : index
    %1473 = memref.load %arg4[%c295] : memref<384xf32, #tpu.memory_space<smem>>
    %1474 = vector.broadcast %1473 : f32 to vector<8x178xf32>
    %1475 = arith.mulf %229, %1474 : vector<8x178xf32>
    %1476 = arith.addf %1472, %1475 : vector<8x178xf32>
    %c296 = arith.constant 296 : index
    %1477 = memref.load %arg4[%c296] : memref<384xf32, #tpu.memory_space<smem>>
    %1478 = vector.broadcast %1477 : f32 to vector<8x178xf32>
    %1479 = arith.mulf %230, %1478 : vector<8x178xf32>
    %1480 = arith.addf %1476, %1479 : vector<8x178xf32>
    %c297 = arith.constant 297 : index
    %1481 = memref.load %arg4[%c297] : memref<384xf32, #tpu.memory_space<smem>>
    %1482 = vector.broadcast %1481 : f32 to vector<8x178xf32>
    %1483 = arith.mulf %231, %1482 : vector<8x178xf32>
    %1484 = arith.addf %1480, %1483 : vector<8x178xf32>
    %c298 = arith.constant 298 : index
    %1485 = memref.load %arg4[%c298] : memref<384xf32, #tpu.memory_space<smem>>
    %1486 = vector.broadcast %1485 : f32 to vector<8x178xf32>
    %1487 = arith.mulf %232, %1486 : vector<8x178xf32>
    %1488 = arith.addf %1484, %1487 : vector<8x178xf32>
    %c299 = arith.constant 299 : index
    %1489 = memref.load %arg4[%c299] : memref<384xf32, #tpu.memory_space<smem>>
    %1490 = vector.broadcast %1489 : f32 to vector<8x178xf32>
    %1491 = arith.mulf %233, %1490 : vector<8x178xf32>
    %1492 = arith.addf %1488, %1491 : vector<8x178xf32>
    %c300 = arith.constant 300 : index
    %1493 = memref.load %arg4[%c300] : memref<384xf32, #tpu.memory_space<smem>>
    %1494 = vector.broadcast %1493 : f32 to vector<8x178xf32>
    %1495 = arith.mulf %234, %1494 : vector<8x178xf32>
    %1496 = arith.addf %1492, %1495 : vector<8x178xf32>
    %c301 = arith.constant 301 : index
    %1497 = memref.load %arg4[%c301] : memref<384xf32, #tpu.memory_space<smem>>
    %1498 = vector.broadcast %1497 : f32 to vector<8x178xf32>
    %1499 = arith.mulf %235, %1498 : vector<8x178xf32>
    %1500 = arith.addf %1496, %1499 : vector<8x178xf32>
    %c302 = arith.constant 302 : index
    %1501 = memref.load %arg4[%c302] : memref<384xf32, #tpu.memory_space<smem>>
    %1502 = vector.broadcast %1501 : f32 to vector<8x178xf32>
    %1503 = arith.mulf %236, %1502 : vector<8x178xf32>
    %1504 = arith.addf %1500, %1503 : vector<8x178xf32>
    %c303 = arith.constant 303 : index
    %1505 = memref.load %arg4[%c303] : memref<384xf32, #tpu.memory_space<smem>>
    %1506 = vector.broadcast %1505 : f32 to vector<8x178xf32>
    %1507 = arith.mulf %237, %1506 : vector<8x178xf32>
    %1508 = arith.addf %1504, %1507 : vector<8x178xf32>
    %c304 = arith.constant 304 : index
    %1509 = memref.load %arg4[%c304] : memref<384xf32, #tpu.memory_space<smem>>
    %1510 = vector.broadcast %1509 : f32 to vector<8x178xf32>
    %1511 = arith.mulf %238, %1510 : vector<8x178xf32>
    %1512 = arith.addf %1508, %1511 : vector<8x178xf32>
    %c305 = arith.constant 305 : index
    %1513 = memref.load %arg4[%c305] : memref<384xf32, #tpu.memory_space<smem>>
    %1514 = vector.broadcast %1513 : f32 to vector<8x178xf32>
    %1515 = arith.mulf %239, %1514 : vector<8x178xf32>
    %1516 = arith.addf %1512, %1515 : vector<8x178xf32>
    %c306 = arith.constant 306 : index
    %1517 = memref.load %arg4[%c306] : memref<384xf32, #tpu.memory_space<smem>>
    %1518 = vector.broadcast %1517 : f32 to vector<8x178xf32>
    %1519 = arith.mulf %240, %1518 : vector<8x178xf32>
    %1520 = arith.addf %1516, %1519 : vector<8x178xf32>
    %c307 = arith.constant 307 : index
    %1521 = memref.load %arg4[%c307] : memref<384xf32, #tpu.memory_space<smem>>
    %1522 = vector.broadcast %1521 : f32 to vector<8x178xf32>
    %1523 = arith.mulf %241, %1522 : vector<8x178xf32>
    %1524 = arith.addf %1520, %1523 : vector<8x178xf32>
    %c308 = arith.constant 308 : index
    %1525 = memref.load %arg4[%c308] : memref<384xf32, #tpu.memory_space<smem>>
    %1526 = vector.broadcast %1525 : f32 to vector<8x178xf32>
    %1527 = arith.mulf %242, %1526 : vector<8x178xf32>
    %1528 = arith.addf %1524, %1527 : vector<8x178xf32>
    %c309 = arith.constant 309 : index
    %1529 = memref.load %arg4[%c309] : memref<384xf32, #tpu.memory_space<smem>>
    %1530 = vector.broadcast %1529 : f32 to vector<8x178xf32>
    %1531 = arith.mulf %243, %1530 : vector<8x178xf32>
    %1532 = arith.addf %1528, %1531 : vector<8x178xf32>
    %c310 = arith.constant 310 : index
    %1533 = memref.load %arg4[%c310] : memref<384xf32, #tpu.memory_space<smem>>
    %1534 = vector.broadcast %1533 : f32 to vector<8x178xf32>
    %1535 = arith.mulf %244, %1534 : vector<8x178xf32>
    %1536 = arith.addf %1532, %1535 : vector<8x178xf32>
    %c311 = arith.constant 311 : index
    %1537 = memref.load %arg4[%c311] : memref<384xf32, #tpu.memory_space<smem>>
    %1538 = vector.broadcast %1537 : f32 to vector<8x178xf32>
    %1539 = arith.mulf %245, %1538 : vector<8x178xf32>
    %1540 = arith.addf %1536, %1539 : vector<8x178xf32>
    %c12_81 = arith.constant 12 : index
    %1541 = memref.load %arg5[%c12_81] : memref<16xf32, #tpu.memory_space<smem>>
    %1542 = vector.broadcast %1541 : f32 to vector<8x178xf32>
    %1543 = arith.addf %1540, %1542 : vector<8x178xf32>
    %cst_82 = arith.constant 0.000000e+00 : f32
    %1544 = vector.broadcast %cst_82 : f32 to vector<8x178xf32>
    %1545 = arith.maximumf %1543, %1544 : vector<8x178xf32>
    %c312 = arith.constant 312 : index
    %1546 = memref.load %arg4[%c312] : memref<384xf32, #tpu.memory_space<smem>>
    %1547 = vector.broadcast %1546 : f32 to vector<8x178xf32>
    %1548 = arith.mulf %222, %1547 : vector<8x178xf32>
    %c313 = arith.constant 313 : index
    %1549 = memref.load %arg4[%c313] : memref<384xf32, #tpu.memory_space<smem>>
    %1550 = vector.broadcast %1549 : f32 to vector<8x178xf32>
    %1551 = arith.mulf %223, %1550 : vector<8x178xf32>
    %1552 = arith.addf %1548, %1551 : vector<8x178xf32>
    %c314 = arith.constant 314 : index
    %1553 = memref.load %arg4[%c314] : memref<384xf32, #tpu.memory_space<smem>>
    %1554 = vector.broadcast %1553 : f32 to vector<8x178xf32>
    %1555 = arith.mulf %224, %1554 : vector<8x178xf32>
    %1556 = arith.addf %1552, %1555 : vector<8x178xf32>
    %c315 = arith.constant 315 : index
    %1557 = memref.load %arg4[%c315] : memref<384xf32, #tpu.memory_space<smem>>
    %1558 = vector.broadcast %1557 : f32 to vector<8x178xf32>
    %1559 = arith.mulf %225, %1558 : vector<8x178xf32>
    %1560 = arith.addf %1556, %1559 : vector<8x178xf32>
    %c316 = arith.constant 316 : index
    %1561 = memref.load %arg4[%c316] : memref<384xf32, #tpu.memory_space<smem>>
    %1562 = vector.broadcast %1561 : f32 to vector<8x178xf32>
    %1563 = arith.mulf %226, %1562 : vector<8x178xf32>
    %1564 = arith.addf %1560, %1563 : vector<8x178xf32>
    %c317 = arith.constant 317 : index
    %1565 = memref.load %arg4[%c317] : memref<384xf32, #tpu.memory_space<smem>>
    %1566 = vector.broadcast %1565 : f32 to vector<8x178xf32>
    %1567 = arith.mulf %227, %1566 : vector<8x178xf32>
    %1568 = arith.addf %1564, %1567 : vector<8x178xf32>
    %c318 = arith.constant 318 : index
    %1569 = memref.load %arg4[%c318] : memref<384xf32, #tpu.memory_space<smem>>
    %1570 = vector.broadcast %1569 : f32 to vector<8x178xf32>
    %1571 = arith.mulf %228, %1570 : vector<8x178xf32>
    %1572 = arith.addf %1568, %1571 : vector<8x178xf32>
    %c319 = arith.constant 319 : index
    %1573 = memref.load %arg4[%c319] : memref<384xf32, #tpu.memory_space<smem>>
    %1574 = vector.broadcast %1573 : f32 to vector<8x178xf32>
    %1575 = arith.mulf %229, %1574 : vector<8x178xf32>
    %1576 = arith.addf %1572, %1575 : vector<8x178xf32>
    %c320 = arith.constant 320 : index
    %1577 = memref.load %arg4[%c320] : memref<384xf32, #tpu.memory_space<smem>>
    %1578 = vector.broadcast %1577 : f32 to vector<8x178xf32>
    %1579 = arith.mulf %230, %1578 : vector<8x178xf32>
    %1580 = arith.addf %1576, %1579 : vector<8x178xf32>
    %c321 = arith.constant 321 : index
    %1581 = memref.load %arg4[%c321] : memref<384xf32, #tpu.memory_space<smem>>
    %1582 = vector.broadcast %1581 : f32 to vector<8x178xf32>
    %1583 = arith.mulf %231, %1582 : vector<8x178xf32>
    %1584 = arith.addf %1580, %1583 : vector<8x178xf32>
    %c322 = arith.constant 322 : index
    %1585 = memref.load %arg4[%c322] : memref<384xf32, #tpu.memory_space<smem>>
    %1586 = vector.broadcast %1585 : f32 to vector<8x178xf32>
    %1587 = arith.mulf %232, %1586 : vector<8x178xf32>
    %1588 = arith.addf %1584, %1587 : vector<8x178xf32>
    %c323 = arith.constant 323 : index
    %1589 = memref.load %arg4[%c323] : memref<384xf32, #tpu.memory_space<smem>>
    %1590 = vector.broadcast %1589 : f32 to vector<8x178xf32>
    %1591 = arith.mulf %233, %1590 : vector<8x178xf32>
    %1592 = arith.addf %1588, %1591 : vector<8x178xf32>
    %c324 = arith.constant 324 : index
    %1593 = memref.load %arg4[%c324] : memref<384xf32, #tpu.memory_space<smem>>
    %1594 = vector.broadcast %1593 : f32 to vector<8x178xf32>
    %1595 = arith.mulf %234, %1594 : vector<8x178xf32>
    %1596 = arith.addf %1592, %1595 : vector<8x178xf32>
    %c325 = arith.constant 325 : index
    %1597 = memref.load %arg4[%c325] : memref<384xf32, #tpu.memory_space<smem>>
    %1598 = vector.broadcast %1597 : f32 to vector<8x178xf32>
    %1599 = arith.mulf %235, %1598 : vector<8x178xf32>
    %1600 = arith.addf %1596, %1599 : vector<8x178xf32>
    %c326 = arith.constant 326 : index
    %1601 = memref.load %arg4[%c326] : memref<384xf32, #tpu.memory_space<smem>>
    %1602 = vector.broadcast %1601 : f32 to vector<8x178xf32>
    %1603 = arith.mulf %236, %1602 : vector<8x178xf32>
    %1604 = arith.addf %1600, %1603 : vector<8x178xf32>
    %c327 = arith.constant 327 : index
    %1605 = memref.load %arg4[%c327] : memref<384xf32, #tpu.memory_space<smem>>
    %1606 = vector.broadcast %1605 : f32 to vector<8x178xf32>
    %1607 = arith.mulf %237, %1606 : vector<8x178xf32>
    %1608 = arith.addf %1604, %1607 : vector<8x178xf32>
    %c328 = arith.constant 328 : index
    %1609 = memref.load %arg4[%c328] : memref<384xf32, #tpu.memory_space<smem>>
    %1610 = vector.broadcast %1609 : f32 to vector<8x178xf32>
    %1611 = arith.mulf %238, %1610 : vector<8x178xf32>
    %1612 = arith.addf %1608, %1611 : vector<8x178xf32>
    %c329 = arith.constant 329 : index
    %1613 = memref.load %arg4[%c329] : memref<384xf32, #tpu.memory_space<smem>>
    %1614 = vector.broadcast %1613 : f32 to vector<8x178xf32>
    %1615 = arith.mulf %239, %1614 : vector<8x178xf32>
    %1616 = arith.addf %1612, %1615 : vector<8x178xf32>
    %c330 = arith.constant 330 : index
    %1617 = memref.load %arg4[%c330] : memref<384xf32, #tpu.memory_space<smem>>
    %1618 = vector.broadcast %1617 : f32 to vector<8x178xf32>
    %1619 = arith.mulf %240, %1618 : vector<8x178xf32>
    %1620 = arith.addf %1616, %1619 : vector<8x178xf32>
    %c331 = arith.constant 331 : index
    %1621 = memref.load %arg4[%c331] : memref<384xf32, #tpu.memory_space<smem>>
    %1622 = vector.broadcast %1621 : f32 to vector<8x178xf32>
    %1623 = arith.mulf %241, %1622 : vector<8x178xf32>
    %1624 = arith.addf %1620, %1623 : vector<8x178xf32>
    %c332 = arith.constant 332 : index
    %1625 = memref.load %arg4[%c332] : memref<384xf32, #tpu.memory_space<smem>>
    %1626 = vector.broadcast %1625 : f32 to vector<8x178xf32>
    %1627 = arith.mulf %242, %1626 : vector<8x178xf32>
    %1628 = arith.addf %1624, %1627 : vector<8x178xf32>
    %c333 = arith.constant 333 : index
    %1629 = memref.load %arg4[%c333] : memref<384xf32, #tpu.memory_space<smem>>
    %1630 = vector.broadcast %1629 : f32 to vector<8x178xf32>
    %1631 = arith.mulf %243, %1630 : vector<8x178xf32>
    %1632 = arith.addf %1628, %1631 : vector<8x178xf32>
    %c334 = arith.constant 334 : index
    %1633 = memref.load %arg4[%c334] : memref<384xf32, #tpu.memory_space<smem>>
    %1634 = vector.broadcast %1633 : f32 to vector<8x178xf32>
    %1635 = arith.mulf %244, %1634 : vector<8x178xf32>
    %1636 = arith.addf %1632, %1635 : vector<8x178xf32>
    %c335 = arith.constant 335 : index
    %1637 = memref.load %arg4[%c335] : memref<384xf32, #tpu.memory_space<smem>>
    %1638 = vector.broadcast %1637 : f32 to vector<8x178xf32>
    %1639 = arith.mulf %245, %1638 : vector<8x178xf32>
    %1640 = arith.addf %1636, %1639 : vector<8x178xf32>
    %c13_83 = arith.constant 13 : index
    %1641 = memref.load %arg5[%c13_83] : memref<16xf32, #tpu.memory_space<smem>>
    %1642 = vector.broadcast %1641 : f32 to vector<8x178xf32>
    %1643 = arith.addf %1640, %1642 : vector<8x178xf32>
    %cst_84 = arith.constant 0.000000e+00 : f32
    %1644 = vector.broadcast %cst_84 : f32 to vector<8x178xf32>
    %1645 = arith.maximumf %1643, %1644 : vector<8x178xf32>
    %c336 = arith.constant 336 : index
    %1646 = memref.load %arg4[%c336] : memref<384xf32, #tpu.memory_space<smem>>
    %1647 = vector.broadcast %1646 : f32 to vector<8x178xf32>
    %1648 = arith.mulf %222, %1647 : vector<8x178xf32>
    %c337 = arith.constant 337 : index
    %1649 = memref.load %arg4[%c337] : memref<384xf32, #tpu.memory_space<smem>>
    %1650 = vector.broadcast %1649 : f32 to vector<8x178xf32>
    %1651 = arith.mulf %223, %1650 : vector<8x178xf32>
    %1652 = arith.addf %1648, %1651 : vector<8x178xf32>
    %c338 = arith.constant 338 : index
    %1653 = memref.load %arg4[%c338] : memref<384xf32, #tpu.memory_space<smem>>
    %1654 = vector.broadcast %1653 : f32 to vector<8x178xf32>
    %1655 = arith.mulf %224, %1654 : vector<8x178xf32>
    %1656 = arith.addf %1652, %1655 : vector<8x178xf32>
    %c339 = arith.constant 339 : index
    %1657 = memref.load %arg4[%c339] : memref<384xf32, #tpu.memory_space<smem>>
    %1658 = vector.broadcast %1657 : f32 to vector<8x178xf32>
    %1659 = arith.mulf %225, %1658 : vector<8x178xf32>
    %1660 = arith.addf %1656, %1659 : vector<8x178xf32>
    %c340 = arith.constant 340 : index
    %1661 = memref.load %arg4[%c340] : memref<384xf32, #tpu.memory_space<smem>>
    %1662 = vector.broadcast %1661 : f32 to vector<8x178xf32>
    %1663 = arith.mulf %226, %1662 : vector<8x178xf32>
    %1664 = arith.addf %1660, %1663 : vector<8x178xf32>
    %c341 = arith.constant 341 : index
    %1665 = memref.load %arg4[%c341] : memref<384xf32, #tpu.memory_space<smem>>
    %1666 = vector.broadcast %1665 : f32 to vector<8x178xf32>
    %1667 = arith.mulf %227, %1666 : vector<8x178xf32>
    %1668 = arith.addf %1664, %1667 : vector<8x178xf32>
    %c342 = arith.constant 342 : index
    %1669 = memref.load %arg4[%c342] : memref<384xf32, #tpu.memory_space<smem>>
    %1670 = vector.broadcast %1669 : f32 to vector<8x178xf32>
    %1671 = arith.mulf %228, %1670 : vector<8x178xf32>
    %1672 = arith.addf %1668, %1671 : vector<8x178xf32>
    %c343 = arith.constant 343 : index
    %1673 = memref.load %arg4[%c343] : memref<384xf32, #tpu.memory_space<smem>>
    %1674 = vector.broadcast %1673 : f32 to vector<8x178xf32>
    %1675 = arith.mulf %229, %1674 : vector<8x178xf32>
    %1676 = arith.addf %1672, %1675 : vector<8x178xf32>
    %c344 = arith.constant 344 : index
    %1677 = memref.load %arg4[%c344] : memref<384xf32, #tpu.memory_space<smem>>
    %1678 = vector.broadcast %1677 : f32 to vector<8x178xf32>
    %1679 = arith.mulf %230, %1678 : vector<8x178xf32>
    %1680 = arith.addf %1676, %1679 : vector<8x178xf32>
    %c345 = arith.constant 345 : index
    %1681 = memref.load %arg4[%c345] : memref<384xf32, #tpu.memory_space<smem>>
    %1682 = vector.broadcast %1681 : f32 to vector<8x178xf32>
    %1683 = arith.mulf %231, %1682 : vector<8x178xf32>
    %1684 = arith.addf %1680, %1683 : vector<8x178xf32>
    %c346 = arith.constant 346 : index
    %1685 = memref.load %arg4[%c346] : memref<384xf32, #tpu.memory_space<smem>>
    %1686 = vector.broadcast %1685 : f32 to vector<8x178xf32>
    %1687 = arith.mulf %232, %1686 : vector<8x178xf32>
    %1688 = arith.addf %1684, %1687 : vector<8x178xf32>
    %c347 = arith.constant 347 : index
    %1689 = memref.load %arg4[%c347] : memref<384xf32, #tpu.memory_space<smem>>
    %1690 = vector.broadcast %1689 : f32 to vector<8x178xf32>
    %1691 = arith.mulf %233, %1690 : vector<8x178xf32>
    %1692 = arith.addf %1688, %1691 : vector<8x178xf32>
    %c348 = arith.constant 348 : index
    %1693 = memref.load %arg4[%c348] : memref<384xf32, #tpu.memory_space<smem>>
    %1694 = vector.broadcast %1693 : f32 to vector<8x178xf32>
    %1695 = arith.mulf %234, %1694 : vector<8x178xf32>
    %1696 = arith.addf %1692, %1695 : vector<8x178xf32>
    %c349 = arith.constant 349 : index
    %1697 = memref.load %arg4[%c349] : memref<384xf32, #tpu.memory_space<smem>>
    %1698 = vector.broadcast %1697 : f32 to vector<8x178xf32>
    %1699 = arith.mulf %235, %1698 : vector<8x178xf32>
    %1700 = arith.addf %1696, %1699 : vector<8x178xf32>
    %c350 = arith.constant 350 : index
    %1701 = memref.load %arg4[%c350] : memref<384xf32, #tpu.memory_space<smem>>
    %1702 = vector.broadcast %1701 : f32 to vector<8x178xf32>
    %1703 = arith.mulf %236, %1702 : vector<8x178xf32>
    %1704 = arith.addf %1700, %1703 : vector<8x178xf32>
    %c351 = arith.constant 351 : index
    %1705 = memref.load %arg4[%c351] : memref<384xf32, #tpu.memory_space<smem>>
    %1706 = vector.broadcast %1705 : f32 to vector<8x178xf32>
    %1707 = arith.mulf %237, %1706 : vector<8x178xf32>
    %1708 = arith.addf %1704, %1707 : vector<8x178xf32>
    %c352 = arith.constant 352 : index
    %1709 = memref.load %arg4[%c352] : memref<384xf32, #tpu.memory_space<smem>>
    %1710 = vector.broadcast %1709 : f32 to vector<8x178xf32>
    %1711 = arith.mulf %238, %1710 : vector<8x178xf32>
    %1712 = arith.addf %1708, %1711 : vector<8x178xf32>
    %c353 = arith.constant 353 : index
    %1713 = memref.load %arg4[%c353] : memref<384xf32, #tpu.memory_space<smem>>
    %1714 = vector.broadcast %1713 : f32 to vector<8x178xf32>
    %1715 = arith.mulf %239, %1714 : vector<8x178xf32>
    %1716 = arith.addf %1712, %1715 : vector<8x178xf32>
    %c354 = arith.constant 354 : index
    %1717 = memref.load %arg4[%c354] : memref<384xf32, #tpu.memory_space<smem>>
    %1718 = vector.broadcast %1717 : f32 to vector<8x178xf32>
    %1719 = arith.mulf %240, %1718 : vector<8x178xf32>
    %1720 = arith.addf %1716, %1719 : vector<8x178xf32>
    %c355 = arith.constant 355 : index
    %1721 = memref.load %arg4[%c355] : memref<384xf32, #tpu.memory_space<smem>>
    %1722 = vector.broadcast %1721 : f32 to vector<8x178xf32>
    %1723 = arith.mulf %241, %1722 : vector<8x178xf32>
    %1724 = arith.addf %1720, %1723 : vector<8x178xf32>
    %c356 = arith.constant 356 : index
    %1725 = memref.load %arg4[%c356] : memref<384xf32, #tpu.memory_space<smem>>
    %1726 = vector.broadcast %1725 : f32 to vector<8x178xf32>
    %1727 = arith.mulf %242, %1726 : vector<8x178xf32>
    %1728 = arith.addf %1724, %1727 : vector<8x178xf32>
    %c357 = arith.constant 357 : index
    %1729 = memref.load %arg4[%c357] : memref<384xf32, #tpu.memory_space<smem>>
    %1730 = vector.broadcast %1729 : f32 to vector<8x178xf32>
    %1731 = arith.mulf %243, %1730 : vector<8x178xf32>
    %1732 = arith.addf %1728, %1731 : vector<8x178xf32>
    %c358 = arith.constant 358 : index
    %1733 = memref.load %arg4[%c358] : memref<384xf32, #tpu.memory_space<smem>>
    %1734 = vector.broadcast %1733 : f32 to vector<8x178xf32>
    %1735 = arith.mulf %244, %1734 : vector<8x178xf32>
    %1736 = arith.addf %1732, %1735 : vector<8x178xf32>
    %c359 = arith.constant 359 : index
    %1737 = memref.load %arg4[%c359] : memref<384xf32, #tpu.memory_space<smem>>
    %1738 = vector.broadcast %1737 : f32 to vector<8x178xf32>
    %1739 = arith.mulf %245, %1738 : vector<8x178xf32>
    %1740 = arith.addf %1736, %1739 : vector<8x178xf32>
    %c14_85 = arith.constant 14 : index
    %1741 = memref.load %arg5[%c14_85] : memref<16xf32, #tpu.memory_space<smem>>
    %1742 = vector.broadcast %1741 : f32 to vector<8x178xf32>
    %1743 = arith.addf %1740, %1742 : vector<8x178xf32>
    %cst_86 = arith.constant 0.000000e+00 : f32
    %1744 = vector.broadcast %cst_86 : f32 to vector<8x178xf32>
    %1745 = arith.maximumf %1743, %1744 : vector<8x178xf32>
    %c360 = arith.constant 360 : index
    %1746 = memref.load %arg4[%c360] : memref<384xf32, #tpu.memory_space<smem>>
    %1747 = vector.broadcast %1746 : f32 to vector<8x178xf32>
    %1748 = arith.mulf %222, %1747 : vector<8x178xf32>
    %c361 = arith.constant 361 : index
    %1749 = memref.load %arg4[%c361] : memref<384xf32, #tpu.memory_space<smem>>
    %1750 = vector.broadcast %1749 : f32 to vector<8x178xf32>
    %1751 = arith.mulf %223, %1750 : vector<8x178xf32>
    %1752 = arith.addf %1748, %1751 : vector<8x178xf32>
    %c362 = arith.constant 362 : index
    %1753 = memref.load %arg4[%c362] : memref<384xf32, #tpu.memory_space<smem>>
    %1754 = vector.broadcast %1753 : f32 to vector<8x178xf32>
    %1755 = arith.mulf %224, %1754 : vector<8x178xf32>
    %1756 = arith.addf %1752, %1755 : vector<8x178xf32>
    %c363 = arith.constant 363 : index
    %1757 = memref.load %arg4[%c363] : memref<384xf32, #tpu.memory_space<smem>>
    %1758 = vector.broadcast %1757 : f32 to vector<8x178xf32>
    %1759 = arith.mulf %225, %1758 : vector<8x178xf32>
    %1760 = arith.addf %1756, %1759 : vector<8x178xf32>
    %c364 = arith.constant 364 : index
    %1761 = memref.load %arg4[%c364] : memref<384xf32, #tpu.memory_space<smem>>
    %1762 = vector.broadcast %1761 : f32 to vector<8x178xf32>
    %1763 = arith.mulf %226, %1762 : vector<8x178xf32>
    %1764 = arith.addf %1760, %1763 : vector<8x178xf32>
    %c365 = arith.constant 365 : index
    %1765 = memref.load %arg4[%c365] : memref<384xf32, #tpu.memory_space<smem>>
    %1766 = vector.broadcast %1765 : f32 to vector<8x178xf32>
    %1767 = arith.mulf %227, %1766 : vector<8x178xf32>
    %1768 = arith.addf %1764, %1767 : vector<8x178xf32>
    %c366 = arith.constant 366 : index
    %1769 = memref.load %arg4[%c366] : memref<384xf32, #tpu.memory_space<smem>>
    %1770 = vector.broadcast %1769 : f32 to vector<8x178xf32>
    %1771 = arith.mulf %228, %1770 : vector<8x178xf32>
    %1772 = arith.addf %1768, %1771 : vector<8x178xf32>
    %c367 = arith.constant 367 : index
    %1773 = memref.load %arg4[%c367] : memref<384xf32, #tpu.memory_space<smem>>
    %1774 = vector.broadcast %1773 : f32 to vector<8x178xf32>
    %1775 = arith.mulf %229, %1774 : vector<8x178xf32>
    %1776 = arith.addf %1772, %1775 : vector<8x178xf32>
    %c368 = arith.constant 368 : index
    %1777 = memref.load %arg4[%c368] : memref<384xf32, #tpu.memory_space<smem>>
    %1778 = vector.broadcast %1777 : f32 to vector<8x178xf32>
    %1779 = arith.mulf %230, %1778 : vector<8x178xf32>
    %1780 = arith.addf %1776, %1779 : vector<8x178xf32>
    %c369 = arith.constant 369 : index
    %1781 = memref.load %arg4[%c369] : memref<384xf32, #tpu.memory_space<smem>>
    %1782 = vector.broadcast %1781 : f32 to vector<8x178xf32>
    %1783 = arith.mulf %231, %1782 : vector<8x178xf32>
    %1784 = arith.addf %1780, %1783 : vector<8x178xf32>
    %c370 = arith.constant 370 : index
    %1785 = memref.load %arg4[%c370] : memref<384xf32, #tpu.memory_space<smem>>
    %1786 = vector.broadcast %1785 : f32 to vector<8x178xf32>
    %1787 = arith.mulf %232, %1786 : vector<8x178xf32>
    %1788 = arith.addf %1784, %1787 : vector<8x178xf32>
    %c371 = arith.constant 371 : index
    %1789 = memref.load %arg4[%c371] : memref<384xf32, #tpu.memory_space<smem>>
    %1790 = vector.broadcast %1789 : f32 to vector<8x178xf32>
    %1791 = arith.mulf %233, %1790 : vector<8x178xf32>
    %1792 = arith.addf %1788, %1791 : vector<8x178xf32>
    %c372 = arith.constant 372 : index
    %1793 = memref.load %arg4[%c372] : memref<384xf32, #tpu.memory_space<smem>>
    %1794 = vector.broadcast %1793 : f32 to vector<8x178xf32>
    %1795 = arith.mulf %234, %1794 : vector<8x178xf32>
    %1796 = arith.addf %1792, %1795 : vector<8x178xf32>
    %c373 = arith.constant 373 : index
    %1797 = memref.load %arg4[%c373] : memref<384xf32, #tpu.memory_space<smem>>
    %1798 = vector.broadcast %1797 : f32 to vector<8x178xf32>
    %1799 = arith.mulf %235, %1798 : vector<8x178xf32>
    %1800 = arith.addf %1796, %1799 : vector<8x178xf32>
    %c374 = arith.constant 374 : index
    %1801 = memref.load %arg4[%c374] : memref<384xf32, #tpu.memory_space<smem>>
    %1802 = vector.broadcast %1801 : f32 to vector<8x178xf32>
    %1803 = arith.mulf %236, %1802 : vector<8x178xf32>
    %1804 = arith.addf %1800, %1803 : vector<8x178xf32>
    %c375 = arith.constant 375 : index
    %1805 = memref.load %arg4[%c375] : memref<384xf32, #tpu.memory_space<smem>>
    %1806 = vector.broadcast %1805 : f32 to vector<8x178xf32>
    %1807 = arith.mulf %237, %1806 : vector<8x178xf32>
    %1808 = arith.addf %1804, %1807 : vector<8x178xf32>
    %c376 = arith.constant 376 : index
    %1809 = memref.load %arg4[%c376] : memref<384xf32, #tpu.memory_space<smem>>
    %1810 = vector.broadcast %1809 : f32 to vector<8x178xf32>
    %1811 = arith.mulf %238, %1810 : vector<8x178xf32>
    %1812 = arith.addf %1808, %1811 : vector<8x178xf32>
    %c377 = arith.constant 377 : index
    %1813 = memref.load %arg4[%c377] : memref<384xf32, #tpu.memory_space<smem>>
    %1814 = vector.broadcast %1813 : f32 to vector<8x178xf32>
    %1815 = arith.mulf %239, %1814 : vector<8x178xf32>
    %1816 = arith.addf %1812, %1815 : vector<8x178xf32>
    %c378 = arith.constant 378 : index
    %1817 = memref.load %arg4[%c378] : memref<384xf32, #tpu.memory_space<smem>>
    %1818 = vector.broadcast %1817 : f32 to vector<8x178xf32>
    %1819 = arith.mulf %240, %1818 : vector<8x178xf32>
    %1820 = arith.addf %1816, %1819 : vector<8x178xf32>
    %c379 = arith.constant 379 : index
    %1821 = memref.load %arg4[%c379] : memref<384xf32, #tpu.memory_space<smem>>
    %1822 = vector.broadcast %1821 : f32 to vector<8x178xf32>
    %1823 = arith.mulf %241, %1822 : vector<8x178xf32>
    %1824 = arith.addf %1820, %1823 : vector<8x178xf32>
    %c380 = arith.constant 380 : index
    %1825 = memref.load %arg4[%c380] : memref<384xf32, #tpu.memory_space<smem>>
    %1826 = vector.broadcast %1825 : f32 to vector<8x178xf32>
    %1827 = arith.mulf %242, %1826 : vector<8x178xf32>
    %1828 = arith.addf %1824, %1827 : vector<8x178xf32>
    %c381 = arith.constant 381 : index
    %1829 = memref.load %arg4[%c381] : memref<384xf32, #tpu.memory_space<smem>>
    %1830 = vector.broadcast %1829 : f32 to vector<8x178xf32>
    %1831 = arith.mulf %243, %1830 : vector<8x178xf32>
    %1832 = arith.addf %1828, %1831 : vector<8x178xf32>
    %c382 = arith.constant 382 : index
    %1833 = memref.load %arg4[%c382] : memref<384xf32, #tpu.memory_space<smem>>
    %1834 = vector.broadcast %1833 : f32 to vector<8x178xf32>
    %1835 = arith.mulf %244, %1834 : vector<8x178xf32>
    %1836 = arith.addf %1832, %1835 : vector<8x178xf32>
    %c383 = arith.constant 383 : index
    %1837 = memref.load %arg4[%c383] : memref<384xf32, #tpu.memory_space<smem>>
    %1838 = vector.broadcast %1837 : f32 to vector<8x178xf32>
    %1839 = arith.mulf %245, %1838 : vector<8x178xf32>
    %1840 = arith.addf %1836, %1839 : vector<8x178xf32>
    %c15_87 = arith.constant 15 : index
    %1841 = memref.load %arg5[%c15_87] : memref<16xf32, #tpu.memory_space<smem>>
    %1842 = vector.broadcast %1841 : f32 to vector<8x178xf32>
    %1843 = arith.addf %1840, %1842 : vector<8x178xf32>
    %cst_88 = arith.constant 0.000000e+00 : f32
    %1844 = vector.broadcast %cst_88 : f32 to vector<8x178xf32>
    %1845 = arith.maximumf %1843, %1844 : vector<8x178xf32>
    %1846 = vector.extract_strided_slice %345 {offsets = [0, 0], sizes = [8, 176], strides = [1, 1]} : vector<8x178xf32> to vector<8x176xf32>
    %1847 = vector.extract_strided_slice %345 {offsets = [0, 2], sizes = [8, 176], strides = [1, 1]} : vector<8x178xf32> to vector<8x176xf32>
    %1848 = arith.maximumf %1846, %1847 : vector<8x176xf32>
    %1849 = vector.extract_strided_slice %445 {offsets = [0, 0], sizes = [8, 176], strides = [1, 1]} : vector<8x178xf32> to vector<8x176xf32>
    %1850 = vector.extract_strided_slice %445 {offsets = [0, 2], sizes = [8, 176], strides = [1, 1]} : vector<8x178xf32> to vector<8x176xf32>
    %1851 = arith.maximumf %1849, %1850 : vector<8x176xf32>
    %1852 = vector.extract_strided_slice %545 {offsets = [0, 0], sizes = [8, 176], strides = [1, 1]} : vector<8x178xf32> to vector<8x176xf32>
    %1853 = vector.extract_strided_slice %545 {offsets = [0, 2], sizes = [8, 176], strides = [1, 1]} : vector<8x178xf32> to vector<8x176xf32>
    %1854 = arith.maximumf %1852, %1853 : vector<8x176xf32>
    %1855 = vector.extract_strided_slice %645 {offsets = [0, 0], sizes = [8, 176], strides = [1, 1]} : vector<8x178xf32> to vector<8x176xf32>
    %1856 = vector.extract_strided_slice %645 {offsets = [0, 2], sizes = [8, 176], strides = [1, 1]} : vector<8x178xf32> to vector<8x176xf32>
    %1857 = arith.maximumf %1855, %1856 : vector<8x176xf32>
    %1858 = vector.extract_strided_slice %745 {offsets = [0, 0], sizes = [8, 176], strides = [1, 1]} : vector<8x178xf32> to vector<8x176xf32>
    %1859 = vector.extract_strided_slice %745 {offsets = [0, 2], sizes = [8, 176], strides = [1, 1]} : vector<8x178xf32> to vector<8x176xf32>
    %1860 = arith.maximumf %1858, %1859 : vector<8x176xf32>
    %1861 = vector.extract_strided_slice %845 {offsets = [0, 0], sizes = [8, 176], strides = [1, 1]} : vector<8x178xf32> to vector<8x176xf32>
    %1862 = vector.extract_strided_slice %845 {offsets = [0, 2], sizes = [8, 176], strides = [1, 1]} : vector<8x178xf32> to vector<8x176xf32>
    %1863 = arith.maximumf %1861, %1862 : vector<8x176xf32>
    %1864 = vector.extract_strided_slice %945 {offsets = [0, 0], sizes = [8, 176], strides = [1, 1]} : vector<8x178xf32> to vector<8x176xf32>
    %1865 = vector.extract_strided_slice %945 {offsets = [0, 2], sizes = [8, 176], strides = [1, 1]} : vector<8x178xf32> to vector<8x176xf32>
    %1866 = arith.maximumf %1864, %1865 : vector<8x176xf32>
    %1867 = vector.extract_strided_slice %1045 {offsets = [0, 0], sizes = [8, 176], strides = [1, 1]} : vector<8x178xf32> to vector<8x176xf32>
    %1868 = vector.extract_strided_slice %1045 {offsets = [0, 2], sizes = [8, 176], strides = [1, 1]} : vector<8x178xf32> to vector<8x176xf32>
    %1869 = arith.maximumf %1867, %1868 : vector<8x176xf32>
    %1870 = vector.extract_strided_slice %1145 {offsets = [0, 0], sizes = [8, 176], strides = [1, 1]} : vector<8x178xf32> to vector<8x176xf32>
    %1871 = vector.extract_strided_slice %1145 {offsets = [0, 2], sizes = [8, 176], strides = [1, 1]} : vector<8x178xf32> to vector<8x176xf32>
    %1872 = arith.maximumf %1870, %1871 : vector<8x176xf32>
    %1873 = vector.extract_strided_slice %1245 {offsets = [0, 0], sizes = [8, 176], strides = [1, 1]} : vector<8x178xf32> to vector<8x176xf32>
    %1874 = vector.extract_strided_slice %1245 {offsets = [0, 2], sizes = [8, 176], strides = [1, 1]} : vector<8x178xf32> to vector<8x176xf32>
    %1875 = arith.maximumf %1873, %1874 : vector<8x176xf32>
    %1876 = vector.extract_strided_slice %1345 {offsets = [0, 0], sizes = [8, 176], strides = [1, 1]} : vector<8x178xf32> to vector<8x176xf32>
    %1877 = vector.extract_strided_slice %1345 {offsets = [0, 2], sizes = [8, 176], strides = [1, 1]} : vector<8x178xf32> to vector<8x176xf32>
    %1878 = arith.maximumf %1876, %1877 : vector<8x176xf32>
    %1879 = vector.extract_strided_slice %1445 {offsets = [0, 0], sizes = [8, 176], strides = [1, 1]} : vector<8x178xf32> to vector<8x176xf32>
    %1880 = vector.extract_strided_slice %1445 {offsets = [0, 2], sizes = [8, 176], strides = [1, 1]} : vector<8x178xf32> to vector<8x176xf32>
    %1881 = arith.maximumf %1879, %1880 : vector<8x176xf32>
    %1882 = vector.extract_strided_slice %1545 {offsets = [0, 0], sizes = [8, 176], strides = [1, 1]} : vector<8x178xf32> to vector<8x176xf32>
    %1883 = vector.extract_strided_slice %1545 {offsets = [0, 2], sizes = [8, 176], strides = [1, 1]} : vector<8x178xf32> to vector<8x176xf32>
    %1884 = arith.maximumf %1882, %1883 : vector<8x176xf32>
    %1885 = vector.extract_strided_slice %1645 {offsets = [0, 0], sizes = [8, 176], strides = [1, 1]} : vector<8x178xf32> to vector<8x176xf32>
    %1886 = vector.extract_strided_slice %1645 {offsets = [0, 2], sizes = [8, 176], strides = [1, 1]} : vector<8x178xf32> to vector<8x176xf32>
    %1887 = arith.maximumf %1885, %1886 : vector<8x176xf32>
    %1888 = vector.extract_strided_slice %1745 {offsets = [0, 0], sizes = [8, 176], strides = [1, 1]} : vector<8x178xf32> to vector<8x176xf32>
    %1889 = vector.extract_strided_slice %1745 {offsets = [0, 2], sizes = [8, 176], strides = [1, 1]} : vector<8x178xf32> to vector<8x176xf32>
    %1890 = arith.maximumf %1888, %1889 : vector<8x176xf32>
    %1891 = vector.extract_strided_slice %1845 {offsets = [0, 0], sizes = [8, 176], strides = [1, 1]} : vector<8x178xf32> to vector<8x176xf32>
    %1892 = vector.extract_strided_slice %1845 {offsets = [0, 2], sizes = [8, 176], strides = [1, 1]} : vector<8x178xf32> to vector<8x176xf32>
    %1893 = arith.maximumf %1891, %1892 : vector<8x176xf32>
    %1894 = tpu.concatenate %1848, %1851, %1854, %1857, %1860, %1863, %1866, %1869, %1872, %1875, %1878, %1881, %1884, %1887, %1890, %1893 in 1 : vector<8x176xf32>, vector<8x176xf32>, vector<8x176xf32>, vector<8x176xf32>, vector<8x176xf32>, vector<8x176xf32>, vector<8x176xf32>, vector<8x176xf32>, vector<8x176xf32>, vector<8x176xf32>, vector<8x176xf32>, vector<8x176xf32>, vector<8x176xf32>, vector<8x176xf32>, vector<8x176xf32>, vector<8x176xf32> -> vector<8x2816xf32>
    %c0_89 = arith.constant 0 : index
    %c0_90 = arith.constant 0 : index
    %1895 = vector.load %arg6[%c0_89, %c0_90] : memref<2816x32xf32, #tpu.memory_space<vmem>>, vector<2816x32xf32>
    %cst_91 = arith.constant dense<0.000000e+00> : vector<8x32xf32>
    %1896 = tpu.matmul %1894, %1895, %cst_91 {dimension_numbers = #tpu.dot_dimension_numbers<[1], [0], [0], [1], [0, 0, 1, 1], [], []>} : vector<8x2816xf32>, vector<2816x32xf32>, vector<8x32xf32> -> vector<8x32xf32>
    %c0_92 = arith.constant 0 : index
    %c0_93 = arith.constant 0 : index
    %1897 = vector.load %arg7[%c0_92, %c0_93] : memref<1x32xf32, #tpu.memory_space<vmem>>, vector<1x32xf32>
    %1898 = vector.broadcast %1897 : vector<1x32xf32> to vector<8x32xf32>
    %1899 = arith.addf %1896, %1898 : vector<8x32xf32>
    %cst_94 = arith.constant 0.000000e+00 : f32
    %1900 = vector.broadcast %cst_94 : f32 to vector<8x32xf32>
    %1901 = arith.maximumf %1899, %1900 : vector<8x32xf32>
    %c0_95 = arith.constant 0 : index
    %c0_96 = arith.constant 0 : index
    %1902 = vector.load %arg8[%c0_95, %c0_96] : memref<32x5xf32, #tpu.memory_space<vmem>>, vector<32x5xf32>
    %cst_97 = arith.constant dense<0.000000e+00> : vector<8x5xf32>
    %1903 = tpu.matmul %1901, %1902, %cst_97 {dimension_numbers = #tpu.dot_dimension_numbers<[1], [0], [0], [1], [0, 0, 1, 1], [], []>} : vector<8x32xf32>, vector<32x5xf32>, vector<8x5xf32> -> vector<8x5xf32>
    %c0_98 = arith.constant 0 : index
    %c0_99 = arith.constant 0 : index
    %1904 = vector.load %arg9[%c0_98, %c0_99] : memref<1x5xf32, #tpu.memory_space<vmem>>, vector<1x5xf32>
    %1905 = vector.broadcast %1904 : vector<1x5xf32> to vector<8x5xf32>
    %1906 = arith.addf %1903, %1905 : vector<8x5xf32>
    %c0_100 = arith.constant 0 : index
    %c0_101 = arith.constant 0 : index
    %1907 = vector.load %arg10[%c0_100, %c0_101] : memref<8x5xf32, #tpu.memory_space<vmem>>, vector<8x5xf32>
    tpu.vector_store %arg10[%c0_100, %c0_101], %1906 {strides = array<i32>} : memref<8x5xf32, #tpu.memory_space<vmem>>, vector<8x5xf32>,
    return
  }
  func.func @transform_0(%arg0: i32) -> (i32, i32) {
    %c0_i32 = arith.constant 0 : i32
    %c0_i32_0 = arith.constant 0 : i32
    return %arg0, %c0_i32 : i32, i32
  }
  func.func @transform_1(%arg0: i32) -> i32 {
    %c0_i32 = arith.constant 0 : i32
    %c0_i32_0 = arith.constant 0 : i32
    return %c0_i32 : i32
  }
  func.func @transform_2(%arg0: i32) -> i32 {
    %c0_i32 = arith.constant 0 : i32
    %c0_i32_0 = arith.constant 0 : i32
    return %c0_i32 : i32
  }
  func.func @transform_3(%arg0: i32) -> i32 {
    %c0_i32 = arith.constant 0 : i32
    %c0_i32_0 = arith.constant 0 : i32
    return %c0_i32 : i32
  }
  func.func @transform_4(%arg0: i32) -> i32 {
    %c0_i32 = arith.constant 0 : i32
    %c0_i32_0 = arith.constant 0 : i32
    return %c0_i32 : i32
  }
  func.func @transform_5(%arg0: i32) -> (i32, i32) {
    %c0_i32 = arith.constant 0 : i32
    %c0_i32_0 = arith.constant 0 : i32
    %c0_i32_1 = arith.constant 0 : i32
    return %c0_i32, %c0_i32_0 : i32, i32
  }
  func.func @transform_6(%arg0: i32) -> (i32, i32) {
    %c0_i32 = arith.constant 0 : i32
    %c0_i32_0 = arith.constant 0 : i32
    %c0_i32_1 = arith.constant 0 : i32
    return %c0_i32, %c0_i32_0 : i32, i32
  }
  func.func @transform_7(%arg0: i32) -> (i32, i32) {
    %c0_i32 = arith.constant 0 : i32
    %c0_i32_0 = arith.constant 0 : i32
    %c0_i32_1 = arith.constant 0 : i32
    return %c0_i32, %c0_i32_0 : i32, i32
  }
  func.func @transform_8(%arg0: i32) -> (i32, i32) {
    %c0_i32 = arith.constant 0 : i32
    %c0_i32_0 = arith.constant 0 : i32
    %c0_i32_1 = arith.constant 0 : i32
    return %c0_i32, %c0_i32_0 : i32, i32
  }
  func.func @transform_9(%arg0: i32) -> (i32, i32) {
    %c0_i32 = arith.constant 0 : i32
    %c0_i32_0 = arith.constant 0 : i32
    return %arg0, %c0_i32 : i32, i32
  }
}

</mosaic_0001>

<llo_original>
// kernel: tpu_custom_call.1
$region0: #{tpu_custom_call.1}
  #allocation0 [shape = 'u32[]', space=smem, size = 0x4, offset = 0x4, fixed_abs, tag = 'smem constant byte address 0x4 - core index']
  #allocation1 [shape = 'u32[144,128]{1,0:T(1,128)}', space=vmem, size = 0x12000, scoped, tag = 'internal scratch']
  %s0 = inlined_call_operand.vmem [shape: f32[16,187], index: 0, kind: input, shape index: {}]
  %s1 = inlined_call_operand.vmem [shape: f32[40], index: 1, kind: input, shape index: {}]
  %s2 = inlined_call_operand.vmem [shape: f32[8], index: 2, kind: input, shape index: {}]
  %s3 = inlined_call_operand.vmem [shape: f32[384], index: 3, kind: input, shape index: {}]
  %s4 = inlined_call_operand.vmem [shape: f32[16], index: 4, kind: input, shape index: {}]
  %s5 = inlined_call_operand.vmem [shape: f32[2816,32], index: 5, kind: input, shape index: {}]
  %s6 = inlined_call_operand.vmem [shape: f32[1,32], index: 6, kind: input, shape index: {}]
  %s7 = inlined_call_operand.vmem [shape: f32[32,5], index: 7, kind: input, shape index: {}]
  %s8 = inlined_call_operand.vmem [shape: f32[1,5], index: 8, kind: input, shape index: {}]
  %s9 = inlined_call_operand.vmem [shape: f32[16,5], index: 9, kind: output, shape index: {}]
  %s10 = sld [smem:[#allocation0]]
  $region85: #{tpu_custom_call.1} parent=0
    _
  %s12 = ssub.s32 1, %s10
  %s13 = scalar_select 0, %s12, %s10
  $region1: #{tpu_custom_call.1} parent=0
    #allocation2 [shape = 'u8[512]{0}', space=smem, size = 0x200, scoped, tag = 'input window, operand 1, single buffered']
    #allocation3 [shape = 's32[2]{0}', space=sflag, size = 0x8, scoped, tag = 'scoped memory for tpu_custom_call.1']
    #allocation4 [shape = 'u8[512]{0}', space=smem, size = 0x200, scoped, tag = 'input window, operand 2, single buffered']
    #allocation5 [shape = 's32[1]{0}', space=sflag, size = 0x4, scoped, tag = 'scoped memory for tpu_custom_call.1']
    #allocation6 [shape = 'u8[1536]{0}', space=smem, size = 0x600, scoped, tag = 'input window, operand 3, single buffered']
    #allocation7 [shape = 'u8[512]{0}', space=smem, size = 0x200, scoped, tag = 'input window, operand 4, single buffered']
    #allocation8 [shape = 's32[1]{0}', space=sflag, size = 0x4, scoped, tag = 'scoped memory for tpu_custom_call.1']
    %14 = vsyncpa [#allocation3], 0
    %15 = vsyncpa [#allocation5], 0
    %16 = vsyncpa [#allocation8], 0
    loop: start=0, step=1, limit=4
    $region2: #{tpu_custom_call.1} parent=1 // loop_pre_header
      _
    $region3: #{tpu_custom_call.1} parent=1 // loop_header
      %s18 = sphi 0, %s22
      %p19 = scmp.ge.s32.totalorder %s18, 4
      %s28 = sphi 0, %s30
      %s31 = sphi 0, %s28
      %s32 = sphi 0, %s31
      %s48 = sphi 0, %s32
      %s52 = sphi 0, %s52
      %s54 = sphi 0, %s52
      %s55 = sphi 0, %s54
      %s69 = sphi 0, %s55
      %s73 = sphi 0, %s73
      %s75 = sphi 0, %s73
      %s76 = sphi 0, %s75
      %s90 = sphi 0, %s76
      %s94 = sphi 0, %s94
      %s96 = sphi 0, %s94
      %s97 = sphi 0, %s96
      %s111 = sphi 0, %s97
      %s115 = sphi 0, %s115
      %s117 = sphi 0, %s115
      %s118 = sphi 0, %s117
      %s132 = sphi 0, %s118
      %s136 = sphi 0, %s136
      %s138 = sphi 0, %s136
      %s139 = sphi 0, %s138
      %s153 = sphi 0, %s139
      %s157 = sphi 0, %s157
      %s159 = sphi 0, %s157
      %s160 = sphi 0, %s159
      %s174 = sphi 0, %s160
      %s178 = sphi 0, %s178
      %s180 = sphi 0, %s178
      %s181 = sphi 0, %s180
      %s195 = sphi 0, %s181
      %s199 = sphi 0, %s199
      %s201 = sphi 0, %s199
      %s202 = sphi 0, %s201
      %s216 = sphi 0, %s202
      %s222 = sphi 0, %s224
      %s225 = sphi 0, %s222
      %s226 = sphi 0, %s225
      %s242 = sphi 0, %s226
    $region4: #{tpu_custom_call.1} parent=1 // loop_header_branch
      %21 = sbr.rel (%p19) target = $region8
    $region5: #{tpu_custom_call.1} parent=1 // loop_body
      %s23 = ssub.s32 %s18, 1
      %s24 = ssub.s32 %s18, 2
      %s25 = sadd.s32 %s18, 1
      %s26 = ssub.s32 %s18, %s25
      %p27 = scmp.eq.s32.totalorder %s26, 0
      %s29 = sadd.s32 %s28, 1
      %s30 = scalar_select %p27, %s28, %s29
      %p33 = pneg %p27
      %p34 = scmp.eq.s32.totalorder %s18, 1
      %p35 = por %p33, %p34
      %p36 = scmp.ne.s32.totalorder %s28, %s31
      %p37 = scmp.eq.s32.totalorder %s18, 0
      %p38 = por %p36, %p37
      %p39 = scmp.ne.s32.totalorder %s28, %s31
      %p40 = scmp.eq.s32.totalorder %s23, 1
      %p41 = por %p39, %p40
      %p42 = scmp.ne.s32.totalorder %s31, %s32
      %p43 = scmp.eq.s32.totalorder %s23, 0
      %p44 = por %p42, %p43
      %p45 = scmp.ne.s32.totalorder %s31, %s32
      %p46 = scmp.eq.s32.totalorder %s24, 1
      %p47 = por %p45, %p46
      %p49 = scmp.ne.s32.totalorder %s32, %s48
      %p50 = scmp.eq.s32.totalorder %s24, 0
      %p51 = por %p49, %p50
      %s53 = sadd.s32 %s52, 1
      %p56 = scmp.eq.s32.totalorder %s18, 1
      %p57 = scmp.ne.s32.totalorder %s52, %s54
      %p58 = scmp.eq.s32.totalorder %s18, 0
      %p59 = por %p57, %p58
      %p60 = scmp.ne.s32.totalorder %s52, %s54
      %p61 = scmp.eq.s32.totalorder %s23, 1
      %p62 = por %p60, %p61
      %p63 = scmp.ne.s32.totalorder %s54, %s55
      %p64 = scmp.eq.s32.totalorder %s23, 0
      %p65 = por %p63, %p64
      %p66 = scmp.ne.s32.totalorder %s54, %s55
      %p67 = scmp.eq.s32.totalorder %s24, 1
      %p68 = por %p66, %p67
      %p70 = scmp.ne.s32.totalorder %s55, %s69
      %p71 = scmp.eq.s32.totalorder %s24, 0
      %p72 = por %p70, %p71
      %s74 = sadd.s32 %s73, 1
      %p77 = scmp.eq.s32.totalorder %s18, 1
      %p78 = scmp.ne.s32.totalorder %s73, %s75
      %p79 = scmp.eq.s32.totalorder %s18, 0
      %p80 = por %p78, %p79
      %p81 = scmp.ne.s32.totalorder %s73, %s75
      %p82 = scmp.eq.s32.totalorder %s23, 1
      %p83 = por %p81, %p82
      %p84 = scmp.ne.s32.totalorder %s75, %s76
      %p85 = scmp.eq.s32.totalorder %s23, 0
      %p86 = por %p84, %p85
      %p87 = scmp.ne.s32.totalorder %s75, %s76
      %p88 = scmp.eq.s32.totalorder %s24, 1
      %p89 = por %p87, %p88
      %p91 = scmp.ne.s32.totalorder %s76, %s90
      %p92 = scmp.eq.s32.totalorder %s24, 0
      %p93 = por %p91, %p92
      %s95 = sadd.s32 %s94, 1
      %p98 = scmp.eq.s32.totalorder %s18, 1
      %p99 = scmp.ne.s32.totalorder %s94, %s96
      %p100 = scmp.eq.s32.totalorder %s18, 0
      %p101 = por %p99, %p100
      %p102 = scmp.ne.s32.totalorder %s94, %s96
      %p103 = scmp.eq.s32.totalorder %s23, 1
      %p104 = por %p102, %p103
      %p105 = scmp.ne.s32.totalorder %s96, %s97
      %p106 = scmp.eq.s32.totalorder %s23, 0
      %p107 = por %p105, %p106
      %p108 = scmp.ne.s32.totalorder %s96, %s97
      %p109 = scmp.eq.s32.totalorder %s24, 1
      %p110 = por %p108, %p109
      %p112 = scmp.ne.s32.totalorder %s97, %s111
      %p113 = scmp.eq.s32.totalorder %s24, 0
      %p114 = por %p112, %p113
      %s116 = sadd.s32 %s115, 1
      %p119 = scmp.eq.s32.totalorder %s18, 1
      %p120 = scmp.ne.s32.totalorder %s115, %s117
      %p121 = scmp.eq.s32.totalorder %s18, 0
      %p122 = por %p120, %p121
      %p123 = scmp.ne.s32.totalorder %s115, %s117
      %p124 = scmp.eq.s32.totalorder %s23, 1
      %p125 = por %p123, %p124
      %p126 = scmp.ne.s32.totalorder %s117, %s118
      %p127 = scmp.eq.s32.totalorder %s23, 0
      %p128 = por %p126, %p127
      %p129 = scmp.ne.s32.totalorder %s117, %s118
      %p130 = scmp.eq.s32.totalorder %s24, 1
      %p131 = por %p129, %p130
      %p133 = scmp.ne.s32.totalorder %s118, %s132
      %p134 = scmp.eq.s32.totalorder %s24, 0
      %p135 = por %p133, %p134
      %s137 = sadd.s32 %s136, 1
      %p140 = scmp.eq.s32.totalorder %s18, 1
      %p141 = scmp.ne.s32.totalorder %s136, %s138
      %p142 = scmp.eq.s32.totalorder %s18, 0
      %p143 = por %p141, %p142
      %p144 = scmp.ne.s32.totalorder %s136, %s138
      %p145 = scmp.eq.s32.totalorder %s23, 1
      %p146 = por %p144, %p145
      %p147 = scmp.ne.s32.totalorder %s138, %s139
      %p148 = scmp.eq.s32.totalorder %s23, 0
      %p149 = por %p147, %p148
      %p150 = scmp.ne.s32.totalorder %s138, %s139
      %p151 = scmp.eq.s32.totalorder %s24, 1
      %p152 = por %p150, %p151
      %p154 = scmp.ne.s32.totalorder %s139, %s153
      %p155 = scmp.eq.s32.totalorder %s24, 0
      %p156 = por %p154, %p155
      %s158 = sadd.s32 %s157, 1
      %p161 = scmp.eq.s32.totalorder %s18, 1
      %p162 = scmp.ne.s32.totalorder %s157, %s159
      %p163 = scmp.eq.s32.totalorder %s18, 0
      %p164 = por %p162, %p163
      %p165 = scmp.ne.s32.totalorder %s157, %s159
      %p166 = scmp.eq.s32.totalorder %s23, 1
      %p167 = por %p165, %p166
      %p168 = scmp.ne.s32.totalorder %s159, %s160
      %p169 = scmp.eq.s32.totalorder %s23, 0
      %p170 = por %p168, %p169
      %p171 = scmp.ne.s32.totalorder %s159, %s160
      %p172 = scmp.eq.s32.totalorder %s24, 1
      %p173 = por %p171, %p172
      %p175 = scmp.ne.s32.totalorder %s160, %s174
      %p176 = scmp.eq.s32.totalorder %s24, 0
      %p177 = por %p175, %p176
      %s179 = sadd.s32 %s178, 1
      %p182 = scmp.eq.s32.totalorder %s18, 1
      %p183 = scmp.ne.s32.totalorder %s178, %s180
      %p184 = scmp.eq.s32.totalorder %s18, 0
      %p185 = por %p183, %p184
      %p186 = scmp.ne.s32.totalorder %s178, %s180
      %p187 = scmp.eq.s32.totalorder %s23, 1
      %p188 = por %p186, %p187
      %p189 = scmp.ne.s32.totalorder %s180, %s181
      %p190 = scmp.eq.s32.totalorder %s23, 0
      %p191 = por %p189, %p190
      %p192 = scmp.ne.s32.totalorder %s180, %s181
      %p193 = scmp.eq.s32.totalorder %s24, 1
      %p194 = por %p192, %p193
      %p196 = scmp.ne.s32.totalorder %s181, %s195
      %p197 = scmp.eq.s32.totalorder %s24, 0
      %p198 = por %p196, %p197
      %s200 = sadd.s32 %s199, 1
      %p203 = scmp.eq.s32.totalorder %s18, 1
      %p204 = scmp.ne.s32.totalorder %s199, %s201
      %p205 = scmp.eq.s32.totalorder %s18, 0
      %p206 = por %p204, %p205
      %p207 = scmp.ne.s32.totalorder %s199, %s201
      %p208 = scmp.eq.s32.totalorder %s23, 1
      %p209 = por %p207, %p208
      %p210 = scmp.ne.s32.totalorder %s201, %s202
      %p211 = scmp.eq.s32.totalorder %s23, 0
      %p212 = por %p210, %p211
      %p213 = scmp.ne.s32.totalorder %s201, %s202
      %p214 = scmp.eq.s32.totalorder %s24, 1
      %p215 = por %p213, %p214
      %p217 = scmp.ne.s32.totalorder %s202, %s216
      %p218 = scmp.eq.s32.totalorder %s24, 0
      %p219 = por %p217, %p218
      %s220 = ssub.s32 %s18, %s25
      %p221 = scmp.eq.s32.totalorder %s220, 0
      %s223 = sadd.s32 %s222, 1
      %s224 = scalar_select %p221, %s222, %s223
      %p227 = pneg %p221
      %p228 = scmp.eq.s32.totalorder %s18, 1
      %p229 = por %p227, %p228
      %p230 = scmp.ne.s32.totalorder %s222, %s225
      %p231 = scmp.eq.s32.totalorder %s18, 0
      %p232 = por %p230, %p231
      %p233 = scmp.ne.s32.totalorder %s222, %s225
      %p234 = scmp.eq.s32.totalorder %s23, 1
      %p235 = por %p233, %p234
      %p236 = scmp.ne.s32.totalorder %s225, %s226
      %p237 = scmp.eq.s32.totalorder %s23, 0
      %p238 = por %p236, %p237
      %p239 = scmp.ne.s32.totalorder %s225, %s226
      %p240 = scmp.eq.s32.totalorder %s24, 1
      %p241 = por %p239, %p240
      %p243 = scmp.ne.s32.totalorder %s226, %s242
      %p244 = scmp.eq.s32.totalorder %s24, 0
      %p245 = por %p243, %p244
      %p246 = scmp.le.s32.totalorder 1, %s18
      %p247 = scmp.lt.s32.totalorder %s18, 3
      %p248 = pnand %p246, %p247
      %p249 = pneg %p248
      // Predicated region
      $region9: #{tpu_custom_call.1} parent=5 // pred_check
        _
      $region10: #{tpu_custom_call.1} parent=5 // pred_check_branch
        %251 = sbr.rel (%p248) target = $region12
      $region11: #{tpu_custom_call.1} parent=5 // pred_region
        %s252 = ssub.s32 %s18, 1
        // Predicated region
        $region13: #{tpu_custom_call.1} parent=11 // pred_check
          %p253 = pneg %p65
        $region14: #{tpu_custom_call.1} parent=11 // pred_check_branch
          %255 = sbr.rel (%p253) target = $region16
        $region15: #{tpu_custom_call.1} parent=11 // pred_region
          %s257 = ssub.s32 16, 16
          %258 = vsyncadd [#allocation3], %s257
          %s260 = sshll.u32 %s1, 4
          %s261 = int_to_ptr.vmem [resolvable:$true] %s260
          %263 = dma.vmem_to_smem %s261, 16, [#allocation2], [#allocation3]
        $region16: #{tpu_custom_call.1} parent=11 // pred_fallthru
          _
        // Predicated region
        $region17: #{tpu_custom_call.1} parent=11 // pred_check
          %p264 = pneg %p86
        $region18: #{tpu_custom_call.1} parent=11 // pred_check_branch
          %266 = sbr.rel (%p264) target = $region20
        $region19: #{tpu_custom_call.1} parent=11 // pred_region
          %s268 = ssub.s32 16, 16
          %269 = vsyncadd [#allocation5], %s268
          %s271 = sshll.u32 %s2, 4
          %s272 = int_to_ptr.vmem [resolvable:$true] %s271
          %274 = dma.vmem_to_smem %s272, 16, [#allocation4], [#allocation5]
        $region20: #{tpu_custom_call.1} parent=11 // pred_fallthru
          _
        // Predicated region
        $region21: #{tpu_custom_call.1} parent=11 // pred_check
          %p275 = pneg %p107
        $region22: #{tpu_custom_call.1} parent=11 // pred_check_branch
          %277 = sbr.rel (%p275) target = $region24
        $region23: #{tpu_custom_call.1} parent=11 // pred_region
          %s279 = ssub.s32 48, 48
          %280 = vsyncadd [#allocation5], %s279
          %s282 = sshll.u32 %s3, 4
          %s283 = int_to_ptr.vmem [resolvable:$true] %s282
          %285 = dma.vmem_to_smem %s283, 48, [#allocation6], [#allocation5]
        $region24: #{tpu_custom_call.1} parent=11 // pred_fallthru
          _
        // Predicated region
        $region25: #{tpu_custom_call.1} parent=11 // pred_check
          %p286 = pneg %p128
        $region26: #{tpu_custom_call.1} parent=11 // pred_check_branch
          %288 = sbr.rel (%p286) target = $region28
        $region27: #{tpu_custom_call.1} parent=11 // pred_region
          %s290 = ssub.s32 16, 16
          %291 = vsyncadd [#allocation8], %s290
          %s293 = sshll.u32 %s4, 4
          %s294 = int_to_ptr.vmem [resolvable:$true] %s293
          %296 = dma.vmem_to_smem %s294, 16, [#allocation7], [#allocation8]
        $region28: #{tpu_custom_call.1} parent=11 // pred_fallthru
          _
        // Predicated region
        $region29: #{tpu_custom_call.1} parent=11 // pred_check
          %p297 = pneg %p149
        $region30: #{tpu_custom_call.1} parent=11 // pred_check_branch
          %299 = sbr.rel (%p297) target = $region32
        $region31: #{tpu_custom_call.1} parent=11 // pred_region
          _
        $region32: #{tpu_custom_call.1} parent=11 // pred_fallthru
          _
        // Predicated region
        $region33: #{tpu_custom_call.1} parent=11 // pred_check
          %p300 = pneg %p170
        $region34: #{tpu_custom_call.1} parent=11 // pred_check_branch
          %302 = sbr.rel (%p300) target = $region36
        $region35: #{tpu_custom_call.1} parent=11 // pred_region
          _
        $region36: #{tpu_custom_call.1} parent=11 // pred_fallthru
          _
        // Predicated region
        $region37: #{tpu_custom_call.1} parent=11 // pred_check
          %p303 = pneg %p191
        $region38: #{tpu_custom_call.1} parent=11 // pred_check_branch
          %305 = sbr.rel (%p303) target = $region40
        $region39: #{tpu_custom_call.1} parent=11 // pred_region
          _
        $region40: #{tpu_custom_call.1} parent=11 // pred_fallthru
          _
        // Predicated region
        $region41: #{tpu_custom_call.1} parent=11 // pred_check
          %p306 = pneg %p212
        $region42: #{tpu_custom_call.1} parent=11 // pred_check_branch
          %308 = sbr.rel (%p306) target = $region44
        $region43: #{tpu_custom_call.1} parent=11 // pred_region
          _
        $region44: #{tpu_custom_call.1} parent=11 // pred_fallthru
          _
      $region12: #{tpu_custom_call.1} parent=5 // pred_fallthru
        _
      %p309 = scmp.lt.s32.totalorder %s18, 2
      // Predicated region
      $region45: #{tpu_custom_call.1} parent=5 // pred_check
        %p310 = pneg %p309
      $region46: #{tpu_custom_call.1} parent=5 // pred_check_branch
        %312 = sbr.rel (%p310) target = $region48
      $region47: #{tpu_custom_call.1} parent=5 // pred_region
        // Predicated region
        $region49: #{tpu_custom_call.1} parent=47 // pred_check
          %p313 = pneg %p38
        $region50: #{tpu_custom_call.1} parent=47 // pred_check_branch
          %315 = sbr.rel (%p313) target = $region52
        $region51: #{tpu_custom_call.1} parent=47 // pred_region
          %p316 = scmp.lt.s32.totalorder %s18, 1
          %s317 = scalar_select %p316, %s18, 1
          %s318 = smul.addr %s317, 2
          %s319 = smul.addr %s318, 8
          %s320 = scalar_lea.vmem %s0, %s319
        $region52: #{tpu_custom_call.1} parent=47 // pred_fallthru
          _
      $region48: #{tpu_custom_call.1} parent=5 // pred_fallthru
        _
      %p321 = scmp.le.s32.totalorder 1, %s18
      %p322 = scmp.lt.s32.totalorder %s18, 3
      %p323 = pnand %p321, %p322
      %p324 = pneg %p323
      // Predicated region
      $region53: #{tpu_custom_call.1} parent=5 // pred_check
        _
      $region54: #{tpu_custom_call.1} parent=5 // pred_check_branch
        %326 = sbr.rel (%p323) target = $region56
      $region55: #{tpu_custom_call.1} parent=5 // pred_region
        %s327 = ssub.s32 %s18, 1
        // Predicated region
        $region57: #{tpu_custom_call.1} parent=55 // pred_check
          %p328 = pneg %p65
        $region58: #{tpu_custom_call.1} parent=55 // pred_check_branch
          %330 = sbr.rel (%p328) target = $region60
        $region59: #{tpu_custom_call.1} parent=55 // pred_region
          %331 = dma.done [#allocation3], 16
        $region60: #{tpu_custom_call.1} parent=55 // pred_fallthru
          _
        // Predicated region
        $region61: #{tpu_custom_call.1} parent=55 // pred_check
          %p332 = pneg %p86
        $region62: #{tpu_custom_call.1} parent=55 // pred_check_branch
          %334 = sbr.rel (%p332) target = $region64
        $region63: #{tpu_custom_call.1} parent=55 // pred_region
          %335 = dma.done [#allocation5], 16
        $region64: #{tpu_custom_call.1} parent=55 // pred_fallthru
          _
        // Predicated region
        $region65: #{tpu_custom_call.1} parent=55 // pred_check
          %p336 = pneg %p107
        $region66: #{tpu_custom_call.1} parent=55 // pred_check_branch
          %338 = sbr.rel (%p336) target = $region68
        $region67: #{tpu_custom_call.1} parent=55 // pred_region
          %339 = dma.done [#allocation5], 48
        $region68: #{tpu_custom_call.1} parent=55 // pred_fallthru
          _
        // Predicated region
        $region69: #{tpu_custom_call.1} parent=55 // pred_check
          %p340 = pneg %p128
        $region70: #{tpu_custom_call.1} parent=55 // pred_check_branch
          %342 = sbr.rel (%p340) target = $region72
        $region71: #{tpu_custom_call.1} parent=55 // pred_region
          %343 = dma.done [#allocation8], 16
        $region72: #{tpu_custom_call.1} parent=55 // pred_fallthru
          _
        %344 = sfence
        %p345 = scmp.lt.s32.totalorder %s23, 1
        %s346 = scalar_select %p345, %s23, 1
        %s347 = smul.addr %s346, 2
        %s348 = smul.addr %s347, 8
        %s349 = scalar_lea.vmem %s0, %s348
        %p350 = pneg %p44
        %p351 = pneg %p41
        %p352 = pneg %p65
        %p353 = pneg %p62
        %p354 = pneg %p86
        %p355 = pneg %p83
        %p356 = pneg %p107
        %p357 = pneg %p104
        %p358 = pneg %p128
        %p359 = pneg %p125
        %p360 = pneg %p149
        %p361 = pneg %p146
        %p362 = pneg %p170
        %p363 = pneg %p167
        %p364 = pneg %p191
        %p365 = pneg %p188
        %p366 = pneg %p212
        %p367 = pneg %p209
        %p368 = pneg %p238
        %p369 = pneg %p235
        %p370 = scmp.lt.s32.totalorder %s23, 1
        %s371 = scalar_select %p370, %s23, 1
        %s372 = smul.addr %s371, 8
        %s373 = scalar_lea.vmem %s9, %s372
        %p374 = scmp.lt.s32.totalorder %s23, 1
        %s375 = scalar_select %p374, %s23, 1
        %s376 = smul.addr %s375, 2
        %s377 = smul.addr %s376, 8
        %s378 = scalar_lea.vmem %s0, %s377
        %p379 = scmp.lt.s32.totalorder %s23, 1
        %s380 = scalar_select %p379, %s23, 1
        %s381 = smul.addr %s380, 8
        %s382 = scalar_lea.vmem %s9, %s381
        %v383 = vld [vmem:[%s378] sm:$0xff]
        %v384 = vld [vmem:[%s378 + $0x8] sm:$0xff]
        %s385 = sld [smem:[#allocation2]]
        %v386 = vstv %s385
        %v387 = vmul.f32 %v383, %v386
        %v388 = vmul.f32 %v384, %v386
        %s389 = sld [smem:[#allocation2 + $0x1]]
        %v390 = vstv %s389
        %v391 = vmul.f32 %v383, %v390
        %v392 = vmul.f32 %v384, %v390
        %395 = vrot.lane.b32.xlu0 %v391, 127
        %v396 = vpop.permute.xlu0 %395
        %397 = vrot.lane.b32.xlu0 %v392, 127
        %v398 = vpop.permute.xlu0 %397
        %vm399 = vcmask 1039360
        %v400 = vsel %vm399, %v396, %v398
        %v403 = vadd.f32 %v387, %v400
        %v404 = vadd.f32 %v388, %v398
        %s405 = sld [smem:[#allocation2 + $0x2]]
        %v406 = vstv %s405
        %v407 = vmul.f32 %v383, %v406
        %v408 = vmul.f32 %v384, %v406
        %411 = vrot.lane.b32.xlu0 %v407, 126
        %v412 = vpop.permute.xlu0 %411
        %413 = vrot.lane.b32.xlu0 %v408, 126
        %v414 = vpop.permute.xlu0 %413
        %vm415 = vcmask 1031168
        %v416 = vsel %vm415, %v412, %v414
        %v419 = vadd.f32 %v403, %v416
        %v420 = vadd.f32 %v404, %v414
        %s421 = sld [smem:[#allocation2 + $0x3]]
        %v422 = vstv %s421
        %v423 = vmul.f32 %v383, %v422
        %v424 = vmul.f32 %v384, %v422
        %427 = vrot.lane.b32.xlu0 %v423, 125
        %v428 = vpop.permute.xlu0 %427
        %429 = vrot.lane.b32.xlu0 %v424, 125
        %v430 = vpop.permute.xlu0 %429
        %vm431 = vcmask 1022976
        %v432 = vsel %vm431, %v428, %v430
        %v435 = vadd.f32 %v419, %v432
        %v436 = vadd.f32 %v420, %v430
        %s437 = sld [smem:[#allocation2 + $0x4]]
        %v438 = vstv %s437
        %v439 = vmul.f32 %v383, %v438
        %v440 = vmul.f32 %v384, %v438
        %443 = vrot.lane.b32.xlu0 %v439, 124
        %v444 = vpop.permute.xlu0 %443
        %445 = vrot.lane.b32.xlu0 %v440, 124
        %v446 = vpop.permute.xlu0 %445
        %vm447 = vcmask 1014784
        %v448 = vsel %vm447, %v444, %v446
        %v451 = vadd.f32 %v435, %v448
        %v452 = vadd.f32 %v436, %v446
        %s453 = sld [smem:[#allocation4]]
        %v454 = vstv %s453
        %v455 = vadd.f32 %v451, %v454
        %v456 = vadd.f32 %v452, %v454
        %v457 = vmax.f32 %v455, 0.0
        %v458 = vmax.f32 %v456, 0.0
        %s459 = sld [smem:[#allocation2 + $0x5]]
        %v460 = vstv %s459
        %v461 = vmul.f32 %v383, %v460
        %v462 = vmul.f32 %v384, %v460
        %s463 = sld [smem:[#allocation2 + $0x6]]
        %v464 = vstv %s463
        %v465 = vmul.f32 %v383, %v464
        %v466 = vmul.f32 %v384, %v464
        %469 = vrot.lane.b32.xlu0 %v465, 127
        %v470 = vpop.permute.xlu0 %469
        %471 = vrot.lane.b32.xlu0 %v466, 127
        %v472 = vpop.permute.xlu0 %471
        %v473 = vsel %vm399, %v470, %v472
        %v476 = vadd.f32 %v461, %v473
        %v477 = vadd.f32 %v462, %v472
        %s478 = sld [smem:[#allocation2 + $0x7]]
        %v479 = vstv %s478
        %v480 = vmul.f32 %v383, %v479
        %v481 = vmul.f32 %v384, %v479
        %484 = vrot.lane.b32.xlu0 %v480, 126
        %v485 = vpop.permute.xlu0 %484
        %486 = vrot.lane.b32.xlu0 %v481, 126
        %v487 = vpop.permute.xlu0 %486
        %v488 = vsel %vm415, %v485, %v487
        %v491 = vadd.f32 %v476, %v488
        %v492 = vadd.f32 %v477, %v487
        %s493 = sld [smem:[#allocation2 + $0x8]]
        %v494 = vstv %s493
        %v495 = vmul.f32 %v383, %v494
        %v496 = vmul.f32 %v384, %v494
        %499 = vrot.lane.b32.xlu0 %v495, 125
        %v500 = vpop.permute.xlu0 %499
        %501 = vrot.lane.b32.xlu0 %v496, 125
        %v502 = vpop.permute.xlu0 %501
        %v503 = vsel %vm431, %v500, %v502
        %v506 = vadd.f32 %v491, %v503
        %v507 = vadd.f32 %v492, %v502
        %s508 = sld [smem:[#allocation2 + $0x9]]
        %v509 = vstv %s508
        %v510 = vmul.f32 %v383, %v509
        %v511 = vmul.f32 %v384, %v509
        %514 = vrot.lane.b32.xlu0 %v510, 124
        %v515 = vpop.permute.xlu0 %514
        %516 = vrot.lane.b32.xlu0 %v511, 124
        %v517 = vpop.permute.xlu0 %516
        %v518 = vsel %vm447, %v515, %v517
        %v521 = vadd.f32 %v506, %v518
        %v522 = vadd.f32 %v507, %v517
        %s523 = sld [smem:[#allocation4 + $0x1]]
        %v524 = vstv %s523
        %v525 = vadd.f32 %v521, %v524
        %v526 = vadd.f32 %v522, %v524
        %v527 = vmax.f32 %v525, 0.0
        %v528 = vmax.f32 %v526, 0.0
        %s529 = sld [smem:[#allocation2 + $0xa]]
        %v530 = vstv %s529
        %v531 = vmul.f32 %v383, %v530
        %v532 = vmul.f32 %v384, %v530
        %s533 = sld [smem:[#allocation2 + $0xb]]
        %v534 = vstv %s533
        %v535 = vmul.f32 %v383, %v534
        %v536 = vmul.f32 %v384, %v534
        %539 = vrot.lane.b32.xlu0 %v535, 127
        %v540 = vpop.permute.xlu0 %539
        %541 = vrot.lane.b32.xlu0 %v536, 127
        %v542 = vpop.permute.xlu0 %541
        %v543 = vsel %vm399, %v540, %v542
        %v546 = vadd.f32 %v531, %v543
        %v547 = vadd.f32 %v532, %v542
        %s548 = sld [smem:[#allocation2 + $0xc]]
        %v549 = vstv %s548
        %v550 = vmul.f32 %v383, %v549
        %v551 = vmul.f32 %v384, %v549
        %554 = vrot.lane.b32.xlu0 %v550, 126
        %v555 = vpop.permute.xlu0 %554
        %556 = vrot.lane.b32.xlu0 %v551, 126
        %v557 = vpop.permute.xlu0 %556
        %v558 = vsel %vm415, %v555, %v557
        %v561 = vadd.f32 %v546, %v558
        %v562 = vadd.f32 %v547, %v557
        %s563 = sld [smem:[#allocation2 + $0xd]]
        %v564 = vstv %s563
        %v565 = vmul.f32 %v383, %v564
        %v566 = vmul.f32 %v384, %v564
        %569 = vrot.lane.b32.xlu0 %v565, 125
        %v570 = vpop.permute.xlu0 %569
        %571 = vrot.lane.b32.xlu0 %v566, 125
        %v572 = vpop.permute.xlu0 %571
        %v573 = vsel %vm431, %v570, %v572
        %v576 = vadd.f32 %v561, %v573
        %v577 = vadd.f32 %v562, %v572
        %s578 = sld [smem:[#allocation2 + $0xe]]
        %v579 = vstv %s578
        %v580 = vmul.f32 %v383, %v579
        %v581 = vmul.f32 %v384, %v579
        %584 = vrot.lane.b32.xlu0 %v580, 124
        %v585 = vpop.permute.xlu0 %584
        %586 = vrot.lane.b32.xlu0 %v581, 124
        %v587 = vpop.permute.xlu0 %586
        %v588 = vsel %vm447, %v585, %v587
        %v591 = vadd.f32 %v576, %v588
        %v592 = vadd.f32 %v577, %v587
        %s593 = sld [smem:[#allocation4 + $0x2]]
        %v594 = vstv %s593
        %v595 = vadd.f32 %v591, %v594
        %v596 = vadd.f32 %v592, %v594
        %v597 = vmax.f32 %v595, 0.0
        %v598 = vmax.f32 %v596, 0.0
        %s599 = sld [smem:[#allocation2 + $0xf]]
        %v600 = vstv %s599
        %v601 = vmul.f32 %v383, %v600
        %v602 = vmul.f32 %v384, %v600
        %s603 = sld [smem:[#allocation2 + $0x10]]
        %v604 = vstv %s603
        %v605 = vmul.f32 %v383, %v604
        %v606 = vmul.f32 %v384, %v604
        %609 = vrot.lane.b32.xlu0 %v605, 127
        %v610 = vpop.permute.xlu0 %609
        %611 = vrot.lane.b32.xlu0 %v606, 127
        %v612 = vpop.permute.xlu0 %611
        %v613 = vsel %vm399, %v610, %v612
        %v616 = vadd.f32 %v601, %v613
        %v617 = vadd.f32 %v602, %v612
        %s618 = sld [smem:[#allocation2 + $0x11]]
        %v619 = vstv %s618
        %v620 = vmul.f32 %v383, %v619
        %v621 = vmul.f32 %v384, %v619
        %624 = vrot.lane.b32.xlu0 %v620, 126
        %v625 = vpop.permute.xlu0 %624
        %626 = vrot.lane.b32.xlu0 %v621, 126
        %v627 = vpop.permute.xlu0 %626
        %v628 = vsel %vm415, %v625, %v627
        %v631 = vadd.f32 %v616, %v628
        %v632 = vadd.f32 %v617, %v627
        %s633 = sld [smem:[#allocation2 + $0x12]]
        %v634 = vstv %s633
        %v635 = vmul.f32 %v383, %v634
        %v636 = vmul.f32 %v384, %v634
        %639 = vrot.lane.b32.xlu0 %v635, 125
        %v640 = vpop.permute.xlu0 %639
        %641 = vrot.lane.b32.xlu0 %v636, 125
        %v642 = vpop.permute.xlu0 %641
        %v643 = vsel %vm431, %v640, %v642
        %v646 = vadd.f32 %v631, %v643
        %v647 = vadd.f32 %v632, %v642
        %s648 = sld [smem:[#allocation2 + $0x13]]
        %v649 = vstv %s648
        %v650 = vmul.f32 %v383, %v649
        %v651 = vmul.f32 %v384, %v649
        %654 = vrot.lane.b32.xlu0 %v650, 124
        %v655 = vpop.permute.xlu0 %654
        %656 = vrot.lane.b32.xlu0 %v651, 124
        %v657 = vpop.permute.xlu0 %656
        %v658 = vsel %vm447, %v655, %v657
        %v661 = vadd.f32 %v646, %v658
        %v662 = vadd.f32 %v647, %v657
        %s663 = sld [smem:[#allocation4 + $0x3]]
        %v664 = vstv %s663
        %v665 = vadd.f32 %v661, %v664
        %v666 = vadd.f32 %v662, %v664
        %v667 = vmax.f32 %v665, 0.0
        %v668 = vmax.f32 %v666, 0.0
        %s669 = sld [smem:[#allocation2 + $0x14]]
        %v670 = vstv %s669
        %v671 = vmul.f32 %v383, %v670
        %v672 = vmul.f32 %v384, %v670
        %s673 = sld [smem:[#allocation2 + $0x15]]
        %v674 = vstv %s673
        %v675 = vmul.f32 %v383, %v674
        %v676 = vmul.f32 %v384, %v674
        %679 = vrot.lane.b32.xlu0 %v675, 127
        %v680 = vpop.permute.xlu0 %679
        %681 = vrot.lane.b32.xlu0 %v676, 127
        %v682 = vpop.permute.xlu0 %681
        %v683 = vsel %vm399, %v680, %v682
        %v686 = vadd.f32 %v671, %v683
        %v687 = vadd.f32 %v672, %v682
        %s688 = sld [smem:[#allocation2 + $0x16]]
        %v689 = vstv %s688
        %v690 = vmul.f32 %v383, %v689
        %v691 = vmul.f32 %v384, %v689
        %694 = vrot.lane.b32.xlu0 %v690, 126
        %v695 = vpop.permute.xlu0 %694
        %696 = vrot.lane.b32.xlu0 %v691, 126
        %v697 = vpop.permute.xlu0 %696
        %v698 = vsel %vm415, %v695, %v697
        %v701 = vadd.f32 %v686, %v698
        %v702 = vadd.f32 %v687, %v697
        %s703 = sld [smem:[#allocation2 + $0x17]]
        %v704 = vstv %s703
        %v705 = vmul.f32 %v383, %v704
        %v706 = vmul.f32 %v384, %v704
        %709 = vrot.lane.b32.xlu0 %v705, 125
        %v710 = vpop.permute.xlu0 %709
        %711 = vrot.lane.b32.xlu0 %v706, 125
        %v712 = vpop.permute.xlu0 %711
        %v713 = vsel %vm431, %v710, %v712
        %v716 = vadd.f32 %v701, %v713
        %v717 = vadd.f32 %v702, %v712
        %s718 = sld [smem:[#allocation2 + $0x18]]
        %v719 = vstv %s718
        %v720 = vmul.f32 %v383, %v719
        %v721 = vmul.f32 %v384, %v719
        %724 = vrot.lane.b32.xlu0 %v720, 124
        %v725 = vpop.permute.xlu0 %724
        %726 = vrot.lane.b32.xlu0 %v721, 124
        %v727 = vpop.permute.xlu0 %726
        %v728 = vsel %vm447, %v725, %v727
        %v731 = vadd.f32 %v716, %v728
        %v732 = vadd.f32 %v717, %v727
        %s733 = sld [smem:[#allocation4 + $0x4]]
        %v734 = vstv %s733
        %v735 = vadd.f32 %v731, %v734
        %v736 = vadd.f32 %v732, %v734
        %v737 = vmax.f32 %v735, 0.0
        %v738 = vmax.f32 %v736, 0.0
        %s739 = sld [smem:[#allocation2 + $0x19]]
        %v740 = vstv %s739
        %v741 = vmul.f32 %v383, %v740
        %v742 = vmul.f32 %v384, %v740
        %s743 = sld [smem:[#allocation2 + $0x1a]]
        %v744 = vstv %s743
        %v745 = vmul.f32 %v383, %v744
        %v746 = vmul.f32 %v384, %v744
        %749 = vrot.lane.b32.xlu0 %v745, 127
        %v750 = vpop.permute.xlu0 %749
        %751 = vrot.lane.b32.xlu0 %v746, 127
        %v752 = vpop.permute.xlu0 %751
        %v753 = vsel %vm399, %v750, %v752
        %v756 = vadd.f32 %v741, %v753
        %v757 = vadd.f32 %v742, %v752
        %s758 = sld [smem:[#allocation2 + $0x1b]]
        %v759 = vstv %s758
        %v760 = vmul.f32 %v383, %v759
        %v761 = vmul.f32 %v384, %v759
        %764 = vrot.lane.b32.xlu0 %v760, 126
        %v765 = vpop.permute.xlu0 %764
        %766 = vrot.lane.b32.xlu0 %v761, 126
        %v767 = vpop.permute.xlu0 %766
        %v768 = vsel %vm415, %v765, %v767
        %v771 = vadd.f32 %v756, %v768
        %v772 = vadd.f32 %v757, %v767
        %s773 = sld [smem:[#allocation2 + $0x1c]]
        %v774 = vstv %s773
        %v775 = vmul.f32 %v383, %v774
        %v776 = vmul.f32 %v384, %v774
        %779 = vrot.lane.b32.xlu0 %v775, 125
        %v780 = vpop.permute.xlu0 %779
        %781 = vrot.lane.b32.xlu0 %v776, 125
        %v782 = vpop.permute.xlu0 %781
        %v783 = vsel %vm431, %v780, %v782
        %v786 = vadd.f32 %v771, %v783
        %v787 = vadd.f32 %v772, %v782
        %s788 = sld [smem:[#allocation2 + $0x1d]]
        %v789 = vstv %s788
        %v790 = vmul.f32 %v383, %v789
        %v791 = vmul.f32 %v384, %v789
        %794 = vrot.lane.b32.xlu0 %v790, 124
        %v795 = vpop.permute.xlu0 %794
        %796 = vrot.lane.b32.xlu0 %v791, 124
        %v797 = vpop.permute.xlu0 %796
        %v798 = vsel %vm447, %v795, %v797
        %v801 = vadd.f32 %v786, %v798
        %v802 = vadd.f32 %v787, %v797
        %s803 = sld [smem:[#allocation4 + $0x5]]
        %v804 = vstv %s803
        %v805 = vadd.f32 %v801, %v804
        %v806 = vadd.f32 %v802, %v804
        %v807 = vmax.f32 %v805, 0.0
        %v808 = vmax.f32 %v806, 0.0
        %s809 = sld [smem:[#allocation2 + $0x1e]]
        %v810 = vstv %s809
        %v811 = vmul.f32 %v383, %v810
        %v812 = vmul.f32 %v384, %v810
        %s813 = sld [smem:[#allocation2 + $0x1f]]
        %v814 = vstv %s813
        %v815 = vmul.f32 %v383, %v814
        %v816 = vmul.f32 %v384, %v814
        %819 = vrot.lane.b32.xlu0 %v815, 127
        %v820 = vpop.permute.xlu0 %819
        %821 = vrot.lane.b32.xlu0 %v816, 127
        %v822 = vpop.permute.xlu0 %821
        %v823 = vsel %vm399, %v820, %v822
        %v826 = vadd.f32 %v811, %v823
        %v827 = vadd.f32 %v812, %v822
        %s828 = sld [smem:[#allocation2 + $0x20]]
        %v829 = vstv %s828
        %v830 = vmul.f32 %v383, %v829
        %v831 = vmul.f32 %v384, %v829
        %834 = vrot.lane.b32.xlu0 %v830, 126
        %v835 = vpop.permute.xlu0 %834
        %836 = vrot.lane.b32.xlu0 %v831, 126
        %v837 = vpop.permute.xlu0 %836
        %v838 = vsel %vm415, %v835, %v837
        %v841 = vadd.f32 %v826, %v838
        %v842 = vadd.f32 %v827, %v837
        %s843 = sld [smem:[#allocation2 + $0x21]]
        %v844 = vstv %s843
        %v845 = vmul.f32 %v383, %v844
        %v846 = vmul.f32 %v384, %v844
        %849 = vrot.lane.b32.xlu0 %v845, 125
        %v850 = vpop.permute.xlu0 %849
        %851 = vrot.lane.b32.xlu0 %v846, 125
        %v852 = vpop.permute.xlu0 %851
        %v853 = vsel %vm431, %v850, %v852
        %v856 = vadd.f32 %v841, %v853
        %v857 = vadd.f32 %v842, %v852
        %s858 = sld [smem:[#allocation2 + $0x22]]
        %v859 = vstv %s858
        %v860 = vmul.f32 %v383, %v859
        %v861 = vmul.f32 %v384, %v859
        %864 = vrot.lane.b32.xlu0 %v860, 124
        %v865 = vpop.permute.xlu0 %864
        %866 = vrot.lane.b32.xlu0 %v861, 124
        %v867 = vpop.permute.xlu0 %866
        %v868 = vsel %vm447, %v865, %v867
        %v871 = vadd.f32 %v856, %v868
        %v872 = vadd.f32 %v857, %v867
        %s873 = sld [smem:[#allocation4 + $0x6]]
        %v874 = vstv %s873
        %v875 = vadd.f32 %v871, %v874
        %v876 = vadd.f32 %v872, %v874
        %v877 = vmax.f32 %v875, 0.0
        %v878 = vmax.f32 %v876, 0.0
        %s879 = sld [smem:[#allocation2 + $0x23]]
        %v880 = vstv %s879
        %v881 = vmul.f32 %v383, %v880
        %v882 = vmul.f32 %v384, %v880
        %s883 = sld [smem:[#allocation2 + $0x24]]
        %v884 = vstv %s883
        %v885 = vmul.f32 %v383, %v884
        %v886 = vmul.f32 %v384, %v884
        %889 = vrot.lane.b32.xlu0 %v885, 127
        %v890 = vpop.permute.xlu0 %889
        %891 = vrot.lane.b32.xlu0 %v886, 127
        %v892 = vpop.permute.xlu0 %891
        %v893 = vsel %vm399, %v890, %v892
        %v896 = vadd.f32 %v881, %v893
        %v897 = vadd.f32 %v882, %v892
        %s898 = sld [smem:[#allocation2 + $0x25]]
        %v899 = vstv %s898
        %v900 = vmul.f32 %v383, %v899
        %v901 = vmul.f32 %v384, %v899
        %904 = vrot.lane.b32.xlu0 %v900, 126
        %v905 = vpop.permute.xlu0 %904
        %906 = vrot.lane.b32.xlu0 %v901, 126
        %v907 = vpop.permute.xlu0 %906
        %v908 = vsel %vm415, %v905, %v907
        %v911 = vadd.f32 %v896, %v908
        %v912 = vadd.f32 %v897, %v907
        %s913 = sld [smem:[#allocation2 + $0x26]]
        %v914 = vstv %s913
        %v915 = vmul.f32 %v383, %v914
        %v916 = vmul.f32 %v384, %v914
        %919 = vrot.lane.b32.xlu0 %v915, 125
        %v920 = vpop.permute.xlu0 %919
        %921 = vrot.lane.b32.xlu0 %v916, 125
        %v922 = vpop.permute.xlu0 %921
        %v923 = vsel %vm431, %v920, %v922
        %v926 = vadd.f32 %v911, %v923
        %v927 = vadd.f32 %v912, %v922
        %s928 = sld [smem:[#allocation2 + $0x27]]
        %v929 = vstv %s928
        %v930 = vmul.f32 %v383, %v929
        %v931 = vmul.f32 %v384, %v929
        %934 = vrot.lane.b32.xlu0 %v930, 124
        %v935 = vpop.permute.xlu0 %934
        %936 = vrot.lane.b32.xlu0 %v931, 124
        %v937 = vpop.permute.xlu0 %936
        %v938 = vsel %vm447, %v935, %v937
        %v941 = vadd.f32 %v926, %v938
        %v942 = vadd.f32 %v927, %v937
        %s943 = sld [smem:[#allocation4 + $0x7]]
        %v944 = vstv %s943
        %v945 = vadd.f32 %v941, %v944
        %v946 = vadd.f32 %v942, %v944
        %v947 = vmax.f32 %v945, 0.0
        %v948 = vmax.f32 %v946, 0.0
        %951 = vrot.lane.b32.xlu0 %v457, 127
        %v952 = vpop.permute.xlu0 %951
        %953 = vrot.lane.b32.xlu0 %v458, 127
        %v954 = vpop.permute.xlu0 %953
        %v955 = vsel %vm399, %v952, %v954
        %v958 = vmax.f32 %v457, %v955
        %v959 = vmax.f32 %v458, %v954
        %962 = vrot.lane.b32.xlu0 %v527, 127
        %v963 = vpop.permute.xlu0 %962
        %964 = vrot.lane.b32.xlu0 %v528, 127
        %v965 = vpop.permute.xlu0 %964
        %v966 = vsel %vm399, %v963, %v965
        %v969 = vmax.f32 %v527, %v966
        %v970 = vmax.f32 %v528, %v965
        %973 = vrot.lane.b32.xlu0 %v597, 127
        %v974 = vpop.permute.xlu0 %973
        %975 = vrot.lane.b32.xlu0 %v598, 127
        %v976 = vpop.permute.xlu0 %975
        %v977 = vsel %vm399, %v974, %v976
        %v980 = vmax.f32 %v597, %v977
        %v981 = vmax.f32 %v598, %v976
        %984 = vrot.lane.b32.xlu0 %v667, 127
        %v985 = vpop.permute.xlu0 %984
        %986 = vrot.lane.b32.xlu0 %v668, 127
        %v987 = vpop.permute.xlu0 %986
        %v988 = vsel %vm399, %v985, %v987
        %v991 = vmax.f32 %v667, %v988
        %v992 = vmax.f32 %v668, %v987
        %995 = vrot.lane.b32.xlu0 %v737, 127
        %v996 = vpop.permute.xlu0 %995
        %997 = vrot.lane.b32.xlu0 %v738, 127
        %v998 = vpop.permute.xlu0 %997
        %v999 = vsel %vm399, %v996, %v998
        %v1002 = vmax.f32 %v737, %v999
        %v1003 = vmax.f32 %v738, %v998
        %1006 = vrot.lane.b32.xlu0 %v807, 127
        %v1007 = vpop.permute.xlu0 %1006
        %1008 = vrot.lane.b32.xlu0 %v808, 127
        %v1009 = vpop.permute.xlu0 %1008
        %v1010 = vsel %vm399, %v1007, %v1009
        %v1013 = vmax.f32 %v807, %v1010
        %v1014 = vmax.f32 %v808, %v1009
        %1017 = vrot.lane.b32.xlu0 %v877, 127
        %v1018 = vpop.permute.xlu0 %1017
        %1019 = vrot.lane.b32.xlu0 %v878, 127
        %v1020 = vpop.permute.xlu0 %1019
        %v1021 = vsel %vm399, %v1018, %v1020
        %v1024 = vmax.f32 %v877, %v1021
        %v1025 = vmax.f32 %v878, %v1020
        %1028 = vrot.lane.b32.xlu0 %v947, 127
        %v1029 = vpop.permute.xlu0 %1028
        %1030 = vrot.lane.b32.xlu0 %v948, 127
        %v1031 = vpop.permute.xlu0 %1030
        %v1032 = vsel %vm399, %v1029, %v1031
        %v1035 = vmax.f32 %v947, %v1032
        %v1036 = vmax.f32 %v948, %v1031
        %s1037 = sld [smem:[#allocation6]]
        %v1038 = vstv %s1037
        %v1039 = vmul.f32 %v958, %v1038
        %v1040 = vmul.f32 %v959, %v1038
        %s1041 = sld [smem:[#allocation6 + $0x1]]
        %v1042 = vstv %s1041
        %v1043 = vmul.f32 %v958, %v1042
        %v1044 = vmul.f32 %v959, %v1042
        %1047 = vrot.lane.b32.xlu0 %v1043, 126
        %v1048 = vpop.permute.xlu0 %1047
        %1049 = vrot.lane.b32.xlu0 %v1044, 126
        %v1050 = vpop.permute.xlu0 %1049
        %v1051 = vsel %vm415, %v1048, %v1050
        %v1054 = vadd.f32 %v1039, %v1051
        %v1055 = vadd.f32 %v1040, %v1050
        %s1056 = sld [smem:[#allocation6 + $0x2]]
        %v1057 = vstv %s1056
        %v1058 = vmul.f32 %v958, %v1057
        %v1059 = vmul.f32 %v959, %v1057
        %1062 = vrot.lane.b32.xlu0 %v1058, 124
        %v1063 = vpop.permute.xlu0 %1062
        %1064 = vrot.lane.b32.xlu0 %v1059, 124
        %v1065 = vpop.permute.xlu0 %1064
        %v1066 = vsel %vm447, %v1063, %v1065
        %v1069 = vadd.f32 %v1054, %v1066
        %v1070 = vadd.f32 %v1055, %v1065
        %s1071 = sld [smem:[#allocation6 + $0x3]]
        %v1072 = vstv %s1071
        %v1073 = vmul.f32 %v969, %v1072
        %v1074 = vmul.f32 %v970, %v1072
        %v1075 = vadd.f32 %v1069, %v1073
        %v1076 = vadd.f32 %v1070, %v1074
        %s1077 = sld [smem:[#allocation6 + $0x4]]
        %v1078 = vstv %s1077
        %v1079 = vmul.f32 %v969, %v1078
        %v1080 = vmul.f32 %v970, %v1078
        %1083 = vrot.lane.b32.xlu0 %v1079, 126
        %v1084 = vpop.permute.xlu0 %1083
        %1085 = vrot.lane.b32.xlu0 %v1080, 126
        %v1086 = vpop.permute.xlu0 %1085
        %v1087 = vsel %vm415, %v1084, %v1086
        %v1090 = vadd.f32 %v1075, %v1087
        %v1091 = vadd.f32 %v1076, %v1086
        %s1092 = sld [smem:[#allocation6 + $0x5]]
        %v1093 = vstv %s1092
        %v1094 = vmul.f32 %v969, %v1093
        %v1095 = vmul.f32 %v970, %v1093
        %1098 = vrot.lane.b32.xlu0 %v1094, 124
        %v1099 = vpop.permute.xlu0 %1098
        %1100 = vrot.lane.b32.xlu0 %v1095, 124
        %v1101 = vpop.permute.xlu0 %1100
        %v1102 = vsel %vm447, %v1099, %v1101
        %v1105 = vadd.f32 %v1090, %v1102
        %v1106 = vadd.f32 %v1091, %v1101
        %s1107 = sld [smem:[#allocation6 + $0x6]]
        %v1108 = vstv %s1107
        %v1109 = vmul.f32 %v980, %v1108
        %v1110 = vmul.f32 %v981, %v1108
        %v1111 = vadd.f32 %v1105, %v1109
        %v1112 = vadd.f32 %v1106, %v1110
        %s1113 = sld [smem:[#allocation6 + $0x7]]
        %v1114 = vstv %s1113
        %v1115 = vmul.f32 %v980, %v1114
        %v1116 = vmul.f32 %v981, %v1114
        %1119 = vrot.lane.b32.xlu0 %v1115, 126
        %v1120 = vpop.permute.xlu0 %1119
        %1121 = vrot.lane.b32.xlu0 %v1116, 126
        %v1122 = vpop.permute.xlu0 %1121
        %v1123 = vsel %vm415, %v1120, %v1122
        %v1126 = vadd.f32 %v1111, %v1123
        %v1127 = vadd.f32 %v1112, %v1122
        %s1128 = sld [smem:[#allocation6 + $0x8]]
        %v1129 = vstv %s1128
        %v1130 = vmul.f32 %v980, %v1129
        %v1131 = vmul.f32 %v981, %v1129
        %1134 = vrot.lane.b32.xlu0 %v1130, 124
        %v1135 = vpop.permute.xlu0 %1134
        %1136 = vrot.lane.b32.xlu0 %v1131, 124
        %v1137 = vpop.permute.xlu0 %1136
        %v1138 = vsel %vm447, %v1135, %v1137
        %v1141 = vadd.f32 %v1126, %v1138
        %v1142 = vadd.f32 %v1127, %v1137
        %s1143 = sld [smem:[#allocation6 + $0x9]]
        %v1144 = vstv %s1143
        %v1145 = vmul.f32 %v991, %v1144
        %v1146 = vmul.f32 %v992, %v1144
        %v1147 = vadd.f32 %v1141, %v1145
        %v1148 = vadd.f32 %v1142, %v1146
        %s1149 = sld [smem:[#allocation6 + $0xa]]
        %v1150 = vstv %s1149
        %v1151 = vmul.f32 %v991, %v1150
        %v1152 = vmul.f32 %v992, %v1150
        %1155 = vrot.lane.b32.xlu0 %v1151, 126
        %v1156 = vpop.permute.xlu0 %1155
        %1157 = vrot.lane.b32.xlu0 %v1152, 126
        %v1158 = vpop.permute.xlu0 %1157
        %v1159 = vsel %vm415, %v1156, %v1158
        %v1162 = vadd.f32 %v1147, %v1159
        %v1163 = vadd.f32 %v1148, %v1158
        %s1164 = sld [smem:[#allocation6 + $0xb]]
        %v1165 = vstv %s1164
        %v1166 = vmul.f32 %v991, %v1165
        %v1167 = vmul.f32 %v992, %v1165
        %1170 = vrot.lane.b32.xlu0 %v1166, 124
        %v1171 = vpop.permute.xlu0 %1170
        %1172 = vrot.lane.b32.xlu0 %v1167, 124
        %v1173 = vpop.permute.xlu0 %1172
        %v1174 = vsel %vm447, %v1171, %v1173
        %v1177 = vadd.f32 %v1162, %v1174
        %v1178 = vadd.f32 %v1163, %v1173
        %s1179 = sld [smem:[#allocation6 + $0xc]]
        %v1180 = vstv %s1179
        %v1181 = vmul.f32 %v1002, %v1180
        %v1182 = vmul.f32 %v1003, %v1180
        %v1183 = vadd.f32 %v1177, %v1181
        %v1184 = vadd.f32 %v1178, %v1182
        %s1185 = sld [smem:[#allocation6 + $0xd]]
        %v1186 = vstv %s1185
        %v1187 = vmul.f32 %v1002, %v1186
        %v1188 = vmul.f32 %v1003, %v1186
        %1191 = vrot.lane.b32.xlu0 %v1187, 126
        %v1192 = vpop.permute.xlu0 %1191
        %1193 = vrot.lane.b32.xlu0 %v1188, 126
        %v1194 = vpop.permute.xlu0 %1193
        %v1195 = vsel %vm415, %v1192, %v1194
        %v1198 = vadd.f32 %v1183, %v1195
        %v1199 = vadd.f32 %v1184, %v1194
        %s1200 = sld [smem:[#allocation6 + $0xe]]
        %v1201 = vstv %s1200
        %v1202 = vmul.f32 %v1002, %v1201
        %v1203 = vmul.f32 %v1003, %v1201
        %1206 = vrot.lane.b32.xlu0 %v1202, 124
        %v1207 = vpop.permute.xlu0 %1206
        %1208 = vrot.lane.b32.xlu0 %v1203, 124
        %v1209 = vpop.permute.xlu0 %1208
        %v1210 = vsel %vm447, %v1207, %v1209
        %v1213 = vadd.f32 %v1198, %v1210
        %v1214 = vadd.f32 %v1199, %v1209
        %s1215 = sld [smem:[#allocation6 + $0xf]]
        %v1216 = vstv %s1215
        %v1217 = vmul.f32 %v1013, %v1216
        %v1218 = vmul.f32 %v1014, %v1216
        %v1219 = vadd.f32 %v1213, %v1217
        %v1220 = vadd.f32 %v1214, %v1218
        %s1221 = sld [smem:[#allocation6 + $0x10]]
        %v1222 = vstv %s1221
        %v1223 = vmul.f32 %v1013, %v1222
        %v1224 = vmul.f32 %v1014, %v1222
        %1227 = vrot.lane.b32.xlu0 %v1223, 126
        %v1228 = vpop.permute.xlu0 %1227
        %1229 = vrot.lane.b32.xlu0 %v1224, 126
        %v1230 = vpop.permute.xlu0 %1229
        %v1231 = vsel %vm415, %v1228, %v1230
        %v1234 = vadd.f32 %v1219, %v1231
        %v1235 = vadd.f32 %v1220, %v1230
        %s1236 = sld [smem:[#allocation6 + $0x11]]
        %v1237 = vstv %s1236
        %v1238 = vmul.f32 %v1013, %v1237
        %v1239 = vmul.f32 %v1014, %v1237
        %1242 = vrot.lane.b32.xlu0 %v1238, 124
        %v1243 = vpop.permute.xlu0 %1242
        %1244 = vrot.lane.b32.xlu0 %v1239, 124
        %v1245 = vpop.permute.xlu0 %1244
        %v1246 = vsel %vm447, %v1243, %v1245
        %v1249 = vadd.f32 %v1234, %v1246
        %v1250 = vadd.f32 %v1235, %v1245
        %s1251 = sld [smem:[#allocation6 + $0x12]]
        %v1252 = vstv %s1251
        %v1253 = vmul.f32 %v1024, %v1252
        %v1254 = vmul.f32 %v1025, %v1252
        %v1255 = vadd.f32 %v1249, %v1253
        %v1256 = vadd.f32 %v1250, %v1254
        %s1257 = sld [smem:[#allocation6 + $0x13]]
        %v1258 = vstv %s1257
        %v1259 = vmul.f32 %v1024, %v1258
        %v1260 = vmul.f32 %v1025, %v1258
        %1263 = vrot.lane.b32.xlu0 %v1259, 126
        %v1264 = vpop.permute.xlu0 %1263
        %1265 = vrot.lane.b32.xlu0 %v1260, 126
        %v1266 = vpop.permute.xlu0 %1265
        %v1267 = vsel %vm415, %v1264, %v1266
        %v1270 = vadd.f32 %v1255, %v1267
        %v1271 = vadd.f32 %v1256, %v1266
        %s1272 = sld [smem:[#allocation6 + $0x14]]
        %v1273 = vstv %s1272
        %v1274 = vmul.f32 %v1024, %v1273
        %v1275 = vmul.f32 %v1025, %v1273
        %1278 = vrot.lane.b32.xlu0 %v1274, 124
        %v1279 = vpop.permute.xlu0 %1278
        %1280 = vrot.lane.b32.xlu0 %v1275, 124
        %v1281 = vpop.permute.xlu0 %1280
        %v1282 = vsel %vm447, %v1279, %v1281
        %v1285 = vadd.f32 %v1270, %v1282
        %v1286 = vadd.f32 %v1271, %v1281
        %s1287 = sld [smem:[#allocation6 + $0x15]]
        %v1288 = vstv %s1287
        %v1289 = vmul.f32 %v1035, %v1288
        %v1290 = vmul.f32 %v1036, %v1288
        %v1291 = vadd.f32 %v1285, %v1289
        %v1292 = vadd.f32 %v1286, %v1290
        %s1293 = sld [smem:[#allocation6 + $0x16]]
        %v1294 = vstv %s1293
        %v1295 = vmul.f32 %v1035, %v1294
        %v1296 = vmul.f32 %v1036, %v1294
        %1299 = vrot.lane.b32.xlu0 %v1295, 126
        %v1300 = vpop.permute.xlu0 %1299
        %1301 = vrot.lane.b32.xlu0 %v1296, 126
        %v1302 = vpop.permute.xlu0 %1301
        %v1303 = vsel %vm415, %v1300, %v1302
        %v1306 = vadd.f32 %v1291, %v1303
        %v1307 = vadd.f32 %v1292, %v1302
        %s1308 = sld [smem:[#allocation6 + $0x17]]
        %v1309 = vstv %s1308
        %v1310 = vmul.f32 %v1035, %v1309
        %v1311 = vmul.f32 %v1036, %v1309
        %1314 = vrot.lane.b32.xlu0 %v1310, 124
        %v1315 = vpop.permute.xlu0 %1314
        %1316 = vrot.lane.b32.xlu0 %v1311, 124
        %v1317 = vpop.permute.xlu0 %1316
        %v1318 = vsel %vm447, %v1315, %v1317
        %v1321 = vadd.f32 %v1306, %v1318
        %v1322 = vadd.f32 %v1307, %v1317
        %s1323 = sld [smem:[#allocation7]]
        %v1324 = vstv %s1323
        %v1325 = vadd.f32 %v1321, %v1324
        %v1326 = vadd.f32 %v1322, %v1324
        %v1327 = vmax.f32 %v1325, 0.0
        %v1328 = vmax.f32 %v1326, 0.0
        %s1329 = sld [smem:[#allocation6 + $0x18]]
        %v1330 = vstv %s1329
        %v1331 = vmul.f32 %v958, %v1330
        %v1332 = vmul.f32 %v959, %v1330
        %s1333 = sld [smem:[#allocation6 + $0x19]]
        %v1334 = vstv %s1333
        %v1335 = vmul.f32 %v958, %v1334
        %v1336 = vmul.f32 %v959, %v1334
        %1339 = vrot.lane.b32.xlu0 %v1335, 126
        %v1340 = vpop.permute.xlu0 %1339
        %1341 = vrot.lane.b32.xlu0 %v1336, 126
        %v1342 = vpop.permute.xlu0 %1341
        %v1343 = vsel %vm415, %v1340, %v1342
        %v1346 = vadd.f32 %v1331, %v1343
        %v1347 = vadd.f32 %v1332, %v1342
        %s1348 = sld [smem:[#allocation6 + $0x1a]]
        %v1349 = vstv %s1348
        %v1350 = vmul.f32 %v958, %v1349
        %v1351 = vmul.f32 %v959, %v1349
        %1354 = vrot.lane.b32.xlu0 %v1350, 124
        %v1355 = vpop.permute.xlu0 %1354
        %1356 = vrot.lane.b32.xlu0 %v1351, 124
        %v1357 = vpop.permute.xlu0 %1356
        %v1358 = vsel %vm447, %v1355, %v1357
        %v1361 = vadd.f32 %v1346, %v1358
        %v1362 = vadd.f32 %v1347, %v1357
        %s1363 = sld [smem:[#allocation6 + $0x1b]]
        %v1364 = vstv %s1363
        %v1365 = vmul.f32 %v969, %v1364
        %v1366 = vmul.f32 %v970, %v1364
        %v1367 = vadd.f32 %v1361, %v1365
        %v1368 = vadd.f32 %v1362, %v1366
        %s1369 = sld [smem:[#allocation6 + $0x1c]]
        %v1370 = vstv %s1369
        %v1371 = vmul.f32 %v969, %v1370
        %v1372 = vmul.f32 %v970, %v1370
        %1375 = vrot.lane.b32.xlu0 %v1371, 126
        %v1376 = vpop.permute.xlu0 %1375
        %1377 = vrot.lane.b32.xlu0 %v1372, 126
        %v1378 = vpop.permute.xlu0 %1377
        %v1379 = vsel %vm415, %v1376, %v1378
        %v1382 = vadd.f32 %v1367, %v1379
        %v1383 = vadd.f32 %v1368, %v1378
        %s1384 = sld [smem:[#allocation6 + $0x1d]]
        %v1385 = vstv %s1384
        %v1386 = vmul.f32 %v969, %v1385
        %v1387 = vmul.f32 %v970, %v1385
        %1390 = vrot.lane.b32.xlu0 %v1386, 124
        %v1391 = vpop.permute.xlu0 %1390
        %1392 = vrot.lane.b32.xlu0 %v1387, 124
        %v1393 = vpop.permute.xlu0 %1392
        %v1394 = vsel %vm447, %v1391, %v1393
        %v1397 = vadd.f32 %v1382, %v1394
        %v1398 = vadd.f32 %v1383, %v1393
        %s1399 = sld [smem:[#allocation6 + $0x1e]]
        %v1400 = vstv %s1399
        %v1401 = vmul.f32 %v980, %v1400
        %v1402 = vmul.f32 %v981, %v1400
        %v1403 = vadd.f32 %v1397, %v1401
        %v1404 = vadd.f32 %v1398, %v1402
        %s1405 = sld [smem:[#allocation6 + $0x1f]]
        %v1406 = vstv %s1405
        %v1407 = vmul.f32 %v980, %v1406
        %v1408 = vmul.f32 %v981, %v1406
        %1411 = vrot.lane.b32.xlu0 %v1407, 126
        %v1412 = vpop.permute.xlu0 %1411
        %1413 = vrot.lane.b32.xlu0 %v1408, 126
        %v1414 = vpop.permute.xlu0 %1413
        %v1415 = vsel %vm415, %v1412, %v1414
        %v1418 = vadd.f32 %v1403, %v1415
        %v1419 = vadd.f32 %v1404, %v1414
        %s1420 = sld [smem:[#allocation6 + $0x20]]
        %v1421 = vstv %s1420
        %v1422 = vmul.f32 %v980, %v1421
        %v1423 = vmul.f32 %v981, %v1421
        %1426 = vrot.lane.b32.xlu0 %v1422, 124
        %v1427 = vpop.permute.xlu0 %1426
        %1428 = vrot.lane.b32.xlu0 %v1423, 124
        %v1429 = vpop.permute.xlu0 %1428
        %v1430 = vsel %vm447, %v1427, %v1429
        %v1433 = vadd.f32 %v1418, %v1430
        %v1434 = vadd.f32 %v1419, %v1429
        %s1435 = sld [smem:[#allocation6 + $0x21]]
        %v1436 = vstv %s1435
        %v1437 = vmul.f32 %v991, %v1436
        %v1438 = vmul.f32 %v992, %v1436
        %v1439 = vadd.f32 %v1433, %v1437
        %v1440 = vadd.f32 %v1434, %v1438
        %s1441 = sld [smem:[#allocation6 + $0x22]]
        %v1442 = vstv %s1441
        %v1443 = vmul.f32 %v991, %v1442
        %v1444 = vmul.f32 %v992, %v1442
        %1447 = vrot.lane.b32.xlu0 %v1443, 126
        %v1448 = vpop.permute.xlu0 %1447
        %1449 = vrot.lane.b32.xlu0 %v1444, 126
        %v1450 = vpop.permute.xlu0 %1449
        %v1451 = vsel %vm415, %v1448, %v1450
        %v1454 = vadd.f32 %v1439, %v1451
        %v1455 = vadd.f32 %v1440, %v1450
        %s1456 = sld [smem:[#allocation6 + $0x23]]
        %v1457 = vstv %s1456
        %v1458 = vmul.f32 %v991, %v1457
        %v1459 = vmul.f32 %v992, %v1457
        %1462 = vrot.lane.b32.xlu0 %v1458, 124
        %v1463 = vpop.permute.xlu0 %1462
        %1464 = vrot.lane.b32.xlu0 %v1459, 124
        %v1465 = vpop.permute.xlu0 %1464
        %v1466 = vsel %vm447, %v1463, %v1465
        %v1469 = vadd.f32 %v1454, %v1466
        %v1470 = vadd.f32 %v1455, %v1465
        %s1471 = sld [smem:[#allocation6 + $0x24]]
        %v1472 = vstv %s1471
        %v1473 = vmul.f32 %v1002, %v1472
        %v1474 = vmul.f32 %v1003, %v1472
        %v1475 = vadd.f32 %v1469, %v1473
        %v1476 = vadd.f32 %v1470, %v1474
        %s1477 = sld [smem:[#allocation6 + $0x25]]
        %v1478 = vstv %s1477
        %v1479 = vmul.f32 %v1002, %v1478
        %v1480 = vmul.f32 %v1003, %v1478
        %1483 = vrot.lane.b32.xlu0 %v1479, 126
        %v1484 = vpop.permute.xlu0 %1483
        %1485 = vrot.lane.b32.xlu0 %v1480, 126
        %v1486 = vpop.permute.xlu0 %1485
        %v1487 = vsel %vm415, %v1484, %v1486
        %v1490 = vadd.f32 %v1475, %v1487
        %v1491 = vadd.f32 %v1476, %v1486
        %s1492 = sld [smem:[#allocation6 + $0x26]]
        %v1493 = vstv %s1492
        %v1494 = vmul.f32 %v1002, %v1493
        %v1495 = vmul.f32 %v1003, %v1493
        %1498 = vrot.lane.b32.xlu0 %v1494, 124
        %v1499 = vpop.permute.xlu0 %1498
        %1500 = vrot.lane.b32.xlu0 %v1495, 124
        %v1501 = vpop.permute.xlu0 %1500
        %v1502 = vsel %vm447, %v1499, %v1501
        %v1505 = vadd.f32 %v1490, %v1502
        %v1506 = vadd.f32 %v1491, %v1501
        %s1507 = sld [smem:[#allocation6 + $0x27]]
        %v1508 = vstv %s1507
        %v1509 = vmul.f32 %v1013, %v1508
        %v1510 = vmul.f32 %v1014, %v1508
        %v1511 = vadd.f32 %v1505, %v1509
        %v1512 = vadd.f32 %v1506, %v1510
        %s1513 = sld [smem:[#allocation6 + $0x28]]
        %v1514 = vstv %s1513
        %v1515 = vmul.f32 %v1013, %v1514
        %v1516 = vmul.f32 %v1014, %v1514
        %1519 = vrot.lane.b32.xlu0 %v1515, 126
        %v1520 = vpop.permute.xlu0 %1519
        %1521 = vrot.lane.b32.xlu0 %v1516, 126
        %v1522 = vpop.permute.xlu0 %1521
        %v1523 = vsel %vm415, %v1520, %v1522
        %v1526 = vadd.f32 %v1511, %v1523
        %v1527 = vadd.f32 %v1512, %v1522
        %s1528 = sld [smem:[#allocation6 + $0x29]]
        %v1529 = vstv %s1528
        %v1530 = vmul.f32 %v1013, %v1529
        %v1531 = vmul.f32 %v1014, %v1529
        %1534 = vrot.lane.b32.xlu0 %v1530, 124
        %v1535 = vpop.permute.xlu0 %1534
        %1536 = vrot.lane.b32.xlu0 %v1531, 124
        %v1537 = vpop.permute.xlu0 %1536
        %v1538 = vsel %vm447, %v1535, %v1537
        %v1541 = vadd.f32 %v1526, %v1538
        %v1542 = vadd.f32 %v1527, %v1537
        %s1543 = sld [smem:[#allocation6 + $0x2a]]
        %v1544 = vstv %s1543
        %v1545 = vmul.f32 %v1024, %v1544
        %v1546 = vmul.f32 %v1025, %v1544
        %v1547 = vadd.f32 %v1541, %v1545
        %v1548 = vadd.f32 %v1542, %v1546
        %s1549 = sld [smem:[#allocation6 + $0x2b]]
        %v1550 = vstv %s1549
        %v1551 = vmul.f32 %v1024, %v1550
        %v1552 = vmul.f32 %v1025, %v1550
        %1555 = vrot.lane.b32.xlu0 %v1551, 126
        %v1556 = vpop.permute.xlu0 %1555
        %1557 = vrot.lane.b32.xlu0 %v1552, 126
        %v1558 = vpop.permute.xlu0 %1557
        %v1559 = vsel %vm415, %v1556, %v1558
        %v1562 = vadd.f32 %v1547, %v1559
        %v1563 = vadd.f32 %v1548, %v1558
        %s1564 = sld [smem:[#allocation6 + $0x2c]]
        %v1565 = vstv %s1564
        %v1566 = vmul.f32 %v1024, %v1565
        %v1567 = vmul.f32 %v1025, %v1565
        %1570 = vrot.lane.b32.xlu0 %v1566, 124
        %v1571 = vpop.permute.xlu0 %1570
        %1572 = vrot.lane.b32.xlu0 %v1567, 124
        %v1573 = vpop.permute.xlu0 %1572
        %v1574 = vsel %vm447, %v1571, %v1573
        %v1577 = vadd.f32 %v1562, %v1574
        %v1578 = vadd.f32 %v1563, %v1573
        %s1579 = sld [smem:[#allocation6 + $0x2d]]
        %v1580 = vstv %s1579
        %v1581 = vmul.f32 %v1035, %v1580
        %v1582 = vmul.f32 %v1036, %v1580
        %v1583 = vadd.f32 %v1577, %v1581
        %v1584 = vadd.f32 %v1578, %v1582
        %s1585 = sld [smem:[#allocation6 + $0x2e]]
        %v1586 = vstv %s1585
        %v1587 = vmul.f32 %v1035, %v1586
        %v1588 = vmul.f32 %v1036, %v1586
        %1591 = vrot.lane.b32.xlu0 %v1587, 126
        %v1592 = vpop.permute.xlu0 %1591
        %1593 = vrot.lane.b32.xlu0 %v1588, 126
        %v1594 = vpop.permute.xlu0 %1593
        %v1595 = vsel %vm415, %v1592, %v1594
        %v1598 = vadd.f32 %v1583, %v1595
        %v1599 = vadd.f32 %v1584, %v1594
        %s1600 = sld [smem:[#allocation6 + $0x2f]]
        %v1601 = vstv %s1600
        %v1602 = vmul.f32 %v1035, %v1601
        %v1603 = vmul.f32 %v1036, %v1601
        %1606 = vrot.lane.b32.xlu0 %v1602, 124
        %v1607 = vpop.permute.xlu0 %1606
        %1608 = vrot.lane.b32.xlu0 %v1603, 124
        %v1609 = vpop.permute.xlu0 %1608
        %v1610 = vsel %vm447, %v1607, %v1609
        %v1613 = vadd.f32 %v1598, %v1610
        %v1614 = vadd.f32 %v1599, %v1609
        %s1615 = sld [smem:[#allocation7 + $0x1]]
        %v1616 = vstv %s1615
        %v1617 = vadd.f32 %v1613, %v1616
        %v1618 = vadd.f32 %v1614, %v1616
        %v1619 = vmax.f32 %v1617, 0.0
        %v1620 = vmax.f32 %v1618, 0.0
        %s1621 = sld [smem:[#allocation6 + $0x30]]
        %v1622 = vstv %s1621
        %v1623 = vmul.f32 %v958, %v1622
        %v1624 = vmul.f32 %v959, %v1622
        %s1625 = sld [smem:[#allocation6 + $0x31]]
        %v1626 = vstv %s1625
        %v1627 = vmul.f32 %v958, %v1626
        %v1628 = vmul.f32 %v959, %v1626
        %1631 = vrot.lane.b32.xlu0 %v1627, 126
        %v1632 = vpop.permute.xlu0 %1631
        %1633 = vrot.lane.b32.xlu0 %v1628, 126
        %v1634 = vpop.permute.xlu0 %1633
        %v1635 = vsel %vm415, %v1632, %v1634
        %v1638 = vadd.f32 %v1623, %v1635
        %v1639 = vadd.f32 %v1624, %v1634
        %s1640 = sld [smem:[#allocation6 + $0x32]]
        %v1641 = vstv %s1640
        %v1642 = vmul.f32 %v958, %v1641
        %v1643 = vmul.f32 %v959, %v1641
        %1646 = vrot.lane.b32.xlu0 %v1642, 124
        %v1647 = vpop.permute.xlu0 %1646
        %1648 = vrot.lane.b32.xlu0 %v1643, 124
        %v1649 = vpop.permute.xlu0 %1648
        %v1650 = vsel %vm447, %v1647, %v1649
        %v1653 = vadd.f32 %v1638, %v1650
        %v1654 = vadd.f32 %v1639, %v1649
        %s1655 = sld [smem:[#allocation6 + $0x33]]
        %v1656 = vstv %s1655
        %v1657 = vmul.f32 %v969, %v1656
        %v1658 = vmul.f32 %v970, %v1656
        %v1659 = vadd.f32 %v1653, %v1657
        %v1660 = vadd.f32 %v1654, %v1658
        %s1661 = sld [smem:[#allocation6 + $0x34]]
        %v1662 = vstv %s1661
        %v1663 = vmul.f32 %v969, %v1662
        %v1664 = vmul.f32 %v970, %v1662
        %1667 = vrot.lane.b32.xlu0 %v1663, 126
        %v1668 = vpop.permute.xlu0 %1667
        %1669 = vrot.lane.b32.xlu0 %v1664, 126
        %v1670 = vpop.permute.xlu0 %1669
        %v1671 = vsel %vm415, %v1668, %v1670
        %v1674 = vadd.f32 %v1659, %v1671
        %v1675 = vadd.f32 %v1660, %v1670
        %s1676 = sld [smem:[#allocation6 + $0x35]]
        %v1677 = vstv %s1676
        %v1678 = vmul.f32 %v969, %v1677
        %v1679 = vmul.f32 %v970, %v1677
        %1682 = vrot.lane.b32.xlu0 %v1678, 124
        %v1683 = vpop.permute.xlu0 %1682
        %1684 = vrot.lane.b32.xlu0 %v1679, 124
        %v1685 = vpop.permute.xlu0 %1684
        %v1686 = vsel %vm447, %v1683, %v1685
        %v1689 = vadd.f32 %v1674, %v1686
        %v1690 = vadd.f32 %v1675, %v1685
        %s1691 = sld [smem:[#allocation6 + $0x36]]
        %v1692 = vstv %s1691
        %v1693 = vmul.f32 %v980, %v1692
        %v1694 = vmul.f32 %v981, %v1692
        %v1695 = vadd.f32 %v1689, %v1693
        %v1696 = vadd.f32 %v1690, %v1694
        %s1697 = sld [smem:[#allocation6 + $0x37]]
        %v1698 = vstv %s1697
        %v1699 = vmul.f32 %v980, %v1698
        %v1700 = vmul.f32 %v981, %v1698
        %1703 = vrot.lane.b32.xlu0 %v1699, 126
        %v1704 = vpop.permute.xlu0 %1703
        %1705 = vrot.lane.b32.xlu0 %v1700, 126
        %v1706 = vpop.permute.xlu0 %1705
        %v1707 = vsel %vm415, %v1704, %v1706
        %v1710 = vadd.f32 %v1695, %v1707
        %v1711 = vadd.f32 %v1696, %v1706
        %s1712 = sld [smem:[#allocation6 + $0x38]]
        %v1713 = vstv %s1712
        %v1714 = vmul.f32 %v980, %v1713
        %v1715 = vmul.f32 %v981, %v1713
        %1718 = vrot.lane.b32.xlu0 %v1714, 124
        %v1719 = vpop.permute.xlu0 %1718
        %1720 = vrot.lane.b32.xlu0 %v1715, 124
        %v1721 = vpop.permute.xlu0 %1720
        %v1722 = vsel %vm447, %v1719, %v1721
        %v1725 = vadd.f32 %v1710, %v1722
        %v1726 = vadd.f32 %v1711, %v1721
        %s1727 = sld [smem:[#allocation6 + $0x39]]
        %v1728 = vstv %s1727
        %v1729 = vmul.f32 %v991, %v1728
        %v1730 = vmul.f32 %v992, %v1728
        %v1731 = vadd.f32 %v1725, %v1729
        %v1732 = vadd.f32 %v1726, %v1730
        %s1733 = sld [smem:[#allocation6 + $0x3a]]
        %v1734 = vstv %s1733
        %v1735 = vmul.f32 %v991, %v1734
        %v1736 = vmul.f32 %v992, %v1734
        %1739 = vrot.lane.b32.xlu0 %v1735, 126
        %v1740 = vpop.permute.xlu0 %1739
        %1741 = vrot.lane.b32.xlu0 %v1736, 126
        %v1742 = vpop.permute.xlu0 %1741
        %v1743 = vsel %vm415, %v1740, %v1742
        %v1746 = vadd.f32 %v1731, %v1743
        %v1747 = vadd.f32 %v1732, %v1742
        %s1748 = sld [smem:[#allocation6 + $0x3b]]
        %v1749 = vstv %s1748
        %v1750 = vmul.f32 %v991, %v1749
        %v1751 = vmul.f32 %v992, %v1749
        %1754 = vrot.lane.b32.xlu0 %v1750, 124
        %v1755 = vpop.permute.xlu0 %1754
        %1756 = vrot.lane.b32.xlu0 %v1751, 124
        %v1757 = vpop.permute.xlu0 %1756
        %v1758 = vsel %vm447, %v1755, %v1757
        %v1761 = vadd.f32 %v1746, %v1758
        %v1762 = vadd.f32 %v1747, %v1757
        %s1763 = sld [smem:[#allocation6 + $0x3c]]
        %v1764 = vstv %s1763
        %v1765 = vmul.f32 %v1002, %v1764
        %v1766 = vmul.f32 %v1003, %v1764
        %v1767 = vadd.f32 %v1761, %v1765
        %v1768 = vadd.f32 %v1762, %v1766
        %s1769 = sld [smem:[#allocation6 + $0x3d]]
        %v1770 = vstv %s1769
        %v1771 = vmul.f32 %v1002, %v1770
        %v1772 = vmul.f32 %v1003, %v1770
        %1775 = vrot.lane.b32.xlu0 %v1771, 126
        %v1776 = vpop.permute.xlu0 %1775
        %1777 = vrot.lane.b32.xlu0 %v1772, 126
        %v1778 = vpop.permute.xlu0 %1777
        %v1779 = vsel %vm415, %v1776, %v1778
        %v1782 = vadd.f32 %v1767, %v1779
        %v1783 = vadd.f32 %v1768, %v1778
        %s1784 = sld [smem:[#allocation6 + $0x3e]]
        %v1785 = vstv %s1784
        %v1786 = vmul.f32 %v1002, %v1785
        %v1787 = vmul.f32 %v1003, %v1785
        %1790 = vrot.lane.b32.xlu0 %v1786, 124
        %v1791 = vpop.permute.xlu0 %1790
        %1792 = vrot.lane.b32.xlu0 %v1787, 124
        %v1793 = vpop.permute.xlu0 %1792
        %v1794 = vsel %vm447, %v1791, %v1793
        %v1797 = vadd.f32 %v1782, %v1794
        %v1798 = vadd.f32 %v1783, %v1793
        %s1799 = sld [smem:[#allocation6 + $0x3f]]
        %v1800 = vstv %s1799
        %v1801 = vmul.f32 %v1013, %v1800
        %v1802 = vmul.f32 %v1014, %v1800
        %v1803 = vadd.f32 %v1797, %v1801
        %v1804 = vadd.f32 %v1798, %v1802
        %s1805 = sld [smem:[#allocation6 + $0x40]]
        %v1806 = vstv %s1805
        %v1807 = vmul.f32 %v1013, %v1806
        %v1808 = vmul.f32 %v1014, %v1806
        %1811 = vrot.lane.b32.xlu0 %v1807, 126
        %v1812 = vpop.permute.xlu0 %1811
        %1813 = vrot.lane.b32.xlu0 %v1808, 126
        %v1814 = vpop.permute.xlu0 %1813
        %v1815 = vsel %vm415, %v1812, %v1814
        %v1818 = vadd.f32 %v1803, %v1815
        %v1819 = vadd.f32 %v1804, %v1814
        %s1820 = sld [smem:[#allocation6 + $0x41]]
        %v1821 = vstv %s1820
        %v1822 = vmul.f32 %v1013, %v1821
        %v1823 = vmul.f32 %v1014, %v1821
        %1826 = vrot.lane.b32.xlu0 %v1822, 124
        %v1827 = vpop.permute.xlu0 %1826
        %1828 = vrot.lane.b32.xlu0 %v1823, 124
        %v1829 = vpop.permute.xlu0 %1828
        %v1830 = vsel %vm447, %v1827, %v1829
        %v1833 = vadd.f32 %v1818, %v1830
        %v1834 = vadd.f32 %v1819, %v1829
        %s1835 = sld [smem:[#allocation6 + $0x42]]
        %v1836 = vstv %s1835
        %v1837 = vmul.f32 %v1024, %v1836
        %v1838 = vmul.f32 %v1025, %v1836
        %v1839 = vadd.f32 %v1833, %v1837
        %v1840 = vadd.f32 %v1834, %v1838
        %s1841 = sld [smem:[#allocation6 + $0x43]]
        %v1842 = vstv %s1841
        %v1843 = vmul.f32 %v1024, %v1842
        %v1844 = vmul.f32 %v1025, %v1842
        %1847 = vrot.lane.b32.xlu0 %v1843, 126
        %v1848 = vpop.permute.xlu0 %1847
        %1849 = vrot.lane.b32.xlu0 %v1844, 126
        %v1850 = vpop.permute.xlu0 %1849
        %v1851 = vsel %vm415, %v1848, %v1850
        %v1854 = vadd.f32 %v1839, %v1851
        %v1855 = vadd.f32 %v1840, %v1850
        %s1856 = sld [smem:[#allocation6 + $0x44]]
        %v1857 = vstv %s1856
        %v1858 = vmul.f32 %v1024, %v1857
        %v1859 = vmul.f32 %v1025, %v1857
        %1862 = vrot.lane.b32.xlu0 %v1858, 124
        %v1863 = vpop.permute.xlu0 %1862
        %1864 = vrot.lane.b32.xlu0 %v1859, 124
        %v1865 = vpop.permute.xlu0 %1864
        %v1866 = vsel %vm447, %v1863, %v1865
        %v1869 = vadd.f32 %v1854, %v1866
        %v1870 = vadd.f32 %v1855, %v1865
        %s1871 = sld [smem:[#allocation6 + $0x45]]
        %v1872 = vstv %s1871
        %v1873 = vmul.f32 %v1035, %v1872
        %v1874 = vmul.f32 %v1036, %v1872
        %v1875 = vadd.f32 %v1869, %v1873
        %v1876 = vadd.f32 %v1870, %v1874
        %s1877 = sld [smem:[#allocation6 + $0x46]]
        %v1878 = vstv %s1877
        %v1879 = vmul.f32 %v1035, %v1878
        %v1880 = vmul.f32 %v1036, %v1878
        %1883 = vrot.lane.b32.xlu0 %v1879, 126
        %v1884 = vpop.permute.xlu0 %1883
        %1885 = vrot.lane.b32.xlu0 %v1880, 126
        %v1886 = vpop.permute.xlu0 %1885
        %v1887 = vsel %vm415, %v1884, %v1886
        %v1890 = vadd.f32 %v1875, %v1887
        %v1891 = vadd.f32 %v1876, %v1886
        %s1892 = sld [smem:[#allocation6 + $0x47]]
        %v1893 = vstv %s1892
        %v1894 = vmul.f32 %v1035, %v1893
        %v1895 = vmul.f32 %v1036, %v1893
        %1898 = vrot.lane.b32.xlu0 %v1894, 124
        %v1899 = vpop.permute.xlu0 %1898
        %1900 = vrot.lane.b32.xlu0 %v1895, 124
        %v1901 = vpop.permute.xlu0 %1900
        %v1902 = vsel %vm447, %v1899, %v1901
        %v1905 = vadd.f32 %v1890, %v1902
        %v1906 = vadd.f32 %v1891, %v1901
        %s1907 = sld [smem:[#allocation7 + $0x2]]
        %v1908 = vstv %s1907
        %v1909 = vadd.f32 %v1905, %v1908
        %v1910 = vadd.f32 %v1906, %v1908
        %v1911 = vmax.f32 %v1909, 0.0
        %v1912 = vmax.f32 %v1910, 0.0
        %s1913 = sld [smem:[#allocation6 + $0x48]]
        %v1914 = vstv %s1913
        %v1915 = vmul.f32 %v958, %v1914
        %v1916 = vmul.f32 %v959, %v1914
        %s1917 = sld [smem:[#allocation6 + $0x49]]
        %v1918 = vstv %s1917
        %v1919 = vmul.f32 %v958, %v1918
        %v1920 = vmul.f32 %v959, %v1918
        %1923 = vrot.lane.b32.xlu0 %v1919, 126
        %v1924 = vpop.permute.xlu0 %1923
        %1925 = vrot.lane.b32.xlu0 %v1920, 126
        %v1926 = vpop.permute.xlu0 %1925
        %v1927 = vsel %vm415, %v1924, %v1926
        %v1930 = vadd.f32 %v1915, %v1927
        %v1931 = vadd.f32 %v1916, %v1926
        %s1932 = sld [smem:[#allocation6 + $0x4a]]
        %v1933 = vstv %s1932
        %v1934 = vmul.f32 %v958, %v1933
        %v1935 = vmul.f32 %v959, %v1933
        %1938 = vrot.lane.b32.xlu0 %v1934, 124
        %v1939 = vpop.permute.xlu0 %1938
        %1940 = vrot.lane.b32.xlu0 %v1935, 124
        %v1941 = vpop.permute.xlu0 %1940
        %v1942 = vsel %vm447, %v1939, %v1941
        %v1945 = vadd.f32 %v1930, %v1942
        %v1946 = vadd.f32 %v1931, %v1941
        %s1947 = sld [smem:[#allocation6 + $0x4b]]
        %v1948 = vstv %s1947
        %v1949 = vmul.f32 %v969, %v1948
        %v1950 = vmul.f32 %v970, %v1948
        %v1951 = vadd.f32 %v1945, %v1949
        %v1952 = vadd.f32 %v1946, %v1950
        %s1953 = sld [smem:[#allocation6 + $0x4c]]
        %v1954 = vstv %s1953
        %v1955 = vmul.f32 %v969, %v1954
        %v1956 = vmul.f32 %v970, %v1954
        %1959 = vrot.lane.b32.xlu0 %v1955, 126
        %v1960 = vpop.permute.xlu0 %1959
        %1961 = vrot.lane.b32.xlu0 %v1956, 126
        %v1962 = vpop.permute.xlu0 %1961
        %v1963 = vsel %vm415, %v1960, %v1962
        %v1966 = vadd.f32 %v1951, %v1963
        %v1967 = vadd.f32 %v1952, %v1962
        %s1968 = sld [smem:[#allocation6 + $0x4d]]
        %v1969 = vstv %s1968
        %v1970 = vmul.f32 %v969, %v1969
        %v1971 = vmul.f32 %v970, %v1969
        %1974 = vrot.lane.b32.xlu0 %v1970, 124
        %v1975 = vpop.permute.xlu0 %1974
        %1976 = vrot.lane.b32.xlu0 %v1971, 124
        %v1977 = vpop.permute.xlu0 %1976
        %v1978 = vsel %vm447, %v1975, %v1977
        %v1981 = vadd.f32 %v1966, %v1978
        %v1982 = vadd.f32 %v1967, %v1977
        %s1983 = sld [smem:[#allocation6 + $0x4e]]
        %v1984 = vstv %s1983
        %v1985 = vmul.f32 %v980, %v1984
        %v1986 = vmul.f32 %v981, %v1984
        %v1987 = vadd.f32 %v1981, %v1985
        %v1988 = vadd.f32 %v1982, %v1986
        %s1989 = sld [smem:[#allocation6 + $0x4f]]
        %v1990 = vstv %s1989
        %v1991 = vmul.f32 %v980, %v1990
        %v1992 = vmul.f32 %v981, %v1990
        %1995 = vrot.lane.b32.xlu0 %v1991, 126
        %v1996 = vpop.permute.xlu0 %1995
        %1997 = vrot.lane.b32.xlu0 %v1992, 126
        %v1998 = vpop.permute.xlu0 %1997
        %v1999 = vsel %vm415, %v1996, %v1998
        %v2002 = vadd.f32 %v1987, %v1999
        %v2003 = vadd.f32 %v1988, %v1998
        %s2004 = sld [smem:[#allocation6 + $0x50]]
        %v2005 = vstv %s2004
        %v2006 = vmul.f32 %v980, %v2005
        %v2007 = vmul.f32 %v981, %v2005
        %2010 = vrot.lane.b32.xlu0 %v2006, 124
        %v2011 = vpop.permute.xlu0 %2010
        %2012 = vrot.lane.b32.xlu0 %v2007, 124
        %v2013 = vpop.permute.xlu0 %2012
        %v2014 = vsel %vm447, %v2011, %v2013
        %v2017 = vadd.f32 %v2002, %v2014
        %v2018 = vadd.f32 %v2003, %v2013
        %s2019 = sld [smem:[#allocation6 + $0x51]]
        %v2020 = vstv %s2019
        %v2021 = vmul.f32 %v991, %v2020
        %v2022 = vmul.f32 %v992, %v2020
        %v2023 = vadd.f32 %v2017, %v2021
        %v2024 = vadd.f32 %v2018, %v2022
        %s2025 = sld [smem:[#allocation6 + $0x52]]
        %v2026 = vstv %s2025
        %v2027 = vmul.f32 %v991, %v2026
        %v2028 = vmul.f32 %v992, %v2026
        %2031 = vrot.lane.b32.xlu0 %v2027, 126
        %v2032 = vpop.permute.xlu0 %2031
        %2033 = vrot.lane.b32.xlu0 %v2028, 126
        %v2034 = vpop.permute.xlu0 %2033
        %v2035 = vsel %vm415, %v2032, %v2034
        %v2038 = vadd.f32 %v2023, %v2035
        %v2039 = vadd.f32 %v2024, %v2034
        %s2040 = sld [smem:[#allocation6 + $0x53]]
        %v2041 = vstv %s2040
        %v2042 = vmul.f32 %v991, %v2041
        %v2043 = vmul.f32 %v992, %v2041
        %2046 = vrot.lane.b32.xlu0 %v2042, 124
        %v2047 = vpop.permute.xlu0 %2046
        %2048 = vrot.lane.b32.xlu0 %v2043, 124
        %v2049 = vpop.permute.xlu0 %2048
        %v2050 = vsel %vm447, %v2047, %v2049
        %v2053 = vadd.f32 %v2038, %v2050
        %v2054 = vadd.f32 %v2039, %v2049
        %s2055 = sld [smem:[#allocation6 + $0x54]]
        %v2056 = vstv %s2055
        %v2057 = vmul.f32 %v1002, %v2056
        %v2058 = vmul.f32 %v1003, %v2056
        %v2059 = vadd.f32 %v2053, %v2057
        %v2060 = vadd.f32 %v2054, %v2058
        %s2061 = sld [smem:[#allocation6 + $0x55]]
        %v2062 = vstv %s2061
        %v2063 = vmul.f32 %v1002, %v2062
        %v2064 = vmul.f32 %v1003, %v2062
        %2067 = vrot.lane.b32.xlu0 %v2063, 126
        %v2068 = vpop.permute.xlu0 %2067
        %2069 = vrot.lane.b32.xlu0 %v2064, 126
        %v2070 = vpop.permute.xlu0 %2069
        %v2071 = vsel %vm415, %v2068, %v2070
        %v2074 = vadd.f32 %v2059, %v2071
        %v2075 = vadd.f32 %v2060, %v2070
        %s2076 = sld [smem:[#allocation6 + $0x56]]
        %v2077 = vstv %s2076
        %v2078 = vmul.f32 %v1002, %v2077
        %v2079 = vmul.f32 %v1003, %v2077
        %2082 = vrot.lane.b32.xlu0 %v2078, 124
        %v2083 = vpop.permute.xlu0 %2082
        %2084 = vrot.lane.b32.xlu0 %v2079, 124
        %v2085 = vpop.permute.xlu0 %2084
        %v2086 = vsel %vm447, %v2083, %v2085
        %v2089 = vadd.f32 %v2074, %v2086
        %v2090 = vadd.f32 %v2075, %v2085
        %s2091 = sld [smem:[#allocation6 + $0x57]]
        %v2092 = vstv %s2091
        %v2093 = vmul.f32 %v1013, %v2092
        %v2094 = vmul.f32 %v1014, %v2092
        %v2095 = vadd.f32 %v2089, %v2093
        %v2096 = vadd.f32 %v2090, %v2094
        %s2097 = sld [smem:[#allocation6 + $0x58]]
        %v2098 = vstv %s2097
        %v2099 = vmul.f32 %v1013, %v2098
        %v2100 = vmul.f32 %v1014, %v2098
        %2103 = vrot.lane.b32.xlu0 %v2099, 126
        %v2104 = vpop.permute.xlu0 %2103
        %2105 = vrot.lane.b32.xlu0 %v2100, 126
        %v2106 = vpop.permute.xlu0 %2105
        %v2107 = vsel %vm415, %v2104, %v2106
        %v2110 = vadd.f32 %v2095, %v2107
        %v2111 = vadd.f32 %v2096, %v2106
        %s2112 = sld [smem:[#allocation6 + $0x59]]
        %v2113 = vstv %s2112
        %v2114 = vmul.f32 %v1013, %v2113
        %v2115 = vmul.f32 %v1014, %v2113
        %2118 = vrot.lane.b32.xlu0 %v2114, 124
        %v2119 = vpop.permute.xlu0 %2118
        %2120 = vrot.lane.b32.xlu0 %v2115, 124
        %v2121 = vpop.permute.xlu0 %2120
        %v2122 = vsel %vm447, %v2119, %v2121
        %v2125 = vadd.f32 %v2110, %v2122
        %v2126 = vadd.f32 %v2111, %v2121
        %s2127 = sld [smem:[#allocation6 + $0x5a]]
        %v2128 = vstv %s2127
        %v2129 = vmul.f32 %v1024, %v2128
        %v2130 = vmul.f32 %v1025, %v2128
        %v2131 = vadd.f32 %v2125, %v2129
        %v2132 = vadd.f32 %v2126, %v2130
        %s2133 = sld [smem:[#allocation6 + $0x5b]]
        %v2134 = vstv %s2133
        %v2135 = vmul.f32 %v1024, %v2134
        %v2136 = vmul.f32 %v1025, %v2134
        %2139 = vrot.lane.b32.xlu0 %v2135, 126
        %v2140 = vpop.permute.xlu0 %2139
        %2141 = vrot.lane.b32.xlu0 %v2136, 126
        %v2142 = vpop.permute.xlu0 %2141
        %v2143 = vsel %vm415, %v2140, %v2142
        %v2146 = vadd.f32 %v2131, %v2143
        %v2147 = vadd.f32 %v2132, %v2142
        %s2148 = sld [smem:[#allocation6 + $0x5c]]
        %v2149 = vstv %s2148
        %v2150 = vmul.f32 %v1024, %v2149
        %v2151 = vmul.f32 %v1025, %v2149
        %2154 = vrot.lane.b32.xlu0 %v2150, 124
        %v2155 = vpop.permute.xlu0 %2154
        %2156 = vrot.lane.b32.xlu0 %v2151, 124
        %v2157 = vpop.permute.xlu0 %2156
        %v2158 = vsel %vm447, %v2155, %v2157
        %v2161 = vadd.f32 %v2146, %v2158
        %v2162 = vadd.f32 %v2147, %v2157
        %s2163 = sld [smem:[#allocation6 + $0x5d]]
        %v2164 = vstv %s2163
        %v2165 = vmul.f32 %v1035, %v2164
        %v2166 = vmul.f32 %v1036, %v2164
        %v2167 = vadd.f32 %v2161, %v2165
        %v2168 = vadd.f32 %v2162, %v2166
        %s2169 = sld [smem:[#allocation6 + $0x5e]]
        %v2170 = vstv %s2169
        %v2171 = vmul.f32 %v1035, %v2170
        %v2172 = vmul.f32 %v1036, %v2170
        %2175 = vrot.lane.b32.xlu0 %v2171, 126
        %v2176 = vpop.permute.xlu0 %2175
        %2177 = vrot.lane.b32.xlu0 %v2172, 126
        %v2178 = vpop.permute.xlu0 %2177
        %v2179 = vsel %vm415, %v2176, %v2178
        %v2182 = vadd.f32 %v2167, %v2179
        %v2183 = vadd.f32 %v2168, %v2178
        %s2184 = sld [smem:[#allocation6 + $0x5f]]
        %v2185 = vstv %s2184
        %v2186 = vmul.f32 %v1035, %v2185
        %v2187 = vmul.f32 %v1036, %v2185
        %2190 = vrot.lane.b32.xlu0 %v2186, 124
        %v2191 = vpop.permute.xlu0 %2190
        %2192 = vrot.lane.b32.xlu0 %v2187, 124
        %v2193 = vpop.permute.xlu0 %2192
        %v2194 = vsel %vm447, %v2191, %v2193
        %v2197 = vadd.f32 %v2182, %v2194
        %v2198 = vadd.f32 %v2183, %v2193
        %s2199 = sld [smem:[#allocation7 + $0x3]]
        %v2200 = vstv %s2199
        %v2201 = vadd.f32 %v2197, %v2200
        %v2202 = vadd.f32 %v2198, %v2200
        %v2203 = vmax.f32 %v2201, 0.0
        %v2204 = vmax.f32 %v2202, 0.0
        %s2205 = sld [smem:[#allocation6 + $0x60]]
        %v2206 = vstv %s2205
        %v2207 = vmul.f32 %v958, %v2206
        %v2208 = vmul.f32 %v959, %v2206
        %s2209 = sld [smem:[#allocation6 + $0x61]]
        %v2210 = vstv %s2209
        %v2211 = vmul.f32 %v958, %v2210
        %v2212 = vmul.f32 %v959, %v2210
        %2215 = vrot.lane.b32.xlu0 %v2211, 126
        %v2216 = vpop.permute.xlu0 %2215
        %2217 = vrot.lane.b32.xlu0 %v2212, 126
        %v2218 = vpop.permute.xlu0 %2217
        %v2219 = vsel %vm415, %v2216, %v2218
        %v2222 = vadd.f32 %v2207, %v2219
        %v2223 = vadd.f32 %v2208, %v2218
        %s2224 = sld [smem:[#allocation6 + $0x62]]
        %v2225 = vstv %s2224
        %v2226 = vmul.f32 %v958, %v2225
        %v2227 = vmul.f32 %v959, %v2225
        %2230 = vrot.lane.b32.xlu0 %v2226, 124
        %v2231 = vpop.permute.xlu0 %2230
        %2232 = vrot.lane.b32.xlu0 %v2227, 124
        %v2233 = vpop.permute.xlu0 %2232
        %v2234 = vsel %vm447, %v2231, %v2233
        %v2237 = vadd.f32 %v2222, %v2234
        %v2238 = vadd.f32 %v2223, %v2233
        %s2239 = sld [smem:[#allocation6 + $0x63]]
        %v2240 = vstv %s2239
        %v2241 = vmul.f32 %v969, %v2240
        %v2242 = vmul.f32 %v970, %v2240
        %v2243 = vadd.f32 %v2237, %v2241
        %v2244 = vadd.f32 %v2238, %v2242
        %s2245 = sld [smem:[#allocation6 + $0x64]]
        %v2246 = vstv %s2245
        %v2247 = vmul.f32 %v969, %v2246
        %v2248 = vmul.f32 %v970, %v2246
        %2251 = vrot.lane.b32.xlu0 %v2247, 126
        %v2252 = vpop.permute.xlu0 %2251
        %2253 = vrot.lane.b32.xlu0 %v2248, 126
        %v2254 = vpop.permute.xlu0 %2253
        %v2255 = vsel %vm415, %v2252, %v2254
        %v2258 = vadd.f32 %v2243, %v2255
        %v2259 = vadd.f32 %v2244, %v2254
        %s2260 = sld [smem:[#allocation6 + $0x65]]
        %v2261 = vstv %s2260
        %v2262 = vmul.f32 %v969, %v2261
        %v2263 = vmul.f32 %v970, %v2261
        %2266 = vrot.lane.b32.xlu0 %v2262, 124
        %v2267 = vpop.permute.xlu0 %2266
        %2268 = vrot.lane.b32.xlu0 %v2263, 124
        %v2269 = vpop.permute.xlu0 %2268
        %v2270 = vsel %vm447, %v2267, %v2269
        %v2273 = vadd.f32 %v2258, %v2270
        %v2274 = vadd.f32 %v2259, %v2269
        %s2275 = sld [smem:[#allocation6 + $0x66]]
        %v2276 = vstv %s2275
        %v2277 = vmul.f32 %v980, %v2276
        %v2278 = vmul.f32 %v981, %v2276
        %v2279 = vadd.f32 %v2273, %v2277
        %v2280 = vadd.f32 %v2274, %v2278
        %s2281 = sld [smem:[#allocation6 + $0x67]]
        %v2282 = vstv %s2281
        %v2283 = vmul.f32 %v980, %v2282
        %v2284 = vmul.f32 %v981, %v2282
        %2287 = vrot.lane.b32.xlu0 %v2283, 126
        %v2288 = vpop.permute.xlu0 %2287
        %2289 = vrot.lane.b32.xlu0 %v2284, 126
        %v2290 = vpop.permute.xlu0 %2289
        %v2291 = vsel %vm415, %v2288, %v2290
        %v2294 = vadd.f32 %v2279, %v2291
        %v2295 = vadd.f32 %v2280, %v2290
        %s2296 = sld [smem:[#allocation6 + $0x68]]
        %v2297 = vstv %s2296
        %v2298 = vmul.f32 %v980, %v2297
        %v2299 = vmul.f32 %v981, %v2297
        %2302 = vrot.lane.b32.xlu0 %v2298, 124
        %v2303 = vpop.permute.xlu0 %2302
        %2304 = vrot.lane.b32.xlu0 %v2299, 124
        %v2305 = vpop.permute.xlu0 %2304
        %v2306 = vsel %vm447, %v2303, %v2305
        %v2309 = vadd.f32 %v2294, %v2306
        %v2310 = vadd.f32 %v2295, %v2305
        %s2311 = sld [smem:[#allocation6 + $0x69]]
        %v2312 = vstv %s2311
        %v2313 = vmul.f32 %v991, %v2312
        %v2314 = vmul.f32 %v992, %v2312
        %v2315 = vadd.f32 %v2309, %v2313
        %v2316 = vadd.f32 %v2310, %v2314
        %s2317 = sld [smem:[#allocation6 + $0x6a]]
        %v2318 = vstv %s2317
        %v2319 = vmul.f32 %v991, %v2318
        %v2320 = vmul.f32 %v992, %v2318
        %2323 = vrot.lane.b32.xlu0 %v2319, 126
        %v2324 = vpop.permute.xlu0 %2323
        %2325 = vrot.lane.b32.xlu0 %v2320, 126
        %v2326 = vpop.permute.xlu0 %2325
        %v2327 = vsel %vm415, %v2324, %v2326
        %v2330 = vadd.f32 %v2315, %v2327
        %v2331 = vadd.f32 %v2316, %v2326
        %s2332 = sld [smem:[#allocation6 + $0x6b]]
        %v2333 = vstv %s2332
        %v2334 = vmul.f32 %v991, %v2333
        %v2335 = vmul.f32 %v992, %v2333
        %2338 = vrot.lane.b32.xlu0 %v2334, 124
        %v2339 = vpop.permute.xlu0 %2338
        %2340 = vrot.lane.b32.xlu0 %v2335, 124
        %v2341 = vpop.permute.xlu0 %2340
        %v2342 = vsel %vm447, %v2339, %v2341
        %v2345 = vadd.f32 %v2330, %v2342
        %v2346 = vadd.f32 %v2331, %v2341
        %s2347 = sld [smem:[#allocation6 + $0x6c]]
        %v2348 = vstv %s2347
        %v2349 = vmul.f32 %v1002, %v2348
        %v2350 = vmul.f32 %v1003, %v2348
        %v2351 = vadd.f32 %v2345, %v2349
        %v2352 = vadd.f32 %v2346, %v2350
        %s2353 = sld [smem:[#allocation6 + $0x6d]]
        %v2354 = vstv %s2353
        %v2355 = vmul.f32 %v1002, %v2354
        %v2356 = vmul.f32 %v1003, %v2354
        %2359 = vrot.lane.b32.xlu0 %v2355, 126
        %v2360 = vpop.permute.xlu0 %2359
        %2361 = vrot.lane.b32.xlu0 %v2356, 126
        %v2362 = vpop.permute.xlu0 %2361
        %v2363 = vsel %vm415, %v2360, %v2362
        %v2366 = vadd.f32 %v2351, %v2363
        %v2367 = vadd.f32 %v2352, %v2362
        %s2368 = sld [smem:[#allocation6 + $0x6e]]
        %v2369 = vstv %s2368
        %v2370 = vmul.f32 %v1002, %v2369
        %v2371 = vmul.f32 %v1003, %v2369
        %2374 = vrot.lane.b32.xlu0 %v2370, 124
        %v2375 = vpop.permute.xlu0 %2374
        %2376 = vrot.lane.b32.xlu0 %v2371, 124
        %v2377 = vpop.permute.xlu0 %2376
        %v2378 = vsel %vm447, %v2375, %v2377
        %v2381 = vadd.f32 %v2366, %v2378
        %v2382 = vadd.f32 %v2367, %v2377
        %s2383 = sld [smem:[#allocation6 + $0x6f]]
        %v2384 = vstv %s2383
        %v2385 = vmul.f32 %v1013, %v2384
        %v2386 = vmul.f32 %v1014, %v2384
        %v2387 = vadd.f32 %v2381, %v2385
        %v2388 = vadd.f32 %v2382, %v2386
        %s2389 = sld [smem:[#allocation6 + $0x70]]
        %v2390 = vstv %s2389
        %v2391 = vmul.f32 %v1013, %v2390
        %v2392 = vmul.f32 %v1014, %v2390
        %2395 = vrot.lane.b32.xlu0 %v2391, 126
        %v2396 = vpop.permute.xlu0 %2395
        %2397 = vrot.lane.b32.xlu0 %v2392, 126
        %v2398 = vpop.permute.xlu0 %2397
        %v2399 = vsel %vm415, %v2396, %v2398
        %v2402 = vadd.f32 %v2387, %v2399
        %v2403 = vadd.f32 %v2388, %v2398
        %s2404 = sld [smem:[#allocation6 + $0x71]]
        %v2405 = vstv %s2404
        %v2406 = vmul.f32 %v1013, %v2405
        %v2407 = vmul.f32 %v1014, %v2405
        %2410 = vrot.lane.b32.xlu0 %v2406, 124
        %v2411 = vpop.permute.xlu0 %2410
        %2412 = vrot.lane.b32.xlu0 %v2407, 124
        %v2413 = vpop.permute.xlu0 %2412
        %v2414 = vsel %vm447, %v2411, %v2413
        %v2417 = vadd.f32 %v2402, %v2414
        %v2418 = vadd.f32 %v2403, %v2413
        %s2419 = sld [smem:[#allocation6 + $0x72]]
        %v2420 = vstv %s2419
        %v2421 = vmul.f32 %v1024, %v2420
        %v2422 = vmul.f32 %v1025, %v2420
        %v2423 = vadd.f32 %v2417, %v2421
        %v2424 = vadd.f32 %v2418, %v2422
        %s2425 = sld [smem:[#allocation6 + $0x73]]
        %v2426 = vstv %s2425
        %v2427 = vmul.f32 %v1024, %v2426
        %v2428 = vmul.f32 %v1025, %v2426
        %2431 = vrot.lane.b32.xlu0 %v2427, 126
        %v2432 = vpop.permute.xlu0 %2431
        %2433 = vrot.lane.b32.xlu0 %v2428, 126
        %v2434 = vpop.permute.xlu0 %2433
        %v2435 = vsel %vm415, %v2432, %v2434
        %v2438 = vadd.f32 %v2423, %v2435
        %v2439 = vadd.f32 %v2424, %v2434
        %s2440 = sld [smem:[#allocation6 + $0x74]]
        %v2441 = vstv %s2440
        %v2442 = vmul.f32 %v1024, %v2441
        %v2443 = vmul.f32 %v1025, %v2441
        %2446 = vrot.lane.b32.xlu0 %v2442, 124
        %v2447 = vpop.permute.xlu0 %2446
        %2448 = vrot.lane.b32.xlu0 %v2443, 124
        %v2449 = vpop.permute.xlu0 %2448
        %v2450 = vsel %vm447, %v2447, %v2449
        %v2453 = vadd.f32 %v2438, %v2450
        %v2454 = vadd.f32 %v2439, %v2449
        %s2455 = sld [smem:[#allocation6 + $0x75]]
        %v2456 = vstv %s2455
        %v2457 = vmul.f32 %v1035, %v2456
        %v2458 = vmul.f32 %v1036, %v2456
        %v2459 = vadd.f32 %v2453, %v2457
        %v2460 = vadd.f32 %v2454, %v2458
        %s2461 = sld [smem:[#allocation6 + $0x76]]
        %v2462 = vstv %s2461
        %v2463 = vmul.f32 %v1035, %v2462
        %v2464 = vmul.f32 %v1036, %v2462
        %2467 = vrot.lane.b32.xlu0 %v2463, 126
        %v2468 = vpop.permute.xlu0 %2467
        %2469 = vrot.lane.b32.xlu0 %v2464, 126
        %v2470 = vpop.permute.xlu0 %2469
        %v2471 = vsel %vm415, %v2468, %v2470
        %v2474 = vadd.f32 %v2459, %v2471
        %v2475 = vadd.f32 %v2460, %v2470
        %s2476 = sld [smem:[#allocation6 + $0x77]]
        %v2477 = vstv %s2476
        %v2478 = vmul.f32 %v1035, %v2477
        %v2479 = vmul.f32 %v1036, %v2477
        %2482 = vrot.lane.b32.xlu0 %v2478, 124
        %v2483 = vpop.permute.xlu0 %2482
        %2484 = vrot.lane.b32.xlu0 %v2479, 124
        %v2485 = vpop.permute.xlu0 %2484
        %v2486 = vsel %vm447, %v2483, %v2485
        %v2489 = vadd.f32 %v2474, %v2486
        %v2490 = vadd.f32 %v2475, %v2485
        %s2491 = sld [smem:[#allocation7 + $0x4]]
        %v2492 = vstv %s2491
        %v2493 = vadd.f32 %v2489, %v2492
        %v2494 = vadd.f32 %v2490, %v2492
        %v2495 = vmax.f32 %v2493, 0.0
        %v2496 = vmax.f32 %v2494, 0.0
        %s2497 = sld [smem:[#allocation6 + $0x78]]
        %v2498 = vstv %s2497
        %v2499 = vmul.f32 %v958, %v2498
        %v2500 = vmul.f32 %v959, %v2498
        %s2501 = sld [smem:[#allocation6 + $0x79]]
        %v2502 = vstv %s2501
        %v2503 = vmul.f32 %v958, %v2502
        %v2504 = vmul.f32 %v959, %v2502
        %2507 = vrot.lane.b32.xlu0 %v2503, 126
        %v2508 = vpop.permute.xlu0 %2507
        %2509 = vrot.lane.b32.xlu0 %v2504, 126
        %v2510 = vpop.permute.xlu0 %2509
        %v2511 = vsel %vm415, %v2508, %v2510
        %v2514 = vadd.f32 %v2499, %v2511
        %v2515 = vadd.f32 %v2500, %v2510
        %s2516 = sld [smem:[#allocation6 + $0x7a]]
        %v2517 = vstv %s2516
        %v2518 = vmul.f32 %v958, %v2517
        %v2519 = vmul.f32 %v959, %v2517
        %2522 = vrot.lane.b32.xlu0 %v2518, 124
        %v2523 = vpop.permute.xlu0 %2522
        %2524 = vrot.lane.b32.xlu0 %v2519, 124
        %v2525 = vpop.permute.xlu0 %2524
        %v2526 = vsel %vm447, %v2523, %v2525
        %v2529 = vadd.f32 %v2514, %v2526
        %v2530 = vadd.f32 %v2515, %v2525
        %s2531 = sld [smem:[#allocation6 + $0x7b]]
        %v2532 = vstv %s2531
        %v2533 = vmul.f32 %v969, %v2532
        %v2534 = vmul.f32 %v970, %v2532
        %v2535 = vadd.f32 %v2529, %v2533
        %v2536 = vadd.f32 %v2530, %v2534
        %s2537 = sld [smem:[#allocation6 + $0x7c]]
        %v2538 = vstv %s2537
        %v2539 = vmul.f32 %v969, %v2538
        %v2540 = vmul.f32 %v970, %v2538
        %2543 = vrot.lane.b32.xlu0 %v2539, 126
        %v2544 = vpop.permute.xlu0 %2543
        %2545 = vrot.lane.b32.xlu0 %v2540, 126
        %v2546 = vpop.permute.xlu0 %2545
        %v2547 = vsel %vm415, %v2544, %v2546
        %v2550 = vadd.f32 %v2535, %v2547
        %v2551 = vadd.f32 %v2536, %v2546
        %s2552 = sld [smem:[#allocation6 + $0x7d]]
        %v2553 = vstv %s2552
        %v2554 = vmul.f32 %v969, %v2553
        %v2555 = vmul.f32 %v970, %v2553
        %2558 = vrot.lane.b32.xlu0 %v2554, 124
        %v2559 = vpop.permute.xlu0 %2558
        %2560 = vrot.lane.b32.xlu0 %v2555, 124
        %v2561 = vpop.permute.xlu0 %2560
        %v2562 = vsel %vm447, %v2559, %v2561
        %v2565 = vadd.f32 %v2550, %v2562
        %v2566 = vadd.f32 %v2551, %v2561
        %s2567 = sld [smem:[#allocation6 + $0x7e]]
        %v2568 = vstv %s2567
        %v2569 = vmul.f32 %v980, %v2568
        %v2570 = vmul.f32 %v981, %v2568
        %v2571 = vadd.f32 %v2565, %v2569
        %v2572 = vadd.f32 %v2566, %v2570
        %s2573 = sld [smem:[#allocation6 + $0x7f]]
        %v2574 = vstv %s2573
        %v2575 = vmul.f32 %v980, %v2574
        %v2576 = vmul.f32 %v981, %v2574
        %2579 = vrot.lane.b32.xlu0 %v2575, 126
        %v2580 = vpop.permute.xlu0 %2579
        %2581 = vrot.lane.b32.xlu0 %v2576, 126
        %v2582 = vpop.permute.xlu0 %2581
        %v2583 = vsel %vm415, %v2580, %v2582
        %v2586 = vadd.f32 %v2571, %v2583
        %v2587 = vadd.f32 %v2572, %v2582
        %s2588 = sld [smem:[#allocation6 + $0x80]]
        %v2589 = vstv %s2588
        %v2590 = vmul.f32 %v980, %v2589
        %v2591 = vmul.f32 %v981, %v2589
        %2594 = vrot.lane.b32.xlu0 %v2590, 124
        %v2595 = vpop.permute.xlu0 %2594
        %2596 = vrot.lane.b32.xlu0 %v2591, 124
        %v2597 = vpop.permute.xlu0 %2596
        %v2598 = vsel %vm447, %v2595, %v2597
        %v2601 = vadd.f32 %v2586, %v2598
        %v2602 = vadd.f32 %v2587, %v2597
        %s2603 = sld [smem:[#allocation6 + $0x81]]
        %v2604 = vstv %s2603
        %v2605 = vmul.f32 %v991, %v2604
        %v2606 = vmul.f32 %v992, %v2604
        %v2607 = vadd.f32 %v2601, %v2605
        %v2608 = vadd.f32 %v2602, %v2606
        %s2609 = sld [smem:[#allocation6 + $0x82]]
        %v2610 = vstv %s2609
        %v2611 = vmul.f32 %v991, %v2610
        %v2612 = vmul.f32 %v992, %v2610
        %2615 = vrot.lane.b32.xlu0 %v2611, 126
        %v2616 = vpop.permute.xlu0 %2615
        %2617 = vrot.lane.b32.xlu0 %v2612, 126
        %v2618 = vpop.permute.xlu0 %2617
        %v2619 = vsel %vm415, %v2616, %v2618
        %v2622 = vadd.f32 %v2607, %v2619
        %v2623 = vadd.f32 %v2608, %v2618
        %s2624 = sld [smem:[#allocation6 + $0x83]]
        %v2625 = vstv %s2624
        %v2626 = vmul.f32 %v991, %v2625
        %v2627 = vmul.f32 %v992, %v2625
        %2630 = vrot.lane.b32.xlu0 %v2626, 124
        %v2631 = vpop.permute.xlu0 %2630
        %2632 = vrot.lane.b32.xlu0 %v2627, 124
        %v2633 = vpop.permute.xlu0 %2632
        %v2634 = vsel %vm447, %v2631, %v2633
        %v2637 = vadd.f32 %v2622, %v2634
        %v2638 = vadd.f32 %v2623, %v2633
        %s2639 = sld [smem:[#allocation6 + $0x84]]
        %v2640 = vstv %s2639
        %v2641 = vmul.f32 %v1002, %v2640
        %v2642 = vmul.f32 %v1003, %v2640
        %v2643 = vadd.f32 %v2637, %v2641
        %v2644 = vadd.f32 %v2638, %v2642
        %s2645 = sld [smem:[#allocation6 + $0x85]]
        %v2646 = vstv %s2645
        %v2647 = vmul.f32 %v1002, %v2646
        %v2648 = vmul.f32 %v1003, %v2646
        %2651 = vrot.lane.b32.xlu0 %v2647, 126
        %v2652 = vpop.permute.xlu0 %2651
        %2653 = vrot.lane.b32.xlu0 %v2648, 126
        %v2654 = vpop.permute.xlu0 %2653
        %v2655 = vsel %vm415, %v2652, %v2654
        %v2658 = vadd.f32 %v2643, %v2655
        %v2659 = vadd.f32 %v2644, %v2654
        %s2660 = sld [smem:[#allocation6 + $0x86]]
        %v2661 = vstv %s2660
        %v2662 = vmul.f32 %v1002, %v2661
        %v2663 = vmul.f32 %v1003, %v2661
        %2666 = vrot.lane.b32.xlu0 %v2662, 124
        %v2667 = vpop.permute.xlu0 %2666
        %2668 = vrot.lane.b32.xlu0 %v2663, 124
        %v2669 = vpop.permute.xlu0 %2668
        %v2670 = vsel %vm447, %v2667, %v2669
        %v2673 = vadd.f32 %v2658, %v2670
        %v2674 = vadd.f32 %v2659, %v2669
        %s2675 = sld [smem:[#allocation6 + $0x87]]
        %v2676 = vstv %s2675
        %v2677 = vmul.f32 %v1013, %v2676
        %v2678 = vmul.f32 %v1014, %v2676
        %v2679 = vadd.f32 %v2673, %v2677
        %v2680 = vadd.f32 %v2674, %v2678
        %s2681 = sld [smem:[#allocation6 + $0x88]]
        %v2682 = vstv %s2681
        %v2683 = vmul.f32 %v1013, %v2682
        %v2684 = vmul.f32 %v1014, %v2682
        %2687 = vrot.lane.b32.xlu0 %v2683, 126
        %v2688 = vpop.permute.xlu0 %2687
        %2689 = vrot.lane.b32.xlu0 %v2684, 126
        %v2690 = vpop.permute.xlu0 %2689
        %v2691 = vsel %vm415, %v2688, %v2690
        %v2694 = vadd.f32 %v2679, %v2691
        %v2695 = vadd.f32 %v2680, %v2690
        %s2696 = sld [smem:[#allocation6 + $0x89]]
        %v2697 = vstv %s2696
        %v2698 = vmul.f32 %v1013, %v2697
        %v2699 = vmul.f32 %v1014, %v2697
        %2702 = vrot.lane.b32.xlu0 %v2698, 124
        %v2703 = vpop.permute.xlu0 %2702
        %2704 = vrot.lane.b32.xlu0 %v2699, 124
        %v2705 = vpop.permute.xlu0 %2704
        %v2706 = vsel %vm447, %v2703, %v2705
        %v2709 = vadd.f32 %v2694, %v2706
        %v2710 = vadd.f32 %v2695, %v2705
        %s2711 = sld [smem:[#allocation6 + $0x8a]]
        %v2712 = vstv %s2711
        %v2713 = vmul.f32 %v1024, %v2712
        %v2714 = vmul.f32 %v1025, %v2712
        %v2715 = vadd.f32 %v2709, %v2713
        %v2716 = vadd.f32 %v2710, %v2714
        %s2717 = sld [smem:[#allocation6 + $0x8b]]
        %v2718 = vstv %s2717
        %v2719 = vmul.f32 %v1024, %v2718
        %v2720 = vmul.f32 %v1025, %v2718
        %2723 = vrot.lane.b32.xlu0 %v2719, 126
        %v2724 = vpop.permute.xlu0 %2723
        %2725 = vrot.lane.b32.xlu0 %v2720, 126
        %v2726 = vpop.permute.xlu0 %2725
        %v2727 = vsel %vm415, %v2724, %v2726
        %v2730 = vadd.f32 %v2715, %v2727
        %v2731 = vadd.f32 %v2716, %v2726
        %s2732 = sld [smem:[#allocation6 + $0x8c]]
        %v2733 = vstv %s2732
        %v2734 = vmul.f32 %v1024, %v2733
        %v2735 = vmul.f32 %v1025, %v2733
        %2738 = vrot.lane.b32.xlu0 %v2734, 124
        %v2739 = vpop.permute.xlu0 %2738
        %2740 = vrot.lane.b32.xlu0 %v2735, 124
        %v2741 = vpop.permute.xlu0 %2740
        %v2742 = vsel %vm447, %v2739, %v2741
        %v2745 = vadd.f32 %v2730, %v2742
        %v2746 = vadd.f32 %v2731, %v2741
        %s2747 = sld [smem:[#allocation6 + $0x8d]]
        %v2748 = vstv %s2747
        %v2749 = vmul.f32 %v1035, %v2748
        %v2750 = vmul.f32 %v1036, %v2748
        %v2751 = vadd.f32 %v2745, %v2749
        %v2752 = vadd.f32 %v2746, %v2750
        %s2753 = sld [smem:[#allocation6 + $0x8e]]
        %v2754 = vstv %s2753
        %v2755 = vmul.f32 %v1035, %v2754
        %v2756 = vmul.f32 %v1036, %v2754
        %2759 = vrot.lane.b32.xlu0 %v2755, 126
        %v2760 = vpop.permute.xlu0 %2759
        %2761 = vrot.lane.b32.xlu0 %v2756, 126
        %v2762 = vpop.permute.xlu0 %2761
        %v2763 = vsel %vm415, %v2760, %v2762
        %v2766 = vadd.f32 %v2751, %v2763
        %v2767 = vadd.f32 %v2752, %v2762
        %s2768 = sld [smem:[#allocation6 + $0x8f]]
        %v2769 = vstv %s2768
        %v2770 = vmul.f32 %v1035, %v2769
        %v2771 = vmul.f32 %v1036, %v2769
        %2774 = vrot.lane.b32.xlu0 %v2770, 124
        %v2775 = vpop.permute.xlu0 %2774
        %2776 = vrot.lane.b32.xlu0 %v2771, 124
        %v2777 = vpop.permute.xlu0 %2776
        %v2778 = vsel %vm447, %v2775, %v2777
        %v2781 = vadd.f32 %v2766, %v2778
        %v2782 = vadd.f32 %v2767, %v2777
        %s2783 = sld [smem:[#allocation7 + $0x5]]
        %v2784 = vstv %s2783
        %v2785 = vadd.f32 %v2781, %v2784
        %v2786 = vadd.f32 %v2782, %v2784
        %v2787 = vmax.f32 %v2785, 0.0
        %v2788 = vmax.f32 %v2786, 0.0
        %s2789 = sld [smem:[#allocation6 + $0x90]]
        %v2790 = vstv %s2789
        %v2791 = vmul.f32 %v958, %v2790
        %v2792 = vmul.f32 %v959, %v2790
        %s2793 = sld [smem:[#allocation6 + $0x91]]
        %v2794 = vstv %s2793
        %v2795 = vmul.f32 %v958, %v2794
        %v2796 = vmul.f32 %v959, %v2794
        %2799 = vrot.lane.b32.xlu0 %v2795, 126
        %v2800 = vpop.permute.xlu0 %2799
        %2801 = vrot.lane.b32.xlu0 %v2796, 126
        %v2802 = vpop.permute.xlu0 %2801
        %v2803 = vsel %vm415, %v2800, %v2802
        %v2806 = vadd.f32 %v2791, %v2803
        %v2807 = vadd.f32 %v2792, %v2802
        %s2808 = sld [smem:[#allocation6 + $0x92]]
        %v2809 = vstv %s2808
        %v2810 = vmul.f32 %v958, %v2809
        %v2811 = vmul.f32 %v959, %v2809
        %2814 = vrot.lane.b32.xlu0 %v2810, 124
        %v2815 = vpop.permute.xlu0 %2814
        %2816 = vrot.lane.b32.xlu0 %v2811, 124
        %v2817 = vpop.permute.xlu0 %2816
        %v2818 = vsel %vm447, %v2815, %v2817
        %v2821 = vadd.f32 %v2806, %v2818
        %v2822 = vadd.f32 %v2807, %v2817
        %s2823 = sld [smem:[#allocation6 + $0x93]]
        %v2824 = vstv %s2823
        %v2825 = vmul.f32 %v969, %v2824
        %v2826 = vmul.f32 %v970, %v2824
        %v2827 = vadd.f32 %v2821, %v2825
        %v2828 = vadd.f32 %v2822, %v2826
        %s2829 = sld [smem:[#allocation6 + $0x94]]
        %v2830 = vstv %s2829
        %v2831 = vmul.f32 %v969, %v2830
        %v2832 = vmul.f32 %v970, %v2830
        %2835 = vrot.lane.b32.xlu0 %v2831, 126
        %v2836 = vpop.permute.xlu0 %2835
        %2837 = vrot.lane.b32.xlu0 %v2832, 126
        %v2838 = vpop.permute.xlu0 %2837
        %v2839 = vsel %vm415, %v2836, %v2838
        %v2842 = vadd.f32 %v2827, %v2839
        %v2843 = vadd.f32 %v2828, %v2838
        %s2844 = sld [smem:[#allocation6 + $0x95]]
        %v2845 = vstv %s2844
        %v2846 = vmul.f32 %v969, %v2845
        %v2847 = vmul.f32 %v970, %v2845
        %2850 = vrot.lane.b32.xlu0 %v2846, 124
        %v2851 = vpop.permute.xlu0 %2850
        %2852 = vrot.lane.b32.xlu0 %v2847, 124
        %v2853 = vpop.permute.xlu0 %2852
        %v2854 = vsel %vm447, %v2851, %v2853
        %v2857 = vadd.f32 %v2842, %v2854
        %v2858 = vadd.f32 %v2843, %v2853
        %s2859 = sld [smem:[#allocation6 + $0x96]]
        %v2860 = vstv %s2859
        %v2861 = vmul.f32 %v980, %v2860
        %v2862 = vmul.f32 %v981, %v2860
        %v2863 = vadd.f32 %v2857, %v2861
        %v2864 = vadd.f32 %v2858, %v2862
        %s2865 = sld [smem:[#allocation6 + $0x97]]
        %v2866 = vstv %s2865
        %v2867 = vmul.f32 %v980, %v2866
        %v2868 = vmul.f32 %v981, %v2866
        %2871 = vrot.lane.b32.xlu0 %v2867, 126
        %v2872 = vpop.permute.xlu0 %2871
        %2873 = vrot.lane.b32.xlu0 %v2868, 126
        %v2874 = vpop.permute.xlu0 %2873
        %v2875 = vsel %vm415, %v2872, %v2874
        %v2878 = vadd.f32 %v2863, %v2875
        %v2879 = vadd.f32 %v2864, %v2874
        %s2880 = sld [smem:[#allocation6 + $0x98]]
        %v2881 = vstv %s2880
        %v2882 = vmul.f32 %v980, %v2881
        %v2883 = vmul.f32 %v981, %v2881
        %2886 = vrot.lane.b32.xlu0 %v2882, 124
        %v2887 = vpop.permute.xlu0 %2886
        %2888 = vrot.lane.b32.xlu0 %v2883, 124
        %v2889 = vpop.permute.xlu0 %2888
        %v2890 = vsel %vm447, %v2887, %v2889
        %v2893 = vadd.f32 %v2878, %v2890
        %v2894 = vadd.f32 %v2879, %v2889
        %s2895 = sld [smem:[#allocation6 + $0x99]]
        %v2896 = vstv %s2895
        %v2897 = vmul.f32 %v991, %v2896
        %v2898 = vmul.f32 %v992, %v2896
        %v2899 = vadd.f32 %v2893, %v2897
        %v2900 = vadd.f32 %v2894, %v2898
        %s2901 = sld [smem:[#allocation6 + $0x9a]]
        %v2902 = vstv %s2901
        %v2903 = vmul.f32 %v991, %v2902
        %v2904 = vmul.f32 %v992, %v2902
        %2907 = vrot.lane.b32.xlu0 %v2903, 126
        %v2908 = vpop.permute.xlu0 %2907
        %2909 = vrot.lane.b32.xlu0 %v2904, 126
        %v2910 = vpop.permute.xlu0 %2909
        %v2911 = vsel %vm415, %v2908, %v2910
        %v2914 = vadd.f32 %v2899, %v2911
        %v2915 = vadd.f32 %v2900, %v2910
        %s2916 = sld [smem:[#allocation6 + $0x9b]]
        %v2917 = vstv %s2916
        %v2918 = vmul.f32 %v991, %v2917
        %v2919 = vmul.f32 %v992, %v2917
        %2922 = vrot.lane.b32.xlu0 %v2918, 124
        %v2923 = vpop.permute.xlu0 %2922
        %2924 = vrot.lane.b32.xlu0 %v2919, 124
        %v2925 = vpop.permute.xlu0 %2924
        %v2926 = vsel %vm447, %v2923, %v2925
        %v2929 = vadd.f32 %v2914, %v2926
        %v2930 = vadd.f32 %v2915, %v2925
        %s2931 = sld [smem:[#allocation6 + $0x9c]]
        %v2932 = vstv %s2931
        %v2933 = vmul.f32 %v1002, %v2932
        %v2934 = vmul.f32 %v1003, %v2932
        %v2935 = vadd.f32 %v2929, %v2933
        %v2936 = vadd.f32 %v2930, %v2934
        %s2937 = sld [smem:[#allocation6 + $0x9d]]
        %v2938 = vstv %s2937
        %v2939 = vmul.f32 %v1002, %v2938
        %v2940 = vmul.f32 %v1003, %v2938
        %2943 = vrot.lane.b32.xlu0 %v2939, 126
        %v2944 = vpop.permute.xlu0 %2943
        %2945 = vrot.lane.b32.xlu0 %v2940, 126
        %v2946 = vpop.permute.xlu0 %2945
        %v2947 = vsel %vm415, %v2944, %v2946
        %v2950 = vadd.f32 %v2935, %v2947
        %v2951 = vadd.f32 %v2936, %v2946
        %s2952 = sld [smem:[#allocation6 + $0x9e]]
        %v2953 = vstv %s2952
        %v2954 = vmul.f32 %v1002, %v2953
        %v2955 = vmul.f32 %v1003, %v2953
        %2958 = vrot.lane.b32.xlu0 %v2954, 124
        %v2959 = vpop.permute.xlu0 %2958
        %2960 = vrot.lane.b32.xlu0 %v2955, 124
        %v2961 = vpop.permute.xlu0 %2960
        %v2962 = vsel %vm447, %v2959, %v2961
        %v2965 = vadd.f32 %v2950, %v2962
        %v2966 = vadd.f32 %v2951, %v2961
        %s2967 = sld [smem:[#allocation6 + $0x9f]]
        %v2968 = vstv %s2967
        %v2969 = vmul.f32 %v1013, %v2968
        %v2970 = vmul.f32 %v1014, %v2968
        %v2971 = vadd.f32 %v2965, %v2969
        %v2972 = vadd.f32 %v2966, %v2970
        %s2973 = sld [smem:[#allocation6 + $0xa0]]
        %v2974 = vstv %s2973
        %v2975 = vmul.f32 %v1013, %v2974
        %v2976 = vmul.f32 %v1014, %v2974
        %2979 = vrot.lane.b32.xlu0 %v2975, 126
        %v2980 = vpop.permute.xlu0 %2979
        %2981 = vrot.lane.b32.xlu0 %v2976, 126
        %v2982 = vpop.permute.xlu0 %2981
        %v2983 = vsel %vm415, %v2980, %v2982
        %v2986 = vadd.f32 %v2971, %v2983
        %v2987 = vadd.f32 %v2972, %v2982
        %s2988 = sld [smem:[#allocation6 + $0xa1]]
        %v2989 = vstv %s2988
        %v2990 = vmul.f32 %v1013, %v2989
        %v2991 = vmul.f32 %v1014, %v2989
        %2994 = vrot.lane.b32.xlu0 %v2990, 124
        %v2995 = vpop.permute.xlu0 %2994
        %2996 = vrot.lane.b32.xlu0 %v2991, 124
        %v2997 = vpop.permute.xlu0 %2996
        %v2998 = vsel %vm447, %v2995, %v2997
        %v3001 = vadd.f32 %v2986, %v2998
        %v3002 = vadd.f32 %v2987, %v2997
        %s3003 = sld [smem:[#allocation6 + $0xa2]]
        %v3004 = vstv %s3003
        %v3005 = vmul.f32 %v1024, %v3004
        %v3006 = vmul.f32 %v1025, %v3004
        %v3007 = vadd.f32 %v3001, %v3005
        %v3008 = vadd.f32 %v3002, %v3006
        %s3009 = sld [smem:[#allocation6 + $0xa3]]
        %v3010 = vstv %s3009
        %v3011 = vmul.f32 %v1024, %v3010
        %v3012 = vmul.f32 %v1025, %v3010
        %3015 = vrot.lane.b32.xlu0 %v3011, 126
        %v3016 = vpop.permute.xlu0 %3015
        %3017 = vrot.lane.b32.xlu0 %v3012, 126
        %v3018 = vpop.permute.xlu0 %3017
        %v3019 = vsel %vm415, %v3016, %v3018
        %v3022 = vadd.f32 %v3007, %v3019
        %v3023 = vadd.f32 %v3008, %v3018
        %s3024 = sld [smem:[#allocation6 + $0xa4]]
        %v3025 = vstv %s3024
        %v3026 = vmul.f32 %v1024, %v3025
        %v3027 = vmul.f32 %v1025, %v3025
        %3030 = vrot.lane.b32.xlu0 %v3026, 124
        %v3031 = vpop.permute.xlu0 %3030
        %3032 = vrot.lane.b32.xlu0 %v3027, 124
        %v3033 = vpop.permute.xlu0 %3032
        %v3034 = vsel %vm447, %v3031, %v3033
        %v3037 = vadd.f32 %v3022, %v3034
        %v3038 = vadd.f32 %v3023, %v3033
        %s3039 = sld [smem:[#allocation6 + $0xa5]]
        %v3040 = vstv %s3039
        %v3041 = vmul.f32 %v1035, %v3040
        %v3042 = vmul.f32 %v1036, %v3040
        %v3043 = vadd.f32 %v3037, %v3041
        %v3044 = vadd.f32 %v3038, %v3042
        %s3045 = sld [smem:[#allocation6 + $0xa6]]
        %v3046 = vstv %s3045
        %v3047 = vmul.f32 %v1035, %v3046
        %v3048 = vmul.f32 %v1036, %v3046
        %3051 = vrot.lane.b32.xlu0 %v3047, 126
        %v3052 = vpop.permute.xlu0 %3051
        %3053 = vrot.lane.b32.xlu0 %v3048, 126
        %v3054 = vpop.permute.xlu0 %3053
        %v3055 = vsel %vm415, %v3052, %v3054
        %v3058 = vadd.f32 %v3043, %v3055
        %v3059 = vadd.f32 %v3044, %v3054
        %s3060 = sld [smem:[#allocation6 + $0xa7]]
        %v3061 = vstv %s3060
        %v3062 = vmul.f32 %v1035, %v3061
        %v3063 = vmul.f32 %v1036, %v3061
        %3066 = vrot.lane.b32.xlu0 %v3062, 124
        %v3067 = vpop.permute.xlu0 %3066
        %3068 = vrot.lane.b32.xlu0 %v3063, 124
        %v3069 = vpop.permute.xlu0 %3068
        %v3070 = vsel %vm447, %v3067, %v3069
        %v3073 = vadd.f32 %v3058, %v3070
        %v3074 = vadd.f32 %v3059, %v3069
        %s3075 = sld [smem:[#allocation7 + $0x6]]
        %v3076 = vstv %s3075
        %v3077 = vadd.f32 %v3073, %v3076
        %v3078 = vadd.f32 %v3074, %v3076
        %v3079 = vmax.f32 %v3077, 0.0
        %v3080 = vmax.f32 %v3078, 0.0
        %s3081 = sld [smem:[#allocation6 + $0xa8]]
        %v3082 = vstv %s3081
        %v3083 = vmul.f32 %v958, %v3082
        %v3084 = vmul.f32 %v959, %v3082
        %s3085 = sld [smem:[#allocation6 + $0xa9]]
        %v3086 = vstv %s3085
        %v3087 = vmul.f32 %v958, %v3086
        %v3088 = vmul.f32 %v959, %v3086
        %3091 = vrot.lane.b32.xlu0 %v3087, 126
        %v3092 = vpop.permute.xlu0 %3091
        %3093 = vrot.lane.b32.xlu0 %v3088, 126
        %v3094 = vpop.permute.xlu0 %3093
        %v3095 = vsel %vm415, %v3092, %v3094
        %v3098 = vadd.f32 %v3083, %v3095
        %v3099 = vadd.f32 %v3084, %v3094
        %s3100 = sld [smem:[#allocation6 + $0xaa]]
        %v3101 = vstv %s3100
        %v3102 = vmul.f32 %v958, %v3101
        %v3103 = vmul.f32 %v959, %v3101
        %3106 = vrot.lane.b32.xlu0 %v3102, 124
        %v3107 = vpop.permute.xlu0 %3106
        %3108 = vrot.lane.b32.xlu0 %v3103, 124
        %v3109 = vpop.permute.xlu0 %3108
        %v3110 = vsel %vm447, %v3107, %v3109
        %v3113 = vadd.f32 %v3098, %v3110
        %v3114 = vadd.f32 %v3099, %v3109
        %s3115 = sld [smem:[#allocation6 + $0xab]]
        %v3116 = vstv %s3115
        %v3117 = vmul.f32 %v969, %v3116
        %v3118 = vmul.f32 %v970, %v3116
        %v3119 = vadd.f32 %v3113, %v3117
        %v3120 = vadd.f32 %v3114, %v3118
        %s3121 = sld [smem:[#allocation6 + $0xac]]
        %v3122 = vstv %s3121
        %v3123 = vmul.f32 %v969, %v3122
        %v3124 = vmul.f32 %v970, %v3122
        %3127 = vrot.lane.b32.xlu0 %v3123, 126
        %v3128 = vpop.permute.xlu0 %3127
        %3129 = vrot.lane.b32.xlu0 %v3124, 126
        %v3130 = vpop.permute.xlu0 %3129
        %v3131 = vsel %vm415, %v3128, %v3130
        %v3134 = vadd.f32 %v3119, %v3131
        %v3135 = vadd.f32 %v3120, %v3130
        %s3136 = sld [smem:[#allocation6 + $0xad]]
        %v3137 = vstv %s3136
        %v3138 = vmul.f32 %v969, %v3137
        %v3139 = vmul.f32 %v970, %v3137
        %3142 = vrot.lane.b32.xlu0 %v3138, 124
        %v3143 = vpop.permute.xlu0 %3142
        %3144 = vrot.lane.b32.xlu0 %v3139, 124
        %v3145 = vpop.permute.xlu0 %3144
        %v3146 = vsel %vm447, %v3143, %v3145
        %v3149 = vadd.f32 %v3134, %v3146
        %v3150 = vadd.f32 %v3135, %v3145
        %s3151 = sld [smem:[#allocation6 + $0xae]]
        %v3152 = vstv %s3151
        %v3153 = vmul.f32 %v980, %v3152
        %v3154 = vmul.f32 %v981, %v3152
        %v3155 = vadd.f32 %v3149, %v3153
        %v3156 = vadd.f32 %v3150, %v3154
        %s3157 = sld [smem:[#allocation6 + $0xaf]]
        %v3158 = vstv %s3157
        %v3159 = vmul.f32 %v980, %v3158
        %v3160 = vmul.f32 %v981, %v3158
        %3163 = vrot.lane.b32.xlu0 %v3159, 126
        %v3164 = vpop.permute.xlu0 %3163
        %3165 = vrot.lane.b32.xlu0 %v3160, 126
        %v3166 = vpop.permute.xlu0 %3165
        %v3167 = vsel %vm415, %v3164, %v3166
        %v3170 = vadd.f32 %v3155, %v3167
        %v3171 = vadd.f32 %v3156, %v3166
        %s3172 = sld [smem:[#allocation6 + $0xb0]]
        %v3173 = vstv %s3172
        %v3174 = vmul.f32 %v980, %v3173
        %v3175 = vmul.f32 %v981, %v3173
        %3178 = vrot.lane.b32.xlu0 %v3174, 124
        %v3179 = vpop.permute.xlu0 %3178
        %3180 = vrot.lane.b32.xlu0 %v3175, 124
        %v3181 = vpop.permute.xlu0 %3180
        %v3182 = vsel %vm447, %v3179, %v3181
        %v3185 = vadd.f32 %v3170, %v3182
        %v3186 = vadd.f32 %v3171, %v3181
        %s3187 = sld [smem:[#allocation6 + $0xb1]]
        %v3188 = vstv %s3187
        %v3189 = vmul.f32 %v991, %v3188
        %v3190 = vmul.f32 %v992, %v3188
        %v3191 = vadd.f32 %v3185, %v3189
        %v3192 = vadd.f32 %v3186, %v3190
        %s3193 = sld [smem:[#allocation6 + $0xb2]]
        %v3194 = vstv %s3193
        %v3195 = vmul.f32 %v991, %v3194
        %v3196 = vmul.f32 %v992, %v3194
        %3199 = vrot.lane.b32.xlu0 %v3195, 126
        %v3200 = vpop.permute.xlu0 %3199
        %3201 = vrot.lane.b32.xlu0 %v3196, 126
        %v3202 = vpop.permute.xlu0 %3201
        %v3203 = vsel %vm415, %v3200, %v3202
        %v3206 = vadd.f32 %v3191, %v3203
        %v3207 = vadd.f32 %v3192, %v3202
        %s3208 = sld [smem:[#allocation6 + $0xb3]]
        %v3209 = vstv %s3208
        %v3210 = vmul.f32 %v991, %v3209
        %v3211 = vmul.f32 %v992, %v3209
        %3214 = vrot.lane.b32.xlu0 %v3210, 124
        %v3215 = vpop.permute.xlu0 %3214
        %3216 = vrot.lane.b32.xlu0 %v3211, 124
        %v3217 = vpop.permute.xlu0 %3216
        %v3218 = vsel %vm447, %v3215, %v3217
        %v3221 = vadd.f32 %v3206, %v3218
        %v3222 = vadd.f32 %v3207, %v3217
        %s3223 = sld [smem:[#allocation6 + $0xb4]]
        %v3224 = vstv %s3223
        %v3225 = vmul.f32 %v1002, %v3224
        %v3226 = vmul.f32 %v1003, %v3224
        %v3227 = vadd.f32 %v3221, %v3225
        %v3228 = vadd.f32 %v3222, %v3226
        %s3229 = sld [smem:[#allocation6 + $0xb5]]
        %v3230 = vstv %s3229
        %v3231 = vmul.f32 %v1002, %v3230
        %v3232 = vmul.f32 %v1003, %v3230
        %3235 = vrot.lane.b32.xlu0 %v3231, 126
        %v3236 = vpop.permute.xlu0 %3235
        %3237 = vrot.lane.b32.xlu0 %v3232, 126
        %v3238 = vpop.permute.xlu0 %3237
        %v3239 = vsel %vm415, %v3236, %v3238
        %v3242 = vadd.f32 %v3227, %v3239
        %v3243 = vadd.f32 %v3228, %v3238
        %s3244 = sld [smem:[#allocation6 + $0xb6]]
        %v3245 = vstv %s3244
        %v3246 = vmul.f32 %v1002, %v3245
        %v3247 = vmul.f32 %v1003, %v3245
        %3250 = vrot.lane.b32.xlu0 %v3246, 124
        %v3251 = vpop.permute.xlu0 %3250
        %3252 = vrot.lane.b32.xlu0 %v3247, 124
        %v3253 = vpop.permute.xlu0 %3252
        %v3254 = vsel %vm447, %v3251, %v3253
        %v3257 = vadd.f32 %v3242, %v3254
        %v3258 = vadd.f32 %v3243, %v3253
        %s3259 = sld [smem:[#allocation6 + $0xb7]]
        %v3260 = vstv %s3259
        %v3261 = vmul.f32 %v1013, %v3260
        %v3262 = vmul.f32 %v1014, %v3260
        %v3263 = vadd.f32 %v3257, %v3261
        %v3264 = vadd.f32 %v3258, %v3262
        %s3265 = sld [smem:[#allocation6 + $0xb8]]
        %v3266 = vstv %s3265
        %v3267 = vmul.f32 %v1013, %v3266
        %v3268 = vmul.f32 %v1014, %v3266
        %3271 = vrot.lane.b32.xlu0 %v3267, 126
        %v3272 = vpop.permute.xlu0 %3271
        %3273 = vrot.lane.b32.xlu0 %v3268, 126
        %v3274 = vpop.permute.xlu0 %3273
        %v3275 = vsel %vm415, %v3272, %v3274
        %v3278 = vadd.f32 %v3263, %v3275
        %v3279 = vadd.f32 %v3264, %v3274
        %s3280 = sld [smem:[#allocation6 + $0xb9]]
        %v3281 = vstv %s3280
        %v3282 = vmul.f32 %v1013, %v3281
        %v3283 = vmul.f32 %v1014, %v3281
        %3286 = vrot.lane.b32.xlu0 %v3282, 124
        %v3287 = vpop.permute.xlu0 %3286
        %3288 = vrot.lane.b32.xlu0 %v3283, 124
        %v3289 = vpop.permute.xlu0 %3288
        %v3290 = vsel %vm447, %v3287, %v3289
        %v3293 = vadd.f32 %v3278, %v3290
        %v3294 = vadd.f32 %v3279, %v3289
        %s3295 = sld [smem:[#allocation6 + $0xba]]
        %v3296 = vstv %s3295
        %v3297 = vmul.f32 %v1024, %v3296
        %v3298 = vmul.f32 %v1025, %v3296
        %v3299 = vadd.f32 %v3293, %v3297
        %v3300 = vadd.f32 %v3294, %v3298
        %s3301 = sld [smem:[#allocation6 + $0xbb]]
        %v3302 = vstv %s3301
        %v3303 = vmul.f32 %v1024, %v3302
        %v3304 = vmul.f32 %v1025, %v3302
        %3307 = vrot.lane.b32.xlu0 %v3303, 126
        %v3308 = vpop.permute.xlu0 %3307
        %3309 = vrot.lane.b32.xlu0 %v3304, 126
        %v3310 = vpop.permute.xlu0 %3309
        %v3311 = vsel %vm415, %v3308, %v3310
        %v3314 = vadd.f32 %v3299, %v3311
        %v3315 = vadd.f32 %v3300, %v3310
        %s3316 = sld [smem:[#allocation6 + $0xbc]]
        %v3317 = vstv %s3316
        %v3318 = vmul.f32 %v1024, %v3317
        %v3319 = vmul.f32 %v1025, %v3317
        %3322 = vrot.lane.b32.xlu0 %v3318, 124
        %v3323 = vpop.permute.xlu0 %3322
        %3324 = vrot.lane.b32.xlu0 %v3319, 124
        %v3325 = vpop.permute.xlu0 %3324
        %v3326 = vsel %vm447, %v3323, %v3325
        %v3329 = vadd.f32 %v3314, %v3326
        %v3330 = vadd.f32 %v3315, %v3325
        %s3331 = sld [smem:[#allocation6 + $0xbd]]
        %v3332 = vstv %s3331
        %v3333 = vmul.f32 %v1035, %v3332
        %v3334 = vmul.f32 %v1036, %v3332
        %v3335 = vadd.f32 %v3329, %v3333
        %v3336 = vadd.f32 %v3330, %v3334
        %s3337 = sld [smem:[#allocation6 + $0xbe]]
        %v3338 = vstv %s3337
        %v3339 = vmul.f32 %v1035, %v3338
        %v3340 = vmul.f32 %v1036, %v3338
        %3343 = vrot.lane.b32.xlu0 %v3339, 126
        %v3344 = vpop.permute.xlu0 %3343
        %3345 = vrot.lane.b32.xlu0 %v3340, 126
        %v3346 = vpop.permute.xlu0 %3345
        %v3347 = vsel %vm415, %v3344, %v3346
        %v3350 = vadd.f32 %v3335, %v3347
        %v3351 = vadd.f32 %v3336, %v3346
        %s3352 = sld [smem:[#allocation6 + $0xbf]]
        %v3353 = vstv %s3352
        %v3354 = vmul.f32 %v1035, %v3353
        %v3355 = vmul.f32 %v1036, %v3353
        %3358 = vrot.lane.b32.xlu0 %v3354, 124
        %v3359 = vpop.permute.xlu0 %3358
        %3360 = vrot.lane.b32.xlu0 %v3355, 124
        %v3361 = vpop.permute.xlu0 %3360
        %v3362 = vsel %vm447, %v3359, %v3361
        %v3365 = vadd.f32 %v3350, %v3362
        %v3366 = vadd.f32 %v3351, %v3361
        %s3367 = sld [smem:[#allocation7 + $0x7]]
        %v3368 = vstv %s3367
        %v3369 = vadd.f32 %v3365, %v3368
        %v3370 = vadd.f32 %v3366, %v3368
        %v3371 = vmax.f32 %v3369, 0.0
        %v3372 = vmax.f32 %v3370, 0.0
        %s3373 = sld [smem:[#allocation6 + $0xc0]]
        %v3374 = vstv %s3373
        %v3375 = vmul.f32 %v958, %v3374
        %v3376 = vmul.f32 %v959, %v3374
        %s3377 = sld [smem:[#allocation6 + $0xc1]]
        %v3378 = vstv %s3377
        %v3379 = vmul.f32 %v958, %v3378
        %v3380 = vmul.f32 %v959, %v3378
        %3383 = vrot.lane.b32.xlu0 %v3379, 126
        %v3384 = vpop.permute.xlu0 %3383
        %3385 = vrot.lane.b32.xlu0 %v3380, 126
        %v3386 = vpop.permute.xlu0 %3385
        %v3387 = vsel %vm415, %v3384, %v3386
        %v3390 = vadd.f32 %v3375, %v3387
        %v3391 = vadd.f32 %v3376, %v3386
        %s3392 = sld [smem:[#allocation6 + $0xc2]]
        %v3393 = vstv %s3392
        %v3394 = vmul.f32 %v958, %v3393
        %v3395 = vmul.f32 %v959, %v3393
        %3398 = vrot.lane.b32.xlu0 %v3394, 124
        %v3399 = vpop.permute.xlu0 %3398
        %3400 = vrot.lane.b32.xlu0 %v3395, 124
        %v3401 = vpop.permute.xlu0 %3400
        %v3402 = vsel %vm447, %v3399, %v3401
        %v3405 = vadd.f32 %v3390, %v3402
        %v3406 = vadd.f32 %v3391, %v3401
        %s3407 = sld [smem:[#allocation6 + $0xc3]]
        %v3408 = vstv %s3407
        %v3409 = vmul.f32 %v969, %v3408
        %v3410 = vmul.f32 %v970, %v3408
        %v3411 = vadd.f32 %v3405, %v3409
        %v3412 = vadd.f32 %v3406, %v3410
        %s3413 = sld [smem:[#allocation6 + $0xc4]]
        %v3414 = vstv %s3413
        %v3415 = vmul.f32 %v969, %v3414
        %v3416 = vmul.f32 %v970, %v3414
        %3419 = vrot.lane.b32.xlu0 %v3415, 126
        %v3420 = vpop.permute.xlu0 %3419
        %3421 = vrot.lane.b32.xlu0 %v3416, 126
        %v3422 = vpop.permute.xlu0 %3421
        %v3423 = vsel %vm415, %v3420, %v3422
        %v3426 = vadd.f32 %v3411, %v3423
        %v3427 = vadd.f32 %v3412, %v3422
        %s3428 = sld [smem:[#allocation6 + $0xc5]]
        %v3429 = vstv %s3428
        %v3430 = vmul.f32 %v969, %v3429
        %v3431 = vmul.f32 %v970, %v3429
        %3434 = vrot.lane.b32.xlu0 %v3430, 124
        %v3435 = vpop.permute.xlu0 %3434
        %3436 = vrot.lane.b32.xlu0 %v3431, 124
        %v3437 = vpop.permute.xlu0 %3436
        %v3438 = vsel %vm447, %v3435, %v3437
        %v3441 = vadd.f32 %v3426, %v3438
        %v3442 = vadd.f32 %v3427, %v3437
        %s3443 = sld [smem:[#allocation6 + $0xc6]]
        %v3444 = vstv %s3443
        %v3445 = vmul.f32 %v980, %v3444
        %v3446 = vmul.f32 %v981, %v3444
        %v3447 = vadd.f32 %v3441, %v3445
        %v3448 = vadd.f32 %v3442, %v3446
        %s3449 = sld [smem:[#allocation6 + $0xc7]]
        %v3450 = vstv %s3449
        %v3451 = vmul.f32 %v980, %v3450
        %v3452 = vmul.f32 %v981, %v3450
        %3455 = vrot.lane.b32.xlu0 %v3451, 126
        %v3456 = vpop.permute.xlu0 %3455
        %3457 = vrot.lane.b32.xlu0 %v3452, 126
        %v3458 = vpop.permute.xlu0 %3457
        %v3459 = vsel %vm415, %v3456, %v3458
        %v3462 = vadd.f32 %v3447, %v3459
        %v3463 = vadd.f32 %v3448, %v3458
        %s3464 = sld [smem:[#allocation6 + $0xc8]]
        %v3465 = vstv %s3464
        %v3466 = vmul.f32 %v980, %v3465
        %v3467 = vmul.f32 %v981, %v3465
        %3470 = vrot.lane.b32.xlu0 %v3466, 124
        %v3471 = vpop.permute.xlu0 %3470
        %3472 = vrot.lane.b32.xlu0 %v3467, 124
        %v3473 = vpop.permute.xlu0 %3472
        %v3474 = vsel %vm447, %v3471, %v3473
        %v3477 = vadd.f32 %v3462, %v3474
        %v3478 = vadd.f32 %v3463, %v3473
        %s3479 = sld [smem:[#allocation6 + $0xc9]]
        %v3480 = vstv %s3479
        %v3481 = vmul.f32 %v991, %v3480
        %v3482 = vmul.f32 %v992, %v3480
        %v3483 = vadd.f32 %v3477, %v3481
        %v3484 = vadd.f32 %v3478, %v3482
        %s3485 = sld [smem:[#allocation6 + $0xca]]
        %v3486 = vstv %s3485
        %v3487 = vmul.f32 %v991, %v3486
        %v3488 = vmul.f32 %v992, %v3486
        %3491 = vrot.lane.b32.xlu0 %v3487, 126
        %v3492 = vpop.permute.xlu0 %3491
        %3493 = vrot.lane.b32.xlu0 %v3488, 126
        %v3494 = vpop.permute.xlu0 %3493
        %v3495 = vsel %vm415, %v3492, %v3494
        %v3498 = vadd.f32 %v3483, %v3495
        %v3499 = vadd.f32 %v3484, %v3494
        %s3500 = sld [smem:[#allocation6 + $0xcb]]
        %v3501 = vstv %s3500
        %v3502 = vmul.f32 %v991, %v3501
        %v3503 = vmul.f32 %v992, %v3501
        %3506 = vrot.lane.b32.xlu0 %v3502, 124
        %v3507 = vpop.permute.xlu0 %3506
        %3508 = vrot.lane.b32.xlu0 %v3503, 124
        %v3509 = vpop.permute.xlu0 %3508
        %v3510 = vsel %vm447, %v3507, %v3509
        %v3513 = vadd.f32 %v3498, %v3510
        %v3514 = vadd.f32 %v3499, %v3509
        %s3515 = sld [smem:[#allocation6 + $0xcc]]
        %v3516 = vstv %s3515
        %v3517 = vmul.f32 %v1002, %v3516
        %v3518 = vmul.f32 %v1003, %v3516
        %v3519 = vadd.f32 %v3513, %v3517
        %v3520 = vadd.f32 %v3514, %v3518
        %s3521 = sld [smem:[#allocation6 + $0xcd]]
        %v3522 = vstv %s3521
        %v3523 = vmul.f32 %v1002, %v3522
        %v3524 = vmul.f32 %v1003, %v3522
        %3527 = vrot.lane.b32.xlu0 %v3523, 126
        %v3528 = vpop.permute.xlu0 %3527
        %3529 = vrot.lane.b32.xlu0 %v3524, 126
        %v3530 = vpop.permute.xlu0 %3529
        %v3531 = vsel %vm415, %v3528, %v3530
        %v3534 = vadd.f32 %v3519, %v3531
        %v3535 = vadd.f32 %v3520, %v3530
        %s3536 = sld [smem:[#allocation6 + $0xce]]
        %v3537 = vstv %s3536
        %v3538 = vmul.f32 %v1002, %v3537
        %v3539 = vmul.f32 %v1003, %v3537
        %3542 = vrot.lane.b32.xlu0 %v3538, 124
        %v3543 = vpop.permute.xlu0 %3542
        %3544 = vrot.lane.b32.xlu0 %v3539, 124
        %v3545 = vpop.permute.xlu0 %3544
        %v3546 = vsel %vm447, %v3543, %v3545
        %v3549 = vadd.f32 %v3534, %v3546
        %v3550 = vadd.f32 %v3535, %v3545
        %s3551 = sld [smem:[#allocation6 + $0xcf]]
        %v3552 = vstv %s3551
        %v3553 = vmul.f32 %v1013, %v3552
        %v3554 = vmul.f32 %v1014, %v3552
        %v3555 = vadd.f32 %v3549, %v3553
        %v3556 = vadd.f32 %v3550, %v3554
        %s3557 = sld [smem:[#allocation6 + $0xd0]]
        %v3558 = vstv %s3557
        %v3559 = vmul.f32 %v1013, %v3558
        %v3560 = vmul.f32 %v1014, %v3558
        %3563 = vrot.lane.b32.xlu0 %v3559, 126
        %v3564 = vpop.permute.xlu0 %3563
        %3565 = vrot.lane.b32.xlu0 %v3560, 126
        %v3566 = vpop.permute.xlu0 %3565
        %v3567 = vsel %vm415, %v3564, %v3566
        %v3570 = vadd.f32 %v3555, %v3567
        %v3571 = vadd.f32 %v3556, %v3566
        %s3572 = sld [smem:[#allocation6 + $0xd1]]
        %v3573 = vstv %s3572
        %v3574 = vmul.f32 %v1013, %v3573
        %v3575 = vmul.f32 %v1014, %v3573
        %3578 = vrot.lane.b32.xlu0 %v3574, 124
        %v3579 = vpop.permute.xlu0 %3578
        %3580 = vrot.lane.b32.xlu0 %v3575, 124
        %v3581 = vpop.permute.xlu0 %3580
        %v3582 = vsel %vm447, %v3579, %v3581
        %v3585 = vadd.f32 %v3570, %v3582
        %v3586 = vadd.f32 %v3571, %v3581
        %s3587 = sld [smem:[#allocation6 + $0xd2]]
        %v3588 = vstv %s3587
        %v3589 = vmul.f32 %v1024, %v3588
        %v3590 = vmul.f32 %v1025, %v3588
        %v3591 = vadd.f32 %v3585, %v3589
        %v3592 = vadd.f32 %v3586, %v3590
        %s3593 = sld [smem:[#allocation6 + $0xd3]]
        %v3594 = vstv %s3593
        %v3595 = vmul.f32 %v1024, %v3594
        %v3596 = vmul.f32 %v1025, %v3594
        %3599 = vrot.lane.b32.xlu0 %v3595, 126
        %v3600 = vpop.permute.xlu0 %3599
        %3601 = vrot.lane.b32.xlu0 %v3596, 126
        %v3602 = vpop.permute.xlu0 %3601
        %v3603 = vsel %vm415, %v3600, %v3602
        %v3606 = vadd.f32 %v3591, %v3603
        %v3607 = vadd.f32 %v3592, %v3602
        %s3608 = sld [smem:[#allocation6 + $0xd4]]
        %v3609 = vstv %s3608
        %v3610 = vmul.f32 %v1024, %v3609
        %v3611 = vmul.f32 %v1025, %v3609
        %3614 = vrot.lane.b32.xlu0 %v3610, 124
        %v3615 = vpop.permute.xlu0 %3614
        %3616 = vrot.lane.b32.xlu0 %v3611, 124
        %v3617 = vpop.permute.xlu0 %3616
        %v3618 = vsel %vm447, %v3615, %v3617
        %v3621 = vadd.f32 %v3606, %v3618
        %v3622 = vadd.f32 %v3607, %v3617
        %s3623 = sld [smem:[#allocation6 + $0xd5]]
        %v3624 = vstv %s3623
        %v3625 = vmul.f32 %v1035, %v3624
        %v3626 = vmul.f32 %v1036, %v3624
        %v3627 = vadd.f32 %v3621, %v3625
        %v3628 = vadd.f32 %v3622, %v3626
        %s3629 = sld [smem:[#allocation6 + $0xd6]]
        %v3630 = vstv %s3629
        %v3631 = vmul.f32 %v1035, %v3630
        %v3632 = vmul.f32 %v1036, %v3630
        %3635 = vrot.lane.b32.xlu0 %v3631, 126
        %v3636 = vpop.permute.xlu0 %3635
        %3637 = vrot.lane.b32.xlu0 %v3632, 126
        %v3638 = vpop.permute.xlu0 %3637
        %v3639 = vsel %vm415, %v3636, %v3638
        %v3642 = vadd.f32 %v3627, %v3639
        %v3643 = vadd.f32 %v3628, %v3638
        %s3644 = sld [smem:[#allocation6 + $0xd7]]
        %v3645 = vstv %s3644
        %v3646 = vmul.f32 %v1035, %v3645
        %v3647 = vmul.f32 %v1036, %v3645
        %3650 = vrot.lane.b32.xlu0 %v3646, 124
        %v3651 = vpop.permute.xlu0 %3650
        %3652 = vrot.lane.b32.xlu0 %v3647, 124
        %v3653 = vpop.permute.xlu0 %3652
        %v3654 = vsel %vm447, %v3651, %v3653
        %v3657 = vadd.f32 %v3642, %v3654
        %v3658 = vadd.f32 %v3643, %v3653
        %s3659 = sld [smem:[#allocation7 + $0x8]]
        %v3660 = vstv %s3659
        %v3661 = vadd.f32 %v3657, %v3660
        %v3662 = vadd.f32 %v3658, %v3660
        %v3663 = vmax.f32 %v3661, 0.0
        %v3664 = vmax.f32 %v3662, 0.0
        %s3665 = sld [smem:[#allocation6 + $0xd8]]
        %v3666 = vstv %s3665
        %v3667 = vmul.f32 %v958, %v3666
        %v3668 = vmul.f32 %v959, %v3666
        %s3669 = sld [smem:[#allocation6 + $0xd9]]
        %v3670 = vstv %s3669
        %v3671 = vmul.f32 %v958, %v3670
        %v3672 = vmul.f32 %v959, %v3670
        %3675 = vrot.lane.b32.xlu0 %v3671, 126
        %v3676 = vpop.permute.xlu0 %3675
        %3677 = vrot.lane.b32.xlu0 %v3672, 126
        %v3678 = vpop.permute.xlu0 %3677
        %v3679 = vsel %vm415, %v3676, %v3678
        %v3682 = vadd.f32 %v3667, %v3679
        %v3683 = vadd.f32 %v3668, %v3678
        %s3684 = sld [smem:[#allocation6 + $0xda]]
        %v3685 = vstv %s3684
        %v3686 = vmul.f32 %v958, %v3685
        %v3687 = vmul.f32 %v959, %v3685
        %3690 = vrot.lane.b32.xlu0 %v3686, 124
        %v3691 = vpop.permute.xlu0 %3690
        %3692 = vrot.lane.b32.xlu0 %v3687, 124
        %v3693 = vpop.permute.xlu0 %3692
        %v3694 = vsel %vm447, %v3691, %v3693
        %v3697 = vadd.f32 %v3682, %v3694
        %v3698 = vadd.f32 %v3683, %v3693
        %s3699 = sld [smem:[#allocation6 + $0xdb]]
        %v3700 = vstv %s3699
        %v3701 = vmul.f32 %v969, %v3700
        %v3702 = vmul.f32 %v970, %v3700
        %v3703 = vadd.f32 %v3697, %v3701
        %v3704 = vadd.f32 %v3698, %v3702
        %s3705 = sld [smem:[#allocation6 + $0xdc]]
        %v3706 = vstv %s3705
        %v3707 = vmul.f32 %v969, %v3706
        %v3708 = vmul.f32 %v970, %v3706
        %3711 = vrot.lane.b32.xlu0 %v3707, 126
        %v3712 = vpop.permute.xlu0 %3711
        %3713 = vrot.lane.b32.xlu0 %v3708, 126
        %v3714 = vpop.permute.xlu0 %3713
        %v3715 = vsel %vm415, %v3712, %v3714
        %v3718 = vadd.f32 %v3703, %v3715
        %v3719 = vadd.f32 %v3704, %v3714
        %s3720 = sld [smem:[#allocation6 + $0xdd]]
        %v3721 = vstv %s3720
        %v3722 = vmul.f32 %v969, %v3721
        %v3723 = vmul.f32 %v970, %v3721
        %3726 = vrot.lane.b32.xlu0 %v3722, 124
        %v3727 = vpop.permute.xlu0 %3726
        %3728 = vrot.lane.b32.xlu0 %v3723, 124
        %v3729 = vpop.permute.xlu0 %3728
        %v3730 = vsel %vm447, %v3727, %v3729
        %v3733 = vadd.f32 %v3718, %v3730
        %v3734 = vadd.f32 %v3719, %v3729
        %s3735 = sld [smem:[#allocation6 + $0xde]]
        %v3736 = vstv %s3735
        %v3737 = vmul.f32 %v980, %v3736
        %v3738 = vmul.f32 %v981, %v3736
        %v3739 = vadd.f32 %v3733, %v3737
        %v3740 = vadd.f32 %v3734, %v3738
        %s3741 = sld [smem:[#allocation6 + $0xdf]]
        %v3742 = vstv %s3741
        %v3743 = vmul.f32 %v980, %v3742
        %v3744 = vmul.f32 %v981, %v3742
        %3747 = vrot.lane.b32.xlu0 %v3743, 126
        %v3748 = vpop.permute.xlu0 %3747
        %3749 = vrot.lane.b32.xlu0 %v3744, 126
        %v3750 = vpop.permute.xlu0 %3749
        %v3751 = vsel %vm415, %v3748, %v3750
        %v3754 = vadd.f32 %v3739, %v3751
        %v3755 = vadd.f32 %v3740, %v3750
        %s3756 = sld [smem:[#allocation6 + $0xe0]]
        %v3757 = vstv %s3756
        %v3758 = vmul.f32 %v980, %v3757
        %v3759 = vmul.f32 %v981, %v3757
        %3762 = vrot.lane.b32.xlu0 %v3758, 124
        %v3763 = vpop.permute.xlu0 %3762
        %3764 = vrot.lane.b32.xlu0 %v3759, 124
        %v3765 = vpop.permute.xlu0 %3764
        %v3766 = vsel %vm447, %v3763, %v3765
        %v3769 = vadd.f32 %v3754, %v3766
        %v3770 = vadd.f32 %v3755, %v3765
        %s3771 = sld [smem:[#allocation6 + $0xe1]]
        %v3772 = vstv %s3771
        %v3773 = vmul.f32 %v991, %v3772
        %v3774 = vmul.f32 %v992, %v3772
        %v3775 = vadd.f32 %v3769, %v3773
        %v3776 = vadd.f32 %v3770, %v3774
        %s3777 = sld [smem:[#allocation6 + $0xe2]]
        %v3778 = vstv %s3777
        %v3779 = vmul.f32 %v991, %v3778
        %v3780 = vmul.f32 %v992, %v3778
        %3783 = vrot.lane.b32.xlu0 %v3779, 126
        %v3784 = vpop.permute.xlu0 %3783
        %3785 = vrot.lane.b32.xlu0 %v3780, 126
        %v3786 = vpop.permute.xlu0 %3785
        %v3787 = vsel %vm415, %v3784, %v3786
        %v3790 = vadd.f32 %v3775, %v3787
        %v3791 = vadd.f32 %v3776, %v3786
        %s3792 = sld [smem:[#allocation6 + $0xe3]]
        %v3793 = vstv %s3792
        %v3794 = vmul.f32 %v991, %v3793
        %v3795 = vmul.f32 %v992, %v3793
        %3798 = vrot.lane.b32.xlu0 %v3794, 124
        %v3799 = vpop.permute.xlu0 %3798
        %3800 = vrot.lane.b32.xlu0 %v3795, 124
        %v3801 = vpop.permute.xlu0 %3800
        %v3802 = vsel %vm447, %v3799, %v3801
        %v3805 = vadd.f32 %v3790, %v3802
        %v3806 = vadd.f32 %v3791, %v3801
        %s3807 = sld [smem:[#allocation6 + $0xe4]]
        %v3808 = vstv %s3807
        %v3809 = vmul.f32 %v1002, %v3808
        %v3810 = vmul.f32 %v1003, %v3808
        %v3811 = vadd.f32 %v3805, %v3809
        %v3812 = vadd.f32 %v3806, %v3810
        %s3813 = sld [smem:[#allocation6 + $0xe5]]
        %v3814 = vstv %s3813
        %v3815 = vmul.f32 %v1002, %v3814
        %v3816 = vmul.f32 %v1003, %v3814
        %3819 = vrot.lane.b32.xlu0 %v3815, 126
        %v3820 = vpop.permute.xlu0 %3819
        %3821 = vrot.lane.b32.xlu0 %v3816, 126
        %v3822 = vpop.permute.xlu0 %3821
        %v3823 = vsel %vm415, %v3820, %v3822
        %v3826 = vadd.f32 %v3811, %v3823
        %v3827 = vadd.f32 %v3812, %v3822
        %s3828 = sld [smem:[#allocation6 + $0xe6]]
        %v3829 = vstv %s3828
        %v3830 = vmul.f32 %v1002, %v3829
        %v3831 = vmul.f32 %v1003, %v3829
        %3834 = vrot.lane.b32.xlu0 %v3830, 124
        %v3835 = vpop.permute.xlu0 %3834
        %3836 = vrot.lane.b32.xlu0 %v3831, 124
        %v3837 = vpop.permute.xlu0 %3836
        %v3838 = vsel %vm447, %v3835, %v3837
        %v3841 = vadd.f32 %v3826, %v3838
        %v3842 = vadd.f32 %v3827, %v3837
        %s3843 = sld [smem:[#allocation6 + $0xe7]]
        %v3844 = vstv %s3843
        %v3845 = vmul.f32 %v1013, %v3844
        %v3846 = vmul.f32 %v1014, %v3844
        %v3847 = vadd.f32 %v3841, %v3845
        %v3848 = vadd.f32 %v3842, %v3846
        %s3849 = sld [smem:[#allocation6 + $0xe8]]
        %v3850 = vstv %s3849
        %v3851 = vmul.f32 %v1013, %v3850
        %v3852 = vmul.f32 %v1014, %v3850
        %3855 = vrot.lane.b32.xlu0 %v3851, 126
        %v3856 = vpop.permute.xlu0 %3855
        %3857 = vrot.lane.b32.xlu0 %v3852, 126
        %v3858 = vpop.permute.xlu0 %3857
        %v3859 = vsel %vm415, %v3856, %v3858
        %v3862 = vadd.f32 %v3847, %v3859
        %v3863 = vadd.f32 %v3848, %v3858
        %s3864 = sld [smem:[#allocation6 + $0xe9]]
        %v3865 = vstv %s3864
        %v3866 = vmul.f32 %v1013, %v3865
        %v3867 = vmul.f32 %v1014, %v3865
        %3870 = vrot.lane.b32.xlu0 %v3866, 124
        %v3871 = vpop.permute.xlu0 %3870
        %3872 = vrot.lane.b32.xlu0 %v3867, 124
        %v3873 = vpop.permute.xlu0 %3872
        %v3874 = vsel %vm447, %v3871, %v3873
        %v3877 = vadd.f32 %v3862, %v3874
        %v3878 = vadd.f32 %v3863, %v3873
        %s3879 = sld [smem:[#allocation6 + $0xea]]
        %v3880 = vstv %s3879
        %v3881 = vmul.f32 %v1024, %v3880
        %v3882 = vmul.f32 %v1025, %v3880
        %v3883 = vadd.f32 %v3877, %v3881
        %v3884 = vadd.f32 %v3878, %v3882
        %s3885 = sld [smem:[#allocation6 + $0xeb]]
        %v3886 = vstv %s3885
        %v3887 = vmul.f32 %v1024, %v3886
        %v3888 = vmul.f32 %v1025, %v3886
        %3891 = vrot.lane.b32.xlu0 %v3887, 126
        %v3892 = vpop.permute.xlu0 %3891
        %3893 = vrot.lane.b32.xlu0 %v3888, 126
        %v3894 = vpop.permute.xlu0 %3893
        %v3895 = vsel %vm415, %v3892, %v3894
        %v3898 = vadd.f32 %v3883, %v3895
        %v3899 = vadd.f32 %v3884, %v3894
        %s3900 = sld [smem:[#allocation6 + $0xec]]
        %v3901 = vstv %s3900
        %v3902 = vmul.f32 %v1024, %v3901
        %v3903 = vmul.f32 %v1025, %v3901
        %3906 = vrot.lane.b32.xlu0 %v3902, 124
        %v3907 = vpop.permute.xlu0 %3906
        %3908 = vrot.lane.b32.xlu0 %v3903, 124
        %v3909 = vpop.permute.xlu0 %3908
        %v3910 = vsel %vm447, %v3907, %v3909
        %v3913 = vadd.f32 %v3898, %v3910
        %v3914 = vadd.f32 %v3899, %v3909
        %s3915 = sld [smem:[#allocation6 + $0xed]]
        %v3916 = vstv %s3915
        %v3917 = vmul.f32 %v1035, %v3916
        %v3918 = vmul.f32 %v1036, %v3916
        %v3919 = vadd.f32 %v3913, %v3917
        %v3920 = vadd.f32 %v3914, %v3918
        %s3921 = sld [smem:[#allocation6 + $0xee]]
        %v3922 = vstv %s3921
        %v3923 = vmul.f32 %v1035, %v3922
        %v3924 = vmul.f32 %v1036, %v3922
        %3927 = vrot.lane.b32.xlu0 %v3923, 126
        %v3928 = vpop.permute.xlu0 %3927
        %3929 = vrot.lane.b32.xlu0 %v3924, 126
        %v3930 = vpop.permute.xlu0 %3929
        %v3931 = vsel %vm415, %v3928, %v3930
        %v3934 = vadd.f32 %v3919, %v3931
        %v3935 = vadd.f32 %v3920, %v3930
        %s3936 = sld [smem:[#allocation6 + $0xef]]
        %v3937 = vstv %s3936
        %v3938 = vmul.f32 %v1035, %v3937
        %v3939 = vmul.f32 %v1036, %v3937
        %3942 = vrot.lane.b32.xlu0 %v3938, 124
        %v3943 = vpop.permute.xlu0 %3942
        %3944 = vrot.lane.b32.xlu0 %v3939, 124
        %v3945 = vpop.permute.xlu0 %3944
        %v3946 = vsel %vm447, %v3943, %v3945
        %v3949 = vadd.f32 %v3934, %v3946
        %v3950 = vadd.f32 %v3935, %v3945
        %s3951 = sld [smem:[#allocation7 + $0x9]]
        %v3952 = vstv %s3951
        %v3953 = vadd.f32 %v3949, %v3952
        %v3954 = vadd.f32 %v3950, %v3952
        %v3955 = vmax.f32 %v3953, 0.0
        %v3956 = vmax.f32 %v3954, 0.0
        %s3957 = sld [smem:[#allocation6 + $0xf0]]
        %v3958 = vstv %s3957
        %v3959 = vmul.f32 %v958, %v3958
        %v3960 = vmul.f32 %v959, %v3958
        %s3961 = sld [smem:[#allocation6 + $0xf1]]
        %v3962 = vstv %s3961
        %v3963 = vmul.f32 %v958, %v3962
        %v3964 = vmul.f32 %v959, %v3962
        %3967 = vrot.lane.b32.xlu0 %v3963, 126
        %v3968 = vpop.permute.xlu0 %3967
        %3969 = vrot.lane.b32.xlu0 %v3964, 126
        %v3970 = vpop.permute.xlu0 %3969
        %v3971 = vsel %vm415, %v3968, %v3970
        %v3974 = vadd.f32 %v3959, %v3971
        %v3975 = vadd.f32 %v3960, %v3970
        %s3976 = sld [smem:[#allocation6 + $0xf2]]
        %v3977 = vstv %s3976
        %v3978 = vmul.f32 %v958, %v3977
        %v3979 = vmul.f32 %v959, %v3977
        %3982 = vrot.lane.b32.xlu0 %v3978, 124
        %v3983 = vpop.permute.xlu0 %3982
        %3984 = vrot.lane.b32.xlu0 %v3979, 124
        %v3985 = vpop.permute.xlu0 %3984
        %v3986 = vsel %vm447, %v3983, %v3985
        %v3989 = vadd.f32 %v3974, %v3986
        %v3990 = vadd.f32 %v3975, %v3985
        %s3991 = sld [smem:[#allocation6 + $0xf3]]
        %v3992 = vstv %s3991
        %v3993 = vmul.f32 %v969, %v3992
        %v3994 = vmul.f32 %v970, %v3992
        %v3995 = vadd.f32 %v3989, %v3993
        %v3996 = vadd.f32 %v3990, %v3994
        %s3997 = sld [smem:[#allocation6 + $0xf4]]
        %v3998 = vstv %s3997
        %v3999 = vmul.f32 %v969, %v3998
        %v4000 = vmul.f32 %v970, %v3998
        %4003 = vrot.lane.b32.xlu0 %v3999, 126
        %v4004 = vpop.permute.xlu0 %4003
        %4005 = vrot.lane.b32.xlu0 %v4000, 126
        %v4006 = vpop.permute.xlu0 %4005
        %v4007 = vsel %vm415, %v4004, %v4006
        %v4010 = vadd.f32 %v3995, %v4007
        %v4011 = vadd.f32 %v3996, %v4006
        %s4012 = sld [smem:[#allocation6 + $0xf5]]
        %v4013 = vstv %s4012
        %v4014 = vmul.f32 %v969, %v4013
        %v4015 = vmul.f32 %v970, %v4013
        %4018 = vrot.lane.b32.xlu0 %v4014, 124
        %v4019 = vpop.permute.xlu0 %4018
        %4020 = vrot.lane.b32.xlu0 %v4015, 124
        %v4021 = vpop.permute.xlu0 %4020
        %v4022 = vsel %vm447, %v4019, %v4021
        %v4025 = vadd.f32 %v4010, %v4022
        %v4026 = vadd.f32 %v4011, %v4021
        %s4027 = sld [smem:[#allocation6 + $0xf6]]
        %v4028 = vstv %s4027
        %v4029 = vmul.f32 %v980, %v4028
        %v4030 = vmul.f32 %v981, %v4028
        %v4031 = vadd.f32 %v4025, %v4029
        %v4032 = vadd.f32 %v4026, %v4030
        %s4033 = sld [smem:[#allocation6 + $0xf7]]
        %v4034 = vstv %s4033
        %v4035 = vmul.f32 %v980, %v4034
        %v4036 = vmul.f32 %v981, %v4034
        %4039 = vrot.lane.b32.xlu0 %v4035, 126
        %v4040 = vpop.permute.xlu0 %4039
        %4041 = vrot.lane.b32.xlu0 %v4036, 126
        %v4042 = vpop.permute.xlu0 %4041
        %v4043 = vsel %vm415, %v4040, %v4042
        %v4046 = vadd.f32 %v4031, %v4043
        %v4047 = vadd.f32 %v4032, %v4042
        %s4048 = sld [smem:[#allocation6 + $0xf8]]
        %v4049 = vstv %s4048
        %v4050 = vmul.f32 %v980, %v4049
        %v4051 = vmul.f32 %v981, %v4049
        %4054 = vrot.lane.b32.xlu0 %v4050, 124
        %v4055 = vpop.permute.xlu0 %4054
        %4056 = vrot.lane.b32.xlu0 %v4051, 124
        %v4057 = vpop.permute.xlu0 %4056
        %v4058 = vsel %vm447, %v4055, %v4057
        %v4061 = vadd.f32 %v4046, %v4058
        %v4062 = vadd.f32 %v4047, %v4057
        %s4063 = sld [smem:[#allocation6 + $0xf9]]
        %v4064 = vstv %s4063
        %v4065 = vmul.f32 %v991, %v4064
        %v4066 = vmul.f32 %v992, %v4064
        %v4067 = vadd.f32 %v4061, %v4065
        %v4068 = vadd.f32 %v4062, %v4066
        %s4069 = sld [smem:[#allocation6 + $0xfa]]
        %v4070 = vstv %s4069
        %v4071 = vmul.f32 %v991, %v4070
        %v4072 = vmul.f32 %v992, %v4070
        %4075 = vrot.lane.b32.xlu0 %v4071, 126
        %v4076 = vpop.permute.xlu0 %4075
        %4077 = vrot.lane.b32.xlu0 %v4072, 126
        %v4078 = vpop.permute.xlu0 %4077
        %v4079 = vsel %vm415, %v4076, %v4078
        %v4082 = vadd.f32 %v4067, %v4079
        %v4083 = vadd.f32 %v4068, %v4078
        %s4084 = sld [smem:[#allocation6 + $0xfb]]
        %v4085 = vstv %s4084
        %v4086 = vmul.f32 %v991, %v4085
        %v4087 = vmul.f32 %v992, %v4085
        %4090 = vrot.lane.b32.xlu0 %v4086, 124
        %v4091 = vpop.permute.xlu0 %4090
        %4092 = vrot.lane.b32.xlu0 %v4087, 124
        %v4093 = vpop.permute.xlu0 %4092
        %v4094 = vsel %vm447, %v4091, %v4093
        %v4097 = vadd.f32 %v4082, %v4094
        %v4098 = vadd.f32 %v4083, %v4093
        %s4099 = sld [smem:[#allocation6 + $0xfc]]
        %v4100 = vstv %s4099
        %v4101 = vmul.f32 %v1002, %v4100
        %v4102 = vmul.f32 %v1003, %v4100
        %v4103 = vadd.f32 %v4097, %v4101
        %v4104 = vadd.f32 %v4098, %v4102
        %s4105 = sld [smem:[#allocation6 + $0xfd]]
        %v4106 = vstv %s4105
        %v4107 = vmul.f32 %v1002, %v4106
        %v4108 = vmul.f32 %v1003, %v4106
        %4111 = vrot.lane.b32.xlu0 %v4107, 126
        %v4112 = vpop.permute.xlu0 %4111
        %4113 = vrot.lane.b32.xlu0 %v4108, 126
        %v4114 = vpop.permute.xlu0 %4113
        %v4115 = vsel %vm415, %v4112, %v4114
        %v4118 = vadd.f32 %v4103, %v4115
        %v4119 = vadd.f32 %v4104, %v4114
        %s4120 = sld [smem:[#allocation6 + $0xfe]]
        %v4121 = vstv %s4120
        %v4122 = vmul.f32 %v1002, %v4121
        %v4123 = vmul.f32 %v1003, %v4121
        %4126 = vrot.lane.b32.xlu0 %v4122, 124
        %v4127 = vpop.permute.xlu0 %4126
        %4128 = vrot.lane.b32.xlu0 %v4123, 124
        %v4129 = vpop.permute.xlu0 %4128
        %v4130 = vsel %vm447, %v4127, %v4129
        %v4133 = vadd.f32 %v4118, %v4130
        %v4134 = vadd.f32 %v4119, %v4129
        %s4135 = sld [smem:[#allocation6 + $0xff]]
        %v4136 = vstv %s4135
        %v4137 = vmul.f32 %v1013, %v4136
        %v4138 = vmul.f32 %v1014, %v4136
        %v4139 = vadd.f32 %v4133, %v4137
        %v4140 = vadd.f32 %v4134, %v4138
        %s4141 = sld [smem:[#allocation6 + $0x100]]
        %v4142 = vstv %s4141
        %v4143 = vmul.f32 %v1013, %v4142
        %v4144 = vmul.f32 %v1014, %v4142
        %4147 = vrot.lane.b32.xlu0 %v4143, 126
        %v4148 = vpop.permute.xlu0 %4147
        %4149 = vrot.lane.b32.xlu0 %v4144, 126
        %v4150 = vpop.permute.xlu0 %4149
        %v4151 = vsel %vm415, %v4148, %v4150
        %v4154 = vadd.f32 %v4139, %v4151
        %v4155 = vadd.f32 %v4140, %v4150
        %s4156 = sld [smem:[#allocation6 + $0x101]]
        %v4157 = vstv %s4156
        %v4158 = vmul.f32 %v1013, %v4157
        %v4159 = vmul.f32 %v1014, %v4157
        %4162 = vrot.lane.b32.xlu0 %v4158, 124
        %v4163 = vpop.permute.xlu0 %4162
        %4164 = vrot.lane.b32.xlu0 %v4159, 124
        %v4165 = vpop.permute.xlu0 %4164
        %v4166 = vsel %vm447, %v4163, %v4165
        %v4169 = vadd.f32 %v4154, %v4166
        %v4170 = vadd.f32 %v4155, %v4165
        %s4171 = sld [smem:[#allocation6 + $0x102]]
        %v4172 = vstv %s4171
        %v4173 = vmul.f32 %v1024, %v4172
        %v4174 = vmul.f32 %v1025, %v4172
        %v4175 = vadd.f32 %v4169, %v4173
        %v4176 = vadd.f32 %v4170, %v4174
        %s4177 = sld [smem:[#allocation6 + $0x103]]
        %v4178 = vstv %s4177
        %v4179 = vmul.f32 %v1024, %v4178
        %v4180 = vmul.f32 %v1025, %v4178
        %4183 = vrot.lane.b32.xlu0 %v4179, 126
        %v4184 = vpop.permute.xlu0 %4183
        %4185 = vrot.lane.b32.xlu0 %v4180, 126
        %v4186 = vpop.permute.xlu0 %4185
        %v4187 = vsel %vm415, %v4184, %v4186
        %v4190 = vadd.f32 %v4175, %v4187
        %v4191 = vadd.f32 %v4176, %v4186
        %s4192 = sld [smem:[#allocation6 + $0x104]]
        %v4193 = vstv %s4192
        %v4194 = vmul.f32 %v1024, %v4193
        %v4195 = vmul.f32 %v1025, %v4193
        %4198 = vrot.lane.b32.xlu0 %v4194, 124
        %v4199 = vpop.permute.xlu0 %4198
        %4200 = vrot.lane.b32.xlu0 %v4195, 124
        %v4201 = vpop.permute.xlu0 %4200
        %v4202 = vsel %vm447, %v4199, %v4201
        %v4205 = vadd.f32 %v4190, %v4202
        %v4206 = vadd.f32 %v4191, %v4201
        %s4207 = sld [smem:[#allocation6 + $0x105]]
        %v4208 = vstv %s4207
        %v4209 = vmul.f32 %v1035, %v4208
        %v4210 = vmul.f32 %v1036, %v4208
        %v4211 = vadd.f32 %v4205, %v4209
        %v4212 = vadd.f32 %v4206, %v4210
        %s4213 = sld [smem:[#allocation6 + $0x106]]
        %v4214 = vstv %s4213
        %v4215 = vmul.f32 %v1035, %v4214
        %v4216 = vmul.f32 %v1036, %v4214
        %4219 = vrot.lane.b32.xlu0 %v4215, 126
        %v4220 = vpop.permute.xlu0 %4219
        %4221 = vrot.lane.b32.xlu0 %v4216, 126
        %v4222 = vpop.permute.xlu0 %4221
        %v4223 = vsel %vm415, %v4220, %v4222
        %v4226 = vadd.f32 %v4211, %v4223
        %v4227 = vadd.f32 %v4212, %v4222
        %s4228 = sld [smem:[#allocation6 + $0x107]]
        %v4229 = vstv %s4228
        %v4230 = vmul.f32 %v1035, %v4229
        %v4231 = vmul.f32 %v1036, %v4229
        %4234 = vrot.lane.b32.xlu0 %v4230, 124
        %v4235 = vpop.permute.xlu0 %4234
        %4236 = vrot.lane.b32.xlu0 %v4231, 124
        %v4237 = vpop.permute.xlu0 %4236
        %v4238 = vsel %vm447, %v4235, %v4237
        %v4241 = vadd.f32 %v4226, %v4238
        %v4242 = vadd.f32 %v4227, %v4237
        %s4243 = sld [smem:[#allocation7 + $0xa]]
        %v4244 = vstv %s4243
        %v4245 = vadd.f32 %v4241, %v4244
        %v4246 = vadd.f32 %v4242, %v4244
        %v4247 = vmax.f32 %v4245, 0.0
        %v4248 = vmax.f32 %v4246, 0.0
        %s4249 = sld [smem:[#allocation6 + $0x108]]
        %v4250 = vstv %s4249
        %v4251 = vmul.f32 %v958, %v4250
        %v4252 = vmul.f32 %v959, %v4250
        %s4253 = sld [smem:[#allocation6 + $0x109]]
        %v4254 = vstv %s4253
        %v4255 = vmul.f32 %v958, %v4254
        %v4256 = vmul.f32 %v959, %v4254
        %4259 = vrot.lane.b32.xlu0 %v4255, 126
        %v4260 = vpop.permute.xlu0 %4259
        %4261 = vrot.lane.b32.xlu0 %v4256, 126
        %v4262 = vpop.permute.xlu0 %4261
        %v4263 = vsel %vm415, %v4260, %v4262
        %v4266 = vadd.f32 %v4251, %v4263
        %v4267 = vadd.f32 %v4252, %v4262
        %s4268 = sld [smem:[#allocation6 + $0x10a]]
        %v4269 = vstv %s4268
        %v4270 = vmul.f32 %v958, %v4269
        %v4271 = vmul.f32 %v959, %v4269
        %4274 = vrot.lane.b32.xlu0 %v4270, 124
        %v4275 = vpop.permute.xlu0 %4274
        %4276 = vrot.lane.b32.xlu0 %v4271, 124
        %v4277 = vpop.permute.xlu0 %4276
        %v4278 = vsel %vm447, %v4275, %v4277
        %v4281 = vadd.f32 %v4266, %v4278
        %v4282 = vadd.f32 %v4267, %v4277
        %s4283 = sld [smem:[#allocation6 + $0x10b]]
        %v4284 = vstv %s4283
        %v4285 = vmul.f32 %v969, %v4284
        %v4286 = vmul.f32 %v970, %v4284
        %v4287 = vadd.f32 %v4281, %v4285
        %v4288 = vadd.f32 %v4282, %v4286
        %s4289 = sld [smem:[#allocation6 + $0x10c]]
        %v4290 = vstv %s4289
        %v4291 = vmul.f32 %v969, %v4290
        %v4292 = vmul.f32 %v970, %v4290
        %4295 = vrot.lane.b32.xlu0 %v4291, 126
        %v4296 = vpop.permute.xlu0 %4295
        %4297 = vrot.lane.b32.xlu0 %v4292, 126
        %v4298 = vpop.permute.xlu0 %4297
        %v4299 = vsel %vm415, %v4296, %v4298
        %v4302 = vadd.f32 %v4287, %v4299
        %v4303 = vadd.f32 %v4288, %v4298
        %s4304 = sld [smem:[#allocation6 + $0x10d]]
        %v4305 = vstv %s4304
        %v4306 = vmul.f32 %v969, %v4305
        %v4307 = vmul.f32 %v970, %v4305
        %4310 = vrot.lane.b32.xlu0 %v4306, 124
        %v4311 = vpop.permute.xlu0 %4310
        %4312 = vrot.lane.b32.xlu0 %v4307, 124
        %v4313 = vpop.permute.xlu0 %4312
        %v4314 = vsel %vm447, %v4311, %v4313
        %v4317 = vadd.f32 %v4302, %v4314
        %v4318 = vadd.f32 %v4303, %v4313
        %s4319 = sld [smem:[#allocation6 + $0x10e]]
        %v4320 = vstv %s4319
        %v4321 = vmul.f32 %v980, %v4320
        %v4322 = vmul.f32 %v981, %v4320
        %v4323 = vadd.f32 %v4317, %v4321
        %v4324 = vadd.f32 %v4318, %v4322
        %s4325 = sld [smem:[#allocation6 + $0x10f]]
        %v4326 = vstv %s4325
        %v4327 = vmul.f32 %v980, %v4326
        %v4328 = vmul.f32 %v981, %v4326
        %4331 = vrot.lane.b32.xlu0 %v4327, 126
        %v4332 = vpop.permute.xlu0 %4331
        %4333 = vrot.lane.b32.xlu0 %v4328, 126
        %v4334 = vpop.permute.xlu0 %4333
        %v4335 = vsel %vm415, %v4332, %v4334
        %v4338 = vadd.f32 %v4323, %v4335
        %v4339 = vadd.f32 %v4324, %v4334
        %s4340 = sld [smem:[#allocation6 + $0x110]]
        %v4341 = vstv %s4340
        %v4342 = vmul.f32 %v980, %v4341
        %v4343 = vmul.f32 %v981, %v4341
        %4346 = vrot.lane.b32.xlu0 %v4342, 124
        %v4347 = vpop.permute.xlu0 %4346
        %4348 = vrot.lane.b32.xlu0 %v4343, 124
        %v4349 = vpop.permute.xlu0 %4348
        %v4350 = vsel %vm447, %v4347, %v4349
        %v4353 = vadd.f32 %v4338, %v4350
        %v4354 = vadd.f32 %v4339, %v4349
        %s4355 = sld [smem:[#allocation6 + $0x111]]
        %v4356 = vstv %s4355
        %v4357 = vmul.f32 %v991, %v4356
        %v4358 = vmul.f32 %v992, %v4356
        %v4359 = vadd.f32 %v4353, %v4357
        %v4360 = vadd.f32 %v4354, %v4358
        %s4361 = sld [smem:[#allocation6 + $0x112]]
        %v4362 = vstv %s4361
        %v4363 = vmul.f32 %v991, %v4362
        %v4364 = vmul.f32 %v992, %v4362
        %4367 = vrot.lane.b32.xlu0 %v4363, 126
        %v4368 = vpop.permute.xlu0 %4367
        %4369 = vrot.lane.b32.xlu0 %v4364, 126
        %v4370 = vpop.permute.xlu0 %4369
        %v4371 = vsel %vm415, %v4368, %v4370
        %v4374 = vadd.f32 %v4359, %v4371
        %v4375 = vadd.f32 %v4360, %v4370
        %s4376 = sld [smem:[#allocation6 + $0x113]]
        %v4377 = vstv %s4376
        %v4378 = vmul.f32 %v991, %v4377
        %v4379 = vmul.f32 %v992, %v4377
        %4382 = vrot.lane.b32.xlu0 %v4378, 124
        %v4383 = vpop.permute.xlu0 %4382
        %4384 = vrot.lane.b32.xlu0 %v4379, 124
        %v4385 = vpop.permute.xlu0 %4384
        %v4386 = vsel %vm447, %v4383, %v4385
        %v4389 = vadd.f32 %v4374, %v4386
        %v4390 = vadd.f32 %v4375, %v4385
        %s4391 = sld [smem:[#allocation6 + $0x114]]
        %v4392 = vstv %s4391
        %v4393 = vmul.f32 %v1002, %v4392
        %v4394 = vmul.f32 %v1003, %v4392
        %v4395 = vadd.f32 %v4389, %v4393
        %v4396 = vadd.f32 %v4390, %v4394
        %s4397 = sld [smem:[#allocation6 + $0x115]]
        %v4398 = vstv %s4397
        %v4399 = vmul.f32 %v1002, %v4398
        %v4400 = vmul.f32 %v1003, %v4398
        %4403 = vrot.lane.b32.xlu0 %v4399, 126
        %v4404 = vpop.permute.xlu0 %4403
        %4405 = vrot.lane.b32.xlu0 %v4400, 126
        %v4406 = vpop.permute.xlu0 %4405
        %v4407 = vsel %vm415, %v4404, %v4406
        %v4410 = vadd.f32 %v4395, %v4407
        %v4411 = vadd.f32 %v4396, %v4406
        %s4412 = sld [smem:[#allocation6 + $0x116]]
        %v4413 = vstv %s4412
        %v4414 = vmul.f32 %v1002, %v4413
        %v4415 = vmul.f32 %v1003, %v4413
        %4418 = vrot.lane.b32.xlu0 %v4414, 124
        %v4419 = vpop.permute.xlu0 %4418
        %4420 = vrot.lane.b32.xlu0 %v4415, 124
        %v4421 = vpop.permute.xlu0 %4420
        %v4422 = vsel %vm447, %v4419, %v4421
        %v4425 = vadd.f32 %v4410, %v4422
        %v4426 = vadd.f32 %v4411, %v4421
        %s4427 = sld [smem:[#allocation6 + $0x117]]
        %v4428 = vstv %s4427
        %v4429 = vmul.f32 %v1013, %v4428
        %v4430 = vmul.f32 %v1014, %v4428
        %v4431 = vadd.f32 %v4425, %v4429
        %v4432 = vadd.f32 %v4426, %v4430
        %s4433 = sld [smem:[#allocation6 + $0x118]]
        %v4434 = vstv %s4433
        %v4435 = vmul.f32 %v1013, %v4434
        %v4436 = vmul.f32 %v1014, %v4434
        %4439 = vrot.lane.b32.xlu0 %v4435, 126
        %v4440 = vpop.permute.xlu0 %4439
        %4441 = vrot.lane.b32.xlu0 %v4436, 126
        %v4442 = vpop.permute.xlu0 %4441
        %v4443 = vsel %vm415, %v4440, %v4442
        %v4446 = vadd.f32 %v4431, %v4443
        %v4447 = vadd.f32 %v4432, %v4442
        %s4448 = sld [smem:[#allocation6 + $0x119]]
        %v4449 = vstv %s4448
        %v4450 = vmul.f32 %v1013, %v4449
        %v4451 = vmul.f32 %v1014, %v4449
        %4454 = vrot.lane.b32.xlu0 %v4450, 124
        %v4455 = vpop.permute.xlu0 %4454
        %4456 = vrot.lane.b32.xlu0 %v4451, 124
        %v4457 = vpop.permute.xlu0 %4456
        %v4458 = vsel %vm447, %v4455, %v4457
        %v4461 = vadd.f32 %v4446, %v4458
        %v4462 = vadd.f32 %v4447, %v4457
        %s4463 = sld [smem:[#allocation6 + $0x11a]]
        %v4464 = vstv %s4463
        %v4465 = vmul.f32 %v1024, %v4464
        %v4466 = vmul.f32 %v1025, %v4464
        %v4467 = vadd.f32 %v4461, %v4465
        %v4468 = vadd.f32 %v4462, %v4466
        %s4469 = sld [smem:[#allocation6 + $0x11b]]
        %v4470 = vstv %s4469
        %v4471 = vmul.f32 %v1024, %v4470
        %v4472 = vmul.f32 %v1025, %v4470
        %4475 = vrot.lane.b32.xlu0 %v4471, 126
        %v4476 = vpop.permute.xlu0 %4475
        %4477 = vrot.lane.b32.xlu0 %v4472, 126
        %v4478 = vpop.permute.xlu0 %4477
        %v4479 = vsel %vm415, %v4476, %v4478
        %v4482 = vadd.f32 %v4467, %v4479
        %v4483 = vadd.f32 %v4468, %v4478
        %s4484 = sld [smem:[#allocation6 + $0x11c]]
        %v4485 = vstv %s4484
        %v4486 = vmul.f32 %v1024, %v4485
        %v4487 = vmul.f32 %v1025, %v4485
        %4490 = vrot.lane.b32.xlu0 %v4486, 124
        %v4491 = vpop.permute.xlu0 %4490
        %4492 = vrot.lane.b32.xlu0 %v4487, 124
        %v4493 = vpop.permute.xlu0 %4492
        %v4494 = vsel %vm447, %v4491, %v4493
        %v4497 = vadd.f32 %v4482, %v4494
        %v4498 = vadd.f32 %v4483, %v4493
        %s4499 = sld [smem:[#allocation6 + $0x11d]]
        %v4500 = vstv %s4499
        %v4501 = vmul.f32 %v1035, %v4500
        %v4502 = vmul.f32 %v1036, %v4500
        %v4503 = vadd.f32 %v4497, %v4501
        %v4504 = vadd.f32 %v4498, %v4502
        %s4505 = sld [smem:[#allocation6 + $0x11e]]
        %v4506 = vstv %s4505
        %v4507 = vmul.f32 %v1035, %v4506
        %v4508 = vmul.f32 %v1036, %v4506
        %4511 = vrot.lane.b32.xlu0 %v4507, 126
        %v4512 = vpop.permute.xlu0 %4511
        %4513 = vrot.lane.b32.xlu0 %v4508, 126
        %v4514 = vpop.permute.xlu0 %4513
        %v4515 = vsel %vm415, %v4512, %v4514
        %v4518 = vadd.f32 %v4503, %v4515
        %v4519 = vadd.f32 %v4504, %v4514
        %s4520 = sld [smem:[#allocation6 + $0x11f]]
        %v4521 = vstv %s4520
        %v4522 = vmul.f32 %v1035, %v4521
        %v4523 = vmul.f32 %v1036, %v4521
        %4526 = vrot.lane.b32.xlu0 %v4522, 124
        %v4527 = vpop.permute.xlu0 %4526
        %4528 = vrot.lane.b32.xlu0 %v4523, 124
        %v4529 = vpop.permute.xlu0 %4528
        %v4530 = vsel %vm447, %v4527, %v4529
        %v4533 = vadd.f32 %v4518, %v4530
        %v4534 = vadd.f32 %v4519, %v4529
        %s4535 = sld [smem:[#allocation7 + $0xb]]
        %v4536 = vstv %s4535
        %v4537 = vadd.f32 %v4533, %v4536
        %v4538 = vadd.f32 %v4534, %v4536
        %v4539 = vmax.f32 %v4537, 0.0
        %v4540 = vmax.f32 %v4538, 0.0
        %s4541 = sld [smem:[#allocation6 + $0x120]]
        %v4542 = vstv %s4541
        %v4543 = vmul.f32 %v958, %v4542
        %v4544 = vmul.f32 %v959, %v4542
        %s4545 = sld [smem:[#allocation6 + $0x121]]
        %v4546 = vstv %s4545
        %v4547 = vmul.f32 %v958, %v4546
        %v4548 = vmul.f32 %v959, %v4546
        %4551 = vrot.lane.b32.xlu0 %v4547, 126
        %v4552 = vpop.permute.xlu0 %4551
        %4553 = vrot.lane.b32.xlu0 %v4548, 126
        %v4554 = vpop.permute.xlu0 %4553
        %v4555 = vsel %vm415, %v4552, %v4554
        %v4558 = vadd.f32 %v4543, %v4555
        %v4559 = vadd.f32 %v4544, %v4554
        %s4560 = sld [smem:[#allocation6 + $0x122]]
        %v4561 = vstv %s4560
        %v4562 = vmul.f32 %v958, %v4561
        %v4563 = vmul.f32 %v959, %v4561
        %4566 = vrot.lane.b32.xlu0 %v4562, 124
        %v4567 = vpop.permute.xlu0 %4566
        %4568 = vrot.lane.b32.xlu0 %v4563, 124
        %v4569 = vpop.permute.xlu0 %4568
        %v4570 = vsel %vm447, %v4567, %v4569
        %v4573 = vadd.f32 %v4558, %v4570
        %v4574 = vadd.f32 %v4559, %v4569
        %s4575 = sld [smem:[#allocation6 + $0x123]]
        %v4576 = vstv %s4575
        %v4577 = vmul.f32 %v969, %v4576
        %v4578 = vmul.f32 %v970, %v4576
        %v4579 = vadd.f32 %v4573, %v4577
        %v4580 = vadd.f32 %v4574, %v4578
        %s4581 = sld [smem:[#allocation6 + $0x124]]
        %v4582 = vstv %s4581
        %v4583 = vmul.f32 %v969, %v4582
        %v4584 = vmul.f32 %v970, %v4582
        %4587 = vrot.lane.b32.xlu0 %v4583, 126
        %v4588 = vpop.permute.xlu0 %4587
        %4589 = vrot.lane.b32.xlu0 %v4584, 126
        %v4590 = vpop.permute.xlu0 %4589
        %v4591 = vsel %vm415, %v4588, %v4590
        %v4594 = vadd.f32 %v4579, %v4591
        %v4595 = vadd.f32 %v4580, %v4590
        %s4596 = sld [smem:[#allocation6 + $0x125]]
        %v4597 = vstv %s4596
        %v4598 = vmul.f32 %v969, %v4597
        %v4599 = vmul.f32 %v970, %v4597
        %4602 = vrot.lane.b32.xlu0 %v4598, 124
        %v4603 = vpop.permute.xlu0 %4602
        %4604 = vrot.lane.b32.xlu0 %v4599, 124
        %v4605 = vpop.permute.xlu0 %4604
        %v4606 = vsel %vm447, %v4603, %v4605
        %v4609 = vadd.f32 %v4594, %v4606
        %v4610 = vadd.f32 %v4595, %v4605
        %s4611 = sld [smem:[#allocation6 + $0x126]]
        %v4612 = vstv %s4611
        %v4613 = vmul.f32 %v980, %v4612
        %v4614 = vmul.f32 %v981, %v4612
        %v4615 = vadd.f32 %v4609, %v4613
        %v4616 = vadd.f32 %v4610, %v4614
        %s4617 = sld [smem:[#allocation6 + $0x127]]
        %v4618 = vstv %s4617
        %v4619 = vmul.f32 %v980, %v4618
        %v4620 = vmul.f32 %v981, %v4618
        %4623 = vrot.lane.b32.xlu0 %v4619, 126
        %v4624 = vpop.permute.xlu0 %4623
        %4625 = vrot.lane.b32.xlu0 %v4620, 126
        %v4626 = vpop.permute.xlu0 %4625
        %v4627 = vsel %vm415, %v4624, %v4626
        %v4630 = vadd.f32 %v4615, %v4627
        %v4631 = vadd.f32 %v4616, %v4626
        %s4632 = sld [smem:[#allocation6 + $0x128]]
        %v4633 = vstv %s4632
        %v4634 = vmul.f32 %v980, %v4633
        %v4635 = vmul.f32 %v981, %v4633
        %4638 = vrot.lane.b32.xlu0 %v4634, 124
        %v4639 = vpop.permute.xlu0 %4638
        %4640 = vrot.lane.b32.xlu0 %v4635, 124
        %v4641 = vpop.permute.xlu0 %4640
        %v4642 = vsel %vm447, %v4639, %v4641
        %v4645 = vadd.f32 %v4630, %v4642
        %v4646 = vadd.f32 %v4631, %v4641
        %s4647 = sld [smem:[#allocation6 + $0x129]]
        %v4648 = vstv %s4647
        %v4649 = vmul.f32 %v991, %v4648
        %v4650 = vmul.f32 %v992, %v4648
        %v4651 = vadd.f32 %v4645, %v4649
        %v4652 = vadd.f32 %v4646, %v4650
        %s4653 = sld [smem:[#allocation6 + $0x12a]]
        %v4654 = vstv %s4653
        %v4655 = vmul.f32 %v991, %v4654
        %v4656 = vmul.f32 %v992, %v4654
        %4659 = vrot.lane.b32.xlu0 %v4655, 126
        %v4660 = vpop.permute.xlu0 %4659
        %4661 = vrot.lane.b32.xlu0 %v4656, 126
        %v4662 = vpop.permute.xlu0 %4661
        %v4663 = vsel %vm415, %v4660, %v4662
        %v4666 = vadd.f32 %v4651, %v4663
        %v4667 = vadd.f32 %v4652, %v4662
        %s4668 = sld [smem:[#allocation6 + $0x12b]]
        %v4669 = vstv %s4668
        %v4670 = vmul.f32 %v991, %v4669
        %v4671 = vmul.f32 %v992, %v4669
        %4674 = vrot.lane.b32.xlu0 %v4670, 124
        %v4675 = vpop.permute.xlu0 %4674
        %4676 = vrot.lane.b32.xlu0 %v4671, 124
        %v4677 = vpop.permute.xlu0 %4676
        %v4678 = vsel %vm447, %v4675, %v4677
        %v4681 = vadd.f32 %v4666, %v4678
        %v4682 = vadd.f32 %v4667, %v4677
        %s4683 = sld [smem:[#allocation6 + $0x12c]]
        %v4684 = vstv %s4683
        %v4685 = vmul.f32 %v1002, %v4684
        %v4686 = vmul.f32 %v1003, %v4684
        %v4687 = vadd.f32 %v4681, %v4685
        %v4688 = vadd.f32 %v4682, %v4686
        %s4689 = sld [smem:[#allocation6 + $0x12d]]
        %v4690 = vstv %s4689
        %v4691 = vmul.f32 %v1002, %v4690
        %v4692 = vmul.f32 %v1003, %v4690
        %4695 = vrot.lane.b32.xlu0 %v4691, 126
        %v4696 = vpop.permute.xlu0 %4695
        %4697 = vrot.lane.b32.xlu0 %v4692, 126
        %v4698 = vpop.permute.xlu0 %4697
        %v4699 = vsel %vm415, %v4696, %v4698
        %v4702 = vadd.f32 %v4687, %v4699
        %v4703 = vadd.f32 %v4688, %v4698
        %s4704 = sld [smem:[#allocation6 + $0x12e]]
        %v4705 = vstv %s4704
        %v4706 = vmul.f32 %v1002, %v4705
        %v4707 = vmul.f32 %v1003, %v4705
        %4710 = vrot.lane.b32.xlu0 %v4706, 124
        %v4711 = vpop.permute.xlu0 %4710
        %4712 = vrot.lane.b32.xlu0 %v4707, 124
        %v4713 = vpop.permute.xlu0 %4712
        %v4714 = vsel %vm447, %v4711, %v4713
        %v4717 = vadd.f32 %v4702, %v4714
        %v4718 = vadd.f32 %v4703, %v4713
        %s4719 = sld [smem:[#allocation6 + $0x12f]]
        %v4720 = vstv %s4719
        %v4721 = vmul.f32 %v1013, %v4720
        %v4722 = vmul.f32 %v1014, %v4720
        %v4723 = vadd.f32 %v4717, %v4721
        %v4724 = vadd.f32 %v4718, %v4722
        %s4725 = sld [smem:[#allocation6 + $0x130]]
        %v4726 = vstv %s4725
        %v4727 = vmul.f32 %v1013, %v4726
        %v4728 = vmul.f32 %v1014, %v4726
        %4731 = vrot.lane.b32.xlu0 %v4727, 126
        %v4732 = vpop.permute.xlu0 %4731
        %4733 = vrot.lane.b32.xlu0 %v4728, 126
        %v4734 = vpop.permute.xlu0 %4733
        %v4735 = vsel %vm415, %v4732, %v4734
        %v4738 = vadd.f32 %v4723, %v4735
        %v4739 = vadd.f32 %v4724, %v4734
        %s4740 = sld [smem:[#allocation6 + $0x131]]
        %v4741 = vstv %s4740
        %v4742 = vmul.f32 %v1013, %v4741
        %v4743 = vmul.f32 %v1014, %v4741
        %4746 = vrot.lane.b32.xlu0 %v4742, 124
        %v4747 = vpop.permute.xlu0 %4746
        %4748 = vrot.lane.b32.xlu0 %v4743, 124
        %v4749 = vpop.permute.xlu0 %4748
        %v4750 = vsel %vm447, %v4747, %v4749
        %v4753 = vadd.f32 %v4738, %v4750
        %v4754 = vadd.f32 %v4739, %v4749
        %s4755 = sld [smem:[#allocation6 + $0x132]]
        %v4756 = vstv %s4755
        %v4757 = vmul.f32 %v1024, %v4756
        %v4758 = vmul.f32 %v1025, %v4756
        %v4759 = vadd.f32 %v4753, %v4757
        %v4760 = vadd.f32 %v4754, %v4758
        %s4761 = sld [smem:[#allocation6 + $0x133]]
        %v4762 = vstv %s4761
        %v4763 = vmul.f32 %v1024, %v4762
        %v4764 = vmul.f32 %v1025, %v4762
        %4767 = vrot.lane.b32.xlu0 %v4763, 126
        %v4768 = vpop.permute.xlu0 %4767
        %4769 = vrot.lane.b32.xlu0 %v4764, 126
        %v4770 = vpop.permute.xlu0 %4769
        %v4771 = vsel %vm415, %v4768, %v4770
        %v4774 = vadd.f32 %v4759, %v4771
        %v4775 = vadd.f32 %v4760, %v4770
        %s4776 = sld [smem:[#allocation6 + $0x134]]
        %v4777 = vstv %s4776
        %v4778 = vmul.f32 %v1024, %v4777
        %v4779 = vmul.f32 %v1025, %v4777
        %4782 = vrot.lane.b32.xlu0 %v4778, 124
        %v4783 = vpop.permute.xlu0 %4782
        %4784 = vrot.lane.b32.xlu0 %v4779, 124
        %v4785 = vpop.permute.xlu0 %4784
        %v4786 = vsel %vm447, %v4783, %v4785
        %v4789 = vadd.f32 %v4774, %v4786
        %v4790 = vadd.f32 %v4775, %v4785
        %s4791 = sld [smem:[#allocation6 + $0x135]]
        %v4792 = vstv %s4791
        %v4793 = vmul.f32 %v1035, %v4792
        %v4794 = vmul.f32 %v1036, %v4792
        %v4795 = vadd.f32 %v4789, %v4793
        %v4796 = vadd.f32 %v4790, %v4794
        %s4797 = sld [smem:[#allocation6 + $0x136]]
        %v4798 = vstv %s4797
        %v4799 = vmul.f32 %v1035, %v4798
        %v4800 = vmul.f32 %v1036, %v4798
        %4803 = vrot.lane.b32.xlu0 %v4799, 126
        %v4804 = vpop.permute.xlu0 %4803
        %4805 = vrot.lane.b32.xlu0 %v4800, 126
        %v4806 = vpop.permute.xlu0 %4805
        %v4807 = vsel %vm415, %v4804, %v4806
        %v4810 = vadd.f32 %v4795, %v4807
        %v4811 = vadd.f32 %v4796, %v4806
        %s4812 = sld [smem:[#allocation6 + $0x137]]
        %v4813 = vstv %s4812
        %v4814 = vmul.f32 %v1035, %v4813
        %v4815 = vmul.f32 %v1036, %v4813
        %4818 = vrot.lane.b32.xlu0 %v4814, 124
        %v4819 = vpop.permute.xlu0 %4818
        %4820 = vrot.lane.b32.xlu0 %v4815, 124
        %v4821 = vpop.permute.xlu0 %4820
        %v4822 = vsel %vm447, %v4819, %v4821
        %v4825 = vadd.f32 %v4810, %v4822
        %v4826 = vadd.f32 %v4811, %v4821
        %s4827 = sld [smem:[#allocation7 + $0xc]]
        %v4828 = vstv %s4827
        %v4829 = vadd.f32 %v4825, %v4828
        %v4830 = vadd.f32 %v4826, %v4828
        %v4831 = vmax.f32 %v4829, 0.0
        %v4832 = vmax.f32 %v4830, 0.0
        %s4833 = sld [smem:[#allocation6 + $0x138]]
        %v4834 = vstv %s4833
        %v4835 = vmul.f32 %v958, %v4834
        %v4836 = vmul.f32 %v959, %v4834
        %s4837 = sld [smem:[#allocation6 + $0x139]]
        %v4838 = vstv %s4837
        %v4839 = vmul.f32 %v958, %v4838
        %v4840 = vmul.f32 %v959, %v4838
        %4843 = vrot.lane.b32.xlu0 %v4839, 126
        %v4844 = vpop.permute.xlu0 %4843
        %4845 = vrot.lane.b32.xlu0 %v4840, 126
        %v4846 = vpop.permute.xlu0 %4845
        %v4847 = vsel %vm415, %v4844, %v4846
        %v4850 = vadd.f32 %v4835, %v4847
        %v4851 = vadd.f32 %v4836, %v4846
        %s4852 = sld [smem:[#allocation6 + $0x13a]]
        %v4853 = vstv %s4852
        %v4854 = vmul.f32 %v958, %v4853
        %v4855 = vmul.f32 %v959, %v4853
        %4858 = vrot.lane.b32.xlu0 %v4854, 124
        %v4859 = vpop.permute.xlu0 %4858
        %4860 = vrot.lane.b32.xlu0 %v4855, 124
        %v4861 = vpop.permute.xlu0 %4860
        %v4862 = vsel %vm447, %v4859, %v4861
        %v4865 = vadd.f32 %v4850, %v4862
        %v4866 = vadd.f32 %v4851, %v4861
        %s4867 = sld [smem:[#allocation6 + $0x13b]]
        %v4868 = vstv %s4867
        %v4869 = vmul.f32 %v969, %v4868
        %v4870 = vmul.f32 %v970, %v4868
        %v4871 = vadd.f32 %v4865, %v4869
        %v4872 = vadd.f32 %v4866, %v4870
        %s4873 = sld [smem:[#allocation6 + $0x13c]]
        %v4874 = vstv %s4873
        %v4875 = vmul.f32 %v969, %v4874
        %v4876 = vmul.f32 %v970, %v4874
        %4879 = vrot.lane.b32.xlu0 %v4875, 126
        %v4880 = vpop.permute.xlu0 %4879
        %4881 = vrot.lane.b32.xlu0 %v4876, 126
        %v4882 = vpop.permute.xlu0 %4881
        %v4883 = vsel %vm415, %v4880, %v4882
        %v4886 = vadd.f32 %v4871, %v4883
        %v4887 = vadd.f32 %v4872, %v4882
        %s4888 = sld [smem:[#allocation6 + $0x13d]]
        %v4889 = vstv %s4888
        %v4890 = vmul.f32 %v969, %v4889
        %v4891 = vmul.f32 %v970, %v4889
        %4894 = vrot.lane.b32.xlu0 %v4890, 124
        %v4895 = vpop.permute.xlu0 %4894
        %4896 = vrot.lane.b32.xlu0 %v4891, 124
        %v4897 = vpop.permute.xlu0 %4896
        %v4898 = vsel %vm447, %v4895, %v4897
        %v4901 = vadd.f32 %v4886, %v4898
        %v4902 = vadd.f32 %v4887, %v4897
        %s4903 = sld [smem:[#allocation6 + $0x13e]]
        %v4904 = vstv %s4903
        %v4905 = vmul.f32 %v980, %v4904
        %v4906 = vmul.f32 %v981, %v4904
        %v4907 = vadd.f32 %v4901, %v4905
        %v4908 = vadd.f32 %v4902, %v4906
        %s4909 = sld [smem:[#allocation6 + $0x13f]]
        %v4910 = vstv %s4909
        %v4911 = vmul.f32 %v980, %v4910
        %v4912 = vmul.f32 %v981, %v4910
        %4915 = vrot.lane.b32.xlu0 %v4911, 126
        %v4916 = vpop.permute.xlu0 %4915
        %4917 = vrot.lane.b32.xlu0 %v4912, 126
        %v4918 = vpop.permute.xlu0 %4917
        %v4919 = vsel %vm415, %v4916, %v4918
        %v4922 = vadd.f32 %v4907, %v4919
        %v4923 = vadd.f32 %v4908, %v4918
        %s4924 = sld [smem:[#allocation6 + $0x140]]
        %v4925 = vstv %s4924
        %v4926 = vmul.f32 %v980, %v4925
        %v4927 = vmul.f32 %v981, %v4925
        %4930 = vrot.lane.b32.xlu0 %v4926, 124
        %v4931 = vpop.permute.xlu0 %4930
        %4932 = vrot.lane.b32.xlu0 %v4927, 124
        %v4933 = vpop.permute.xlu0 %4932
        %v4934 = vsel %vm447, %v4931, %v4933
        %v4937 = vadd.f32 %v4922, %v4934
        %v4938 = vadd.f32 %v4923, %v4933
        %s4939 = sld [smem:[#allocation6 + $0x141]]
        %v4940 = vstv %s4939
        %v4941 = vmul.f32 %v991, %v4940
        %v4942 = vmul.f32 %v992, %v4940
        %v4943 = vadd.f32 %v4937, %v4941
        %v4944 = vadd.f32 %v4938, %v4942
        %s4945 = sld [smem:[#allocation6 + $0x142]]
        %v4946 = vstv %s4945
        %v4947 = vmul.f32 %v991, %v4946
        %v4948 = vmul.f32 %v992, %v4946
        %4951 = vrot.lane.b32.xlu0 %v4947, 126
        %v4952 = vpop.permute.xlu0 %4951
        %4953 = vrot.lane.b32.xlu0 %v4948, 126
        %v4954 = vpop.permute.xlu0 %4953
        %v4955 = vsel %vm415, %v4952, %v4954
        %v4958 = vadd.f32 %v4943, %v4955
        %v4959 = vadd.f32 %v4944, %v4954
        %s4960 = sld [smem:[#allocation6 + $0x143]]
        %v4961 = vstv %s4960
        %v4962 = vmul.f32 %v991, %v4961
        %v4963 = vmul.f32 %v992, %v4961
        %4966 = vrot.lane.b32.xlu0 %v4962, 124
        %v4967 = vpop.permute.xlu0 %4966
        %4968 = vrot.lane.b32.xlu0 %v4963, 124
        %v4969 = vpop.permute.xlu0 %4968
        %v4970 = vsel %vm447, %v4967, %v4969
        %v4973 = vadd.f32 %v4958, %v4970
        %v4974 = vadd.f32 %v4959, %v4969
        %s4975 = sld [smem:[#allocation6 + $0x144]]
        %v4976 = vstv %s4975
        %v4977 = vmul.f32 %v1002, %v4976
        %v4978 = vmul.f32 %v1003, %v4976
        %v4979 = vadd.f32 %v4973, %v4977
        %v4980 = vadd.f32 %v4974, %v4978
        %s4981 = sld [smem:[#allocation6 + $0x145]]
        %v4982 = vstv %s4981
        %v4983 = vmul.f32 %v1002, %v4982
        %v4984 = vmul.f32 %v1003, %v4982
        %4987 = vrot.lane.b32.xlu0 %v4983, 126
        %v4988 = vpop.permute.xlu0 %4987
        %4989 = vrot.lane.b32.xlu0 %v4984, 126
        %v4990 = vpop.permute.xlu0 %4989
        %v4991 = vsel %vm415, %v4988, %v4990
        %v4994 = vadd.f32 %v4979, %v4991
        %v4995 = vadd.f32 %v4980, %v4990
        %s4996 = sld [smem:[#allocation6 + $0x146]]
        %v4997 = vstv %s4996
        %v4998 = vmul.f32 %v1002, %v4997
        %v4999 = vmul.f32 %v1003, %v4997
        %5002 = vrot.lane.b32.xlu0 %v4998, 124
        %v5003 = vpop.permute.xlu0 %5002
        %5004 = vrot.lane.b32.xlu0 %v4999, 124
        %v5005 = vpop.permute.xlu0 %5004
        %v5006 = vsel %vm447, %v5003, %v5005
        %v5009 = vadd.f32 %v4994, %v5006
        %v5010 = vadd.f32 %v4995, %v5005
        %s5011 = sld [smem:[#allocation6 + $0x147]]
        %v5012 = vstv %s5011
        %v5013 = vmul.f32 %v1013, %v5012
        %v5014 = vmul.f32 %v1014, %v5012
        %v5015 = vadd.f32 %v5009, %v5013
        %v5016 = vadd.f32 %v5010, %v5014
        %s5017 = sld [smem:[#allocation6 + $0x148]]
        %v5018 = vstv %s5017
        %v5019 = vmul.f32 %v1013, %v5018
        %v5020 = vmul.f32 %v1014, %v5018
        %5023 = vrot.lane.b32.xlu0 %v5019, 126
        %v5024 = vpop.permute.xlu0 %5023
        %5025 = vrot.lane.b32.xlu0 %v5020, 126
        %v5026 = vpop.permute.xlu0 %5025
        %v5027 = vsel %vm415, %v5024, %v5026
        %v5030 = vadd.f32 %v5015, %v5027
        %v5031 = vadd.f32 %v5016, %v5026
        %s5032 = sld [smem:[#allocation6 + $0x149]]
        %v5033 = vstv %s5032
        %v5034 = vmul.f32 %v1013, %v5033
        %v5035 = vmul.f32 %v1014, %v5033
        %5038 = vrot.lane.b32.xlu0 %v5034, 124
        %v5039 = vpop.permute.xlu0 %5038
        %5040 = vrot.lane.b32.xlu0 %v5035, 124
        %v5041 = vpop.permute.xlu0 %5040
        %v5042 = vsel %vm447, %v5039, %v5041
        %v5045 = vadd.f32 %v5030, %v5042
        %v5046 = vadd.f32 %v5031, %v5041
        %s5047 = sld [smem:[#allocation6 + $0x14a]]
        %v5048 = vstv %s5047
        %v5049 = vmul.f32 %v1024, %v5048
        %v5050 = vmul.f32 %v1025, %v5048
        %v5051 = vadd.f32 %v5045, %v5049
        %v5052 = vadd.f32 %v5046, %v5050
        %s5053 = sld [smem:[#allocation6 + $0x14b]]
        %v5054 = vstv %s5053
        %v5055 = vmul.f32 %v1024, %v5054
        %v5056 = vmul.f32 %v1025, %v5054
        %5059 = vrot.lane.b32.xlu0 %v5055, 126
        %v5060 = vpop.permute.xlu0 %5059
        %5061 = vrot.lane.b32.xlu0 %v5056, 126
        %v5062 = vpop.permute.xlu0 %5061
        %v5063 = vsel %vm415, %v5060, %v5062
        %v5066 = vadd.f32 %v5051, %v5063
        %v5067 = vadd.f32 %v5052, %v5062
        %s5068 = sld [smem:[#allocation6 + $0x14c]]
        %v5069 = vstv %s5068
        %v5070 = vmul.f32 %v1024, %v5069
        %v5071 = vmul.f32 %v1025, %v5069
        %5074 = vrot.lane.b32.xlu0 %v5070, 124
        %v5075 = vpop.permute.xlu0 %5074
        %5076 = vrot.lane.b32.xlu0 %v5071, 124
        %v5077 = vpop.permute.xlu0 %5076
        %v5078 = vsel %vm447, %v5075, %v5077
        %v5081 = vadd.f32 %v5066, %v5078
        %v5082 = vadd.f32 %v5067, %v5077
        %s5083 = sld [smem:[#allocation6 + $0x14d]]
        %v5084 = vstv %s5083
        %v5085 = vmul.f32 %v1035, %v5084
        %v5086 = vmul.f32 %v1036, %v5084
        %v5087 = vadd.f32 %v5081, %v5085
        %v5088 = vadd.f32 %v5082, %v5086
        %s5089 = sld [smem:[#allocation6 + $0x14e]]
        %v5090 = vstv %s5089
        %v5091 = vmul.f32 %v1035, %v5090
        %v5092 = vmul.f32 %v1036, %v5090
        %5095 = vrot.lane.b32.xlu0 %v5091, 126
        %v5096 = vpop.permute.xlu0 %5095
        %5097 = vrot.lane.b32.xlu0 %v5092, 126
        %v5098 = vpop.permute.xlu0 %5097
        %v5099 = vsel %vm415, %v5096, %v5098
        %v5102 = vadd.f32 %v5087, %v5099
        %v5103 = vadd.f32 %v5088, %v5098
        %s5104 = sld [smem:[#allocation6 + $0x14f]]
        %v5105 = vstv %s5104
        %v5106 = vmul.f32 %v1035, %v5105
        %v5107 = vmul.f32 %v1036, %v5105
        %5110 = vrot.lane.b32.xlu0 %v5106, 124
        %v5111 = vpop.permute.xlu0 %5110
        %5112 = vrot.lane.b32.xlu0 %v5107, 124
        %v5113 = vpop.permute.xlu0 %5112
        %v5114 = vsel %vm447, %v5111, %v5113
        %v5117 = vadd.f32 %v5102, %v5114
        %v5118 = vadd.f32 %v5103, %v5113
        %s5119 = sld [smem:[#allocation7 + $0xd]]
        %v5120 = vstv %s5119
        %v5121 = vadd.f32 %v5117, %v5120
        %v5122 = vadd.f32 %v5118, %v5120
        %v5123 = vmax.f32 %v5121, 0.0
        %v5124 = vmax.f32 %v5122, 0.0
        %s5125 = sld [smem:[#allocation6 + $0x150]]
        %v5126 = vstv %s5125
        %v5127 = vmul.f32 %v958, %v5126
        %v5128 = vmul.f32 %v959, %v5126
        %s5129 = sld [smem:[#allocation6 + $0x151]]
        %v5130 = vstv %s5129
        %v5131 = vmul.f32 %v958, %v5130
        %v5132 = vmul.f32 %v959, %v5130
        %5135 = vrot.lane.b32.xlu0 %v5131, 126
        %v5136 = vpop.permute.xlu0 %5135
        %5137 = vrot.lane.b32.xlu0 %v5132, 126
        %v5138 = vpop.permute.xlu0 %5137
        %v5139 = vsel %vm415, %v5136, %v5138
        %v5142 = vadd.f32 %v5127, %v5139
        %v5143 = vadd.f32 %v5128, %v5138
        %s5144 = sld [smem:[#allocation6 + $0x152]]
        %v5145 = vstv %s5144
        %v5146 = vmul.f32 %v958, %v5145
        %v5147 = vmul.f32 %v959, %v5145
        %5150 = vrot.lane.b32.xlu0 %v5146, 124
        %v5151 = vpop.permute.xlu0 %5150
        %5152 = vrot.lane.b32.xlu0 %v5147, 124
        %v5153 = vpop.permute.xlu0 %5152
        %v5154 = vsel %vm447, %v5151, %v5153
        %v5157 = vadd.f32 %v5142, %v5154
        %v5158 = vadd.f32 %v5143, %v5153
        %s5159 = sld [smem:[#allocation6 + $0x153]]
        %v5160 = vstv %s5159
        %v5161 = vmul.f32 %v969, %v5160
        %v5162 = vmul.f32 %v970, %v5160
        %v5163 = vadd.f32 %v5157, %v5161
        %v5164 = vadd.f32 %v5158, %v5162
        %s5165 = sld [smem:[#allocation6 + $0x154]]
        %v5166 = vstv %s5165
        %v5167 = vmul.f32 %v969, %v5166
        %v5168 = vmul.f32 %v970, %v5166
        %5171 = vrot.lane.b32.xlu0 %v5167, 126
        %v5172 = vpop.permute.xlu0 %5171
        %5173 = vrot.lane.b32.xlu0 %v5168, 126
        %v5174 = vpop.permute.xlu0 %5173
        %v5175 = vsel %vm415, %v5172, %v5174
        %v5178 = vadd.f32 %v5163, %v5175
        %v5179 = vadd.f32 %v5164, %v5174
        %s5180 = sld [smem:[#allocation6 + $0x155]]
        %v5181 = vstv %s5180
        %v5182 = vmul.f32 %v969, %v5181
        %v5183 = vmul.f32 %v970, %v5181
        %5186 = vrot.lane.b32.xlu0 %v5182, 124
        %v5187 = vpop.permute.xlu0 %5186
        %5188 = vrot.lane.b32.xlu0 %v5183, 124
        %v5189 = vpop.permute.xlu0 %5188
        %v5190 = vsel %vm447, %v5187, %v5189
        %v5193 = vadd.f32 %v5178, %v5190
        %v5194 = vadd.f32 %v5179, %v5189
        %s5195 = sld [smem:[#allocation6 + $0x156]]
        %v5196 = vstv %s5195
        %v5197 = vmul.f32 %v980, %v5196
        %v5198 = vmul.f32 %v981, %v5196
        %v5199 = vadd.f32 %v5193, %v5197
        %v5200 = vadd.f32 %v5194, %v5198
        %s5201 = sld [smem:[#allocation6 + $0x157]]
        %v5202 = vstv %s5201
        %v5203 = vmul.f32 %v980, %v5202
        %v5204 = vmul.f32 %v981, %v5202
        %5207 = vrot.lane.b32.xlu0 %v5203, 126
        %v5208 = vpop.permute.xlu0 %5207
        %5209 = vrot.lane.b32.xlu0 %v5204, 126
        %v5210 = vpop.permute.xlu0 %5209
        %v5211 = vsel %vm415, %v5208, %v5210
        %v5214 = vadd.f32 %v5199, %v5211
        %v5215 = vadd.f32 %v5200, %v5210
        %s5216 = sld [smem:[#allocation6 + $0x158]]
        %v5217 = vstv %s5216
        %v5218 = vmul.f32 %v980, %v5217
        %v5219 = vmul.f32 %v981, %v5217
        %5222 = vrot.lane.b32.xlu0 %v5218, 124
        %v5223 = vpop.permute.xlu0 %5222
        %5224 = vrot.lane.b32.xlu0 %v5219, 124
        %v5225 = vpop.permute.xlu0 %5224
        %v5226 = vsel %vm447, %v5223, %v5225
        %v5229 = vadd.f32 %v5214, %v5226
        %v5230 = vadd.f32 %v5215, %v5225
        %s5231 = sld [smem:[#allocation6 + $0x159]]
        %v5232 = vstv %s5231
        %v5233 = vmul.f32 %v991, %v5232
        %v5234 = vmul.f32 %v992, %v5232
        %v5235 = vadd.f32 %v5229, %v5233
        %v5236 = vadd.f32 %v5230, %v5234
        %s5237 = sld [smem:[#allocation6 + $0x15a]]
        %v5238 = vstv %s5237
        %v5239 = vmul.f32 %v991, %v5238
        %v5240 = vmul.f32 %v992, %v5238
        %5243 = vrot.lane.b32.xlu0 %v5239, 126
        %v5244 = vpop.permute.xlu0 %5243
        %5245 = vrot.lane.b32.xlu0 %v5240, 126
        %v5246 = vpop.permute.xlu0 %5245
        %v5247 = vsel %vm415, %v5244, %v5246
        %v5250 = vadd.f32 %v5235, %v5247
        %v5251 = vadd.f32 %v5236, %v5246
        %s5252 = sld [smem:[#allocation6 + $0x15b]]
        %v5253 = vstv %s5252
        %v5254 = vmul.f32 %v991, %v5253
        %v5255 = vmul.f32 %v992, %v5253
        %5258 = vrot.lane.b32.xlu0 %v5254, 124
        %v5259 = vpop.permute.xlu0 %5258
        %5260 = vrot.lane.b32.xlu0 %v5255, 124
        %v5261 = vpop.permute.xlu0 %5260
        %v5262 = vsel %vm447, %v5259, %v5261
        %v5265 = vadd.f32 %v5250, %v5262
        %v5266 = vadd.f32 %v5251, %v5261
        %s5267 = sld [smem:[#allocation6 + $0x15c]]
        %v5268 = vstv %s5267
        %v5269 = vmul.f32 %v1002, %v5268
        %v5270 = vmul.f32 %v1003, %v5268
        %v5271 = vadd.f32 %v5265, %v5269
        %v5272 = vadd.f32 %v5266, %v5270
        %s5273 = sld [smem:[#allocation6 + $0x15d]]
        %v5274 = vstv %s5273
        %v5275 = vmul.f32 %v1002, %v5274
        %v5276 = vmul.f32 %v1003, %v5274
        %5279 = vrot.lane.b32.xlu0 %v5275, 126
        %v5280 = vpop.permute.xlu0 %5279
        %5281 = vrot.lane.b32.xlu0 %v5276, 126
        %v5282 = vpop.permute.xlu0 %5281
        %v5283 = vsel %vm415, %v5280, %v5282
        %v5286 = vadd.f32 %v5271, %v5283
        %v5287 = vadd.f32 %v5272, %v5282
        %s5288 = sld [smem:[#allocation6 + $0x15e]]
        %v5289 = vstv %s5288
        %v5290 = vmul.f32 %v1002, %v5289
        %v5291 = vmul.f32 %v1003, %v5289
        %5294 = vrot.lane.b32.xlu0 %v5290, 124
        %v5295 = vpop.permute.xlu0 %5294
        %5296 = vrot.lane.b32.xlu0 %v5291, 124
        %v5297 = vpop.permute.xlu0 %5296
        %v5298 = vsel %vm447, %v5295, %v5297
        %v5301 = vadd.f32 %v5286, %v5298
        %v5302 = vadd.f32 %v5287, %v5297
        %s5303 = sld [smem:[#allocation6 + $0x15f]]
        %v5304 = vstv %s5303
        %v5305 = vmul.f32 %v1013, %v5304
        %v5306 = vmul.f32 %v1014, %v5304
        %v5307 = vadd.f32 %v5301, %v5305
        %v5308 = vadd.f32 %v5302, %v5306
        %s5309 = sld [smem:[#allocation6 + $0x160]]
        %v5310 = vstv %s5309
        %v5311 = vmul.f32 %v1013, %v5310
        %v5312 = vmul.f32 %v1014, %v5310
        %5315 = vrot.lane.b32.xlu0 %v5311, 126
        %v5316 = vpop.permute.xlu0 %5315
        %5317 = vrot.lane.b32.xlu0 %v5312, 126
        %v5318 = vpop.permute.xlu0 %5317
        %v5319 = vsel %vm415, %v5316, %v5318
        %v5322 = vadd.f32 %v5307, %v5319
        %v5323 = vadd.f32 %v5308, %v5318
        %s5324 = sld [smem:[#allocation6 + $0x161]]
        %v5325 = vstv %s5324
        %v5326 = vmul.f32 %v1013, %v5325
        %v5327 = vmul.f32 %v1014, %v5325
        %5330 = vrot.lane.b32.xlu0 %v5326, 124
        %v5331 = vpop.permute.xlu0 %5330
        %5332 = vrot.lane.b32.xlu0 %v5327, 124
        %v5333 = vpop.permute.xlu0 %5332
        %v5334 = vsel %vm447, %v5331, %v5333
        %v5337 = vadd.f32 %v5322, %v5334
        %v5338 = vadd.f32 %v5323, %v5333
        %s5339 = sld [smem:[#allocation6 + $0x162]]
        %v5340 = vstv %s5339
        %v5341 = vmul.f32 %v1024, %v5340
        %v5342 = vmul.f32 %v1025, %v5340
        %v5343 = vadd.f32 %v5337, %v5341
        %v5344 = vadd.f32 %v5338, %v5342
        %s5345 = sld [smem:[#allocation6 + $0x163]]
        %v5346 = vstv %s5345
        %v5347 = vmul.f32 %v1024, %v5346
        %v5348 = vmul.f32 %v1025, %v5346
        %5351 = vrot.lane.b32.xlu0 %v5347, 126
        %v5352 = vpop.permute.xlu0 %5351
        %5353 = vrot.lane.b32.xlu0 %v5348, 126
        %v5354 = vpop.permute.xlu0 %5353
        %v5355 = vsel %vm415, %v5352, %v5354
        %v5358 = vadd.f32 %v5343, %v5355
        %v5359 = vadd.f32 %v5344, %v5354
        %s5360 = sld [smem:[#allocation6 + $0x164]]
        %v5361 = vstv %s5360
        %v5362 = vmul.f32 %v1024, %v5361
        %v5363 = vmul.f32 %v1025, %v5361
        %5366 = vrot.lane.b32.xlu0 %v5362, 124
        %v5367 = vpop.permute.xlu0 %5366
        %5368 = vrot.lane.b32.xlu0 %v5363, 124
        %v5369 = vpop.permute.xlu0 %5368
        %v5370 = vsel %vm447, %v5367, %v5369
        %v5373 = vadd.f32 %v5358, %v5370
        %v5374 = vadd.f32 %v5359, %v5369
        %s5375 = sld [smem:[#allocation6 + $0x165]]
        %v5376 = vstv %s5375
        %v5377 = vmul.f32 %v1035, %v5376
        %v5378 = vmul.f32 %v1036, %v5376
        %v5379 = vadd.f32 %v5373, %v5377
        %v5380 = vadd.f32 %v5374, %v5378
        %s5381 = sld [smem:[#allocation6 + $0x166]]
        %v5382 = vstv %s5381
        %v5383 = vmul.f32 %v1035, %v5382
        %v5384 = vmul.f32 %v1036, %v5382
        %5387 = vrot.lane.b32.xlu0 %v5383, 126
        %v5388 = vpop.permute.xlu0 %5387
        %5389 = vrot.lane.b32.xlu0 %v5384, 126
        %v5390 = vpop.permute.xlu0 %5389
        %v5391 = vsel %vm415, %v5388, %v5390
        %v5394 = vadd.f32 %v5379, %v5391
        %v5395 = vadd.f32 %v5380, %v5390
        %s5396 = sld [smem:[#allocation6 + $0x167]]
        %v5397 = vstv %s5396
        %v5398 = vmul.f32 %v1035, %v5397
        %v5399 = vmul.f32 %v1036, %v5397
        %5402 = vrot.lane.b32.xlu0 %v5398, 124
        %v5403 = vpop.permute.xlu0 %5402
        %5404 = vrot.lane.b32.xlu0 %v5399, 124
        %v5405 = vpop.permute.xlu0 %5404
        %v5406 = vsel %vm447, %v5403, %v5405
        %v5409 = vadd.f32 %v5394, %v5406
        %v5410 = vadd.f32 %v5395, %v5405
        %s5411 = sld [smem:[#allocation7 + $0xe]]
        %v5412 = vstv %s5411
        %v5413 = vadd.f32 %v5409, %v5412
        %v5414 = vadd.f32 %v5410, %v5412
        %v5415 = vmax.f32 %v5413, 0.0
        %v5416 = vmax.f32 %v5414, 0.0
        %s5417 = sld [smem:[#allocation6 + $0x168]]
        %v5418 = vstv %s5417
        %v5419 = vmul.f32 %v958, %v5418
        %v5420 = vmul.f32 %v959, %v5418
        %s5421 = sld [smem:[#allocation6 + $0x169]]
        %v5422 = vstv %s5421
        %v5423 = vmul.f32 %v958, %v5422
        %v5424 = vmul.f32 %v959, %v5422
        %5427 = vrot.lane.b32.xlu0 %v5423, 126
        %v5428 = vpop.permute.xlu0 %5427
        %5429 = vrot.lane.b32.xlu0 %v5424, 126
        %v5430 = vpop.permute.xlu0 %5429
        %v5431 = vsel %vm415, %v5428, %v5430
        %v5434 = vadd.f32 %v5419, %v5431
        %v5435 = vadd.f32 %v5420, %v5430
        %s5436 = sld [smem:[#allocation6 + $0x16a]]
        %v5437 = vstv %s5436
        %v5438 = vmul.f32 %v958, %v5437
        %v5439 = vmul.f32 %v959, %v5437
        %5442 = vrot.lane.b32.xlu0 %v5438, 124
        %v5443 = vpop.permute.xlu0 %5442
        %5444 = vrot.lane.b32.xlu0 %v5439, 124
        %v5445 = vpop.permute.xlu0 %5444
        %v5446 = vsel %vm447, %v5443, %v5445
        %v5449 = vadd.f32 %v5434, %v5446
        %v5450 = vadd.f32 %v5435, %v5445
        %s5451 = sld [smem:[#allocation6 + $0x16b]]
        %v5452 = vstv %s5451
        %v5453 = vmul.f32 %v969, %v5452
        %v5454 = vmul.f32 %v970, %v5452
        %v5455 = vadd.f32 %v5449, %v5453
        %v5456 = vadd.f32 %v5450, %v5454
        %s5457 = sld [smem:[#allocation6 + $0x16c]]
        %v5458 = vstv %s5457
        %v5459 = vmul.f32 %v969, %v5458
        %v5460 = vmul.f32 %v970, %v5458
        %5463 = vrot.lane.b32.xlu0 %v5459, 126
        %v5464 = vpop.permute.xlu0 %5463
        %5465 = vrot.lane.b32.xlu0 %v5460, 126
        %v5466 = vpop.permute.xlu0 %5465
        %v5467 = vsel %vm415, %v5464, %v5466
        %v5470 = vadd.f32 %v5455, %v5467
        %v5471 = vadd.f32 %v5456, %v5466
        %s5472 = sld [smem:[#allocation6 + $0x16d]]
        %v5473 = vstv %s5472
        %v5474 = vmul.f32 %v969, %v5473
        %v5475 = vmul.f32 %v970, %v5473
        %5478 = vrot.lane.b32.xlu0 %v5474, 124
        %v5479 = vpop.permute.xlu0 %5478
        %5480 = vrot.lane.b32.xlu0 %v5475, 124
        %v5481 = vpop.permute.xlu0 %5480
        %v5482 = vsel %vm447, %v5479, %v5481
        %v5485 = vadd.f32 %v5470, %v5482
        %v5486 = vadd.f32 %v5471, %v5481
        %s5487 = sld [smem:[#allocation6 + $0x16e]]
        %v5488 = vstv %s5487
        %v5489 = vmul.f32 %v980, %v5488
        %v5490 = vmul.f32 %v981, %v5488
        %v5491 = vadd.f32 %v5485, %v5489
        %v5492 = vadd.f32 %v5486, %v5490
        %s5493 = sld [smem:[#allocation6 + $0x16f]]
        %v5494 = vstv %s5493
        %v5495 = vmul.f32 %v980, %v5494
        %v5496 = vmul.f32 %v981, %v5494
        %5499 = vrot.lane.b32.xlu0 %v5495, 126
        %v5500 = vpop.permute.xlu0 %5499
        %5501 = vrot.lane.b32.xlu0 %v5496, 126
        %v5502 = vpop.permute.xlu0 %5501
        %v5503 = vsel %vm415, %v5500, %v5502
        %v5506 = vadd.f32 %v5491, %v5503
        %v5507 = vadd.f32 %v5492, %v5502
        %s5508 = sld [smem:[#allocation6 + $0x170]]
        %v5509 = vstv %s5508
        %v5510 = vmul.f32 %v980, %v5509
        %v5511 = vmul.f32 %v981, %v5509
        %5514 = vrot.lane.b32.xlu0 %v5510, 124
        %v5515 = vpop.permute.xlu0 %5514
        %5516 = vrot.lane.b32.xlu0 %v5511, 124
        %v5517 = vpop.permute.xlu0 %5516
        %v5518 = vsel %vm447, %v5515, %v5517
        %v5521 = vadd.f32 %v5506, %v5518
        %v5522 = vadd.f32 %v5507, %v5517
        %s5523 = sld [smem:[#allocation6 + $0x171]]
        %v5524 = vstv %s5523
        %v5525 = vmul.f32 %v991, %v5524
        %v5526 = vmul.f32 %v992, %v5524
        %v5527 = vadd.f32 %v5521, %v5525
        %v5528 = vadd.f32 %v5522, %v5526
        %s5529 = sld [smem:[#allocation6 + $0x172]]
        %v5530 = vstv %s5529
        %v5531 = vmul.f32 %v991, %v5530
        %v5532 = vmul.f32 %v992, %v5530
        %5535 = vrot.lane.b32.xlu0 %v5531, 126
        %v5536 = vpop.permute.xlu0 %5535
        %5537 = vrot.lane.b32.xlu0 %v5532, 126
        %v5538 = vpop.permute.xlu0 %5537
        %v5539 = vsel %vm415, %v5536, %v5538
        %v5542 = vadd.f32 %v5527, %v5539
        %v5543 = vadd.f32 %v5528, %v5538
        %s5544 = sld [smem:[#allocation6 + $0x173]]
        %v5545 = vstv %s5544
        %v5546 = vmul.f32 %v991, %v5545
        %v5547 = vmul.f32 %v992, %v5545
        %5550 = vrot.lane.b32.xlu0 %v5546, 124
        %v5551 = vpop.permute.xlu0 %5550
        %5552 = vrot.lane.b32.xlu0 %v5547, 124
        %v5553 = vpop.permute.xlu0 %5552
        %v5554 = vsel %vm447, %v5551, %v5553
        %v5557 = vadd.f32 %v5542, %v5554
        %v5558 = vadd.f32 %v5543, %v5553
        %s5559 = sld [smem:[#allocation6 + $0x174]]
        %v5560 = vstv %s5559
        %v5561 = vmul.f32 %v1002, %v5560
        %v5562 = vmul.f32 %v1003, %v5560
        %v5563 = vadd.f32 %v5557, %v5561
        %v5564 = vadd.f32 %v5558, %v5562
        %s5565 = sld [smem:[#allocation6 + $0x175]]
        %v5566 = vstv %s5565
        %v5567 = vmul.f32 %v1002, %v5566
        %v5568 = vmul.f32 %v1003, %v5566
        %5571 = vrot.lane.b32.xlu0 %v5567, 126
        %v5572 = vpop.permute.xlu0 %5571
        %5573 = vrot.lane.b32.xlu0 %v5568, 126
        %v5574 = vpop.permute.xlu0 %5573
        %v5575 = vsel %vm415, %v5572, %v5574
        %v5578 = vadd.f32 %v5563, %v5575
        %v5579 = vadd.f32 %v5564, %v5574
        %s5580 = sld [smem:[#allocation6 + $0x176]]
        %v5581 = vstv %s5580
        %v5582 = vmul.f32 %v1002, %v5581
        %v5583 = vmul.f32 %v1003, %v5581
        %5586 = vrot.lane.b32.xlu0 %v5582, 124
        %v5587 = vpop.permute.xlu0 %5586
        %5588 = vrot.lane.b32.xlu0 %v5583, 124
        %v5589 = vpop.permute.xlu0 %5588
        %v5590 = vsel %vm447, %v5587, %v5589
        %v5593 = vadd.f32 %v5578, %v5590
        %v5594 = vadd.f32 %v5579, %v5589
        %s5595 = sld [smem:[#allocation6 + $0x177]]
        %v5596 = vstv %s5595
        %v5597 = vmul.f32 %v1013, %v5596
        %v5598 = vmul.f32 %v1014, %v5596
        %v5599 = vadd.f32 %v5593, %v5597
        %v5600 = vadd.f32 %v5594, %v5598
        %s5601 = sld [smem:[#allocation6 + $0x178]]
        %v5602 = vstv %s5601
        %v5603 = vmul.f32 %v1013, %v5602
        %v5604 = vmul.f32 %v1014, %v5602
        %5607 = vrot.lane.b32.xlu0 %v5603, 126
        %v5608 = vpop.permute.xlu0 %5607
        %5609 = vrot.lane.b32.xlu0 %v5604, 126
        %v5610 = vpop.permute.xlu0 %5609
        %v5611 = vsel %vm415, %v5608, %v5610
        %v5614 = vadd.f32 %v5599, %v5611
        %v5615 = vadd.f32 %v5600, %v5610
        %s5616 = sld [smem:[#allocation6 + $0x179]]
        %v5617 = vstv %s5616
        %v5618 = vmul.f32 %v1013, %v5617
        %v5619 = vmul.f32 %v1014, %v5617
        %5622 = vrot.lane.b32.xlu0 %v5618, 124
        %v5623 = vpop.permute.xlu0 %5622
        %5624 = vrot.lane.b32.xlu0 %v5619, 124
        %v5625 = vpop.permute.xlu0 %5624
        %v5626 = vsel %vm447, %v5623, %v5625
        %v5629 = vadd.f32 %v5614, %v5626
        %v5630 = vadd.f32 %v5615, %v5625
        %s5631 = sld [smem:[#allocation6 + $0x17a]]
        %v5632 = vstv %s5631
        %v5633 = vmul.f32 %v1024, %v5632
        %v5634 = vmul.f32 %v1025, %v5632
        %v5635 = vadd.f32 %v5629, %v5633
        %v5636 = vadd.f32 %v5630, %v5634
        %s5637 = sld [smem:[#allocation6 + $0x17b]]
        %v5638 = vstv %s5637
        %v5639 = vmul.f32 %v1024, %v5638
        %v5640 = vmul.f32 %v1025, %v5638
        %5643 = vrot.lane.b32.xlu0 %v5639, 126
        %v5644 = vpop.permute.xlu0 %5643
        %5645 = vrot.lane.b32.xlu0 %v5640, 126
        %v5646 = vpop.permute.xlu0 %5645
        %v5647 = vsel %vm415, %v5644, %v5646
        %v5650 = vadd.f32 %v5635, %v5647
        %v5651 = vadd.f32 %v5636, %v5646
        %s5652 = sld [smem:[#allocation6 + $0x17c]]
        %v5653 = vstv %s5652
        %v5654 = vmul.f32 %v1024, %v5653
        %v5655 = vmul.f32 %v1025, %v5653
        %5658 = vrot.lane.b32.xlu0 %v5654, 124
        %v5659 = vpop.permute.xlu0 %5658
        %5660 = vrot.lane.b32.xlu0 %v5655, 124
        %v5661 = vpop.permute.xlu0 %5660
        %v5662 = vsel %vm447, %v5659, %v5661
        %v5665 = vadd.f32 %v5650, %v5662
        %v5666 = vadd.f32 %v5651, %v5661
        %s5667 = sld [smem:[#allocation6 + $0x17d]]
        %v5668 = vstv %s5667
        %v5669 = vmul.f32 %v1035, %v5668
        %v5670 = vmul.f32 %v1036, %v5668
        %v5671 = vadd.f32 %v5665, %v5669
        %v5672 = vadd.f32 %v5666, %v5670
        %s5673 = sld [smem:[#allocation6 + $0x17e]]
        %v5674 = vstv %s5673
        %v5675 = vmul.f32 %v1035, %v5674
        %v5676 = vmul.f32 %v1036, %v5674
        %5679 = vrot.lane.b32.xlu0 %v5675, 126
        %v5680 = vpop.permute.xlu0 %5679
        %5681 = vrot.lane.b32.xlu0 %v5676, 126
        %v5682 = vpop.permute.xlu0 %5681
        %v5683 = vsel %vm415, %v5680, %v5682
        %v5686 = vadd.f32 %v5671, %v5683
        %v5687 = vadd.f32 %v5672, %v5682
        %s5688 = sld [smem:[#allocation6 + $0x17f]]
        %v5689 = vstv %s5688
        %v5690 = vmul.f32 %v1035, %v5689
        %v5691 = vmul.f32 %v1036, %v5689
        %5694 = vrot.lane.b32.xlu0 %v5690, 124
        %v5695 = vpop.permute.xlu0 %5694
        %5696 = vrot.lane.b32.xlu0 %v5691, 124
        %v5697 = vpop.permute.xlu0 %5696
        %v5698 = vsel %vm447, %v5695, %v5697
        %v5701 = vadd.f32 %v5686, %v5698
        %v5702 = vadd.f32 %v5687, %v5697
        %s5703 = sld [smem:[#allocation7 + $0xf]]
        %v5704 = vstv %s5703
        %v5705 = vadd.f32 %v5701, %v5704
        %v5706 = vadd.f32 %v5702, %v5704
        %v5707 = vmax.f32 %v5705, 0.0
        %v5708 = vmax.f32 %v5706, 0.0
        %5711 = vrot.lane.b32.xlu0 %v1327, 126
        %v5712 = vpop.permute.xlu0 %5711
        %5713 = vrot.lane.b32.xlu0 %v1328, 126
        %v5714 = vpop.permute.xlu0 %5713
        %v5715 = vsel %vm415, %v5712, %v5714
        %v5718 = vmax.f32 %v1327, %v5715
        %v5719 = vmax.f32 %v1328, %v5714
        %5722 = vrot.lane.b32.xlu0 %v1619, 126
        %v5723 = vpop.permute.xlu0 %5722
        %5724 = vrot.lane.b32.xlu0 %v1620, 126
        %v5725 = vpop.permute.xlu0 %5724
        %v5726 = vsel %vm415, %v5723, %v5725
        %v5729 = vmax.f32 %v1619, %v5726
        %v5730 = vmax.f32 %v1620, %v5725
        %5733 = vrot.lane.b32.xlu0 %v1911, 126
        %v5734 = vpop.permute.xlu0 %5733
        %5735 = vrot.lane.b32.xlu0 %v1912, 126
        %v5736 = vpop.permute.xlu0 %5735
        %v5737 = vsel %vm415, %v5734, %v5736
        %v5740 = vmax.f32 %v1911, %v5737
        %v5741 = vmax.f32 %v1912, %v5736
        %5744 = vrot.lane.b32.xlu0 %v2203, 126
        %v5745 = vpop.permute.xlu0 %5744
        %5746 = vrot.lane.b32.xlu0 %v2204, 126
        %v5747 = vpop.permute.xlu0 %5746
        %v5748 = vsel %vm415, %v5745, %v5747
        %v5751 = vmax.f32 %v2203, %v5748
        %v5752 = vmax.f32 %v2204, %v5747
        %5755 = vrot.lane.b32.xlu0 %v2495, 126
        %v5756 = vpop.permute.xlu0 %5755
        %5757 = vrot.lane.b32.xlu0 %v2496, 126
        %v5758 = vpop.permute.xlu0 %5757
        %v5759 = vsel %vm415, %v5756, %v5758
        %v5762 = vmax.f32 %v2495, %v5759
        %v5763 = vmax.f32 %v2496, %v5758
        %5766 = vrot.lane.b32.xlu0 %v2787, 126
        %v5767 = vpop.permute.xlu0 %5766
        %5768 = vrot.lane.b32.xlu0 %v2788, 126
        %v5769 = vpop.permute.xlu0 %5768
        %v5770 = vsel %vm415, %v5767, %v5769
        %v5773 = vmax.f32 %v2787, %v5770
        %v5774 = vmax.f32 %v2788, %v5769
        %5777 = vrot.lane.b32.xlu0 %v3079, 126
        %v5778 = vpop.permute.xlu0 %5777
        %5779 = vrot.lane.b32.xlu0 %v3080, 126
        %v5780 = vpop.permute.xlu0 %5779
        %v5781 = vsel %vm415, %v5778, %v5780
        %v5784 = vmax.f32 %v3079, %v5781
        %v5785 = vmax.f32 %v3080, %v5780
        %5788 = vrot.lane.b32.xlu0 %v3371, 126
        %v5789 = vpop.permute.xlu0 %5788
        %5790 = vrot.lane.b32.xlu0 %v3372, 126
        %v5791 = vpop.permute.xlu0 %5790
        %v5792 = vsel %vm415, %v5789, %v5791
        %v5795 = vmax.f32 %v3371, %v5792
        %v5796 = vmax.f32 %v3372, %v5791
        %5799 = vrot.lane.b32.xlu0 %v3663, 126
        %v5800 = vpop.permute.xlu0 %5799
        %5801 = vrot.lane.b32.xlu0 %v3664, 126
        %v5802 = vpop.permute.xlu0 %5801
        %v5803 = vsel %vm415, %v5800, %v5802
        %v5806 = vmax.f32 %v3663, %v5803
        %v5807 = vmax.f32 %v3664, %v5802
        %5810 = vrot.lane.b32.xlu0 %v3955, 126
        %v5811 = vpop.permute.xlu0 %5810
        %5812 = vrot.lane.b32.xlu0 %v3956, 126
        %v5813 = vpop.permute.xlu0 %5812
        %v5814 = vsel %vm415, %v5811, %v5813
        %v5817 = vmax.f32 %v3955, %v5814
        %v5818 = vmax.f32 %v3956, %v5813
        %5821 = vrot.lane.b32.xlu0 %v4247, 126
        %v5822 = vpop.permute.xlu0 %5821
        %5823 = vrot.lane.b32.xlu0 %v4248, 126
        %v5824 = vpop.permute.xlu0 %5823
        %v5825 = vsel %vm415, %v5822, %v5824
        %v5828 = vmax.f32 %v4247, %v5825
        %v5829 = vmax.f32 %v4248, %v5824
        %5832 = vrot.lane.b32.xlu0 %v4539, 126
        %v5833 = vpop.permute.xlu0 %5832
        %5834 = vrot.lane.b32.xlu0 %v4540, 126
        %v5835 = vpop.permute.xlu0 %5834
        %v5836 = vsel %vm415, %v5833, %v5835
        %v5839 = vmax.f32 %v4539, %v5836
        %v5840 = vmax.f32 %v4540, %v5835
        %5843 = vrot.lane.b32.xlu0 %v4831, 126
        %v5844 = vpop.permute.xlu0 %5843
        %5845 = vrot.lane.b32.xlu0 %v4832, 126
        %v5846 = vpop.permute.xlu0 %5845
        %v5847 = vsel %vm415, %v5844, %v5846
        %v5850 = vmax.f32 %v4831, %v5847
        %v5851 = vmax.f32 %v4832, %v5846
        %5854 = vrot.lane.b32.xlu0 %v5123, 126
        %v5855 = vpop.permute.xlu0 %5854
        %5856 = vrot.lane.b32.xlu0 %v5124, 126
        %v5857 = vpop.permute.xlu0 %5856
        %v5858 = vsel %vm415, %v5855, %v5857
        %v5861 = vmax.f32 %v5123, %v5858
        %v5862 = vmax.f32 %v5124, %v5857
        %5865 = vrot.lane.b32.xlu0 %v5415, 126
        %v5866 = vpop.permute.xlu0 %5865
        %5867 = vrot.lane.b32.xlu0 %v5416, 126
        %v5868 = vpop.permute.xlu0 %5867
        %v5869 = vsel %vm415, %v5866, %v5868
        %v5872 = vmax.f32 %v5415, %v5869
        %v5873 = vmax.f32 %v5416, %v5868
        %5876 = vrot.lane.b32.xlu0 %v5707, 126
        %v5877 = vpop.permute.xlu0 %5876
        %5878 = vrot.lane.b32.xlu0 %v5708, 126
        %v5879 = vpop.permute.xlu0 %5878
        %v5880 = vsel %vm415, %v5877, %v5879
        %v5883 = vmax.f32 %v5707, %v5880
        %v5884 = vmax.f32 %v5708, %v5879
        %5887 = vrot.lane.b32.xlu0 %v5729, 48
        %v5888 = vpop.permute.xlu0 %5887
        %5889 = vrot.lane.b32.xlu0 %v5730, 48
        %v5890 = vpop.permute.xlu0 %5889
        %vm5891 = vcmask 392192
        %v5892 = vsel %vm5891, %v5888, %v5890
        %5897 = vrot.lane.b32.xlu0 %v5740, 96
        %v5898 = vpop.permute.xlu0 %5897
        %5899 = vrot.lane.b32.xlu0 %v5741, 96
        %v5900 = vpop.permute.xlu0 %5899
        %vm5901 = vcmask 785408
        %v5902 = vsel %vm5901, %v5898, %v5900
        %5908 = vrot.lane.b32.xlu0 %v5751, 16
        %v5909 = vpop.permute.xlu0 %5908
        %5910 = vrot.lane.b32.xlu0 %v5752, 16
        %v5911 = vpop.permute.xlu0 %5910
        %vm5912 = vcmask 130048
        %v5913 = vsel %vm5912, %v5909, %v5911
        %5918 = vrot.lane.b32.xlu0 %v5762, 64
        %v5919 = vpop.permute.xlu0 %5918
        %5920 = vrot.lane.b32.xlu0 %v5763, 64
        %v5921 = vpop.permute.xlu0 %5920
        %vm5922 = vcmask 523264
        %v5923 = vsel %vm5922, %v5919, %v5921
        %5928 = vrot.lane.b32.xlu0 %v5773, 112
        %v5929 = vpop.permute.xlu0 %5928
        %5930 = vrot.lane.b32.xlu0 %v5774, 112
        %v5931 = vpop.permute.xlu0 %5930
        %vm5932 = vcmask 916480
        %v5933 = vsel %vm5932, %v5929, %v5931
        %5939 = vrot.lane.b32.xlu0 %v5784, 32
        %v5940 = vpop.permute.xlu0 %5939
        %5941 = vrot.lane.b32.xlu0 %v5785, 32
        %v5942 = vpop.permute.xlu0 %5941
        %vm5943 = vcmask 261120
        %v5944 = vsel %vm5943, %v5940, %v5942
        %5949 = vrot.lane.b32.xlu0 %v5795, 80
        %v5950 = vpop.permute.xlu0 %5949
        %5951 = vrot.lane.b32.xlu0 %v5796, 80
        %v5952 = vpop.permute.xlu0 %5951
        %vm5953 = vcmask 654336
        %v5954 = vsel %vm5953, %v5950, %v5952
        %5959 = vrot.lane.b32.xlu0 %v5817, 48
        %v5960 = vpop.permute.xlu0 %5959
        %5961 = vrot.lane.b32.xlu0 %v5818, 48
        %v5962 = vpop.permute.xlu0 %5961
        %v5963 = vsel %vm5891, %v5960, %v5962
        %5968 = vrot.lane.b32.xlu0 %v5828, 96
        %v5969 = vpop.permute.xlu0 %5968
        %5970 = vrot.lane.b32.xlu0 %v5829, 96
        %v5971 = vpop.permute.xlu0 %5970
        %v5972 = vsel %vm5901, %v5969, %v5971
        %5978 = vrot.lane.b32.xlu0 %v5839, 16
        %v5979 = vpop.permute.xlu0 %5978
        %5980 = vrot.lane.b32.xlu0 %v5840, 16
        %v5981 = vpop.permute.xlu0 %5980
        %v5982 = vsel %vm5912, %v5979, %v5981
        %5987 = vrot.lane.b32.xlu0 %v5850, 64
        %v5988 = vpop.permute.xlu0 %5987
        %5989 = vrot.lane.b32.xlu0 %v5851, 64
        %v5990 = vpop.permute.xlu0 %5989
        %v5991 = vsel %vm5922, %v5988, %v5990
        %5996 = vrot.lane.b32.xlu0 %v5861, 112
        %v5997 = vpop.permute.xlu0 %5996
        %5998 = vrot.lane.b32.xlu0 %v5862, 112
        %v5999 = vpop.permute.xlu0 %5998
        %v6000 = vsel %vm5932, %v5997, %v5999
        %6006 = vrot.lane.b32.xlu0 %v5872, 32
        %v6007 = vpop.permute.xlu0 %6006
        %6008 = vrot.lane.b32.xlu0 %v5873, 32
        %v6009 = vpop.permute.xlu0 %6008
        %v6010 = vsel %vm5943, %v6007, %v6009
        %6015 = vrot.lane.b32.xlu0 %v5883, 80
        %v6016 = vpop.permute.xlu0 %6015
        %6017 = vrot.lane.b32.xlu0 %v5884, 80
        %v6018 = vpop.permute.xlu0 %6017
        %v6019 = vsel %vm5953, %v6016, %v6018
        %v6022 = vsel %vm5891, %v5719, %v5888
        %v6023 = vsel %vm5901, %v5892, %v5898
        %v6024 = vsel %vm5912, %v5900, %v5909
        %v6025 = vsel %vm5922, %v5913, %v5919
        %v6026 = vsel %vm5932, %v5923, %v5929
        %v6027 = vsel %vm5943, %v5931, %v5940
        %v6028 = vsel %vm5953, %v5944, %v5950
        %v6029 = vsel %vm5891, %v5807, %v5960
        %v6030 = vsel %vm5901, %v5963, %v5969
        %v6031 = vsel %vm5912, %v5971, %v5979
        %v6032 = vsel %vm5922, %v5982, %v5988
        %v6033 = vsel %vm5932, %v5991, %v5997
        %v6034 = vsel %vm5943, %v5999, %v6007
        %v6035 = vsel %vm5953, %v6010, %v6016
        %v6036 = vld [vmem:[%s5] sm:$0xff]
        %v6037 = vld [vmem:[%s5 + $0x8] sm:$0xff]
        %v6038 = vld [vmem:[%s5 + $0x10] sm:$0xff]
        %v6039 = vld [vmem:[%s5 + $0x18] sm:$0xff]
        %v6040 = vld [vmem:[%s5 + $0x20] sm:$0xff]
        %v6041 = vld [vmem:[%s5 + $0x28] sm:$0xff]
        %v6042 = vld [vmem:[%s5 + $0x30] sm:$0xff]
        %v6043 = vld [vmem:[%s5 + $0x38] sm:$0xff]
        %v6044 = vld [vmem:[%s5 + $0x40] sm:$0xff]
        %v6045 = vld [vmem:[%s5 + $0x48] sm:$0xff]
        %v6046 = vld [vmem:[%s5 + $0x50] sm:$0xff]
        %v6047 = vld [vmem:[%s5 + $0x58] sm:$0xff]
        %v6048 = vld [vmem:[%s5 + $0x60] sm:$0xff]
        %v6049 = vld [vmem:[%s5 + $0x68] sm:$0xff]
        %v6050 = vld [vmem:[%s5 + $0x70] sm:$0xff]
        %v6051 = vld [vmem:[%s5 + $0x78] sm:$0xff]
        %v6052 = vld [vmem:[%s5 + $0x80] sm:$0xff]
        %v6053 = vld [vmem:[%s5 + $0x88] sm:$0xff]
        %v6054 = vld [vmem:[%s5 + $0x90] sm:$0xff]
        %v6055 = vld [vmem:[%s5 + $0x98] sm:$0xff]
        %v6056 = vld [vmem:[%s5 + $0xa0] sm:$0xff]
        %v6057 = vld [vmem:[%s5 + $0xa8] sm:$0xff]
        %v6058 = vld [vmem:[%s5 + $0xb0] sm:$0xff]
        %v6059 = vld [vmem:[%s5 + $0xb8] sm:$0xff]
        %v6060 = vld [vmem:[%s5 + $0xc0] sm:$0xff]
        %v6061 = vld [vmem:[%s5 + $0xc8] sm:$0xff]
        %v6062 = vld [vmem:[%s5 + $0xd0] sm:$0xff]
        %v6063 = vld [vmem:[%s5 + $0xd8] sm:$0xff]
        %v6064 = vld [vmem:[%s5 + $0xe0] sm:$0xff]
        %v6065 = vld [vmem:[%s5 + $0xe8] sm:$0xff]
        %v6066 = vld [vmem:[%s5 + $0xf0] sm:$0xff]
        %v6067 = vld [vmem:[%s5 + $0xf8] sm:$0xff]
        %v6068 = vld [vmem:[%s5 + $0x100] sm:$0xff]
        %v6069 = vld [vmem:[%s5 + $0x108] sm:$0xff]
        %v6070 = vld [vmem:[%s5 + $0x110] sm:$0xff]
        %v6071 = vld [vmem:[%s5 + $0x118] sm:$0xff]
        %v6072 = vld [vmem:[%s5 + $0x120] sm:$0xff]
        %v6073 = vld [vmem:[%s5 + $0x128] sm:$0xff]
        %v6074 = vld [vmem:[%s5 + $0x130] sm:$0xff]
        %v6075 = vld [vmem:[%s5 + $0x138] sm:$0xff]
        %v6076 = vld [vmem:[%s5 + $0x140] sm:$0xff]
        %v6077 = vld [vmem:[%s5 + $0x148] sm:$0xff]
        %v6078 = vld [vmem:[%s5 + $0x150] sm:$0xff]
        %v6079 = vld [vmem:[%s5 + $0x158] sm:$0xff]
        %v6080 = vld [vmem:[%s5 + $0x160] sm:$0xff]
        %v6081 = vld [vmem:[%s5 + $0x168] sm:$0xff]
        %v6082 = vld [vmem:[%s5 + $0x170] sm:$0xff]
        %v6083 = vld [vmem:[%s5 + $0x178] sm:$0xff]
        %v6084 = vld [vmem:[%s5 + $0x180] sm:$0xff]
        %v6085 = vld [vmem:[%s5 + $0x188] sm:$0xff]
        %v6086 = vld [vmem:[%s5 + $0x190] sm:$0xff]
        %v6087 = vld [vmem:[%s5 + $0x198] sm:$0xff]
        %v6088 = vld [vmem:[%s5 + $0x1a0] sm:$0xff]
        %v6089 = vld [vmem:[%s5 + $0x1a8] sm:$0xff]
        %v6090 = vld [vmem:[%s5 + $0x1b0] sm:$0xff]
        %v6091 = vld [vmem:[%s5 + $0x1b8] sm:$0xff]
        %v6092 = vld [vmem:[%s5 + $0x1c0] sm:$0xff]
        %v6093 = vld [vmem:[%s5 + $0x1c8] sm:$0xff]
        %v6094 = vld [vmem:[%s5 + $0x1d0] sm:$0xff]
        %v6095 = vld [vmem:[%s5 + $0x1d8] sm:$0xff]
        %v6096 = vld [vmem:[%s5 + $0x1e0] sm:$0xff]
        %v6097 = vld [vmem:[%s5 + $0x1e8] sm:$0xff]
        %v6098 = vld [vmem:[%s5 + $0x1f0] sm:$0xff]
        %v6099 = vld [vmem:[%s5 + $0x1f8] sm:$0xff]
        %v6100 = vld [vmem:[%s5 + $0x200] sm:$0xff]
        %v6101 = vld [vmem:[%s5 + $0x208] sm:$0xff]
        %v6102 = vld [vmem:[%s5 + $0x210] sm:$0xff]
        %v6103 = vld [vmem:[%s5 + $0x218] sm:$0xff]
        %v6104 = vld [vmem:[%s5 + $0x220] sm:$0xff]
        %v6105 = vld [vmem:[%s5 + $0x228] sm:$0xff]
        %v6106 = vld [vmem:[%s5 + $0x230] sm:$0xff]
        %v6107 = vld [vmem:[%s5 + $0x238] sm:$0xff]
        %v6108 = vld [vmem:[%s5 + $0x240] sm:$0xff]
        %v6109 = vld [vmem:[%s5 + $0x248] sm:$0xff]
        %v6110 = vld [vmem:[%s5 + $0x250] sm:$0xff]
        %v6111 = vld [vmem:[%s5 + $0x258] sm:$0xff]
        %v6112 = vld [vmem:[%s5 + $0x260] sm:$0xff]
        %v6113 = vld [vmem:[%s5 + $0x268] sm:$0xff]
        %v6114 = vld [vmem:[%s5 + $0x270] sm:$0xff]
        %v6115 = vld [vmem:[%s5 + $0x278] sm:$0xff]
        %v6116 = vld [vmem:[%s5 + $0x280] sm:$0xff]
        %v6117 = vld [vmem:[%s5 + $0x288] sm:$0xff]
        %v6118 = vld [vmem:[%s5 + $0x290] sm:$0xff]
        %v6119 = vld [vmem:[%s5 + $0x298] sm:$0xff]
        %v6120 = vld [vmem:[%s5 + $0x2a0] sm:$0xff]
        %v6121 = vld [vmem:[%s5 + $0x2a8] sm:$0xff]
        %v6122 = vld [vmem:[%s5 + $0x2b0] sm:$0xff]
        %v6123 = vld [vmem:[%s5 + $0x2b8] sm:$0xff]
        %v6124 = vld [vmem:[%s5 + $0x2c0] sm:$0xff]
        %v6125 = vld [vmem:[%s5 + $0x2c8] sm:$0xff]
        %v6126 = vld [vmem:[%s5 + $0x2d0] sm:$0xff]
        %v6127 = vld [vmem:[%s5 + $0x2d8] sm:$0xff]
        %v6128 = vld [vmem:[%s5 + $0x2e0] sm:$0xff]
        %v6129 = vld [vmem:[%s5 + $0x2e8] sm:$0xff]
        %v6130 = vld [vmem:[%s5 + $0x2f0] sm:$0xff]
        %v6131 = vld [vmem:[%s5 + $0x2f8] sm:$0xff]
        %v6132 = vld [vmem:[%s5 + $0x300] sm:$0xff]
        %v6133 = vld [vmem:[%s5 + $0x308] sm:$0xff]
        %v6134 = vld [vmem:[%s5 + $0x310] sm:$0xff]
        %v6135 = vld [vmem:[%s5 + $0x318] sm:$0xff]
        %v6136 = vld [vmem:[%s5 + $0x320] sm:$0xff]
        %v6137 = vld [vmem:[%s5 + $0x328] sm:$0xff]
        %v6138 = vld [vmem:[%s5 + $0x330] sm:$0xff]
        %v6139 = vld [vmem:[%s5 + $0x338] sm:$0xff]
        %v6140 = vld [vmem:[%s5 + $0x340] sm:$0xff]
        %v6141 = vld [vmem:[%s5 + $0x348] sm:$0xff]
        %v6142 = vld [vmem:[%s5 + $0x350] sm:$0xff]
        %v6143 = vld [vmem:[%s5 + $0x358] sm:$0xff]
        %v6144 = vld [vmem:[%s5 + $0x360] sm:$0xff]
        %v6145 = vld [vmem:[%s5 + $0x368] sm:$0xff]
        %v6146 = vld [vmem:[%s5 + $0x370] sm:$0xff]
        %v6147 = vld [vmem:[%s5 + $0x378] sm:$0xff]
        %v6148 = vld [vmem:[%s5 + $0x380] sm:$0xff]
        %v6149 = vld [vmem:[%s5 + $0x388] sm:$0xff]
        %v6150 = vld [vmem:[%s5 + $0x390] sm:$0xff]
        %v6151 = vld [vmem:[%s5 + $0x398] sm:$0xff]
        %v6152 = vld [vmem:[%s5 + $0x3a0] sm:$0xff]
        %v6153 = vld [vmem:[%s5 + $0x3a8] sm:$0xff]
        %v6154 = vld [vmem:[%s5 + $0x3b0] sm:$0xff]
        %v6155 = vld [vmem:[%s5 + $0x3b8] sm:$0xff]
        %v6156 = vld [vmem:[%s5 + $0x3c0] sm:$0xff]
        %v6157 = vld [vmem:[%s5 + $0x3c8] sm:$0xff]
        %v6158 = vld [vmem:[%s5 + $0x3d0] sm:$0xff]
        %v6159 = vld [vmem:[%s5 + $0x3d8] sm:$0xff]
        %v6160 = vld [vmem:[%s5 + $0x3e0] sm:$0xff]
        %v6161 = vld [vmem:[%s5 + $0x3e8] sm:$0xff]
        %v6162 = vld [vmem:[%s5 + $0x3f0] sm:$0xff]
        %v6163 = vld [vmem:[%s5 + $0x3f8] sm:$0xff]
        %v6164 = vld [vmem:[%s5 + $0x400] sm:$0xff]
        %v6165 = vld [vmem:[%s5 + $0x408] sm:$0xff]
        %v6166 = vld [vmem:[%s5 + $0x410] sm:$0xff]
        %v6167 = vld [vmem:[%s5 + $0x418] sm:$0xff]
        %v6168 = vld [vmem:[%s5 + $0x420] sm:$0xff]
        %v6169 = vld [vmem:[%s5 + $0x428] sm:$0xff]
        %v6170 = vld [vmem:[%s5 + $0x430] sm:$0xff]
        %v6171 = vld [vmem:[%s5 + $0x438] sm:$0xff]
        %v6172 = vld [vmem:[%s5 + $0x440] sm:$0xff]
        %v6173 = vld [vmem:[%s5 + $0x448] sm:$0xff]
        %v6174 = vld [vmem:[%s5 + $0x450] sm:$0xff]
        %v6175 = vld [vmem:[%s5 + $0x458] sm:$0xff]
        %v6176 = vld [vmem:[%s5 + $0x460] sm:$0xff]
        %v6177 = vld [vmem:[%s5 + $0x468] sm:$0xff]
        %v6178 = vld [vmem:[%s5 + $0x470] sm:$0xff]
        %v6179 = vld [vmem:[%s5 + $0x478] sm:$0xff]
        %v6180 = vld [vmem:[%s5 + $0x480] sm:$0xff]
        %v6181 = vld [vmem:[%s5 + $0x488] sm:$0xff]
        %v6182 = vld [vmem:[%s5 + $0x490] sm:$0xff]
        %v6183 = vld [vmem:[%s5 + $0x498] sm:$0xff]
        %v6184 = vld [vmem:[%s5 + $0x4a0] sm:$0xff]
        %v6185 = vld [vmem:[%s5 + $0x4a8] sm:$0xff]
        %v6186 = vld [vmem:[%s5 + $0x4b0] sm:$0xff]
        %v6187 = vld [vmem:[%s5 + $0x4b8] sm:$0xff]
        %v6188 = vld [vmem:[%s5 + $0x4c0] sm:$0xff]
        %v6189 = vld [vmem:[%s5 + $0x4c8] sm:$0xff]
        %v6190 = vld [vmem:[%s5 + $0x4d0] sm:$0xff]
        %v6191 = vld [vmem:[%s5 + $0x4d8] sm:$0xff]
        %v6192 = vld [vmem:[%s5 + $0x4e0] sm:$0xff]
        %v6193 = vld [vmem:[%s5 + $0x4e8] sm:$0xff]
        %v6194 = vld [vmem:[%s5 + $0x4f0] sm:$0xff]
        %v6195 = vld [vmem:[%s5 + $0x4f8] sm:$0xff]
        %v6196 = vld [vmem:[%s5 + $0x500] sm:$0xff]
        %v6197 = vld [vmem:[%s5 + $0x508] sm:$0xff]
        %v6198 = vld [vmem:[%s5 + $0x510] sm:$0xff]
        %v6199 = vld [vmem:[%s5 + $0x518] sm:$0xff]
        %v6200 = vld [vmem:[%s5 + $0x520] sm:$0xff]
        %v6201 = vld [vmem:[%s5 + $0x528] sm:$0xff]
        %v6202 = vld [vmem:[%s5 + $0x530] sm:$0xff]
        %v6203 = vld [vmem:[%s5 + $0x538] sm:$0xff]
        %v6204 = vld [vmem:[%s5 + $0x540] sm:$0xff]
        %v6205 = vld [vmem:[%s5 + $0x548] sm:$0xff]
        %v6206 = vld [vmem:[%s5 + $0x550] sm:$0xff]
        %v6207 = vld [vmem:[%s5 + $0x558] sm:$0xff]
        %v6208 = vld [vmem:[%s5 + $0x560] sm:$0xff]
        %v6209 = vld [vmem:[%s5 + $0x568] sm:$0xff]
        %v6210 = vld [vmem:[%s5 + $0x570] sm:$0xff]
        %v6211 = vld [vmem:[%s5 + $0x578] sm:$0xff]
        %v6212 = vld [vmem:[%s5 + $0x580] sm:$0xff]
        %v6213 = vld [vmem:[%s5 + $0x588] sm:$0xff]
        %v6214 = vld [vmem:[%s5 + $0x590] sm:$0xff]
        %v6215 = vld [vmem:[%s5 + $0x598] sm:$0xff]
        %v6216 = vld [vmem:[%s5 + $0x5a0] sm:$0xff]
        %v6217 = vld [vmem:[%s5 + $0x5a8] sm:$0xff]
        %v6218 = vld [vmem:[%s5 + $0x5b0] sm:$0xff]
        %v6219 = vld [vmem:[%s5 + $0x5b8] sm:$0xff]
        %v6220 = vld [vmem:[%s5 + $0x5c0] sm:$0xff]
        %v6221 = vld [vmem:[%s5 + $0x5c8] sm:$0xff]
        %v6222 = vld [vmem:[%s5 + $0x5d0] sm:$0xff]
        %v6223 = vld [vmem:[%s5 + $0x5d8] sm:$0xff]
        %v6224 = vld [vmem:[%s5 + $0x5e0] sm:$0xff]
        %v6225 = vld [vmem:[%s5 + $0x5e8] sm:$0xff]
        %v6226 = vld [vmem:[%s5 + $0x5f0] sm:$0xff]
        %v6227 = vld [vmem:[%s5 + $0x5f8] sm:$0xff]
        %v6228 = vld [vmem:[%s5 + $0x600] sm:$0xff]
        %v6229 = vld [vmem:[%s5 + $0x608] sm:$0xff]
        %v6230 = vld [vmem:[%s5 + $0x610] sm:$0xff]
        %v6231 = vld [vmem:[%s5 + $0x618] sm:$0xff]
        %v6232 = vld [vmem:[%s5 + $0x620] sm:$0xff]
        %v6233 = vld [vmem:[%s5 + $0x628] sm:$0xff]
        %v6234 = vld [vmem:[%s5 + $0x630] sm:$0xff]
        %v6235 = vld [vmem:[%s5 + $0x638] sm:$0xff]
        %v6236 = vld [vmem:[%s5 + $0x640] sm:$0xff]
        %v6237 = vld [vmem:[%s5 + $0x648] sm:$0xff]
        %v6238 = vld [vmem:[%s5 + $0x650] sm:$0xff]
        %v6239 = vld [vmem:[%s5 + $0x658] sm:$0xff]
        %v6240 = vld [vmem:[%s5 + $0x660] sm:$0xff]
        %v6241 = vld [vmem:[%s5 + $0x668] sm:$0xff]
        %v6242 = vld [vmem:[%s5 + $0x670] sm:$0xff]
        %v6243 = vld [vmem:[%s5 + $0x678] sm:$0xff]
        %v6244 = vld [vmem:[%s5 + $0x680] sm:$0xff]
        %v6245 = vld [vmem:[%s5 + $0x688] sm:$0xff]
        %v6246 = vld [vmem:[%s5 + $0x690] sm:$0xff]
        %v6247 = vld [vmem:[%s5 + $0x698] sm:$0xff]
        %v6248 = vld [vmem:[%s5 + $0x6a0] sm:$0xff]
        %v6249 = vld [vmem:[%s5 + $0x6a8] sm:$0xff]
        %v6250 = vld [vmem:[%s5 + $0x6b0] sm:$0xff]
        %v6251 = vld [vmem:[%s5 + $0x6b8] sm:$0xff]
        %v6252 = vld [vmem:[%s5 + $0x6c0] sm:$0xff]
        %v6253 = vld [vmem:[%s5 + $0x6c8] sm:$0xff]
        %v6254 = vld [vmem:[%s5 + $0x6d0] sm:$0xff]
        %v6255 = vld [vmem:[%s5 + $0x6d8] sm:$0xff]
        %v6256 = vld [vmem:[%s5 + $0x6e0] sm:$0xff]
        %v6257 = vld [vmem:[%s5 + $0x6e8] sm:$0xff]
        %v6258 = vld [vmem:[%s5 + $0x6f0] sm:$0xff]
        %v6259 = vld [vmem:[%s5 + $0x6f8] sm:$0xff]
        %v6260 = vld [vmem:[%s5 + $0x700] sm:$0xff]
        %v6261 = vld [vmem:[%s5 + $0x708] sm:$0xff]
        %v6262 = vld [vmem:[%s5 + $0x710] sm:$0xff]
        %v6263 = vld [vmem:[%s5 + $0x718] sm:$0xff]
        %v6264 = vld [vmem:[%s5 + $0x720] sm:$0xff]
        %v6265 = vld [vmem:[%s5 + $0x728] sm:$0xff]
        %v6266 = vld [vmem:[%s5 + $0x730] sm:$0xff]
        %v6267 = vld [vmem:[%s5 + $0x738] sm:$0xff]
        %v6268 = vld [vmem:[%s5 + $0x740] sm:$0xff]
        %v6269 = vld [vmem:[%s5 + $0x748] sm:$0xff]
        %v6270 = vld [vmem:[%s5 + $0x750] sm:$0xff]
        %v6271 = vld [vmem:[%s5 + $0x758] sm:$0xff]
        %v6272 = vld [vmem:[%s5 + $0x760] sm:$0xff]
        %v6273 = vld [vmem:[%s5 + $0x768] sm:$0xff]
        %v6274 = vld [vmem:[%s5 + $0x770] sm:$0xff]
        %v6275 = vld [vmem:[%s5 + $0x778] sm:$0xff]
        %v6276 = vld [vmem:[%s5 + $0x780] sm:$0xff]
        %v6277 = vld [vmem:[%s5 + $0x788] sm:$0xff]
        %v6278 = vld [vmem:[%s5 + $0x790] sm:$0xff]
        %v6279 = vld [vmem:[%s5 + $0x798] sm:$0xff]
        %v6280 = vld [vmem:[%s5 + $0x7a0] sm:$0xff]
        %v6281 = vld [vmem:[%s5 + $0x7a8] sm:$0xff]
        %v6282 = vld [vmem:[%s5 + $0x7b0] sm:$0xff]
        %v6283 = vld [vmem:[%s5 + $0x7b8] sm:$0xff]
        %v6284 = vld [vmem:[%s5 + $0x7c0] sm:$0xff]
        %v6285 = vld [vmem:[%s5 + $0x7c8] sm:$0xff]
        %v6286 = vld [vmem:[%s5 + $0x7d0] sm:$0xff]
        %v6287 = vld [vmem:[%s5 + $0x7d8] sm:$0xff]
        %v6288 = vld [vmem:[%s5 + $0x7e0] sm:$0xff]
        %v6289 = vld [vmem:[%s5 + $0x7e8] sm:$0xff]
        %v6290 = vld [vmem:[%s5 + $0x7f0] sm:$0xff]
        %v6291 = vld [vmem:[%s5 + $0x7f8] sm:$0xff]
        %v6292 = vld [vmem:[%s5 + $0x800] sm:$0xff]
        %v6293 = vld [vmem:[%s5 + $0x808] sm:$0xff]
        %v6294 = vld [vmem:[%s5 + $0x810] sm:$0xff]
        %v6295 = vld [vmem:[%s5 + $0x818] sm:$0xff]
        %v6296 = vld [vmem:[%s5 + $0x820] sm:$0xff]
        %v6297 = vld [vmem:[%s5 + $0x828] sm:$0xff]
        %v6298 = vld [vmem:[%s5 + $0x830] sm:$0xff]
        %v6299 = vld [vmem:[%s5 + $0x838] sm:$0xff]
        %v6300 = vld [vmem:[%s5 + $0x840] sm:$0xff]
        %v6301 = vld [vmem:[%s5 + $0x848] sm:$0xff]
        %v6302 = vld [vmem:[%s5 + $0x850] sm:$0xff]
        %v6303 = vld [vmem:[%s5 + $0x858] sm:$0xff]
        %v6304 = vld [vmem:[%s5 + $0x860] sm:$0xff]
        %v6305 = vld [vmem:[%s5 + $0x868] sm:$0xff]
        %v6306 = vld [vmem:[%s5 + $0x870] sm:$0xff]
        %v6307 = vld [vmem:[%s5 + $0x878] sm:$0xff]
        %v6308 = vld [vmem:[%s5 + $0x880] sm:$0xff]
        %v6309 = vld [vmem:[%s5 + $0x888] sm:$0xff]
        %v6310 = vld [vmem:[%s5 + $0x890] sm:$0xff]
        %v6311 = vld [vmem:[%s5 + $0x898] sm:$0xff]
        %v6312 = vld [vmem:[%s5 + $0x8a0] sm:$0xff]
        %v6313 = vld [vmem:[%s5 + $0x8a8] sm:$0xff]
        %v6314 = vld [vmem:[%s5 + $0x8b0] sm:$0xff]
        %v6315 = vld [vmem:[%s5 + $0x8b8] sm:$0xff]
        %v6316 = vld [vmem:[%s5 + $0x8c0] sm:$0xff]
        %v6317 = vld [vmem:[%s5 + $0x8c8] sm:$0xff]
        %v6318 = vld [vmem:[%s5 + $0x8d0] sm:$0xff]
        %v6319 = vld [vmem:[%s5 + $0x8d8] sm:$0xff]
        %v6320 = vld [vmem:[%s5 + $0x8e0] sm:$0xff]
        %v6321 = vld [vmem:[%s5 + $0x8e8] sm:$0xff]
        %v6322 = vld [vmem:[%s5 + $0x8f0] sm:$0xff]
        %v6323 = vld [vmem:[%s5 + $0x8f8] sm:$0xff]
        %v6324 = vld [vmem:[%s5 + $0x900] sm:$0xff]
        %v6325 = vld [vmem:[%s5 + $0x908] sm:$0xff]
        %v6326 = vld [vmem:[%s5 + $0x910] sm:$0xff]
        %v6327 = vld [vmem:[%s5 + $0x918] sm:$0xff]
        %v6328 = vld [vmem:[%s5 + $0x920] sm:$0xff]
        %v6329 = vld [vmem:[%s5 + $0x928] sm:$0xff]
        %v6330 = vld [vmem:[%s5 + $0x930] sm:$0xff]
        %v6331 = vld [vmem:[%s5 + $0x938] sm:$0xff]
        %v6332 = vld [vmem:[%s5 + $0x940] sm:$0xff]
        %v6333 = vld [vmem:[%s5 + $0x948] sm:$0xff]
        %v6334 = vld [vmem:[%s5 + $0x950] sm:$0xff]
        %v6335 = vld [vmem:[%s5 + $0x958] sm:$0xff]
        %v6336 = vld [vmem:[%s5 + $0x960] sm:$0xff]
        %v6337 = vld [vmem:[%s5 + $0x968] sm:$0xff]
        %v6338 = vld [vmem:[%s5 + $0x970] sm:$0xff]
        %v6339 = vld [vmem:[%s5 + $0x978] sm:$0xff]
        %v6340 = vld [vmem:[%s5 + $0x980] sm:$0xff]
        %v6341 = vld [vmem:[%s5 + $0x988] sm:$0xff]
        %v6342 = vld [vmem:[%s5 + $0x990] sm:$0xff]
        %v6343 = vld [vmem:[%s5 + $0x998] sm:$0xff]
        %v6344 = vld [vmem:[%s5 + $0x9a0] sm:$0xff]
        %v6345 = vld [vmem:[%s5 + $0x9a8] sm:$0xff]
        %v6346 = vld [vmem:[%s5 + $0x9b0] sm:$0xff]
        %v6347 = vld [vmem:[%s5 + $0x9b8] sm:$0xff]
        %v6348 = vld [vmem:[%s5 + $0x9c0] sm:$0xff]
        %v6349 = vld [vmem:[%s5 + $0x9c8] sm:$0xff]
        %v6350 = vld [vmem:[%s5 + $0x9d0] sm:$0xff]
        %v6351 = vld [vmem:[%s5 + $0x9d8] sm:$0xff]
        %v6352 = vld [vmem:[%s5 + $0x9e0] sm:$0xff]
        %v6353 = vld [vmem:[%s5 + $0x9e8] sm:$0xff]
        %v6354 = vld [vmem:[%s5 + $0x9f0] sm:$0xff]
        %v6355 = vld [vmem:[%s5 + $0x9f8] sm:$0xff]
        %v6356 = vld [vmem:[%s5 + $0xa00] sm:$0xff]
        %v6357 = vld [vmem:[%s5 + $0xa08] sm:$0xff]
        %v6358 = vld [vmem:[%s5 + $0xa10] sm:$0xff]
        %v6359 = vld [vmem:[%s5 + $0xa18] sm:$0xff]
        %v6360 = vld [vmem:[%s5 + $0xa20] sm:$0xff]
        %v6361 = vld [vmem:[%s5 + $0xa28] sm:$0xff]
        %v6362 = vld [vmem:[%s5 + $0xa30] sm:$0xff]
        %v6363 = vld [vmem:[%s5 + $0xa38] sm:$0xff]
        %v6364 = vld [vmem:[%s5 + $0xa40] sm:$0xff]
        %v6365 = vld [vmem:[%s5 + $0xa48] sm:$0xff]
        %v6366 = vld [vmem:[%s5 + $0xa50] sm:$0xff]
        %v6367 = vld [vmem:[%s5 + $0xa58] sm:$0xff]
        %v6368 = vld [vmem:[%s5 + $0xa60] sm:$0xff]
        %v6369 = vld [vmem:[%s5 + $0xa68] sm:$0xff]
        %v6370 = vld [vmem:[%s5 + $0xa70] sm:$0xff]
        %v6371 = vld [vmem:[%s5 + $0xa78] sm:$0xff]
        %v6372 = vld [vmem:[%s5 + $0xa80] sm:$0xff]
        %v6373 = vld [vmem:[%s5 + $0xa88] sm:$0xff]
        %v6374 = vld [vmem:[%s5 + $0xa90] sm:$0xff]
        %v6375 = vld [vmem:[%s5 + $0xa98] sm:$0xff]
        %v6376 = vld [vmem:[%s5 + $0xaa0] sm:$0xff]
        %v6377 = vld [vmem:[%s5 + $0xaa8] sm:$0xff]
        %v6378 = vld [vmem:[%s5 + $0xab0] sm:$0xff]
        %v6379 = vld [vmem:[%s5 + $0xab8] sm:$0xff]
        %v6380 = vld [vmem:[%s5 + $0xac0] sm:$0xff]
        %v6381 = vld [vmem:[%s5 + $0xac8] sm:$0xff]
        %v6382 = vld [vmem:[%s5 + $0xad0] sm:$0xff]
        %v6383 = vld [vmem:[%s5 + $0xad8] sm:$0xff]
        %v6384 = vld [vmem:[%s5 + $0xae0] sm:$0xff]
        %v6385 = vld [vmem:[%s5 + $0xae8] sm:$0xff]
        %v6386 = vld [vmem:[%s5 + $0xaf0] sm:$0xff]
        %v6387 = vld [vmem:[%s5 + $0xaf8] sm:$0xff]
        %v6388 = vld [vmem:[%s6] sm:$0x1]
        %v6390 = vlaneseq
        %v6391 = vshrl.u32 %v6390, 7
        %v6392 = vsub.s32 0, %v6391
        %v6393 = vrot.slane %v6388, %v6392
        %6395 = vmatprep.subr.mxu0 0.0
        %6396 = vmatpush1.msra.mxu0 %v6051
        %6397 = vmatprep.subr.mxu0 0.0
        %6398 = vmatpush1.msra.mxu0 %v6050
        %6399 = vmatprep.subr.mxu0 0.0
        %6400 = vmatpush1.msra.mxu0 %v6049
        %6401 = vmatprep.subr.mxu0 0.0
        %6402 = vmatpush1.msra.mxu0 %v6048
        %6403 = vmatprep.subr.mxu0 0.0
        %6404 = vmatpush1.msra.mxu0 %v6047
        %6405 = vmatprep.subr.mxu0 0.0
        %6406 = vmatpush1.msra.mxu0 %v6046
        %6407 = vmatprep.subr.mxu0 0.0
        %6408 = vmatpush1.msra.mxu0 %v6045
        %6409 = vmatprep.subr.mxu0 0.0
        %6410 = vmatpush1.msra.mxu0 %v6044
        %6411 = vmatprep.subr.mxu0 0.0
        %6412 = vmatpush1.msra.mxu0 %v6043
        %6413 = vmatprep.subr.mxu0 0.0
        %6414 = vmatpush1.msra.mxu0 %v6042
        %6415 = vmatprep.subr.mxu0 0.0
        %6416 = vmatpush1.msra.mxu0 %v6041
        %6417 = vmatprep.subr.mxu0 0.0
        %6418 = vmatpush1.msra.mxu0 %v6040
        %6419 = vmatprep.subr.mxu0 0.0
        %6420 = vmatpush1.msra.mxu0 %v6039
        %6421 = vmatprep.subr.mxu0 0.0
        %6422 = vmatpush1.msra.mxu0 %v6038
        %6423 = vmatprep.subr.mxu0 0.0
        %6424 = vmatpush1.msra.mxu0 %v6037
        %6425 = vmatprep.subr.mxu0 0.0
        %6426 = vmatpush1.msra.mxu0 %v6036
        %6427 = vmatprep.subr.mxu0 0.0
        %6428 = vmatpush2.msra.mxu0 %v6067
        %6429 = vmatprep.subr.mxu0 0.0
        %6430 = vmatpush2.msra.mxu0 %v6066
        %6431 = vmatprep.subr.mxu0 0.0
        %6432 = vmatpush2.msra.mxu0 %v6065
        %6433 = vmatprep.subr.mxu0 0.0
        %6434 = vmatpush2.msra.mxu0 %v6064
        %6435 = vmatprep.subr.mxu0 0.0
        %6436 = vmatpush2.msra.mxu0 %v6063
        %6437 = vmatprep.subr.mxu0 0.0
        %6438 = vmatpush2.msra.mxu0 %v6062
        %6439 = vmatprep.subr.mxu0 0.0
        %6440 = vmatpush2.msra.mxu0 %v6061
        %6441 = vmatprep.subr.mxu0 0.0
        %6442 = vmatpush2.msra.mxu0 %v6060
        %6443 = vmatprep.subr.mxu0 0.0
        %6444 = vmatpush2.msra.mxu0 %v6059
        %6445 = vmatprep.subr.mxu0 0.0
        %6446 = vmatpush2.msra.mxu0 %v6058
        %6447 = vmatprep.subr.mxu0 0.0
        %6448 = vmatpush2.msra.mxu0 %v6057
        %6449 = vmatprep.subr.mxu0 0.0
        %6450 = vmatpush2.msra.mxu0 %v6056
        %6451 = vmatprep.subr.mxu0 0.0
        %6452 = vmatpush2.msra.mxu0 %v6055
        %6453 = vmatprep.subr.mxu0 0.0
        %6454 = vmatpush2.msra.mxu0 %v6054
        %6455 = vmatprep.subr.mxu0 0.0
        %6456 = vmatpush2.msra.mxu0 %v6053
        %6457 = vmatprep.subr.mxu0 0.0
        %6458 = vmatpush2.msra.mxu0 %v6052
        %6459 = vmatprep.mubr.f32.mxu0 %v6022
        %6460 = vmatmul.mubr.f32.gmra.mxu0 %v5718
        %v6461 = vpop.f32.mrf.mxu0
        %v6462 = vadd.f32 %v6393, %v6461
        %v6463 = vpop.f32.mrf.mxu0
        %6464 = vdwg.mxu0
        %6465 = vmatprep.subr.mxu0 0.0
        %6466 = vmatpush1.msra.mxu0 %v6083
        %6467 = vmatprep.subr.mxu0 0.0
        %6468 = vmatpush1.msra.mxu0 %v6082
        %6469 = vmatprep.subr.mxu0 0.0
        %6470 = vmatpush1.msra.mxu0 %v6081
        %6471 = vmatprep.subr.mxu0 0.0
        %6472 = vmatpush1.msra.mxu0 %v6080
        %6473 = vmatprep.subr.mxu0 0.0
        %6474 = vmatpush1.msra.mxu0 %v6079
        %6475 = vmatprep.subr.mxu0 0.0
        %6476 = vmatpush1.msra.mxu0 %v6078
        %6477 = vmatprep.subr.mxu0 0.0
        %6478 = vmatpush1.msra.mxu0 %v6077
        %6479 = vmatprep.subr.mxu0 0.0
        %6480 = vmatpush1.msra.mxu0 %v6076
        %6481 = vmatprep.subr.mxu0 0.0
        %6482 = vmatpush1.msra.mxu0 %v6075
        %6483 = vmatprep.subr.mxu0 0.0
        %6484 = vmatpush1.msra.mxu0 %v6074
        %6485 = vmatprep.subr.mxu0 0.0
        %6486 = vmatpush1.msra.mxu0 %v6073
        %6487 = vmatprep.subr.mxu0 0.0
        %6488 = vmatpush1.msra.mxu0 %v6072
        %6489 = vmatprep.subr.mxu0 0.0
        %6490 = vmatpush1.msra.mxu0 %v6071
        %6491 = vmatprep.subr.mxu0 0.0
        %6492 = vmatpush1.msra.mxu0 %v6070
        %6493 = vmatprep.subr.mxu0 0.0
        %6494 = vmatpush1.msra.mxu0 %v6069
        %6495 = vmatprep.subr.mxu0 0.0
        %6496 = vmatpush1.msra.mxu0 %v6068
        %6497 = vmatprep.subr.mxu0 0.0
        %6498 = vmatpush2.msra.mxu0 %v6099
        %6499 = vmatprep.subr.mxu0 0.0
        %6500 = vmatpush2.msra.mxu0 %v6098
        %6501 = vmatprep.subr.mxu0 0.0
        %6502 = vmatpush2.msra.mxu0 %v6097
        %6503 = vmatprep.subr.mxu0 0.0
        %6504 = vmatpush2.msra.mxu0 %v6096
        %6505 = vmatprep.subr.mxu0 0.0
        %6506 = vmatpush2.msra.mxu0 %v6095
        %6507 = vmatprep.subr.mxu0 0.0
        %6508 = vmatpush2.msra.mxu0 %v6094
        %6509 = vmatprep.subr.mxu0 0.0
        %6510 = vmatpush2.msra.mxu0 %v6093
        %6511 = vmatprep.subr.mxu0 0.0
        %6512 = vmatpush2.msra.mxu0 %v6092
        %6513 = vmatprep.subr.mxu0 0.0
        %6514 = vmatpush2.msra.mxu0 %v6091
        %6515 = vmatprep.subr.mxu0 0.0
        %6516 = vmatpush2.msra.mxu0 %v6090
        %6517 = vmatprep.subr.mxu0 0.0
        %6518 = vmatpush2.msra.mxu0 %v6089
        %6519 = vmatprep.subr.mxu0 0.0
        %6520 = vmatpush2.msra.mxu0 %v6088
        %6521 = vmatprep.subr.mxu0 0.0
        %6522 = vmatpush2.msra.mxu0 %v6087
        %6523 = vmatprep.subr.mxu0 0.0
        %6524 = vmatpush2.msra.mxu0 %v6086
        %6525 = vmatprep.subr.mxu0 0.0
        %6526 = vmatpush2.msra.mxu0 %v6085
        %6527 = vmatprep.subr.mxu0 0.0
        %6528 = vmatpush2.msra.mxu0 %v6084
        %6529 = vmatprep.mubr.f32.mxu0 %v5902
        %6530 = vmatmul.mubr.f32.gmra.mxu0 %v6023
        %v6531 = vpop.f32.mrf.mxu0
        %v6532 = vadd.f32 %v6462, %v6531
        %v6533 = vpop.f32.mrf.mxu0
        %6534 = vdwg.mxu0
        %6535 = vmatprep.subr.mxu0 0.0
        %6536 = vmatpush1.msra.mxu0 %v6115
        %6537 = vmatprep.subr.mxu0 0.0
        %6538 = vmatpush1.msra.mxu0 %v6114
        %6539 = vmatprep.subr.mxu0 0.0
        %6540 = vmatpush1.msra.mxu0 %v6113
        %6541 = vmatprep.subr.mxu0 0.0
        %6542 = vmatpush1.msra.mxu0 %v6112
        %6543 = vmatprep.subr.mxu0 0.0
        %6544 = vmatpush1.msra.mxu0 %v6111
        %6545 = vmatprep.subr.mxu0 0.0
        %6546 = vmatpush1.msra.mxu0 %v6110
        %6547 = vmatprep.subr.mxu0 0.0
        %6548 = vmatpush1.msra.mxu0 %v6109
        %6549 = vmatprep.subr.mxu0 0.0
        %6550 = vmatpush1.msra.mxu0 %v6108
        %6551 = vmatprep.subr.mxu0 0.0
        %6552 = vmatpush1.msra.mxu0 %v6107
        %6553 = vmatprep.subr.mxu0 0.0
        %6554 = vmatpush1.msra.mxu0 %v6106
        %6555 = vmatprep.subr.mxu0 0.0
        %6556 = vmatpush1.msra.mxu0 %v6105
        %6557 = vmatprep.subr.mxu0 0.0
        %6558 = vmatpush1.msra.mxu0 %v6104
        %6559 = vmatprep.subr.mxu0 0.0
        %6560 = vmatpush1.msra.mxu0 %v6103
        %6561 = vmatprep.subr.mxu0 0.0
        %6562 = vmatpush1.msra.mxu0 %v6102
        %6563 = vmatprep.subr.mxu0 0.0
        %6564 = vmatpush1.msra.mxu0 %v6101
        %6565 = vmatprep.subr.mxu0 0.0
        %6566 = vmatpush1.msra.mxu0 %v6100
        %6567 = vmatprep.subr.mxu0 0.0
        %6568 = vmatpush2.msra.mxu0 %v6131
        %6569 = vmatprep.subr.mxu0 0.0
        %6570 = vmatpush2.msra.mxu0 %v6130
        %6571 = vmatprep.subr.mxu0 0.0
        %6572 = vmatpush2.msra.mxu0 %v6129
        %6573 = vmatprep.subr.mxu0 0.0
        %6574 = vmatpush2.msra.mxu0 %v6128
        %6575 = vmatprep.subr.mxu0 0.0
        %6576 = vmatpush2.msra.mxu0 %v6127
        %6577 = vmatprep.subr.mxu0 0.0
        %6578 = vmatpush2.msra.mxu0 %v6126
        %6579 = vmatprep.subr.mxu0 0.0
        %6580 = vmatpush2.msra.mxu0 %v6125
        %6581 = vmatprep.subr.mxu0 0.0
        %6582 = vmatpush2.msra.mxu0 %v6124
        %6583 = vmatprep.subr.mxu0 0.0
        %6584 = vmatpush2.msra.mxu0 %v6123
        %6585 = vmatprep.subr.mxu0 0.0
        %6586 = vmatpush2.msra.mxu0 %v6122
        %6587 = vmatprep.subr.mxu0 0.0
        %6588 = vmatpush2.msra.mxu0 %v6121
        %6589 = vmatprep.subr.mxu0 0.0
        %6590 = vmatpush2.msra.mxu0 %v6120
        %6591 = vmatprep.subr.mxu0 0.0
        %6592 = vmatpush2.msra.mxu0 %v6119
        %6593 = vmatprep.subr.mxu0 0.0
        %6594 = vmatpush2.msra.mxu0 %v6118
        %6595 = vmatprep.subr.mxu0 0.0
        %6596 = vmatpush2.msra.mxu0 %v6117
        %6597 = vmatprep.subr.mxu0 0.0
        %6598 = vmatpush2.msra.mxu0 %v6116
        %6599 = vmatprep.mubr.f32.mxu0 %v6025
        %6600 = vmatmul.mubr.f32.gmra.mxu0 %v6024
        %v6601 = vpop.f32.mrf.mxu0
        %v6602 = vadd.f32 %v6532, %v6601
        %v6603 = vpop.f32.mrf.mxu0
        %6604 = vdwg.mxu0
        %6605 = vmatprep.subr.mxu0 0.0
        %6606 = vmatpush1.msra.mxu0 %v6147
        %6607 = vmatprep.subr.mxu0 0.0
        %6608 = vmatpush1.msra.mxu0 %v6146
        %6609 = vmatprep.subr.mxu0 0.0
        %6610 = vmatpush1.msra.mxu0 %v6145
        %6611 = vmatprep.subr.mxu0 0.0
        %6612 = vmatpush1.msra.mxu0 %v6144
        %6613 = vmatprep.subr.mxu0 0.0
        %6614 = vmatpush1.msra.mxu0 %v6143
        %6615 = vmatprep.subr.mxu0 0.0
        %6616 = vmatpush1.msra.mxu0 %v6142
        %6617 = vmatprep.subr.mxu0 0.0
        %6618 = vmatpush1.msra.mxu0 %v6141
        %6619 = vmatprep.subr.mxu0 0.0
        %6620 = vmatpush1.msra.mxu0 %v6140
        %6621 = vmatprep.subr.mxu0 0.0
        %6622 = vmatpush1.msra.mxu0 %v6139
        %6623 = vmatprep.subr.mxu0 0.0
        %6624 = vmatpush1.msra.mxu0 %v6138
        %6625 = vmatprep.subr.mxu0 0.0
        %6626 = vmatpush1.msra.mxu0 %v6137
        %6627 = vmatprep.subr.mxu0 0.0
        %6628 = vmatpush1.msra.mxu0 %v6136
        %6629 = vmatprep.subr.mxu0 0.0
        %6630 = vmatpush1.msra.mxu0 %v6135
        %6631 = vmatprep.subr.mxu0 0.0
        %6632 = vmatpush1.msra.mxu0 %v6134
        %6633 = vmatprep.subr.mxu0 0.0
        %6634 = vmatpush1.msra.mxu0 %v6133
        %6635 = vmatprep.subr.mxu0 0.0
        %6636 = vmatpush1.msra.mxu0 %v6132
        %6637 = vmatprep.subr.mxu0 0.0
        %6638 = vmatpush2.msra.mxu0 %v6163
        %6639 = vmatprep.subr.mxu0 0.0
        %6640 = vmatpush2.msra.mxu0 %v6162
        %6641 = vmatprep.subr.mxu0 0.0
        %6642 = vmatpush2.msra.mxu0 %v6161
        %6643 = vmatprep.subr.mxu0 0.0
        %6644 = vmatpush2.msra.mxu0 %v6160
        %6645 = vmatprep.subr.mxu0 0.0
        %6646 = vmatpush2.msra.mxu0 %v6159
        %6647 = vmatprep.subr.mxu0 0.0
        %6648 = vmatpush2.msra.mxu0 %v6158
        %6649 = vmatprep.subr.mxu0 0.0
        %6650 = vmatpush2.msra.mxu0 %v6157
        %6651 = vmatprep.subr.mxu0 0.0
        %6652 = vmatpush2.msra.mxu0 %v6156
        %6653 = vmatprep.subr.mxu0 0.0
        %6654 = vmatpush2.msra.mxu0 %v6155
        %6655 = vmatprep.subr.mxu0 0.0
        %6656 = vmatpush2.msra.mxu0 %v6154
        %6657 = vmatprep.subr.mxu0 0.0
        %6658 = vmatpush2.msra.mxu0 %v6153
        %6659 = vmatprep.subr.mxu0 0.0
        %6660 = vmatpush2.msra.mxu0 %v6152
        %6661 = vmatprep.subr.mxu0 0.0
        %6662 = vmatpush2.msra.mxu0 %v6151
        %6663 = vmatprep.subr.mxu0 0.0
        %6664 = vmatpush2.msra.mxu0 %v6150
        %6665 = vmatprep.subr.mxu0 0.0
        %6666 = vmatpush2.msra.mxu0 %v6149
        %6667 = vmatprep.subr.mxu0 0.0
        %6668 = vmatpush2.msra.mxu0 %v6148
        %6669 = vmatprep.mubr.f32.mxu0 %v5933
        %6670 = vmatmul.mubr.f32.gmra.mxu0 %v6026
        %v6671 = vpop.f32.mrf.mxu0
        %v6672 = vadd.f32 %v6602, %v6671
        %v6673 = vpop.f32.mrf.mxu0
        %6674 = vdwg.mxu0
        %6675 = vmatprep.subr.mxu0 0.0
        %6676 = vmatpush1.msra.mxu0 %v6179
        %6677 = vmatprep.subr.mxu0 0.0
        %6678 = vmatpush1.msra.mxu0 %v6178
        %6679 = vmatprep.subr.mxu0 0.0
        %6680 = vmatpush1.msra.mxu0 %v6177
        %6681 = vmatprep.subr.mxu0 0.0
        %6682 = vmatpush1.msra.mxu0 %v6176
        %6683 = vmatprep.subr.mxu0 0.0
        %6684 = vmatpush1.msra.mxu0 %v6175
        %6685 = vmatprep.subr.mxu0 0.0
        %6686 = vmatpush1.msra.mxu0 %v6174
        %6687 = vmatprep.subr.mxu0 0.0
        %6688 = vmatpush1.msra.mxu0 %v6173
        %6689 = vmatprep.subr.mxu0 0.0
        %6690 = vmatpush1.msra.mxu0 %v6172
        %6691 = vmatprep.subr.mxu0 0.0
        %6692 = vmatpush1.msra.mxu0 %v6171
        %6693 = vmatprep.subr.mxu0 0.0
        %6694 = vmatpush1.msra.mxu0 %v6170
        %6695 = vmatprep.subr.mxu0 0.0
        %6696 = vmatpush1.msra.mxu0 %v6169
        %6697 = vmatprep.subr.mxu0 0.0
        %6698 = vmatpush1.msra.mxu0 %v6168
        %6699 = vmatprep.subr.mxu0 0.0
        %6700 = vmatpush1.msra.mxu0 %v6167
        %6701 = vmatprep.subr.mxu0 0.0
        %6702 = vmatpush1.msra.mxu0 %v6166
        %6703 = vmatprep.subr.mxu0 0.0
        %6704 = vmatpush1.msra.mxu0 %v6165
        %6705 = vmatprep.subr.mxu0 0.0
        %6706 = vmatpush1.msra.mxu0 %v6164
        %6707 = vmatprep.subr.mxu0 0.0
        %6708 = vmatpush2.msra.mxu0 %v6195
        %6709 = vmatprep.subr.mxu0 0.0
        %6710 = vmatpush2.msra.mxu0 %v6194
        %6711 = vmatprep.subr.mxu0 0.0
        %6712 = vmatpush2.msra.mxu0 %v6193
        %6713 = vmatprep.subr.mxu0 0.0
        %6714 = vmatpush2.msra.mxu0 %v6192
        %6715 = vmatprep.subr.mxu0 0.0
        %6716 = vmatpush2.msra.mxu0 %v6191
        %6717 = vmatprep.subr.mxu0 0.0
        %6718 = vmatpush2.msra.mxu0 %v6190
        %6719 = vmatprep.subr.mxu0 0.0
        %6720 = vmatpush2.msra.mxu0 %v6189
        %6721 = vmatprep.subr.mxu0 0.0
        %6722 = vmatpush2.msra.mxu0 %v6188
        %6723 = vmatprep.subr.mxu0 0.0
        %6724 = vmatpush2.msra.mxu0 %v6187
        %6725 = vmatprep.subr.mxu0 0.0
        %6726 = vmatpush2.msra.mxu0 %v6186
        %6727 = vmatprep.subr.mxu0 0.0
        %6728 = vmatpush2.msra.mxu0 %v6185
        %6729 = vmatprep.subr.mxu0 0.0
        %6730 = vmatpush2.msra.mxu0 %v6184
        %6731 = vmatprep.subr.mxu0 0.0
        %6732 = vmatpush2.msra.mxu0 %v6183
        %6733 = vmatprep.subr.mxu0 0.0
        %6734 = vmatpush2.msra.mxu0 %v6182
        %6735 = vmatprep.subr.mxu0 0.0
        %6736 = vmatpush2.msra.mxu0 %v6181
        %6737 = vmatprep.subr.mxu0 0.0
        %6738 = vmatpush2.msra.mxu0 %v6180
        %6739 = vmatprep.mubr.f32.mxu0 %v6028
        %6740 = vmatmul.mubr.f32.gmra.mxu0 %v6027
        %v6741 = vpop.f32.mrf.mxu0
        %v6742 = vadd.f32 %v6672, %v6741
        %v6743 = vpop.f32.mrf.mxu0
        %6744 = vdwg.mxu0
        %6745 = vmatprep.subr.mxu0 0.0
        %6746 = vmatpush1.msra.mxu0 %v6211
        %6747 = vmatprep.subr.mxu0 0.0
        %6748 = vmatpush1.msra.mxu0 %v6210
        %6749 = vmatprep.subr.mxu0 0.0
        %6750 = vmatpush1.msra.mxu0 %v6209
        %6751 = vmatprep.subr.mxu0 0.0
        %6752 = vmatpush1.msra.mxu0 %v6208
        %6753 = vmatprep.subr.mxu0 0.0
        %6754 = vmatpush1.msra.mxu0 %v6207
        %6755 = vmatprep.subr.mxu0 0.0
        %6756 = vmatpush1.msra.mxu0 %v6206
        %6757 = vmatprep.subr.mxu0 0.0
        %6758 = vmatpush1.msra.mxu0 %v6205
        %6759 = vmatprep.subr.mxu0 0.0
        %6760 = vmatpush1.msra.mxu0 %v6204
        %6761 = vmatprep.subr.mxu0 0.0
        %6762 = vmatpush1.msra.mxu0 %v6203
        %6763 = vmatprep.subr.mxu0 0.0
        %6764 = vmatpush1.msra.mxu0 %v6202
        %6765 = vmatprep.subr.mxu0 0.0
        %6766 = vmatpush1.msra.mxu0 %v6201
        %6767 = vmatprep.subr.mxu0 0.0
        %6768 = vmatpush1.msra.mxu0 %v6200
        %6769 = vmatprep.subr.mxu0 0.0
        %6770 = vmatpush1.msra.mxu0 %v6199
        %6771 = vmatprep.subr.mxu0 0.0
        %6772 = vmatpush1.msra.mxu0 %v6198
        %6773 = vmatprep.subr.mxu0 0.0
        %6774 = vmatpush1.msra.mxu0 %v6197
        %6775 = vmatprep.subr.mxu0 0.0
        %6776 = vmatpush1.msra.mxu0 %v6196
        %6777 = vmatprep.subr.mxu0 0.0
        %6778 = vmatpush2.msra.mxu0 %v6227
        %6779 = vmatprep.subr.mxu0 0.0
        %6780 = vmatpush2.msra.mxu0 %v6226
        %6781 = vmatprep.subr.mxu0 0.0
        %6782 = vmatpush2.msra.mxu0 %v6225
        %6783 = vmatprep.subr.mxu0 0.0
        %6784 = vmatpush2.msra.mxu0 %v6224
        %6785 = vmatprep.subr.mxu0 0.0
        %6786 = vmatpush2.msra.mxu0 %v6223
        %6787 = vmatprep.subr.mxu0 0.0
        %6788 = vmatpush2.msra.mxu0 %v6222
        %6789 = vmatprep.subr.mxu0 0.0
        %6790 = vmatpush2.msra.mxu0 %v6221
        %6791 = vmatprep.subr.mxu0 0.0
        %6792 = vmatpush2.msra.mxu0 %v6220
        %6793 = vmatprep.subr.mxu0 0.0
        %6794 = vmatpush2.msra.mxu0 %v6219
        %6795 = vmatprep.subr.mxu0 0.0
        %6796 = vmatpush2.msra.mxu0 %v6218
        %6797 = vmatprep.subr.mxu0 0.0
        %6798 = vmatpush2.msra.mxu0 %v6217
        %6799 = vmatprep.subr.mxu0 0.0
        %6800 = vmatpush2.msra.mxu0 %v6216
        %6801 = vmatprep.subr.mxu0 0.0
        %6802 = vmatpush2.msra.mxu0 %v6215
        %6803 = vmatprep.subr.mxu0 0.0
        %6804 = vmatpush2.msra.mxu0 %v6214
        %6805 = vmatprep.subr.mxu0 0.0
        %6806 = vmatpush2.msra.mxu0 %v6213
        %6807 = vmatprep.subr.mxu0 0.0
        %6808 = vmatpush2.msra.mxu0 %v6212
        %6809 = vmatprep.mubr.f32.mxu0 %v5806
        %6810 = vmatmul.mubr.f32.gmra.mxu0 %v5954
        %v6811 = vpop.f32.mrf.mxu0
        %v6812 = vadd.f32 %v6742, %v6811
        %v6813 = vpop.f32.mrf.mxu0
        %6814 = vdwg.mxu0
        %6815 = vmatprep.subr.mxu0 0.0
        %6816 = vmatpush1.msra.mxu0 %v6243
        %6817 = vmatprep.subr.mxu0 0.0
        %6818 = vmatpush1.msra.mxu0 %v6242
        %6819 = vmatprep.subr.mxu0 0.0
        %6820 = vmatpush1.msra.mxu0 %v6241
        %6821 = vmatprep.subr.mxu0 0.0
        %6822 = vmatpush1.msra.mxu0 %v6240
        %6823 = vmatprep.subr.mxu0 0.0
        %6824 = vmatpush1.msra.mxu0 %v6239
        %6825 = vmatprep.subr.mxu0 0.0
        %6826 = vmatpush1.msra.mxu0 %v6238
        %6827 = vmatprep.subr.mxu0 0.0
        %6828 = vmatpush1.msra.mxu0 %v6237
        %6829 = vmatprep.subr.mxu0 0.0
        %6830 = vmatpush1.msra.mxu0 %v6236
        %6831 = vmatprep.subr.mxu0 0.0
        %6832 = vmatpush1.msra.mxu0 %v6235
        %6833 = vmatprep.subr.mxu0 0.0
        %6834 = vmatpush1.msra.mxu0 %v6234
        %6835 = vmatprep.subr.mxu0 0.0
        %6836 = vmatpush1.msra.mxu0 %v6233
        %6837 = vmatprep.subr.mxu0 0.0
        %6838 = vmatpush1.msra.mxu0 %v6232
        %6839 = vmatprep.subr.mxu0 0.0
        %6840 = vmatpush1.msra.mxu0 %v6231
        %6841 = vmatprep.subr.mxu0 0.0
        %6842 = vmatpush1.msra.mxu0 %v6230
        %6843 = vmatprep.subr.mxu0 0.0
        %6844 = vmatpush1.msra.mxu0 %v6229
        %6845 = vmatprep.subr.mxu0 0.0
        %6846 = vmatpush1.msra.mxu0 %v6228
        %6847 = vmatprep.subr.mxu0 0.0
        %6848 = vmatpush2.msra.mxu0 %v6259
        %6849 = vmatprep.subr.mxu0 0.0
        %6850 = vmatpush2.msra.mxu0 %v6258
        %6851 = vmatprep.subr.mxu0 0.0
        %6852 = vmatpush2.msra.mxu0 %v6257
        %6853 = vmatprep.subr.mxu0 0.0
        %6854 = vmatpush2.msra.mxu0 %v6256
        %6855 = vmatprep.subr.mxu0 0.0
        %6856 = vmatpush2.msra.mxu0 %v6255
        %6857 = vmatprep.subr.mxu0 0.0
        %6858 = vmatpush2.msra.mxu0 %v6254
        %6859 = vmatprep.subr.mxu0 0.0
        %6860 = vmatpush2.msra.mxu0 %v6253
        %6861 = vmatprep.subr.mxu0 0.0
        %6862 = vmatpush2.msra.mxu0 %v6252
        %6863 = vmatprep.subr.mxu0 0.0
        %6864 = vmatpush2.msra.mxu0 %v6251
        %6865 = vmatprep.subr.mxu0 0.0
        %6866 = vmatpush2.msra.mxu0 %v6250
        %6867 = vmatprep.subr.mxu0 0.0
        %6868 = vmatpush2.msra.mxu0 %v6249
        %6869 = vmatprep.subr.mxu0 0.0
        %6870 = vmatpush2.msra.mxu0 %v6248
        %6871 = vmatprep.subr.mxu0 0.0
        %6872 = vmatpush2.msra.mxu0 %v6247
        %6873 = vmatprep.subr.mxu0 0.0
        %6874 = vmatpush2.msra.mxu0 %v6246
        %6875 = vmatprep.subr.mxu0 0.0
        %6876 = vmatpush2.msra.mxu0 %v6245
        %6877 = vmatprep.subr.mxu0 0.0
        %6878 = vmatpush2.msra.mxu0 %v6244
        %6879 = vmatprep.mubr.f32.mxu0 %v6030
        %6880 = vmatmul.mubr.f32.gmra.mxu0 %v6029
        %v6881 = vpop.f32.mrf.mxu0
        %v6882 = vadd.f32 %v6812, %v6881
        %v6883 = vpop.f32.mrf.mxu0
        %6884 = vdwg.mxu0
        %6885 = vmatprep.subr.mxu0 0.0
        %6886 = vmatpush1.msra.mxu0 %v6275
        %6887 = vmatprep.subr.mxu0 0.0
        %6888 = vmatpush1.msra.mxu0 %v6274
        %6889 = vmatprep.subr.mxu0 0.0
        %6890 = vmatpush1.msra.mxu0 %v6273
        %6891 = vmatprep.subr.mxu0 0.0
        %6892 = vmatpush1.msra.mxu0 %v6272
        %6893 = vmatprep.subr.mxu0 0.0
        %6894 = vmatpush1.msra.mxu0 %v6271
        %6895 = vmatprep.subr.mxu0 0.0
        %6896 = vmatpush1.msra.mxu0 %v6270
        %6897 = vmatprep.subr.mxu0 0.0
        %6898 = vmatpush1.msra.mxu0 %v6269
        %6899 = vmatprep.subr.mxu0 0.0
        %6900 = vmatpush1.msra.mxu0 %v6268
        %6901 = vmatprep.subr.mxu0 0.0
        %6902 = vmatpush1.msra.mxu0 %v6267
        %6903 = vmatprep.subr.mxu0 0.0
        %6904 = vmatpush1.msra.mxu0 %v6266
        %6905 = vmatprep.subr.mxu0 0.0
        %6906 = vmatpush1.msra.mxu0 %v6265
        %6907 = vmatprep.subr.mxu0 0.0
        %6908 = vmatpush1.msra.mxu0 %v6264
        %6909 = vmatprep.subr.mxu0 0.0
        %6910 = vmatpush1.msra.mxu0 %v6263
        %6911 = vmatprep.subr.mxu0 0.0
        %6912 = vmatpush1.msra.mxu0 %v6262
        %6913 = vmatprep.subr.mxu0 0.0
        %6914 = vmatpush1.msra.mxu0 %v6261
        %6915 = vmatprep.subr.mxu0 0.0
        %6916 = vmatpush1.msra.mxu0 %v6260
        %6917 = vmatprep.subr.mxu0 0.0
        %6918 = vmatpush2.msra.mxu0 %v6291
        %6919 = vmatprep.subr.mxu0 0.0
        %6920 = vmatpush2.msra.mxu0 %v6290
        %6921 = vmatprep.subr.mxu0 0.0
        %6922 = vmatpush2.msra.mxu0 %v6289
        %6923 = vmatprep.subr.mxu0 0.0
        %6924 = vmatpush2.msra.mxu0 %v6288
        %6925 = vmatprep.subr.mxu0 0.0
        %6926 = vmatpush2.msra.mxu0 %v6287
        %6927 = vmatprep.subr.mxu0 0.0
        %6928 = vmatpush2.msra.mxu0 %v6286
        %6929 = vmatprep.subr.mxu0 0.0
        %6930 = vmatpush2.msra.mxu0 %v6285
        %6931 = vmatprep.subr.mxu0 0.0
        %6932 = vmatpush2.msra.mxu0 %v6284
        %6933 = vmatprep.subr.mxu0 0.0
        %6934 = vmatpush2.msra.mxu0 %v6283
        %6935 = vmatprep.subr.mxu0 0.0
        %6936 = vmatpush2.msra.mxu0 %v6282
        %6937 = vmatprep.subr.mxu0 0.0
        %6938 = vmatpush2.msra.mxu0 %v6281
        %6939 = vmatprep.subr.mxu0 0.0
        %6940 = vmatpush2.msra.mxu0 %v6280
        %6941 = vmatprep.subr.mxu0 0.0
        %6942 = vmatpush2.msra.mxu0 %v6279
        %6943 = vmatprep.subr.mxu0 0.0
        %6944 = vmatpush2.msra.mxu0 %v6278
        %6945 = vmatprep.subr.mxu0 0.0
        %6946 = vmatpush2.msra.mxu0 %v6277
        %6947 = vmatprep.subr.mxu0 0.0
        %6948 = vmatpush2.msra.mxu0 %v6276
        %6949 = vmatprep.mubr.f32.mxu0 %v6031
        %6950 = vmatmul.mubr.f32.gmra.mxu0 %v5972
        %v6951 = vpop.f32.mrf.mxu0
        %v6952 = vadd.f32 %v6882, %v6951
        %v6953 = vpop.f32.mrf.mxu0
        %6954 = vdwg.mxu0
        %6955 = vmatprep.subr.mxu0 0.0
        %6956 = vmatpush1.msra.mxu0 %v6307
        %6957 = vmatprep.subr.mxu0 0.0
        %6958 = vmatpush1.msra.mxu0 %v6306
        %6959 = vmatprep.subr.mxu0 0.0
        %6960 = vmatpush1.msra.mxu0 %v6305
        %6961 = vmatprep.subr.mxu0 0.0
        %6962 = vmatpush1.msra.mxu0 %v6304
        %6963 = vmatprep.subr.mxu0 0.0
        %6964 = vmatpush1.msra.mxu0 %v6303
        %6965 = vmatprep.subr.mxu0 0.0
        %6966 = vmatpush1.msra.mxu0 %v6302
        %6967 = vmatprep.subr.mxu0 0.0
        %6968 = vmatpush1.msra.mxu0 %v6301
        %6969 = vmatprep.subr.mxu0 0.0
        %6970 = vmatpush1.msra.mxu0 %v6300
        %6971 = vmatprep.subr.mxu0 0.0
        %6972 = vmatpush1.msra.mxu0 %v6299
        %6973 = vmatprep.subr.mxu0 0.0
        %6974 = vmatpush1.msra.mxu0 %v6298
        %6975 = vmatprep.subr.mxu0 0.0
        %6976 = vmatpush1.msra.mxu0 %v6297
        %6977 = vmatprep.subr.mxu0 0.0
        %6978 = vmatpush1.msra.mxu0 %v6296
        %6979 = vmatprep.subr.mxu0 0.0
        %6980 = vmatpush1.msra.mxu0 %v6295
        %6981 = vmatprep.subr.mxu0 0.0
        %6982 = vmatpush1.msra.mxu0 %v6294
        %6983 = vmatprep.subr.mxu0 0.0
        %6984 = vmatpush1.msra.mxu0 %v6293
        %6985 = vmatprep.subr.mxu0 0.0
        %6986 = vmatpush1.msra.mxu0 %v6292
        %6987 = vmatprep.subr.mxu0 0.0
        %6988 = vmatpush2.msra.mxu0 %v6323
        %6989 = vmatprep.subr.mxu0 0.0
        %6990 = vmatpush2.msra.mxu0 %v6322
        %6991 = vmatprep.subr.mxu0 0.0
        %6992 = vmatpush2.msra.mxu0 %v6321
        %6993 = vmatprep.subr.mxu0 0.0
        %6994 = vmatpush2.msra.mxu0 %v6320
        %6995 = vmatprep.subr.mxu0 0.0
        %6996 = vmatpush2.msra.mxu0 %v6319
        %6997 = vmatprep.subr.mxu0 0.0
        %6998 = vmatpush2.msra.mxu0 %v6318
        %6999 = vmatprep.subr.mxu0 0.0
        %7000 = vmatpush2.msra.mxu0 %v6317
        %7001 = vmatprep.subr.mxu0 0.0
        %7002 = vmatpush2.msra.mxu0 %v6316
        %7003 = vmatprep.subr.mxu0 0.0
        %7004 = vmatpush2.msra.mxu0 %v6315
        %7005 = vmatprep.subr.mxu0 0.0
        %7006 = vmatpush2.msra.mxu0 %v6314
        %7007 = vmatprep.subr.mxu0 0.0
        %7008 = vmatpush2.msra.mxu0 %v6313
        %7009 = vmatprep.subr.mxu0 0.0
        %7010 = vmatpush2.msra.mxu0 %v6312
        %7011 = vmatprep.subr.mxu0 0.0
        %7012 = vmatpush2.msra.mxu0 %v6311
        %7013 = vmatprep.subr.mxu0 0.0
        %7014 = vmatpush2.msra.mxu0 %v6310
        %7015 = vmatprep.subr.mxu0 0.0
        %7016 = vmatpush2.msra.mxu0 %v6309
        %7017 = vmatprep.subr.mxu0 0.0
        %7018 = vmatpush2.msra.mxu0 %v6308
        %7019 = vmatprep.mubr.f32.mxu0 %v6033
        %7020 = vmatmul.mubr.f32.gmra.mxu0 %v6032
        %v7021 = vpop.f32.mrf.mxu0
        %v7022 = vadd.f32 %v6952, %v7021
        %v7023 = vpop.f32.mrf.mxu0
        %7024 = vdwg.mxu0
        %7025 = vmatprep.subr.mxu0 0.0
        %7026 = vmatpush1.msra.mxu0 %v6339
        %7027 = vmatprep.subr.mxu0 0.0
        %7028 = vmatpush1.msra.mxu0 %v6338
        %7029 = vmatprep.subr.mxu0 0.0
        %7030 = vmatpush1.msra.mxu0 %v6337
        %7031 = vmatprep.subr.mxu0 0.0
        %7032 = vmatpush1.msra.mxu0 %v6336
        %7033 = vmatprep.subr.mxu0 0.0
        %7034 = vmatpush1.msra.mxu0 %v6335
        %7035 = vmatprep.subr.mxu0 0.0
        %7036 = vmatpush1.msra.mxu0 %v6334
        %7037 = vmatprep.subr.mxu0 0.0
        %7038 = vmatpush1.msra.mxu0 %v6333
        %7039 = vmatprep.subr.mxu0 0.0
        %7040 = vmatpush1.msra.mxu0 %v6332
        %7041 = vmatprep.subr.mxu0 0.0
        %7042 = vmatpush1.msra.mxu0 %v6331
        %7043 = vmatprep.subr.mxu0 0.0
        %7044 = vmatpush1.msra.mxu0 %v6330
        %7045 = vmatprep.subr.mxu0 0.0
        %7046 = vmatpush1.msra.mxu0 %v6329
        %7047 = vmatprep.subr.mxu0 0.0
        %7048 = vmatpush1.msra.mxu0 %v6328
        %7049 = vmatprep.subr.mxu0 0.0
        %7050 = vmatpush1.msra.mxu0 %v6327
        %7051 = vmatprep.subr.mxu0 0.0
        %7052 = vmatpush1.msra.mxu0 %v6326
        %7053 = vmatprep.subr.mxu0 0.0
        %7054 = vmatpush1.msra.mxu0 %v6325
        %7055 = vmatprep.subr.mxu0 0.0
        %7056 = vmatpush1.msra.mxu0 %v6324
        %7057 = vmatprep.subr.mxu0 0.0
        %7058 = vmatpush2.msra.mxu0 %v6355
        %7059 = vmatprep.subr.mxu0 0.0
        %7060 = vmatpush2.msra.mxu0 %v6354
        %7061 = vmatprep.subr.mxu0 0.0
        %7062 = vmatpush2.msra.mxu0 %v6353
        %7063 = vmatprep.subr.mxu0 0.0
        %7064 = vmatpush2.msra.mxu0 %v6352
        %7065 = vmatprep.subr.mxu0 0.0
        %7066 = vmatpush2.msra.mxu0 %v6351
        %7067 = vmatprep.subr.mxu0 0.0
        %7068 = vmatpush2.msra.mxu0 %v6350
        %7069 = vmatprep.subr.mxu0 0.0
        %7070 = vmatpush2.msra.mxu0 %v6349
        %7071 = vmatprep.subr.mxu0 0.0
        %7072 = vmatpush2.msra.mxu0 %v6348
        %7073 = vmatprep.subr.mxu0 0.0
        %7074 = vmatpush2.msra.mxu0 %v6347
        %7075 = vmatprep.subr.mxu0 0.0
        %7076 = vmatpush2.msra.mxu0 %v6346
        %7077 = vmatprep.subr.mxu0 0.0
        %7078 = vmatpush2.msra.mxu0 %v6345
        %7079 = vmatprep.subr.mxu0 0.0
        %7080 = vmatpush2.msra.mxu0 %v6344
        %7081 = vmatprep.subr.mxu0 0.0
        %7082 = vmatpush2.msra.mxu0 %v6343
        %7083 = vmatprep.subr.mxu0 0.0
        %7084 = vmatpush2.msra.mxu0 %v6342
        %7085 = vmatprep.subr.mxu0 0.0
        %7086 = vmatpush2.msra.mxu0 %v6341
        %7087 = vmatprep.subr.mxu0 0.0
        %7088 = vmatpush2.msra.mxu0 %v6340
        %7089 = vmatprep.mubr.f32.mxu0 %v6034
        %7090 = vmatmul.mubr.f32.gmra.mxu0 %v6000
        %v7091 = vpop.f32.mrf.mxu0
        %v7092 = vadd.f32 %v7022, %v7091
        %v7093 = vpop.f32.mrf.mxu0
        %7094 = vdwg.mxu0
        %7095 = vmatprep.subr.mxu0 0.0
        %7096 = vmatpush1.msra.mxu0 %v6371
        %7097 = vmatprep.subr.mxu0 0.0
        %7098 = vmatpush1.msra.mxu0 %v6370
        %7099 = vmatprep.subr.mxu0 0.0
        %7100 = vmatpush1.msra.mxu0 %v6369
        %7101 = vmatprep.subr.mxu0 0.0
        %7102 = vmatpush1.msra.mxu0 %v6368
        %7103 = vmatprep.subr.mxu0 0.0
        %7104 = vmatpush1.msra.mxu0 %v6367
        %7105 = vmatprep.subr.mxu0 0.0
        %7106 = vmatpush1.msra.mxu0 %v6366
        %7107 = vmatprep.subr.mxu0 0.0
        %7108 = vmatpush1.msra.mxu0 %v6365
        %7109 = vmatprep.subr.mxu0 0.0
        %7110 = vmatpush1.msra.mxu0 %v6364
        %7111 = vmatprep.subr.mxu0 0.0
        %7112 = vmatpush1.msra.mxu0 %v6363
        %7113 = vmatprep.subr.mxu0 0.0
        %7114 = vmatpush1.msra.mxu0 %v6362
        %7115 = vmatprep.subr.mxu0 0.0
        %7116 = vmatpush1.msra.mxu0 %v6361
        %7117 = vmatprep.subr.mxu0 0.0
        %7118 = vmatpush1.msra.mxu0 %v6360
        %7119 = vmatprep.subr.mxu0 0.0
        %7120 = vmatpush1.msra.mxu0 %v6359
        %7121 = vmatprep.subr.mxu0 0.0
        %7122 = vmatpush1.msra.mxu0 %v6358
        %7123 = vmatprep.subr.mxu0 0.0
        %7124 = vmatpush1.msra.mxu0 %v6357
        %7125 = vmatprep.subr.mxu0 0.0
        %7126 = vmatpush1.msra.mxu0 %v6356
        %7127 = vmatprep.subr.mxu0 0.0
        %7128 = vmatpush2.msra.mxu0 %v6387
        %7129 = vmatprep.subr.mxu0 0.0
        %7130 = vmatpush2.msra.mxu0 %v6386
        %7131 = vmatprep.subr.mxu0 0.0
        %7132 = vmatpush2.msra.mxu0 %v6385
        %7133 = vmatprep.subr.mxu0 0.0
        %7134 = vmatpush2.msra.mxu0 %v6384
        %7135 = vmatprep.subr.mxu0 0.0
        %7136 = vmatpush2.msra.mxu0 %v6383
        %7137 = vmatprep.subr.mxu0 0.0
        %7138 = vmatpush2.msra.mxu0 %v6382
        %7139 = vmatprep.subr.mxu0 0.0
        %7140 = vmatpush2.msra.mxu0 %v6381
        %7141 = vmatprep.subr.mxu0 0.0
        %7142 = vmatpush2.msra.mxu0 %v6380
        %7143 = vmatprep.subr.mxu0 0.0
        %7144 = vmatpush2.msra.mxu0 %v6379
        %7145 = vmatprep.subr.mxu0 0.0
        %7146 = vmatpush2.msra.mxu0 %v6378
        %7147 = vmatprep.subr.mxu0 0.0
        %7148 = vmatpush2.msra.mxu0 %v6377
        %7149 = vmatprep.subr.mxu0 0.0
        %7150 = vmatpush2.msra.mxu0 %v6376
        %7151 = vmatprep.subr.mxu0 0.0
        %7152 = vmatpush2.msra.mxu0 %v6375
        %7153 = vmatprep.subr.mxu0 0.0
        %7154 = vmatpush2.msra.mxu0 %v6374
        %7155 = vmatprep.subr.mxu0 0.0
        %7156 = vmatpush2.msra.mxu0 %v6373
        %7157 = vmatprep.subr.mxu0 0.0
        %7158 = vmatpush2.msra.mxu0 %v6372
        %7159 = vmatprep.mubr.f32.mxu0 %v6019
        %7160 = vmatmul.mubr.f32.gmra.mxu0 %v6035
        %v7161 = vpop.f32.mrf.mxu0
        %v7162 = vadd.f32 %v7092, %v7161
        %v7163 = vpop.f32.mrf.mxu0
        %7164 = vdwg.mxu0
        %v7165 = vmax.f32 %v7162, 0.0
        %v7166 = vld [vmem:[%s7] sm:$0xff]
        %v7167 = vld [vmem:[%s7 + $0x8] sm:$0xff]
        %v7168 = vld [vmem:[%s7 + $0x10] sm:$0xff]
        %v7169 = vld [vmem:[%s7 + $0x18] sm:$0xff]
        %v7170 = vld [vmem:[%s8] sm:$0x1]
        %v7172 = vlaneseq
        %v7173 = vshrl.u32 %v7172, 7
        %v7174 = vsub.s32 0, %v7173
        %v7175 = vrot.slane %v7170, %v7174
        %v7178 = vsel %vm5943, %v7165, 0
        %7180 = vmatprep.subr.mxu0 0.0
        %7181 = vmatpush1.msra.mxu0 0.0
        %7182 = vmatprep.subr.mxu0 0.0
        %7183 = vmatpush1.msra.mxu0 0.0
        %7184 = vmatprep.subr.mxu0 0.0
        %7185 = vmatpush1.msra.mxu0 0.0
        %7186 = vmatprep.subr.mxu0 0.0
        %7187 = vmatpush1.msra.mxu0 0.0
        %7188 = vmatprep.subr.mxu0 0.0
        %7189 = vmatpush1.msra.mxu0 0.0
        %7190 = vmatprep.subr.mxu0 0.0
        %7191 = vmatpush1.msra.mxu0 0.0
        %7192 = vmatprep.subr.mxu0 0.0
        %7193 = vmatpush1.msra.mxu0 0.0
        %7194 = vmatprep.subr.mxu0 0.0
        %7195 = vmatpush1.msra.mxu0 0.0
        %7196 = vmatprep.subr.mxu0 0.0
        %7197 = vmatpush1.msra.mxu0 0.0
        %7198 = vmatprep.subr.mxu0 0.0
        %7199 = vmatpush1.msra.mxu0 0.0
        %7200 = vmatprep.subr.mxu0 0.0
        %7201 = vmatpush1.msra.mxu0 0.0
        %7202 = vmatprep.subr.mxu0 0.0
        %7203 = vmatpush1.msra.mxu0 0.0
        %7204 = vmatprep.subr.mxu0 0.0
        %7205 = vmatpush1.msra.mxu0 %v7169
        %7206 = vmatprep.subr.mxu0 0.0
        %7207 = vmatpush1.msra.mxu0 %v7168
        %7208 = vmatprep.subr.mxu0 0.0
        %7209 = vmatpush1.msra.mxu0 %v7167
        %7210 = vmatprep.subr.mxu0 0.0
        %7211 = vmatpush1.msra.mxu0 %v7166
        %7212 = vmatprep.subr.mxu0 0.0
        %7213 = vmatpush2.msra.mxu0 0.0
        %7214 = vmatprep.subr.mxu0 0.0
        %7215 = vmatpush2.msra.mxu0 0.0
        %7216 = vmatprep.subr.mxu0 0.0
        %7217 = vmatpush2.msra.mxu0 0.0
        %7218 = vmatprep.subr.mxu0 0.0
        %7219 = vmatpush2.msra.mxu0 0.0
        %7220 = vmatprep.subr.mxu0 0.0
        %7221 = vmatpush2.msra.mxu0 0.0
        %7222 = vmatprep.subr.mxu0 0.0
        %7223 = vmatpush2.msra.mxu0 0.0
        %7224 = vmatprep.subr.mxu0 0.0
        %7225 = vmatpush2.msra.mxu0 0.0
        %7226 = vmatprep.subr.mxu0 0.0
        %7227 = vmatpush2.msra.mxu0 0.0
        %7228 = vmatprep.subr.mxu0 0.0
        %7229 = vmatpush2.msra.mxu0 0.0
        %7230 = vmatprep.subr.mxu0 0.0
        %7231 = vmatpush2.msra.mxu0 0.0
        %7232 = vmatprep.subr.mxu0 0.0
        %7233 = vmatpush2.msra.mxu0 0.0
        %7234 = vmatprep.subr.mxu0 0.0
        %7235 = vmatpush2.msra.mxu0 0.0
        %7236 = vmatprep.subr.mxu0 0.0
        %7237 = vmatpush2.msra.mxu0 0.0
        %7238 = vmatprep.subr.mxu0 0.0
        %7239 = vmatpush2.msra.mxu0 0.0
        %7240 = vmatprep.subr.mxu0 0.0
        %7241 = vmatpush2.msra.mxu0 0.0
        %7242 = vmatprep.subr.mxu0 0.0
        %7243 = vmatpush2.msra.mxu0 0.0
        %7244 = vmatprep.mubr.f32.mxu0 0.0
        %7245 = vmatmul.mubr.f32.gmra.mxu0 %v7178
        %v7246 = vpop.f32.mrf.mxu0
        %v7247 = vadd.f32 %v7175, %v7246
        %v7248 = vpop.f32.mrf.mxu0
        %7249 = vdwg.mxu0
        %vm7250 = vcmask 39936
        %7251 = vst.msk [vmem:[%s382] sm:$0xff] %vm7250, %v7247
        %p7252 = scmp.lt.s32.totalorder %s23, 1
        %s7253 = scalar_select %p7252, %s23, 1
        %s7254 = smul.addr %s7253, 8
        %s7255 = scalar_lea.vmem %s9, %s7254
        // Predicated region
        $region73: #{tpu_custom_call.1} parent=55 // pred_check
          %p7256 = pneg %p235
        $region74: #{tpu_custom_call.1} parent=55 // pred_check_branch
          %7258 = sbr.rel (%p7256) target = $region76
        $region75: #{tpu_custom_call.1} parent=55 // pred_region
          _
        $region76: #{tpu_custom_call.1} parent=55 // pred_fallthru
          _
      $region56: #{tpu_custom_call.1} parent=5 // pred_fallthru
        _
      %p7259 = scmp.le.s32.totalorder 2, %s18
      // Predicated region
      $region77: #{tpu_custom_call.1} parent=5 // pred_check
        %p7260 = pneg %p7259
      $region78: #{tpu_custom_call.1} parent=5 // pred_check_branch
        %7262 = sbr.rel (%p7260) target = $region80
      $region79: #{tpu_custom_call.1} parent=5 // pred_region
        %s7263 = ssub.s32 %s18, 2
        // Predicated region
        $region81: #{tpu_custom_call.1} parent=79 // pred_check
          %p7264 = pneg %p241
        $region82: #{tpu_custom_call.1} parent=79 // pred_check_branch
          %7266 = sbr.rel (%p7264) target = $region84
        $region83: #{tpu_custom_call.1} parent=79 // pred_region
          %p7267 = scmp.lt.s32.totalorder %s24, 1
          %s7268 = scalar_select %p7267, %s24, 1
          %s7269 = smul.addr %s7268, 8
          %s7270 = scalar_lea.vmem %s9, %s7269
        $region84: #{tpu_custom_call.1} parent=79 // pred_fallthru
          _
      $region80: #{tpu_custom_call.1} parent=5 // pred_fallthru
        _
    $region6: #{tpu_custom_call.1} parent=1 // loop_footer
      %s22 = sadd.s32 1, %s18
    $region7: #{tpu_custom_call.1} parent=1 // loop_footer_branch
      %17 = sbr.rel target = $region3
    $region8: #{tpu_custom_call.1} parent=1 // loop_exit
      _
    %7271 = vsyncpa [#allocation3], 1
    %s7272 = scalar_lea.sflag [#allocation3], 1
    %7273 = vsyncpa %s7272, 1
    %7274 = vsyncpa [#allocation5], 1
    %7275 = vsyncpa [#allocation8], 1

</llo_original>
